<compile_context>
chip_gen: v6e
topology: v6e:2x2x1
jax: 0.10.0
libtpu: 0.0.40
codegen_flags: <defaults>
</compile_context>

<pallas_src>
import jax
import jax.numpy as jnp
from jax.experimental import pallas as pl
from jax.experimental.pallas import tpu as pltpu

_NUM_SPLITS = 2  # H1 halves; sharded across TensorCores on v7x via "parallel".


def _fc1_relu_kernel(x_ref, w1_ref, b1_ref, h1_ref):
    """One grid point: ReLU(x @ w1_half + b1_half) for its H1 half (full K)."""
    h = jnp.dot(x_ref[...], w1_ref[...], preferred_element_type=jnp.float32)
    h = h + b1_ref[...]
    h1_ref[...] = jnp.maximum(h, 0.0).astype(h1_ref.dtype)


def _head_kernel(h1_ref, w2_ref, b2_ref, w3_ref, b3_ref, o_ref):
    """fc2 + ReLU + fc3 on tiny, fully VMEM-resident operands (single invocation)."""
    h2 = jnp.dot(h1_ref[...], w2_ref[...], preferred_element_type=jnp.float32)
    h2 = jnp.maximum(h2 + b2_ref[...], 0.0)
    out = jnp.dot(h2.astype(jnp.bfloat16), w3_ref[...],
                  preferred_element_type=jnp.float32) + b3_ref[...]
    o_ref[...] = out.astype(o_ref.dtype)


@jax.jit
def simple_dnn_forward(x, params):
    """Forward pass matching SimpleDNN: flatten -> fc1+relu -> fc2+relu -> fc3."""
    B = x.shape[0]
    w1, b1, w2, b2, w3, b3 = params
    K, H1 = w1.shape                       # 12288, 512
    H2 = w2.shape[1]                       # 128
    C = w3.shape[1]                        # num_classes
    assert H1 % _NUM_SPLITS == 0
    Hh = H1 // _NUM_SPLITS

    # x.view(x.size(0), -1); cast to bf16 once here (no per-step pack in-kernel).
    xf = x.reshape(B, -1).astype(jnp.bfloat16)
    assert xf.shape[1] == K

    # --- fc1 + ReLU: parallel grid over the two H1 halves (both TCs on v7x). ---
    h1 = pl.pallas_call(
        _fc1_relu_kernel,
        out_shape=jax.ShapeDtypeStruct((B, H1), jnp.bfloat16),
        grid_spec=pltpu.PrefetchScalarGridSpec(
            num_scalar_prefetch=0,
            grid=(_NUM_SPLITS,),
            in_specs=[
                pl.BlockSpec((B, K), lambda j: (0, 0)),    # x, constant (no re-DMA)
                pl.BlockSpec((K, Hh), lambda j: (0, j)),   # w1 half, bf16 stream
                pl.BlockSpec((1, Hh), lambda j: (0, j)),   # b1 half
            ],
            out_specs=pl.BlockSpec((B, Hh), lambda j: (0, j)),
        ),
        compiler_params=pltpu.CompilerParams(
            dimension_semantics=("parallel",),             # shard halves across TCs
            vmem_limit_bytes=32 * 1024 * 1024,             # ~12.2 MiB used
        ),
    )(xf, w1, b1.reshape(1, H1))

    # --- fc2 + ReLU + fc3: trailing micro-kernel, whole-array VMEM blocks. ---
    out = pl.pallas_call(
        _head_kernel,
        out_shape=jax.ShapeDtypeStruct((B, C), jnp.float32),
    )(h1, w2, b2.reshape(1, H2), w3, b3.reshape(1, C))
    return out


def init_params(key, input_size=12288, num_classes=7):
    """Deterministic synthetic params (shapes = transposed nn.Linear weights).

    Weights are stored in bfloat16 (the dtype streamed / fed to the MXU);
    biases stay float32.
    """
    ks = jax.random.split(key, 6)

    def lin(kw, kb, fan_in, fan_out):
        bound = 1.0 / jnp.sqrt(fan_in)
        w = jax.random.uniform(kw, (fan_in, fan_out), jnp.float32, -bound, bound)
        b = jax.random.uniform(kb, (fan_out,), jnp.float32, -bound, bound)
        return w.astype(jnp.bfloat16), b

    w1, b1 = lin(ks[0], ks[1], input_size, 512)
    w2, b2 = lin(ks[2], ks[3], 512, 128)
    w3, b3 = lin(ks[4], ks[5], 128, num_classes)
    return (w1, b1, w2, b2, w3, b3)


def reference_forward(x, params):
    """Pure-JAX reference mirroring the kernel's dtype choices exactly."""
    B = x.shape[0]
    xf = x.reshape(B, -1).astype(jnp.bfloat16)
    w1, b1, w2, b2, w3, b3 = params
    h1 = jnp.dot(xf, w1, preferred_element_type=jnp.float32) + b1
    h1 = jnp.maximum(h1, 0.0).astype(jnp.bfloat16)
    h2 = jnp.dot(h1, w2, preferred_element_type=jnp.float32) + b2
    h2 = jnp.maximum(h2, 0.0).astype(jnp.bfloat16)
    return jnp.dot(h2, w3, preferred_element_type=jnp.float32) + b3


if __name__ == "__main__":
    key = jax.random.PRNGKey(0)
    k_in, k_p = jax.random.split(key)

    # Input shape implied by the module default: 3*64*64 = 12288, batch = 2.
    x = jax.random.normal(k_in, (2, 3, 64, 64), jnp.float32)
    params = init_params(k_p)

    out = jax.block_until_ready(simple_dnn_forward(x, params))
    ref = jax.block_until_ready(reference_forward(x, params))

    assert out.shape == (2, 7), out.shape
    max_err = float(jnp.max(jnp.abs(out - ref)))
    assert jnp.allclose(out, ref, atol=2e-3, rtol=2e-3), max_err
    print("KERNEL_OK")
</pallas_src>

<mosaic_0001>
module attributes {stable_mosaic.version = 11 : i64} {
  func.func @_fc1_relu_kernel(%arg0: i32, %arg1: memref<2x12288xbf16, #tpu.memory_space<vmem>>, %arg2: memref<12288x256xbf16, #tpu.memory_space<vmem>>, %arg3: memref<1x256xf32, #tpu.memory_space<vmem>>, %arg4: memref<2x256xbf16, #tpu.memory_space<vmem>>) attributes {dimension_semantics = [#tpu.dimension_semantics<parallel>], iteration_bounds = array<i64: 2>, scalar_prefetch = 0 : i64, scratch_operands = 0 : i64, tpu.core_type = #tpu.core_type<tc>, window_params = [{pipeline_mode = #tpu.pipeline_mode<synchronous>, transform_indices = @transform_0, window_bounds = array<i64: 2, 12288>}, {transform_indices = @transform_1, window_bounds = array<i64: 12288, 256>}, {transform_indices = @transform_2, window_bounds = array<i64: 1, 256>}, {transform_indices = @transform_3, window_bounds = array<i64: 2, 256>}]} {
    %c0 = arith.constant 0 : index
    %c0_0 = arith.constant 0 : index
    %0 = vector.load %arg1[%c0, %c0_0] : memref<2x12288xbf16, #tpu.memory_space<vmem>>, vector<2x12288xbf16>
    %c0_1 = arith.constant 0 : index
    %c0_2 = arith.constant 0 : index
    %1 = vector.load %arg2[%c0_1, %c0_2] : memref<12288x256xbf16, #tpu.memory_space<vmem>>, vector<12288x256xbf16>
    %cst = arith.constant dense<0.000000e+00> : vector<2x256xf32>
    %2 = tpu.matmul %0, %1, %cst {dimension_numbers = #tpu.dot_dimension_numbers<[1], [0], [0], [1], [0, 0, 1, 1], [], []>} : vector<2x12288xbf16>, vector<12288x256xbf16>, vector<2x256xf32> -> vector<2x256xf32>
    %c0_3 = arith.constant 0 : index
    %c0_4 = arith.constant 0 : index
    %3 = vector.load %arg3[%c0_3, %c0_4] : memref<1x256xf32, #tpu.memory_space<vmem>>, vector<1x256xf32>
    %4 = vector.broadcast %3 : vector<1x256xf32> to vector<2x256xf32>
    %5 = arith.addf %2, %4 : vector<2x256xf32>
    %cst_5 = arith.constant 0.000000e+00 : f32
    %6 = vector.broadcast %cst_5 : f32 to vector<2x256xf32>
    %7 = arith.maximumf %5, %6 : vector<2x256xf32>
    %8 = arith.truncf %7 : vector<2x256xf32> to vector<2x256xbf16>
    %c0_6 = arith.constant 0 : index
    %c0_7 = arith.constant 0 : index
    %9 = vector.load %arg4[%c0_6, %c0_7] : memref<2x256xbf16, #tpu.memory_space<vmem>>, vector<2x256xbf16>
    tpu.vector_store %arg4[%c0_6, %c0_7], %8 {strides = array<i32>} : memref<2x256xbf16, #tpu.memory_space<vmem>>, vector<2x256xbf16>,
    return
  }
  func.func @transform_0(%arg0: i32) -> (i32, i32) {
    %c0_i32 = arith.constant 0 : i32
    %c0_i32_0 = arith.constant 0 : i32
    %c0_i32_1 = arith.constant 0 : i32
    return %c0_i32, %c0_i32_0 : i32, i32
  }
  func.func @transform_1(%arg0: i32) -> (i32, i32) {
    %c0_i32 = arith.constant 0 : i32
    %c0_i32_0 = arith.constant 0 : i32
    return %c0_i32, %arg0 : i32, i32
  }
  func.func @transform_2(%arg0: i32) -> (i32, i32) {
    %c0_i32 = arith.constant 0 : i32
    %c0_i32_0 = arith.constant 0 : i32
    return %c0_i32, %arg0 : i32, i32
  }
  func.func @transform_3(%arg0: i32) -> (i32, i32) {
    %c0_i32 = arith.constant 0 : i32
    %c0_i32_0 = arith.constant 0 : i32
    return %c0_i32, %arg0 : i32, i32
  }
}

module attributes {stable_mosaic.version = 11 : i64} {
  func.func @_head_kernel(%arg0: memref<2x512xbf16, #tpu.memory_space<vmem>>, %arg1: memref<512x128xbf16, #tpu.memory_space<vmem>>, %arg2: memref<1x128xf32, #tpu.memory_space<vmem>>, %arg3: memref<128x7xbf16, #tpu.memory_space<vmem>>, %arg4: memref<1x7xf32, #tpu.memory_space<vmem>>, %arg5: memref<2x7xf32, #tpu.memory_space<vmem>>) attributes {dimension_semantics = [], scalar_prefetch = 0 : i64, scratch_operands = 0 : i64, tpu.core_type = #tpu.core_type<tc>} {
    %c0 = arith.constant 0 : index
    %c0_0 = arith.constant 0 : index
    %0 = vector.load %arg0[%c0, %c0_0] : memref<2x512xbf16, #tpu.memory_space<vmem>>, vector<2x512xbf16>
    %c0_1 = arith.constant 0 : index
    %c0_2 = arith.constant 0 : index
    %1 = vector.load %arg1[%c0_1, %c0_2] : memref<512x128xbf16, #tpu.memory_space<vmem>>, vector<512x128xbf16>
    %cst = arith.constant dense<0.000000e+00> : vector<2x128xf32>
    %2 = tpu.matmul %0, %1, %cst {dimension_numbers = #tpu.dot_dimension_numbers<[1], [0], [0], [1], [0, 0, 1, 1], [], []>} : vector<2x512xbf16>, vector<512x128xbf16>, vector<2x128xf32> -> vector<2x128xf32>
    %c0_3 = arith.constant 0 : index
    %c0_4 = arith.constant 0 : index
    %3 = vector.load %arg2[%c0_3, %c0_4] : memref<1x128xf32, #tpu.memory_space<vmem>>, vector<1x128xf32>
    %4 = vector.broadcast %3 : vector<1x128xf32> to vector<2x128xf32>
    %5 = arith.addf %2, %4 : vector<2x128xf32>
    %cst_5 = arith.constant 0.000000e+00 : f32
    %6 = vector.broadcast %cst_5 : f32 to vector<2x128xf32>
    %7 = arith.maximumf %5, %6 : vector<2x128xf32>
    %8 = arith.truncf %7 : vector<2x128xf32> to vector<2x128xbf16>
    %c0_6 = arith.constant 0 : index
    %c0_7 = arith.constant 0 : index
    %9 = vector.load %arg3[%c0_6, %c0_7] : memref<128x7xbf16, #tpu.memory_space<vmem>>, vector<128x7xbf16>
    %cst_8 = arith.constant dense<0.000000e+00> : vector<2x7xf32>
    %10 = tpu.matmul %8, %9, %cst_8 {dimension_numbers = #tpu.dot_dimension_numbers<[1], [0], [0], [1], [0, 0, 1, 1], [], []>} : vector<2x128xbf16>, vector<128x7xbf16>, vector<2x7xf32> -> vector<2x7xf32>
    %c0_9 = arith.constant 0 : index
    %c0_10 = arith.constant 0 : index
    %11 = vector.load %arg4[%c0_9, %c0_10] : memref<1x7xf32, #tpu.memory_space<vmem>>, vector<1x7xf32>
    %12 = vector.broadcast %11 : vector<1x7xf32> to vector<2x7xf32>
    %13 = arith.addf %10, %12 : vector<2x7xf32>
    %c0_11 = arith.constant 0 : index
    %c0_12 = arith.constant 0 : index
    %14 = vector.load %arg5[%c0_11, %c0_12] : memref<2x7xf32, #tpu.memory_space<vmem>>, vector<2x7xf32>
    tpu.vector_store %arg5[%c0_11, %c0_12], %13 {strides = array<i32>} : memref<2x7xf32, #tpu.memory_space<vmem>>, vector<2x7xf32>,
    return
  }
}

</mosaic_0001>

<llo_original>
// kernel: simple_dnn_forward.3
$region0: #{simple_dnn_forward.3}
  #allocation0 [shape = 'u32[]', space=smem, size = 0x4, offset = 0x4, fixed_abs, tag = 'smem constant byte address 0x4 - core index']
  #allocation1 [shape = 'u32[144,128]{1,0:T(1,128)}', space=vmem, size = 0x12000, scoped, tag = 'internal scratch']
  %s0 = inlined_call_operand.vmem [shape: bf16[2,512], index: 0, kind: input, shape index: {}]
  %s1 = inlined_call_operand.vmem [shape: bf16[512,128], index: 1, kind: input, shape index: {}]
  %s2 = inlined_call_operand.vmem [shape: f32[1,128], index: 2, kind: input, shape index: {}]
  %s3 = inlined_call_operand.vmem [shape: bf16[128,7], index: 3, kind: input, shape index: {}]
  %s4 = inlined_call_operand.vmem [shape: f32[1,7], index: 4, kind: input, shape index: {}]
  %s5 = inlined_call_operand.hbm [shape: f32[2,7], index: 5, kind: output, shape index: {}]
  %s6 = sld [smem:[#allocation0]]
  $region30: #{simple_dnn_forward.3} parent=0
    _
  %s8 = ssub.s32 1, %s6
  %s9 = scalar_select 0, %s8, %s6
  $region1: #{simple_dnn_forward.3} parent=0
    #allocation2 [shape = 'u8[1024]{0}', space=vmem, size = 0x400, scoped, tag = 'output window, operand 0, single buffered']
    #allocation3 [shape = 's32[1]{0}', space=sflag, size = 0x4, scoped, tag = 'scoped memory for simple_dnn_forward.3']
    %10 = vsyncpa [#allocation3], 0
    // Predicated region
    $region2: #{simple_dnn_forward.3} parent=1 // pred_check
      _
    $region3: #{simple_dnn_forward.3} parent=1 // pred_check_branch
      %12 = sbr.rel (0) target = $region5
    $region4: #{simple_dnn_forward.3} parent=1 // pred_region
      _
    $region5: #{simple_dnn_forward.3} parent=1 // pred_fallthru
      _
    // Predicated region
    $region6: #{simple_dnn_forward.3} parent=1 // pred_check
      _
    $region7: #{simple_dnn_forward.3} parent=1 // pred_check_branch
      %14 = sbr.rel (0) target = $region9
    $region8: #{simple_dnn_forward.3} parent=1 // pred_region
      _
    $region9: #{simple_dnn_forward.3} parent=1 // pred_fallthru
      _
    // Predicated region
    $region10: #{simple_dnn_forward.3} parent=1 // pred_check
      _
    $region11: #{simple_dnn_forward.3} parent=1 // pred_check_branch
      %16 = sbr.rel (0) target = $region13
    $region12: #{simple_dnn_forward.3} parent=1 // pred_region
      _
    $region13: #{simple_dnn_forward.3} parent=1 // pred_fallthru
      _
    // Predicated region
    $region14: #{simple_dnn_forward.3} parent=1 // pred_check
      _
    $region15: #{simple_dnn_forward.3} parent=1 // pred_check_branch
      %18 = sbr.rel (0) target = $region17
    $region16: #{simple_dnn_forward.3} parent=1 // pred_region
      _
    $region17: #{simple_dnn_forward.3} parent=1 // pred_fallthru
      _
    // Predicated region
    $region18: #{simple_dnn_forward.3} parent=1 // pred_check
      _
    $region19: #{simple_dnn_forward.3} parent=1 // pred_check_branch
      %20 = sbr.rel (0) target = $region21
    $region20: #{simple_dnn_forward.3} parent=1 // pred_region
      _
    $region21: #{simple_dnn_forward.3} parent=1 // pred_fallthru
      _
    %v22 = vld [vmem:[%s0] sm:$0xf]
    %v23 = vld [vmem:[%s1] sm:$0xf]
    %v24 = vld [vmem:[%s1 + $0x4] sm:$0xf]
    %v25 = vld [vmem:[%s1 + $0x8] sm:$0xf]
    %v26 = vld [vmem:[%s1 + $0xc] sm:$0xf]
    %v27 = vld [vmem:[%s1 + $0x10] sm:$0xf]
    %v28 = vld [vmem:[%s1 + $0x14] sm:$0xf]
    %v29 = vld [vmem:[%s1 + $0x18] sm:$0xf]
    %v30 = vld [vmem:[%s1 + $0x1c] sm:$0xf]
    %v31 = vld [vmem:[%s1 + $0x20] sm:$0xf]
    %v32 = vld [vmem:[%s1 + $0x24] sm:$0xf]
    %v33 = vld [vmem:[%s1 + $0x28] sm:$0xf]
    %v34 = vld [vmem:[%s1 + $0x2c] sm:$0xf]
    %v35 = vld [vmem:[%s1 + $0x30] sm:$0xf]
    %v36 = vld [vmem:[%s1 + $0x34] sm:$0xf]
    %v37 = vld [vmem:[%s1 + $0x38] sm:$0xf]
    %v38 = vld [vmem:[%s1 + $0x3c] sm:$0xf]
    %v39 = vld [vmem:[%s1 + $0x40] sm:$0xf]
    %v40 = vld [vmem:[%s1 + $0x44] sm:$0xf]
    %v41 = vld [vmem:[%s1 + $0x48] sm:$0xf]
    %v42 = vld [vmem:[%s1 + $0x4c] sm:$0xf]
    %v43 = vld [vmem:[%s1 + $0x50] sm:$0xf]
    %v44 = vld [vmem:[%s1 + $0x54] sm:$0xf]
    %v45 = vld [vmem:[%s1 + $0x58] sm:$0xf]
    %v46 = vld [vmem:[%s1 + $0x5c] sm:$0xf]
    %v47 = vld [vmem:[%s1 + $0x60] sm:$0xf]
    %v48 = vld [vmem:[%s1 + $0x64] sm:$0xf]
    %v49 = vld [vmem:[%s1 + $0x68] sm:$0xf]
    %v50 = vld [vmem:[%s1 + $0x6c] sm:$0xf]
    %v51 = vld [vmem:[%s1 + $0x70] sm:$0xf]
    %v52 = vld [vmem:[%s1 + $0x74] sm:$0xf]
    %v53 = vld [vmem:[%s1 + $0x78] sm:$0xf]
    %v54 = vld [vmem:[%s1 + $0x7c] sm:$0xf]
    %v55 = vld [vmem:[%s1 + $0x80] sm:$0xf]
    %v56 = vld [vmem:[%s1 + $0x84] sm:$0xf]
    %v57 = vld [vmem:[%s1 + $0x88] sm:$0xf]
    %v58 = vld [vmem:[%s1 + $0x8c] sm:$0xf]
    %v59 = vld [vmem:[%s1 + $0x90] sm:$0xf]
    %v60 = vld [vmem:[%s1 + $0x94] sm:$0xf]
    %v61 = vld [vmem:[%s1 + $0x98] sm:$0xf]
    %v62 = vld [vmem:[%s1 + $0x9c] sm:$0xf]
    %v63 = vld [vmem:[%s1 + $0xa0] sm:$0xf]
    %v64 = vld [vmem:[%s1 + $0xa4] sm:$0xf]
    %v65 = vld [vmem:[%s1 + $0xa8] sm:$0xf]
    %v66 = vld [vmem:[%s1 + $0xac] sm:$0xf]
    %v67 = vld [vmem:[%s1 + $0xb0] sm:$0xf]
    %v68 = vld [vmem:[%s1 + $0xb4] sm:$0xf]
    %v69 = vld [vmem:[%s1 + $0xb8] sm:$0xf]
    %v70 = vld [vmem:[%s1 + $0xbc] sm:$0xf]
    %v71 = vld [vmem:[%s1 + $0xc0] sm:$0xf]
    %v72 = vld [vmem:[%s1 + $0xc4] sm:$0xf]
    %v73 = vld [vmem:[%s1 + $0xc8] sm:$0xf]
    %v74 = vld [vmem:[%s1 + $0xcc] sm:$0xf]
    %v75 = vld [vmem:[%s1 + $0xd0] sm:$0xf]
    %v76 = vld [vmem:[%s1 + $0xd4] sm:$0xf]
    %v77 = vld [vmem:[%s1 + $0xd8] sm:$0xf]
    %v78 = vld [vmem:[%s1 + $0xdc] sm:$0xf]
    %v79 = vld [vmem:[%s1 + $0xe0] sm:$0xf]
    %v80 = vld [vmem:[%s1 + $0xe4] sm:$0xf]
    %v81 = vld [vmem:[%s1 + $0xe8] sm:$0xf]
    %v82 = vld [vmem:[%s1 + $0xec] sm:$0xf]
    %v83 = vld [vmem:[%s1 + $0xf0] sm:$0xf]
    %v84 = vld [vmem:[%s1 + $0xf4] sm:$0xf]
    %v85 = vld [vmem:[%s1 + $0xf8] sm:$0xf]
    %v86 = vld [vmem:[%s1 + $0xfc] sm:$0xf]
    %v87 = vld [vmem:[%s2] sm:$0x1]
    %v89 = vlaneseq
    %v90 = vshrl.u32 %v89, 7
    %v91 = vsub.s32 0, %v90
    %v92 = vrot.slane %v87, %v91
    %v96 = vunpack.c.l.s4 1966171168
    %v97 = vunpack.c.0.s8 %v96
    %v98 = vlaneseq
    %v99 = vshrl.u32 %v98, 7
    %v100 = vsub.s32 %v97, %v99
    %v101 = vrot.slane %v22, %v100
    %v102 = vcombine.high %v101, %v101
    %v104 = vunpack.c.l.s4 1966171168
    %v105 = vunpack.c.0.s8 %v104
    %v106 = vlaneseq
    %v107 = vshrl.u32 %v106, 7
    %v108 = vsub.s32 %v105, %v107
    %v109 = vrot.slane %v101, %v108
    %v111 = vunpack.c.l.s4 1966171168
    %v112 = vunpack.c.0.s8 %v111
    %v113 = vlaneseq
    %v114 = vshrl.u32 %v113, 7
    %v115 = vsub.s32 %v112, %v114
    %v116 = vrot.slane %v102, %v115
    %v117 = vcombine.high %v109, %v109
    %v118 = vcombine.high %v116, %v116
    %v187 = vunpack.c.l.b16 %v23
    %v188 = vunpack.c.l.b16 %v24
    %v189 = vunpack.c.l.b16 %v25
    %v190 = vunpack.c.l.b16 %v26
    %v191 = vunpack.c.l.b16 %v27
    %v192 = vunpack.c.l.b16 %v28
    %v193 = vunpack.c.l.b16 %v29
    %v194 = vunpack.c.l.b16 %v30
    %v195 = vunpack.c.l.b16 %v31
    %v196 = vunpack.c.l.b16 %v32
    %v197 = vunpack.c.l.b16 %v33
    %v198 = vunpack.c.l.b16 %v34
    %v199 = vunpack.c.l.b16 %v35
    %v200 = vunpack.c.l.b16 %v36
    %v201 = vunpack.c.l.b16 %v37
    %v202 = vunpack.c.l.b16 %v38
    %v203 = vunpack.c.l.b16 %v39
    %v204 = vunpack.c.l.b16 %v40
    %v205 = vunpack.c.l.b16 %v41
    %v206 = vunpack.c.l.b16 %v42
    %v207 = vunpack.c.l.b16 %v43
    %v208 = vunpack.c.l.b16 %v44
    %v209 = vunpack.c.l.b16 %v45
    %v210 = vunpack.c.l.b16 %v46
    %v211 = vunpack.c.l.b16 %v47
    %v212 = vunpack.c.l.b16 %v48
    %v213 = vunpack.c.l.b16 %v49
    %v214 = vunpack.c.l.b16 %v50
    %v215 = vunpack.c.l.b16 %v51
    %v216 = vunpack.c.l.b16 %v52
    %v217 = vunpack.c.l.b16 %v53
    %v218 = vunpack.c.l.b16 %v54
    %v219 = vunpack.c.l.b16 %v55
    %v220 = vunpack.c.l.b16 %v56
    %v221 = vunpack.c.l.b16 %v57
    %v222 = vunpack.c.l.b16 %v58
    %v223 = vunpack.c.l.b16 %v59
    %v224 = vunpack.c.l.b16 %v60
    %v225 = vunpack.c.l.b16 %v61
    %v226 = vunpack.c.l.b16 %v62
    %v227 = vunpack.c.l.b16 %v63
    %v228 = vunpack.c.l.b16 %v64
    %v229 = vunpack.c.l.b16 %v65
    %v230 = vunpack.c.l.b16 %v66
    %v231 = vunpack.c.l.b16 %v67
    %v232 = vunpack.c.l.b16 %v68
    %v233 = vunpack.c.l.b16 %v69
    %v234 = vunpack.c.l.b16 %v70
    %v235 = vunpack.c.l.b16 %v71
    %v236 = vunpack.c.l.b16 %v72
    %v237 = vunpack.c.l.b16 %v73
    %v238 = vunpack.c.l.b16 %v74
    %v239 = vunpack.c.l.b16 %v75
    %v240 = vunpack.c.l.b16 %v76
    %v241 = vunpack.c.l.b16 %v77
    %v242 = vunpack.c.l.b16 %v78
    %v243 = vunpack.c.l.b16 %v79
    %v244 = vunpack.c.l.b16 %v80
    %v245 = vunpack.c.l.b16 %v81
    %v246 = vunpack.c.l.b16 %v82
    %v247 = vunpack.c.l.b16 %v83
    %v248 = vunpack.c.l.b16 %v84
    %v249 = vunpack.c.l.b16 %v85
    %v250 = vunpack.c.l.b16 %v86
    %v251 = vpack.c.b16 %v188, %v187
    %v252 = vpack.c.b16 %v190, %v189
    %v253 = vpack.c.b16 %v192, %v191
    %v254 = vpack.c.b16 %v194, %v193
    %v255 = vpack.c.b16 %v196, %v195
    %v256 = vpack.c.b16 %v198, %v197
    %v257 = vpack.c.b16 %v200, %v199
    %v258 = vpack.c.b16 %v202, %v201
    %v259 = vpack.c.b16 %v204, %v203
    %v260 = vpack.c.b16 %v206, %v205
    %v261 = vpack.c.b16 %v208, %v207
    %v262 = vpack.c.b16 %v210, %v209
    %v263 = vpack.c.b16 %v212, %v211
    %v264 = vpack.c.b16 %v214, %v213
    %v265 = vpack.c.b16 %v216, %v215
    %v266 = vpack.c.b16 %v218, %v217
    %v267 = vpack.c.b16 %v220, %v219
    %v268 = vpack.c.b16 %v222, %v221
    %v269 = vpack.c.b16 %v224, %v223
    %v270 = vpack.c.b16 %v226, %v225
    %v271 = vpack.c.b16 %v228, %v227
    %v272 = vpack.c.b16 %v230, %v229
    %v273 = vpack.c.b16 %v232, %v231
    %v274 = vpack.c.b16 %v234, %v233
    %v275 = vpack.c.b16 %v236, %v235
    %v276 = vpack.c.b16 %v238, %v237
    %v277 = vpack.c.b16 %v240, %v239
    %v278 = vpack.c.b16 %v242, %v241
    %v279 = vpack.c.b16 %v244, %v243
    %v280 = vpack.c.b16 %v246, %v245
    %v281 = vpack.c.b16 %v248, %v247
    %v282 = vpack.c.b16 %v250, %v249
    %315 = vmatprep.subr.bf16.mxu0 0
    %316 = vmatpush1.bf16.msra.mxu0 %v258
    %317 = vmatprep.subr.bf16.mxu0 0
    %318 = vmatpush1.bf16.msra.mxu0 %v257
    %319 = vmatprep.subr.bf16.mxu0 0
    %320 = vmatpush1.bf16.msra.mxu0 %v256
    %321 = vmatprep.subr.bf16.mxu0 0
    %322 = vmatpush1.bf16.msra.mxu0 %v255
    %323 = vmatprep.subr.bf16.mxu0 0
    %324 = vmatpush1.bf16.msra.mxu0 %v254
    %325 = vmatprep.subr.bf16.mxu0 0
    %326 = vmatpush1.bf16.msra.mxu0 %v253
    %327 = vmatprep.subr.bf16.mxu0 0
    %328 = vmatpush1.bf16.msra.mxu0 %v252
    %329 = vmatprep.subr.bf16.mxu0 0
    %330 = vmatpush1.bf16.msra.mxu0 %v251
    %331 = vmatprep.subr.bf16.mxu0 0
    %332 = vmatpush2.bf16.msra.mxu0 %v266
    %333 = vmatprep.subr.bf16.mxu0 0
    %334 = vmatpush2.bf16.msra.mxu0 %v265
    %335 = vmatprep.subr.bf16.mxu0 0
    %336 = vmatpush2.bf16.msra.mxu0 %v264
    %337 = vmatprep.subr.bf16.mxu0 0
    %338 = vmatpush2.bf16.msra.mxu0 %v263
    %339 = vmatprep.subr.bf16.mxu0 0
    %340 = vmatpush2.bf16.msra.mxu0 %v262
    %341 = vmatprep.subr.bf16.mxu0 0
    %342 = vmatpush2.bf16.msra.mxu0 %v261
    %343 = vmatprep.subr.bf16.mxu0 0
    %344 = vmatpush2.bf16.msra.mxu0 %v260
    %345 = vmatprep.subr.bf16.mxu0 0
    %346 = vmatpush2.bf16.msra.mxu0 %v259
    %347 = vmatprep.mubr.bf16.mxu0 %v116
    %348 = vmatmul.mubr.bf16.gmra.mxu0 %v109
    %v349 = vpop.f32.mrf.mxu0
    %v350 = vadd.f32 %v92, %v349
    %v351 = vpop.f32.mrf.mxu0
    %v352 = vpop.f32.mrf.mxu0
    %v353 = vpop.f32.mrf.mxu0
    %354 = vdwg.mxu0
    %355 = vmatprep.subr.bf16.mxu0 0
    %356 = vmatpush1.bf16.msra.mxu0 %v274
    %357 = vmatprep.subr.bf16.mxu0 0
    %358 = vmatpush1.bf16.msra.mxu0 %v273
    %359 = vmatprep.subr.bf16.mxu0 0
    %360 = vmatpush1.bf16.msra.mxu0 %v272
    %361 = vmatprep.subr.bf16.mxu0 0
    %362 = vmatpush1.bf16.msra.mxu0 %v271
    %363 = vmatprep.subr.bf16.mxu0 0
    %364 = vmatpush1.bf16.msra.mxu0 %v270
    %365 = vmatprep.subr.bf16.mxu0 0
    %366 = vmatpush1.bf16.msra.mxu0 %v269
    %367 = vmatprep.subr.bf16.mxu0 0
    %368 = vmatpush1.bf16.msra.mxu0 %v268
    %369 = vmatprep.subr.bf16.mxu0 0
    %370 = vmatpush1.bf16.msra.mxu0 %v267
    %371 = vmatprep.subr.bf16.mxu0 0
    %372 = vmatpush2.bf16.msra.mxu0 %v282
    %373 = vmatprep.subr.bf16.mxu0 0
    %374 = vmatpush2.bf16.msra.mxu0 %v281
    %375 = vmatprep.subr.bf16.mxu0 0
    %376 = vmatpush2.bf16.msra.mxu0 %v280
    %377 = vmatprep.subr.bf16.mxu0 0
    %378 = vmatpush2.bf16.msra.mxu0 %v279
    %379 = vmatprep.subr.bf16.mxu0 0
    %380 = vmatpush2.bf16.msra.mxu0 %v278
    %381 = vmatprep.subr.bf16.mxu0 0
    %382 = vmatpush2.bf16.msra.mxu0 %v277
    %383 = vmatprep.subr.bf16.mxu0 0
    %384 = vmatpush2.bf16.msra.mxu0 %v276
    %385 = vmatprep.subr.bf16.mxu0 0
    %386 = vmatpush2.bf16.msra.mxu0 %v275
    %387 = vmatprep.mubr.bf16.mxu0 %v118
    %388 = vmatmul.mubr.bf16.gmra.mxu0 %v117
    %v389 = vpop.f32.mrf.mxu0
    %v390 = vadd.f32 %v350, %v389
    %v391 = vpop.f32.mrf.mxu0
    %v392 = vpop.f32.mrf.mxu0
    %v393 = vpop.f32.mrf.mxu0
    %394 = vdwg.mxu0
    %v395 = vmax.f32 %v390, 0.0
    %v396 = vpack.c.bf16 %v395, %v395
    %v397 = vld [vmem:[%s3] sm:$0xf]
    %v398 = vld [vmem:[%s3 + $0x4] sm:$0xf]
    %v399 = vld [vmem:[%s3 + $0x8] sm:$0xf]
    %v400 = vld [vmem:[%s3 + $0xc] sm:$0xf]
    %v401 = vld [vmem:[%s3 + $0x10] sm:$0xf]
    %v402 = vld [vmem:[%s3 + $0x14] sm:$0xf]
    %v403 = vld [vmem:[%s3 + $0x18] sm:$0xf]
    %v404 = vld [vmem:[%s3 + $0x1c] sm:$0xf]
    %v405 = vld [vmem:[%s3 + $0x20] sm:$0xf]
    %v406 = vld [vmem:[%s3 + $0x24] sm:$0xf]
    %v407 = vld [vmem:[%s3 + $0x28] sm:$0xf]
    %v408 = vld [vmem:[%s3 + $0x2c] sm:$0xf]
    %v409 = vld [vmem:[%s3 + $0x30] sm:$0xf]
    %v410 = vld [vmem:[%s3 + $0x34] sm:$0xf]
    %v411 = vld [vmem:[%s3 + $0x38] sm:$0xf]
    %v412 = vld [vmem:[%s3 + $0x3c] sm:$0xf]
    %v413 = vld [vmem:[%s4] sm:$0x1]
    %v415 = vlaneseq
    %v416 = vshrl.u32 %v415, 7
    %v417 = vsub.s32 0, %v416
    %v418 = vrot.slane %v413, %v417
    %v436 = vunpack.c.l.b16 %v397
    %v437 = vunpack.c.l.b16 %v398
    %v438 = vunpack.c.l.b16 %v399
    %v439 = vunpack.c.l.b16 %v400
    %v440 = vunpack.c.l.b16 %v401
    %v441 = vunpack.c.l.b16 %v402
    %v442 = vunpack.c.l.b16 %v403
    %v443 = vunpack.c.l.b16 %v404
    %v444 = vunpack.c.l.b16 %v405
    %v445 = vunpack.c.l.b16 %v406
    %v446 = vunpack.c.l.b16 %v407
    %v447 = vunpack.c.l.b16 %v408
    %v448 = vunpack.c.l.b16 %v409
    %v449 = vunpack.c.l.b16 %v410
    %v450 = vunpack.c.l.b16 %v411
    %v451 = vunpack.c.l.b16 %v412
    %v452 = vpack.c.b16 %v437, %v436
    %v453 = vpack.c.b16 %v439, %v438
    %v454 = vpack.c.b16 %v441, %v440
    %v455 = vpack.c.b16 %v443, %v442
    %v456 = vpack.c.b16 %v445, %v444
    %v457 = vpack.c.b16 %v447, %v446
    %v458 = vpack.c.b16 %v449, %v448
    %v459 = vpack.c.b16 %v451, %v450
    %468 = vmatprep.subr.bf16.mxu0 0
    %469 = vmatpush1.bf16.msra.mxu0 %v459
    %470 = vmatprep.subr.bf16.mxu0 0
    %471 = vmatpush1.bf16.msra.mxu0 %v458
    %472 = vmatprep.subr.bf16.mxu0 0
    %473 = vmatpush1.bf16.msra.mxu0 %v457
    %474 = vmatprep.subr.bf16.mxu0 0
    %475 = vmatpush1.bf16.msra.mxu0 %v456
    %476 = vmatprep.subr.bf16.mxu0 0
    %477 = vmatpush1.bf16.msra.mxu0 %v455
    %478 = vmatprep.subr.bf16.mxu0 0
    %479 = vmatpush1.bf16.msra.mxu0 %v454
    %480 = vmatprep.subr.bf16.mxu0 0
    %481 = vmatpush1.bf16.msra.mxu0 %v453
    %482 = vmatprep.subr.bf16.mxu0 0
    %483 = vmatpush1.bf16.msra.mxu0 %v452
    %484 = vmatprep.subr.bf16.mxu0 0
    %485 = vmatpush2.bf16.msra.mxu0 0
    %486 = vmatprep.subr.bf16.mxu0 0
    %487 = vmatpush2.bf16.msra.mxu0 0
    %488 = vmatprep.subr.bf16.mxu0 0
    %489 = vmatpush2.bf16.msra.mxu0 0
    %490 = vmatprep.subr.bf16.mxu0 0
    %491 = vmatpush2.bf16.msra.mxu0 0
    %492 = vmatprep.subr.bf16.mxu0 0
    %493 = vmatpush2.bf16.msra.mxu0 0
    %494 = vmatprep.subr.bf16.mxu0 0
    %495 = vmatpush2.bf16.msra.mxu0 0
    %496 = vmatprep.subr.bf16.mxu0 0
    %497 = vmatpush2.bf16.msra.mxu0 0
    %498 = vmatprep.subr.bf16.mxu0 0
    %499 = vmatpush2.bf16.msra.mxu0 0
    %500 = vmatprep.mubr.bf16.mxu0 0
    %501 = vmatmul.mubr.bf16.gmra.mxu0 %v396
    %v502 = vpop.f32.mrf.mxu0
    %v503 = vadd.f32 %v418, %v502
    %v504 = vpop.f32.mrf.mxu0
    %v505 = vpop.f32.mrf.mxu0
    %v506 = vpop.f32.mrf.mxu0
    %507 = vdwg.mxu0
    %vm508 = vcmask 50176
    %509 = vst.msk [vmem:[#allocation2] sm:$0x3] %vm508, %v503
    // Predicated region
    $region22: #{simple_dnn_forward.3} parent=1 // pred_check
      _
    $region23: #{simple_dnn_forward.3} parent=1 // pred_check_branch
      %511 = sbr.rel (0) target = $region25
    $region24: #{simple_dnn_forward.3} parent=1 // pred_region
      %s513 = ssub.s32 32, 32
      %514 = vsyncadd [#allocation3], %s513
      %s516 = sshll.u32 [#allocation2], 4
      %s517 = int_to_ptr.vmem [resolvable:$true] %s516
      %519 = dma.vmem_to_hbm [thread:$0]  %s517, 32, %s5, [#allocation3]
    $region25: #{simple_dnn_forward.3} parent=1 // pred_fallthru
      _
    // Predicated region
    $region26: #{simple_dnn_forward.3} parent=1 // pred_check
      _
    $region27: #{simple_dnn_forward.3} parent=1 // pred_check_branch
      %521 = sbr.rel (0) target = $region29
    $region28: #{simple_dnn_forward.3} parent=1 // pred_region
      %522 = dma.done [#allocation3], 32
    $region29: #{simple_dnn_forward.3} parent=1 // pred_fallthru
      _
    %523 = vsyncpa [#allocation3], 1

// kernel: simple_dnn_forward.2
$region0: #{simple_dnn_forward.2}
  #allocation0 [shape = 'u32[]', space=smem, size = 0x4, offset = 0x4, fixed_abs, tag = 'smem constant byte address 0x4 - core index']
  #allocation1 [shape = 'u32[144,128]{1,0:T(1,128)}', space=vmem, size = 0x12000, scoped, tag = 'internal scratch']
  %s0 = inlined_call_operand.vmem [shape: bf16[2,12288], index: 0, kind: input, shape index: {}]
  %s1 = inlined_call_operand.hbm [shape: bf16[12288,512], index: 1, kind: input, shape index: {}]
  %s2 = inlined_call_operand.hbm [shape: f32[1,512], index: 2, kind: input, shape index: {}]
  %s3 = inlined_call_operand.vmem [shape: bf16[2,512], index: 3, kind: output, shape index: {}]
  %s4 = sld [smem:[#allocation0]]
  $region53: #{simple_dnn_forward.2} parent=0
    _
  %s6 = ssub.s32 1, %s4
  %s7 = scalar_select 0, %s6, %s4
  $region1: #{simple_dnn_forward.2} parent=0
    #allocation2 [shape = 'u8[12582912]{0}', space=vmem, size = 0xc00000, scoped, tag = 'input window, operand 1']
    #allocation3 [shape = 's32[2]{0}', space=sflag, size = 0x8, scoped, tag = 'scoped memory for simple_dnn_forward.2']
    #allocation4 [shape = 'u8[2048]{0}', space=vmem, size = 0x800, scoped, tag = 'input window, operand 2']
    #allocation5 [shape = 's32[2]{0}', space=sflag, size = 0x8, scoped, tag = 'scoped memory for simple_dnn_forward.2']
    %8 = vsyncpa [#allocation3], 0
    %s9 = scalar_lea.sflag [#allocation3], 1
    %10 = vsyncpa %s9, 0
    %11 = vsyncpa [#allocation5], 0
    %s12 = scalar_lea.sflag [#allocation5], 1
    %13 = vsyncpa %s12, 0
    loop: start=0, step=1, limit=4
    $region2: #{simple_dnn_forward.2} parent=1 // loop_pre_header
      _
    $region3: #{simple_dnn_forward.2} parent=1 // loop_header
      %s15 = sphi 0, %s19
      %p16 = scmp.ge.s32.totalorder %s15, 4
      %s23 = sphi 0, %s23
      %s25 = sphi 0, %s23
      %s26 = sphi 0, %s25
      %s40 = sphi 0, %s26
      %s46 = sphi 0, %s48
      %s49 = sphi 0, %s46
      %s50 = sphi 0, %s49
      %s66 = sphi 0, %s50
      %s72 = sphi 0, %s74
      %s75 = sphi 0, %s72
      %s76 = sphi 0, %s75
      %s92 = sphi 0, %s76
      %s98 = sphi 0, %s100
      %s101 = sphi 0, %s98
      %s102 = sphi 0, %s101
      %s118 = sphi 0, %s102
    $region4: #{simple_dnn_forward.2} parent=1 // loop_header_branch
      %18 = sbr.rel (%p16) target = $region8
    $region5: #{simple_dnn_forward.2} parent=1 // loop_body
      %s20 = ssub.s32 %s15, 1
      %s21 = ssub.s32 %s15, 2
      %s22 = sadd.s32 %s15, 1
      %s24 = sadd.s32 %s23, 1
      %p27 = scmp.eq.s32.totalorder %s15, 1
      %p28 = scmp.ne.s32.totalorder %s23, %s25
      %p29 = scmp.eq.s32.totalorder %s15, 0
      %p30 = por %p28, %p29
      %p31 = scmp.ne.s32.totalorder %s23, %s25
      %p32 = scmp.eq.s32.totalorder %s20, 1
      %p33 = por %p31, %p32
      %p34 = scmp.ne.s32.totalorder %s25, %s26
      %p35 = scmp.eq.s32.totalorder %s20, 0
      %p36 = por %p34, %p35
      %p37 = scmp.ne.s32.totalorder %s25, %s26
      %p38 = scmp.eq.s32.totalorder %s21, 1
      %p39 = por %p37, %p38
      %p41 = scmp.ne.s32.totalorder %s26, %s40
      %p42 = scmp.eq.s32.totalorder %s21, 0
      %p43 = por %p41, %p42
      %s44 = ssub.s32 %s15, %s22
      %p45 = scmp.eq.s32.totalorder %s44, 0
      %s47 = sadd.s32 %s46, 1
      %s48 = scalar_select %p45, %s46, %s47
      %p51 = pneg %p45
      %p52 = scmp.eq.s32.totalorder %s15, 1
      %p53 = por %p51, %p52
      %p54 = scmp.ne.s32.totalorder %s46, %s49
      %p55 = scmp.eq.s32.totalorder %s15, 0
      %p56 = por %p54, %p55
      %p57 = scmp.ne.s32.totalorder %s46, %s49
      %p58 = scmp.eq.s32.totalorder %s20, 1
      %p59 = por %p57, %p58
      %p60 = scmp.ne.s32.totalorder %s49, %s50
      %p61 = scmp.eq.s32.totalorder %s20, 0
      %p62 = por %p60, %p61
      %p63 = scmp.ne.s32.totalorder %s49, %s50
      %p64 = scmp.eq.s32.totalorder %s21, 1
      %p65 = por %p63, %p64
      %p67 = scmp.ne.s32.totalorder %s50, %s66
      %p68 = scmp.eq.s32.totalorder %s21, 0
      %p69 = por %p67, %p68
      %s70 = ssub.s32 %s15, %s22
      %p71 = scmp.eq.s32.totalorder %s70, 0
      %s73 = sadd.s32 %s72, 1
      %s74 = scalar_select %p71, %s72, %s73
      %p77 = pneg %p71
      %p78 = scmp.eq.s32.totalorder %s15, 1
      %p79 = por %p77, %p78
      %p80 = scmp.ne.s32.totalorder %s72, %s75
      %p81 = scmp.eq.s32.totalorder %s15, 0
      %p82 = por %p80, %p81
      %p83 = scmp.ne.s32.totalorder %s72, %s75
      %p84 = scmp.eq.s32.totalorder %s20, 1
      %p85 = por %p83, %p84
      %p86 = scmp.ne.s32.totalorder %s75, %s76
      %p87 = scmp.eq.s32.totalorder %s20, 0
      %p88 = por %p86, %p87
      %p89 = scmp.ne.s32.totalorder %s75, %s76
      %p90 = scmp.eq.s32.totalorder %s21, 1
      %p91 = por %p89, %p90
      %p93 = scmp.ne.s32.totalorder %s76, %s92
      %p94 = scmp.eq.s32.totalorder %s21, 0
      %p95 = por %p93, %p94
      %s96 = ssub.s32 %s15, %s22
      %p97 = scmp.eq.s32.totalorder %s96, 0
      %s99 = sadd.s32 %s98, 1
      %s100 = scalar_select %p97, %s98, %s99
      %p103 = pneg %p97
      %p104 = scmp.eq.s32.totalorder %s15, 1
      %p105 = por %p103, %p104
      %p106 = scmp.ne.s32.totalorder %s98, %s101
      %p107 = scmp.eq.s32.totalorder %s15, 0
      %p108 = por %p106, %p107
      %p109 = scmp.ne.s32.totalorder %s98, %s101
      %p110 = scmp.eq.s32.totalorder %s20, 1
      %p111 = por %p109, %p110
      %p112 = scmp.ne.s32.totalorder %s101, %s102
      %p113 = scmp.eq.s32.totalorder %s20, 0
      %p114 = por %p112, %p113
      %p115 = scmp.ne.s32.totalorder %s101, %s102
      %p116 = scmp.eq.s32.totalorder %s21, 1
      %p117 = por %p115, %p116
      %p119 = scmp.ne.s32.totalorder %s102, %s118
      %p120 = scmp.eq.s32.totalorder %s21, 0
      %p121 = por %p119, %p120
      %p122 = scmp.le.s32.totalorder 1, %s15
      %p123 = scmp.lt.s32.totalorder %s15, 3
      %p124 = pnand %p122, %p123
      %p125 = pneg %p124
      // Predicated region
      $region9: #{simple_dnn_forward.2} parent=5 // pred_check
        _
      $region10: #{simple_dnn_forward.2} parent=5 // pred_check_branch
        %127 = sbr.rel (%p124) target = $region12
      $region11: #{simple_dnn_forward.2} parent=5 // pred_region
        %s128 = ssub.s32 %s15, 1
        // Predicated region
        $region13: #{simple_dnn_forward.2} parent=11 // pred_check
          %p129 = pneg %p36
        $region14: #{simple_dnn_forward.2} parent=11 // pred_check_branch
          %131 = sbr.rel (%p129) target = $region16
        $region15: #{simple_dnn_forward.2} parent=11 // pred_region
          _
        $region16: #{simple_dnn_forward.2} parent=11 // pred_fallthru
          _
      $region12: #{simple_dnn_forward.2} parent=5 // pred_fallthru
        _
      %p132 = scmp.lt.s32.totalorder %s15, 2
      // Predicated region
      $region17: #{simple_dnn_forward.2} parent=5 // pred_check
        %p133 = pneg %p132
      $region18: #{simple_dnn_forward.2} parent=5 // pred_check_branch
        %135 = sbr.rel (%p133) target = $region20
      $region19: #{simple_dnn_forward.2} parent=5 // pred_region
        // Predicated region
        $region21: #{simple_dnn_forward.2} parent=19 // pred_check
          %p136 = pneg %p56
        $region22: #{simple_dnn_forward.2} parent=19 // pred_check_branch
          %138 = sbr.rel (%p136) target = $region24
        $region23: #{simple_dnn_forward.2} parent=19 // pred_region
          %s139 = sand.u32 %s46, 1
          %s140 = scalar_lea.sflag [#allocation3], %s139
          %s141 = sand.u32 %s46, 1
          %s142 = smul.addr %s141, 12288
          %s143 = scalar_lea.vmem [#allocation2], %s142
          %s144 = smul.u32 2, %s15
          %s146 = ssub.s32 196608, 196608
          %147 = vsyncadd %s140, %s146
          %s148 = smul.addr %s144, 64
          %s149 = scalar_lea.hbm %s1, %s148
          %s150 = sshll.u32 %s143, 4
          %s151 = int_to_ptr.vmem [resolvable:$true] %s150
          %156 = dma.hbm_to_vmem [thread:$0]  %s149, 196608, %s151, %s140, 256, 128, 8
        $region24: #{simple_dnn_forward.2} parent=19 // pred_fallthru
          _
        // Predicated region
        $region25: #{simple_dnn_forward.2} parent=19 // pred_check
          %p157 = pneg %p82
        $region26: #{simple_dnn_forward.2} parent=19 // pred_check_branch
          %159 = sbr.rel (%p157) target = $region28
        $region27: #{simple_dnn_forward.2} parent=19 // pred_region
          %s160 = sand.u32 %s72, 1
          %s161 = scalar_lea.sflag [#allocation5], %s160
          %s162 = sand.u32 %s72, 1
          %s163 = smul.addr %s162, 2
          %s164 = scalar_lea.vmem [#allocation4], %s163
          %s165 = smul.u32 2, %s15
          %s167 = ssub.s32 32, 32
          %168 = vsyncadd %s161, %s167
          %s169 = smul.addr %s165, 16
          %s170 = scalar_lea.hbm %s2, %s169
          %s172 = sshll.u32 %s164, 4
          %s173 = int_to_ptr.vmem [resolvable:$true] %s172
          %175 = dma.hbm_to_vmem [thread:$0]  %s170, 32, %s173, %s161
        $region28: #{simple_dnn_forward.2} parent=19 // pred_fallthru
          _
      $region20: #{simple_dnn_forward.2} parent=5 // pred_fallthru
        _
      %p176 = scmp.le.s32.totalorder 1, %s15
      %p177 = scmp.lt.s32.totalorder %s15, 3
      %p178 = pnand %p176, %p177
      %p179 = pneg %p178
      // Predicated region
      $region29: #{simple_dnn_forward.2} parent=5 // pred_check
        _
      $region30: #{simple_dnn_forward.2} parent=5 // pred_check_branch
        %181 = sbr.rel (%p178) target = $region32
      $region31: #{simple_dnn_forward.2} parent=5 // pred_region
        %s182 = ssub.s32 %s15, 1
        %s183 = sand.u32 %s49, 1
        %s184 = scalar_lea.sflag [#allocation3], %s183
        %s185 = sand.u32 %s49, 1
        %s186 = smul.addr %s185, 12288
        %s187 = scalar_lea.vmem [#allocation2], %s186
        // Predicated region
        $region33: #{simple_dnn_forward.2} parent=31 // pred_check
          %p188 = pneg %p62
        $region34: #{simple_dnn_forward.2} parent=31 // pred_check_branch
          %190 = sbr.rel (%p188) target = $region36
        $region35: #{simple_dnn_forward.2} parent=31 // pred_region
          %191 = dma.done %s184, 196608
        $region36: #{simple_dnn_forward.2} parent=31 // pred_fallthru
          _
        %s192 = sand.u32 %s75, 1
        %s193 = scalar_lea.sflag [#allocation5], %s192
        %s194 = sand.u32 %s75, 1
        %s195 = smul.addr %s194, 2
        %s196 = scalar_lea.vmem [#allocation4], %s195
        // Predicated region
        $region37: #{simple_dnn_forward.2} parent=31 // pred_check
          %p197 = pneg %p88
        $region38: #{simple_dnn_forward.2} parent=31 // pred_check_branch
          %199 = sbr.rel (%p197) target = $region40
        $region39: #{simple_dnn_forward.2} parent=31 // pred_region
          %200 = dma.done %s193, 32
        $region40: #{simple_dnn_forward.2} parent=31 // pred_fallthru
          _
        %p201 = pneg %p36
        %p202 = pneg %p33
        %s203 = sand.u32 %s49, 1
        %s204 = scalar_lea.sflag [#allocation3], %s203
        %s205 = sand.u32 %s49, 1
        %s206 = smul.addr %s205, 12288
        %s207 = scalar_lea.vmem [#allocation2], %s206
        %p208 = pneg %p62
        %p209 = pneg %p59
        %s210 = sand.u32 %s75, 1
        %s211 = scalar_lea.sflag [#allocation5], %s210
        %s212 = sand.u32 %s75, 1
        %s213 = smul.addr %s212, 2
        %s214 = scalar_lea.vmem [#allocation4], %s213
        %p215 = pneg %p88
        %p216 = pneg %p85
        %p217 = pneg %p114
        %p218 = pneg %p111
        %s219 = smul.u32 2, %s20
        %p220 = scmp.lt.s32.totalorder %s219, 3
        %s221 = scalar_select %p220, %s219, 3
        %s222 = scalar_lea.vmem %s3, %s221
        %s223 = smul.u32 2, %s20
        %s224 = smul.u32 2, %s20
        %s225 = smul.u32 2, %s20
        %p226 = scmp.lt.s32.totalorder %s225, 3
        %s227 = scalar_select %p226, %s225, 3
        %s228 = scalar_lea.vmem %s3, %s227
        %s229 = smul.u32 2, %s20
        %v230 = vld [vmem:[%s0] sm:$0xff]
        %v231 = vld [vmem:[%s0 + $0x8] sm:$0xff]
        %v232 = vld [vmem:[%s0 + $0x10] sm:$0xff]
        %v233 = vld [vmem:[%s0 + $0x18] sm:$0xff]
        %v234 = vld [vmem:[%s0 + $0x20] sm:$0xff]
        %v235 = vld [vmem:[%s0 + $0x28] sm:$0xff]
        %v236 = vld [vmem:[%s0 + $0x30] sm:$0xff]
        %v237 = vld [vmem:[%s0 + $0x38] sm:$0xff]
        %v238 = vld [vmem:[%s0 + $0x40] sm:$0xff]
        %v239 = vld [vmem:[%s0 + $0x48] sm:$0xff]
        %v240 = vld [vmem:[%s0 + $0x50] sm:$0xff]
        %v241 = vld [vmem:[%s0 + $0x58] sm:$0xff]
        %v242 = vld [vmem:[%s187] sm:$0xff]
        %v243 = vld [vmem:[%s187 + $0x8] sm:$0xff]
        %v244 = vld [vmem:[%s187 + $0x10] sm:$0xff]
        %v245 = vld [vmem:[%s187 + $0x18] sm:$0xff]
        %v246 = vld [vmem:[%s187 + $0x20] sm:$0xff]
        %v247 = vld [vmem:[%s187 + $0x28] sm:$0xff]
        %v248 = vld [vmem:[%s187 + $0x30] sm:$0xff]
        %v249 = vld [vmem:[%s187 + $0x38] sm:$0xff]
        %v250 = vld [vmem:[%s187 + $0x40] sm:$0xff]
        %v251 = vld [vmem:[%s187 + $0x48] sm:$0xff]
        %v252 = vld [vmem:[%s187 + $0x50] sm:$0xff]
        %v253 = vld [vmem:[%s187 + $0x58] sm:$0xff]
        %v254 = vld [vmem:[%s187 + $0x60] sm:$0xff]
        %v255 = vld [vmem:[%s187 + $0x68] sm:$0xff]
        %v256 = vld [vmem:[%s187 + $0x70] sm:$0xff]
        %v257 = vld [vmem:[%s187 + $0x78] sm:$0xff]
        %v258 = vld [vmem:[%s187 + $0x80] sm:$0xff]
        %v259 = vld [vmem:[%s187 + $0x88] sm:$0xff]
        %v260 = vld [vmem:[%s187 + $0x90] sm:$0xff]
        %v261 = vld [vmem:[%s187 + $0x98] sm:$0xff]
        %v262 = vld [vmem:[%s187 + $0xa0] sm:$0xff]
        %v263 = vld [vmem:[%s187 + $0xa8] sm:$0xff]
        %v264 = vld [vmem:[%s187 + $0xb0] sm:$0xff]
        %v265 = vld [vmem:[%s187 + $0xb8] sm:$0xff]
        %v266 = vld [vmem:[%s187 + $0xc0] sm:$0xff]
        %v267 = vld [vmem:[%s187 + $0xc8] sm:$0xff]
        %v268 = vld [vmem:[%s187 + $0xd0] sm:$0xff]
        %v269 = vld [vmem:[%s187 + $0xd8] sm:$0xff]
        %v270 = vld [vmem:[%s187 + $0xe0] sm:$0xff]
        %v271 = vld [vmem:[%s187 + $0xe8] sm:$0xff]
        %v272 = vld [vmem:[%s187 + $0xf0] sm:$0xff]
        %v273 = vld [vmem:[%s187 + $0xf8] sm:$0xff]
        %v274 = vld [vmem:[%s187 + $0x100] sm:$0xff]
        %v275 = vld [vmem:[%s187 + $0x108] sm:$0xff]
        %v276 = vld [vmem:[%s187 + $0x110] sm:$0xff]
        %v277 = vld [vmem:[%s187 + $0x118] sm:$0xff]
        %v278 = vld [vmem:[%s187 + $0x120] sm:$0xff]
        %v279 = vld [vmem:[%s187 + $0x128] sm:$0xff]
        %v280 = vld [vmem:[%s187 + $0x130] sm:$0xff]
        %v281 = vld [vmem:[%s187 + $0x138] sm:$0xff]
        %v282 = vld [vmem:[%s187 + $0x140] sm:$0xff]
        %v283 = vld [vmem:[%s187 + $0x148] sm:$0xff]
        %v284 = vld [vmem:[%s187 + $0x150] sm:$0xff]
        %v285 = vld [vmem:[%s187 + $0x158] sm:$0xff]
        %v286 = vld [vmem:[%s187 + $0x160] sm:$0xff]
        %v287 = vld [vmem:[%s187 + $0x168] sm:$0xff]
        %v288 = vld [vmem:[%s187 + $0x170] sm:$0xff]
        %v289 = vld [vmem:[%s187 + $0x178] sm:$0xff]
        %v290 = vld [vmem:[%s187 + $0x180] sm:$0xff]
        %v291 = vld [vmem:[%s187 + $0x188] sm:$0xff]
        %v292 = vld [vmem:[%s187 + $0x190] sm:$0xff]
        %v293 = vld [vmem:[%s187 + $0x198] sm:$0xff]
        %v294 = vld [vmem:[%s187 + $0x1a0] sm:$0xff]
        %v295 = vld [vmem:[%s187 + $0x1a8] sm:$0xff]
        %v296 = vld [vmem:[%s187 + $0x1b0] sm:$0xff]
        %v297 = vld [vmem:[%s187 + $0x1b8] sm:$0xff]
        %v298 = vld [vmem:[%s187 + $0x1c0] sm:$0xff]
        %v299 = vld [vmem:[%s187 + $0x1c8] sm:$0xff]
        %v300 = vld [vmem:[%s187 + $0x1d0] sm:$0xff]
        %v301 = vld [vmem:[%s187 + $0x1d8] sm:$0xff]
        %v302 = vld [vmem:[%s187 + $0x1e0] sm:$0xff]
        %v303 = vld [vmem:[%s187 + $0x1e8] sm:$0xff]
        %v304 = vld [vmem:[%s187 + $0x1f0] sm:$0xff]
        %v305 = vld [vmem:[%s187 + $0x1f8] sm:$0xff]
        %v306 = vld [vmem:[%s187 + $0x200] sm:$0xff]
        %v307 = vld [vmem:[%s187 + $0x208] sm:$0xff]
        %v308 = vld [vmem:[%s187 + $0x210] sm:$0xff]
        %v309 = vld [vmem:[%s187 + $0x218] sm:$0xff]
        %v310 = vld [vmem:[%s187 + $0x220] sm:$0xff]
        %v311 = vld [vmem:[%s187 + $0x228] sm:$0xff]
        %v312 = vld [vmem:[%s187 + $0x230] sm:$0xff]
        %v313 = vld [vmem:[%s187 + $0x238] sm:$0xff]
        %v314 = vld [vmem:[%s187 + $0x240] sm:$0xff]
        %v315 = vld [vmem:[%s187 + $0x248] sm:$0xff]
        %v316 = vld [vmem:[%s187 + $0x250] sm:$0xff]
        %v317 = vld [vmem:[%s187 + $0x258] sm:$0xff]
        %v318 = vld [vmem:[%s187 + $0x260] sm:$0xff]
        %v319 = vld [vmem:[%s187 + $0x268] sm:$0xff]
        %v320 = vld [vmem:[%s187 + $0x270] sm:$0xff]
        %v321 = vld [vmem:[%s187 + $0x278] sm:$0xff]
        %v322 = vld [vmem:[%s187 + $0x280] sm:$0xff]
        %v323 = vld [vmem:[%s187 + $0x288] sm:$0xff]
        %v324 = vld [vmem:[%s187 + $0x290] sm:$0xff]
        %v325 = vld [vmem:[%s187 + $0x298] sm:$0xff]
        %v326 = vld [vmem:[%s187 + $0x2a0] sm:$0xff]
        %v327 = vld [vmem:[%s187 + $0x2a8] sm:$0xff]
        %v328 = vld [vmem:[%s187 + $0x2b0] sm:$0xff]
        %v329 = vld [vmem:[%s187 + $0x2b8] sm:$0xff]
        %v330 = vld [vmem:[%s187 + $0x2c0] sm:$0xff]
        %v331 = vld [vmem:[%s187 + $0x2c8] sm:$0xff]
        %v332 = vld [vmem:[%s187 + $0x2d0] sm:$0xff]
        %v333 = vld [vmem:[%s187 + $0x2d8] sm:$0xff]
        %v334 = vld [vmem:[%s187 + $0x2e0] sm:$0xff]
        %v335 = vld [vmem:[%s187 + $0x2e8] sm:$0xff]
        %v336 = vld [vmem:[%s187 + $0x2f0] sm:$0xff]
        %v337 = vld [vmem:[%s187 + $0x2f8] sm:$0xff]
        %v338 = vld [vmem:[%s187 + $0x300] sm:$0xff]
        %v339 = vld [vmem:[%s187 + $0x308] sm:$0xff]
        %v340 = vld [vmem:[%s187 + $0x310] sm:$0xff]
        %v341 = vld [vmem:[%s187 + $0x318] sm:$0xff]
        %v342 = vld [vmem:[%s187 + $0x320] sm:$0xff]
        %v343 = vld [vmem:[%s187 + $0x328] sm:$0xff]
        %v344 = vld [vmem:[%s187 + $0x330] sm:$0xff]
        %v345 = vld [vmem:[%s187 + $0x338] sm:$0xff]
        %v346 = vld [vmem:[%s187 + $0x340] sm:$0xff]
        %v347 = vld [vmem:[%s187 + $0x348] sm:$0xff]
        %v348 = vld [vmem:[%s187 + $0x350] sm:$0xff]
        %v349 = vld [vmem:[%s187 + $0x358] sm:$0xff]
        %v350 = vld [vmem:[%s187 + $0x360] sm:$0xff]
        %v351 = vld [vmem:[%s187 + $0x368] sm:$0xff]
        %v352 = vld [vmem:[%s187 + $0x370] sm:$0xff]
        %v353 = vld [vmem:[%s187 + $0x378] sm:$0xff]
        %v354 = vld [vmem:[%s187 + $0x380] sm:$0xff]
        %v355 = vld [vmem:[%s187 + $0x388] sm:$0xff]
        %v356 = vld [vmem:[%s187 + $0x390] sm:$0xff]
        %v357 = vld [vmem:[%s187 + $0x398] sm:$0xff]
        %v358 = vld [vmem:[%s187 + $0x3a0] sm:$0xff]
        %v359 = vld [vmem:[%s187 + $0x3a8] sm:$0xff]
        %v360 = vld [vmem:[%s187 + $0x3b0] sm:$0xff]
        %v361 = vld [vmem:[%s187 + $0x3b8] sm:$0xff]
        %v362 = vld [vmem:[%s187 + $0x3c0] sm:$0xff]
        %v363 = vld [vmem:[%s187 + $0x3c8] sm:$0xff]
        %v364 = vld [vmem:[%s187 + $0x3d0] sm:$0xff]
        %v365 = vld [vmem:[%s187 + $0x3d8] sm:$0xff]
        %v366 = vld [vmem:[%s187 + $0x3e0] sm:$0xff]
        %v367 = vld [vmem:[%s187 + $0x3e8] sm:$0xff]
        %v368 = vld [vmem:[%s187 + $0x3f0] sm:$0xff]
        %v369 = vld [vmem:[%s187 + $0x3f8] sm:$0xff]
        %v370 = vld [vmem:[%s187 + $0x400] sm:$0xff]
        %v371 = vld [vmem:[%s187 + $0x408] sm:$0xff]
        %v372 = vld [vmem:[%s187 + $0x410] sm:$0xff]
        %v373 = vld [vmem:[%s187 + $0x418] sm:$0xff]
        %v374 = vld [vmem:[%s187 + $0x420] sm:$0xff]
        %v375 = vld [vmem:[%s187 + $0x428] sm:$0xff]
        %v376 = vld [vmem:[%s187 + $0x430] sm:$0xff]
        %v377 = vld [vmem:[%s187 + $0x438] sm:$0xff]
        %v378 = vld [vmem:[%s187 + $0x440] sm:$0xff]
        %v379 = vld [vmem:[%s187 + $0x448] sm:$0xff]
        %v380 = vld [vmem:[%s187 + $0x450] sm:$0xff]
        %v381 = vld [vmem:[%s187 + $0x458] sm:$0xff]
        %v382 = vld [vmem:[%s187 + $0x460] sm:$0xff]
        %v383 = vld [vmem:[%s187 + $0x468] sm:$0xff]
        %v384 = vld [vmem:[%s187 + $0x470] sm:$0xff]
        %v385 = vld [vmem:[%s187 + $0x478] sm:$0xff]
        %v386 = vld [vmem:[%s187 + $0x480] sm:$0xff]
        %v387 = vld [vmem:[%s187 + $0x488] sm:$0xff]
        %v388 = vld [vmem:[%s187 + $0x490] sm:$0xff]
        %v389 = vld [vmem:[%s187 + $0x498] sm:$0xff]
        %v390 = vld [vmem:[%s187 + $0x4a0] sm:$0xff]
        %v391 = vld [vmem:[%s187 + $0x4a8] sm:$0xff]
        %v392 = vld [vmem:[%s187 + $0x4b0] sm:$0xff]
        %v393 = vld [vmem:[%s187 + $0x4b8] sm:$0xff]
        %v394 = vld [vmem:[%s187 + $0x4c0] sm:$0xff]
        %v395 = vld [vmem:[%s187 + $0x4c8] sm:$0xff]
        %v396 = vld [vmem:[%s187 + $0x4d0] sm:$0xff]
        %v397 = vld [vmem:[%s187 + $0x4d8] sm:$0xff]
        %v398 = vld [vmem:[%s187 + $0x4e0] sm:$0xff]
        %v399 = vld [vmem:[%s187 + $0x4e8] sm:$0xff]
        %v400 = vld [vmem:[%s187 + $0x4f0] sm:$0xff]
        %v401 = vld [vmem:[%s187 + $0x4f8] sm:$0xff]
        %v402 = vld [vmem:[%s187 + $0x500] sm:$0xff]
        %v403 = vld [vmem:[%s187 + $0x508] sm:$0xff]
        %v404 = vld [vmem:[%s187 + $0x510] sm:$0xff]
        %v405 = vld [vmem:[%s187 + $0x518] sm:$0xff]
        %v406 = vld [vmem:[%s187 + $0x520] sm:$0xff]
        %v407 = vld [vmem:[%s187 + $0x528] sm:$0xff]
        %v408 = vld [vmem:[%s187 + $0x530] sm:$0xff]
        %v409 = vld [vmem:[%s187 + $0x538] sm:$0xff]
        %v410 = vld [vmem:[%s187 + $0x540] sm:$0xff]
        %v411 = vld [vmem:[%s187 + $0x548] sm:$0xff]
        %v412 = vld [vmem:[%s187 + $0x550] sm:$0xff]
        %v413 = vld [vmem:[%s187 + $0x558] sm:$0xff]
        %v414 = vld [vmem:[%s187 + $0x560] sm:$0xff]
        %v415 = vld [vmem:[%s187 + $0x568] sm:$0xff]
        %v416 = vld [vmem:[%s187 + $0x570] sm:$0xff]
        %v417 = vld [vmem:[%s187 + $0x578] sm:$0xff]
        %v418 = vld [vmem:[%s187 + $0x580] sm:$0xff]
        %v419 = vld [vmem:[%s187 + $0x588] sm:$0xff]
        %v420 = vld [vmem:[%s187 + $0x590] sm:$0xff]
        %v421 = vld [vmem:[%s187 + $0x598] sm:$0xff]
        %v422 = vld [vmem:[%s187 + $0x5a0] sm:$0xff]
        %v423 = vld [vmem:[%s187 + $0x5a8] sm:$0xff]
        %v424 = vld [vmem:[%s187 + $0x5b0] sm:$0xff]
        %v425 = vld [vmem:[%s187 + $0x5b8] sm:$0xff]
        %v426 = vld [vmem:[%s187 + $0x5c0] sm:$0xff]
        %v427 = vld [vmem:[%s187 + $0x5c8] sm:$0xff]
        %v428 = vld [vmem:[%s187 + $0x5d0] sm:$0xff]
        %v429 = vld [vmem:[%s187 + $0x5d8] sm:$0xff]
        %v430 = vld [vmem:[%s187 + $0x5e0] sm:$0xff]
        %v431 = vld [vmem:[%s187 + $0x5e8] sm:$0xff]
        %v432 = vld [vmem:[%s187 + $0x5f0] sm:$0xff]
        %v433 = vld [vmem:[%s187 + $0x5f8] sm:$0xff]
        %v434 = vld [vmem:[%s187 + $0x600] sm:$0xff]
        %v435 = vld [vmem:[%s187 + $0x608] sm:$0xff]
        %v436 = vld [vmem:[%s187 + $0x610] sm:$0xff]
        %v437 = vld [vmem:[%s187 + $0x618] sm:$0xff]
        %v438 = vld [vmem:[%s187 + $0x620] sm:$0xff]
        %v439 = vld [vmem:[%s187 + $0x628] sm:$0xff]
        %v440 = vld [vmem:[%s187 + $0x630] sm:$0xff]
        %v441 = vld [vmem:[%s187 + $0x638] sm:$0xff]
        %v442 = vld [vmem:[%s187 + $0x640] sm:$0xff]
        %v443 = vld [vmem:[%s187 + $0x648] sm:$0xff]
        %v444 = vld [vmem:[%s187 + $0x650] sm:$0xff]
        %v445 = vld [vmem:[%s187 + $0x658] sm:$0xff]
        %v446 = vld [vmem:[%s187 + $0x660] sm:$0xff]
        %v447 = vld [vmem:[%s187 + $0x668] sm:$0xff]
        %v448 = vld [vmem:[%s187 + $0x670] sm:$0xff]
        %v449 = vld [vmem:[%s187 + $0x678] sm:$0xff]
        %v450 = vld [vmem:[%s187 + $0x680] sm:$0xff]
        %v451 = vld [vmem:[%s187 + $0x688] sm:$0xff]
        %v452 = vld [vmem:[%s187 + $0x690] sm:$0xff]
        %v453 = vld [vmem:[%s187 + $0x698] sm:$0xff]
        %v454 = vld [vmem:[%s187 + $0x6a0] sm:$0xff]
        %v455 = vld [vmem:[%s187 + $0x6a8] sm:$0xff]
        %v456 = vld [vmem:[%s187 + $0x6b0] sm:$0xff]
        %v457 = vld [vmem:[%s187 + $0x6b8] sm:$0xff]
        %v458 = vld [vmem:[%s187 + $0x6c0] sm:$0xff]
        %v459 = vld [vmem:[%s187 + $0x6c8] sm:$0xff]
        %v460 = vld [vmem:[%s187 + $0x6d0] sm:$0xff]
        %v461 = vld [vmem:[%s187 + $0x6d8] sm:$0xff]
        %v462 = vld [vmem:[%s187 + $0x6e0] sm:$0xff]
        %v463 = vld [vmem:[%s187 + $0x6e8] sm:$0xff]
        %v464 = vld [vmem:[%s187 + $0x6f0] sm:$0xff]
        %v465 = vld [vmem:[%s187 + $0x6f8] sm:$0xff]
        %v466 = vld [vmem:[%s187 + $0x700] sm:$0xff]
        %v467 = vld [vmem:[%s187 + $0x708] sm:$0xff]
        %v468 = vld [vmem:[%s187 + $0x710] sm:$0xff]
        %v469 = vld [vmem:[%s187 + $0x718] sm:$0xff]
        %v470 = vld [vmem:[%s187 + $0x720] sm:$0xff]
        %v471 = vld [vmem:[%s187 + $0x728] sm:$0xff]
        %v472 = vld [vmem:[%s187 + $0x730] sm:$0xff]
        %v473 = vld [vmem:[%s187 + $0x738] sm:$0xff]
        %v474 = vld [vmem:[%s187 + $0x740] sm:$0xff]
        %v475 = vld [vmem:[%s187 + $0x748] sm:$0xff]
        %v476 = vld [vmem:[%s187 + $0x750] sm:$0xff]
        %v477 = vld [vmem:[%s187 + $0x758] sm:$0xff]
        %v478 = vld [vmem:[%s187 + $0x760] sm:$0xff]
        %v479 = vld [vmem:[%s187 + $0x768] sm:$0xff]
        %v480 = vld [vmem:[%s187 + $0x770] sm:$0xff]
        %v481 = vld [vmem:[%s187 + $0x778] sm:$0xff]
        %v482 = vld [vmem:[%s187 + $0x780] sm:$0xff]
        %v483 = vld [vmem:[%s187 + $0x788] sm:$0xff]
        %v484 = vld [vmem:[%s187 + $0x790] sm:$0xff]
        %v485 = vld [vmem:[%s187 + $0x798] sm:$0xff]
        %v486 = vld [vmem:[%s187 + $0x7a0] sm:$0xff]
        %v487 = vld [vmem:[%s187 + $0x7a8] sm:$0xff]
        %v488 = vld [vmem:[%s187 + $0x7b0] sm:$0xff]
        %v489 = vld [vmem:[%s187 + $0x7b8] sm:$0xff]
        %v490 = vld [vmem:[%s187 + $0x7c0] sm:$0xff]
        %v491 = vld [vmem:[%s187 + $0x7c8] sm:$0xff]
        %v492 = vld [vmem:[%s187 + $0x7d0] sm:$0xff]
        %v493 = vld [vmem:[%s187 + $0x7d8] sm:$0xff]
        %v494 = vld [vmem:[%s187 + $0x7e0] sm:$0xff]
        %v495 = vld [vmem:[%s187 + $0x7e8] sm:$0xff]
        %v496 = vld [vmem:[%s187 + $0x7f0] sm:$0xff]
        %v497 = vld [vmem:[%s187 + $0x7f8] sm:$0xff]
        %v498 = vld [vmem:[%s187 + $0x800] sm:$0xff]
        %v499 = vld [vmem:[%s187 + $0x808] sm:$0xff]
        %v500 = vld [vmem:[%s187 + $0x810] sm:$0xff]
        %v501 = vld [vmem:[%s187 + $0x818] sm:$0xff]
        %v502 = vld [vmem:[%s187 + $0x820] sm:$0xff]
        %v503 = vld [vmem:[%s187 + $0x828] sm:$0xff]
        %v504 = vld [vmem:[%s187 + $0x830] sm:$0xff]
        %v505 = vld [vmem:[%s187 + $0x838] sm:$0xff]
        %v506 = vld [vmem:[%s187 + $0x840] sm:$0xff]
        %v507 = vld [vmem:[%s187 + $0x848] sm:$0xff]
        %v508 = vld [vmem:[%s187 + $0x850] sm:$0xff]
        %v509 = vld [vmem:[%s187 + $0x858] sm:$0xff]
        %v510 = vld [vmem:[%s187 + $0x860] sm:$0xff]
        %v511 = vld [vmem:[%s187 + $0x868] sm:$0xff]
        %v512 = vld [vmem:[%s187 + $0x870] sm:$0xff]
        %v513 = vld [vmem:[%s187 + $0x878] sm:$0xff]
        %v514 = vld [vmem:[%s187 + $0x880] sm:$0xff]
        %v515 = vld [vmem:[%s187 + $0x888] sm:$0xff]
        %v516 = vld [vmem:[%s187 + $0x890] sm:$0xff]
        %v517 = vld [vmem:[%s187 + $0x898] sm:$0xff]
        %v518 = vld [vmem:[%s187 + $0x8a0] sm:$0xff]
        %v519 = vld [vmem:[%s187 + $0x8a8] sm:$0xff]
        %v520 = vld [vmem:[%s187 + $0x8b0] sm:$0xff]
        %v521 = vld [vmem:[%s187 + $0x8b8] sm:$0xff]
        %v522 = vld [vmem:[%s187 + $0x8c0] sm:$0xff]
        %v523 = vld [vmem:[%s187 + $0x8c8] sm:$0xff]
        %v524 = vld [vmem:[%s187 + $0x8d0] sm:$0xff]
        %v525 = vld [vmem:[%s187 + $0x8d8] sm:$0xff]
        %v526 = vld [vmem:[%s187 + $0x8e0] sm:$0xff]
        %v527 = vld [vmem:[%s187 + $0x8e8] sm:$0xff]
        %v528 = vld [vmem:[%s187 + $0x8f0] sm:$0xff]
        %v529 = vld [vmem:[%s187 + $0x8f8] sm:$0xff]
        %v530 = vld [vmem:[%s187 + $0x900] sm:$0xff]
        %v531 = vld [vmem:[%s187 + $0x908] sm:$0xff]
        %v532 = vld [vmem:[%s187 + $0x910] sm:$0xff]
        %v533 = vld [vmem:[%s187 + $0x918] sm:$0xff]
        %v534 = vld [vmem:[%s187 + $0x920] sm:$0xff]
        %v535 = vld [vmem:[%s187 + $0x928] sm:$0xff]
        %v536 = vld [vmem:[%s187 + $0x930] sm:$0xff]
        %v537 = vld [vmem:[%s187 + $0x938] sm:$0xff]
        %v538 = vld [vmem:[%s187 + $0x940] sm:$0xff]
        %v539 = vld [vmem:[%s187 + $0x948] sm:$0xff]
        %v540 = vld [vmem:[%s187 + $0x950] sm:$0xff]
        %v541 = vld [vmem:[%s187 + $0x958] sm:$0xff]
        %v542 = vld [vmem:[%s187 + $0x960] sm:$0xff]
        %v543 = vld [vmem:[%s187 + $0x968] sm:$0xff]
        %v544 = vld [vmem:[%s187 + $0x970] sm:$0xff]
        %v545 = vld [vmem:[%s187 + $0x978] sm:$0xff]
        %v546 = vld [vmem:[%s187 + $0x980] sm:$0xff]
        %v547 = vld [vmem:[%s187 + $0x988] sm:$0xff]
        %v548 = vld [vmem:[%s187 + $0x990] sm:$0xff]
        %v549 = vld [vmem:[%s187 + $0x998] sm:$0xff]
        %v550 = vld [vmem:[%s187 + $0x9a0] sm:$0xff]
        %v551 = vld [vmem:[%s187 + $0x9a8] sm:$0xff]
        %v552 = vld [vmem:[%s187 + $0x9b0] sm:$0xff]
        %v553 = vld [vmem:[%s187 + $0x9b8] sm:$0xff]
        %v554 = vld [vmem:[%s187 + $0x9c0] sm:$0xff]
        %v555 = vld [vmem:[%s187 + $0x9c8] sm:$0xff]
        %v556 = vld [vmem:[%s187 + $0x9d0] sm:$0xff]
        %v557 = vld [vmem:[%s187 + $0x9d8] sm:$0xff]
        %v558 = vld [vmem:[%s187 + $0x9e0] sm:$0xff]
        %v559 = vld [vmem:[%s187 + $0x9e8] sm:$0xff]
        %v560 = vld [vmem:[%s187 + $0x9f0] sm:$0xff]
        %v561 = vld [vmem:[%s187 + $0x9f8] sm:$0xff]
        %v562 = vld [vmem:[%s187 + $0xa00] sm:$0xff]
        %v563 = vld [vmem:[%s187 + $0xa08] sm:$0xff]
        %v564 = vld [vmem:[%s187 + $0xa10] sm:$0xff]
        %v565 = vld [vmem:[%s187 + $0xa18] sm:$0xff]
        %v566 = vld [vmem:[%s187 + $0xa20] sm:$0xff]
        %v567 = vld [vmem:[%s187 + $0xa28] sm:$0xff]
        %v568 = vld [vmem:[%s187 + $0xa30] sm:$0xff]
        %v569 = vld [vmem:[%s187 + $0xa38] sm:$0xff]
        %v570 = vld [vmem:[%s187 + $0xa40] sm:$0xff]
        %v571 = vld [vmem:[%s187 + $0xa48] sm:$0xff]
        %v572 = vld [vmem:[%s187 + $0xa50] sm:$0xff]
        %v573 = vld [vmem:[%s187 + $0xa58] sm:$0xff]
        %v574 = vld [vmem:[%s187 + $0xa60] sm:$0xff]
        %v575 = vld [vmem:[%s187 + $0xa68] sm:$0xff]
        %v576 = vld [vmem:[%s187 + $0xa70] sm:$0xff]
        %v577 = vld [vmem:[%s187 + $0xa78] sm:$0xff]
        %v578 = vld [vmem:[%s187 + $0xa80] sm:$0xff]
        %v579 = vld [vmem:[%s187 + $0xa88] sm:$0xff]
        %v580 = vld [vmem:[%s187 + $0xa90] sm:$0xff]
        %v581 = vld [vmem:[%s187 + $0xa98] sm:$0xff]
        %v582 = vld [vmem:[%s187 + $0xaa0] sm:$0xff]
        %v583 = vld [vmem:[%s187 + $0xaa8] sm:$0xff]
        %v584 = vld [vmem:[%s187 + $0xab0] sm:$0xff]
        %v585 = vld [vmem:[%s187 + $0xab8] sm:$0xff]
        %v586 = vld [vmem:[%s187 + $0xac0] sm:$0xff]
        %v587 = vld [vmem:[%s187 + $0xac8] sm:$0xff]
        %v588 = vld [vmem:[%s187 + $0xad0] sm:$0xff]
        %v589 = vld [vmem:[%s187 + $0xad8] sm:$0xff]
        %v590 = vld [vmem:[%s187 + $0xae0] sm:$0xff]
        %v591 = vld [vmem:[%s187 + $0xae8] sm:$0xff]
        %v592 = vld [vmem:[%s187 + $0xaf0] sm:$0xff]
        %v593 = vld [vmem:[%s187 + $0xaf8] sm:$0xff]
        %v594 = vld [vmem:[%s187 + $0xb00] sm:$0xff]
        %v595 = vld [vmem:[%s187 + $0xb08] sm:$0xff]
        %v596 = vld [vmem:[%s187 + $0xb10] sm:$0xff]
        %v597 = vld [vmem:[%s187 + $0xb18] sm:$0xff]
        %v598 = vld [vmem:[%s187 + $0xb20] sm:$0xff]
        %v599 = vld [vmem:[%s187 + $0xb28] sm:$0xff]
        %v600 = vld [vmem:[%s187 + $0xb30] sm:$0xff]
        %v601 = vld [vmem:[%s187 + $0xb38] sm:$0xff]
        %v602 = vld [vmem:[%s187 + $0xb40] sm:$0xff]
        %v603 = vld [vmem:[%s187 + $0xb48] sm:$0xff]
        %v604 = vld [vmem:[%s187 + $0xb50] sm:$0xff]
        %v605 = vld [vmem:[%s187 + $0xb58] sm:$0xff]
        %v606 = vld [vmem:[%s187 + $0xb60] sm:$0xff]
        %v607 = vld [vmem:[%s187 + $0xb68] sm:$0xff]
        %v608 = vld [vmem:[%s187 + $0xb70] sm:$0xff]
        %v609 = vld [vmem:[%s187 + $0xb78] sm:$0xff]
        %v610 = vld [vmem:[%s187 + $0xb80] sm:$0xff]
        %v611 = vld [vmem:[%s187 + $0xb88] sm:$0xff]
        %v612 = vld [vmem:[%s187 + $0xb90] sm:$0xff]
        %v613 = vld [vmem:[%s187 + $0xb98] sm:$0xff]
        %v614 = vld [vmem:[%s187 + $0xba0] sm:$0xff]
        %v615 = vld [vmem:[%s187 + $0xba8] sm:$0xff]
        %v616 = vld [vmem:[%s187 + $0xbb0] sm:$0xff]
        %v617 = vld [vmem:[%s187 + $0xbb8] sm:$0xff]
        %v618 = vld [vmem:[%s187 + $0xbc0] sm:$0xff]
        %v619 = vld [vmem:[%s187 + $0xbc8] sm:$0xff]
        %v620 = vld [vmem:[%s187 + $0xbd0] sm:$0xff]
        %v621 = vld [vmem:[%s187 + $0xbd8] sm:$0xff]
        %v622 = vld [vmem:[%s187 + $0xbe0] sm:$0xff]
        %v623 = vld [vmem:[%s187 + $0xbe8] sm:$0xff]
        %v624 = vld [vmem:[%s187 + $0xbf0] sm:$0xff]
        %v625 = vld [vmem:[%s187 + $0xbf8] sm:$0xff]
        %v626 = vld [vmem:[%s187 + $0xc00] sm:$0xff]
        %v627 = vld [vmem:[%s187 + $0xc08] sm:$0xff]
        %v628 = vld [vmem:[%s187 + $0xc10] sm:$0xff]
        %v629 = vld [vmem:[%s187 + $0xc18] sm:$0xff]
        %v630 = vld [vmem:[%s187 + $0xc20] sm:$0xff]
        %v631 = vld [vmem:[%s187 + $0xc28] sm:$0xff]
        %v632 = vld [vmem:[%s187 + $0xc30] sm:$0xff]
        %v633 = vld [vmem:[%s187 + $0xc38] sm:$0xff]
        %v634 = vld [vmem:[%s187 + $0xc40] sm:$0xff]
        %v635 = vld [vmem:[%s187 + $0xc48] sm:$0xff]
        %v636 = vld [vmem:[%s187 + $0xc50] sm:$0xff]
        %v637 = vld [vmem:[%s187 + $0xc58] sm:$0xff]
        %v638 = vld [vmem:[%s187 + $0xc60] sm:$0xff]
        %v639 = vld [vmem:[%s187 + $0xc68] sm:$0xff]
        %v640 = vld [vmem:[%s187 + $0xc70] sm:$0xff]
        %v641 = vld [vmem:[%s187 + $0xc78] sm:$0xff]
        %v642 = vld [vmem:[%s187 + $0xc80] sm:$0xff]
        %v643 = vld [vmem:[%s187 + $0xc88] sm:$0xff]
        %v644 = vld [vmem:[%s187 + $0xc90] sm:$0xff]
        %v645 = vld [vmem:[%s187 + $0xc98] sm:$0xff]
        %v646 = vld [vmem:[%s187 + $0xca0] sm:$0xff]
        %v647 = vld [vmem:[%s187 + $0xca8] sm:$0xff]
        %v648 = vld [vmem:[%s187 + $0xcb0] sm:$0xff]
        %v649 = vld [vmem:[%s187 + $0xcb8] sm:$0xff]
        %v650 = vld [vmem:[%s187 + $0xcc0] sm:$0xff]
        %v651 = vld [vmem:[%s187 + $0xcc8] sm:$0xff]
        %v652 = vld [vmem:[%s187 + $0xcd0] sm:$0xff]
        %v653 = vld [vmem:[%s187 + $0xcd8] sm:$0xff]
        %v654 = vld [vmem:[%s187 + $0xce0] sm:$0xff]
        %v655 = vld [vmem:[%s187 + $0xce8] sm:$0xff]
        %v656 = vld [vmem:[%s187 + $0xcf0] sm:$0xff]
        %v657 = vld [vmem:[%s187 + $0xcf8] sm:$0xff]
        %v658 = vld [vmem:[%s187 + $0xd00] sm:$0xff]
        %v659 = vld [vmem:[%s187 + $0xd08] sm:$0xff]
        %v660 = vld [vmem:[%s187 + $0xd10] sm:$0xff]
        %v661 = vld [vmem:[%s187 + $0xd18] sm:$0xff]
        %v662 = vld [vmem:[%s187 + $0xd20] sm:$0xff]
        %v663 = vld [vmem:[%s187 + $0xd28] sm:$0xff]
        %v664 = vld [vmem:[%s187 + $0xd30] sm:$0xff]
        %v665 = vld [vmem:[%s187 + $0xd38] sm:$0xff]
        %v666 = vld [vmem:[%s187 + $0xd40] sm:$0xff]
        %v667 = vld [vmem:[%s187 + $0xd48] sm:$0xff]
        %v668 = vld [vmem:[%s187 + $0xd50] sm:$0xff]
        %v669 = vld [vmem:[%s187 + $0xd58] sm:$0xff]
        %v670 = vld [vmem:[%s187 + $0xd60] sm:$0xff]
        %v671 = vld [vmem:[%s187 + $0xd68] sm:$0xff]
        %v672 = vld [vmem:[%s187 + $0xd70] sm:$0xff]
        %v673 = vld [vmem:[%s187 + $0xd78] sm:$0xff]
        %v674 = vld [vmem:[%s187 + $0xd80] sm:$0xff]
        %v675 = vld [vmem:[%s187 + $0xd88] sm:$0xff]
        %v676 = vld [vmem:[%s187 + $0xd90] sm:$0xff]
        %v677 = vld [vmem:[%s187 + $0xd98] sm:$0xff]
        %v678 = vld [vmem:[%s187 + $0xda0] sm:$0xff]
        %v679 = vld [vmem:[%s187 + $0xda8] sm:$0xff]
        %v680 = vld [vmem:[%s187 + $0xdb0] sm:$0xff]
        %v681 = vld [vmem:[%s187 + $0xdb8] sm:$0xff]
        %v682 = vld [vmem:[%s187 + $0xdc0] sm:$0xff]
        %v683 = vld [vmem:[%s187 + $0xdc8] sm:$0xff]
        %v684 = vld [vmem:[%s187 + $0xdd0] sm:$0xff]
        %v685 = vld [vmem:[%s187 + $0xdd8] sm:$0xff]
        %v686 = vld [vmem:[%s187 + $0xde0] sm:$0xff]
        %v687 = vld [vmem:[%s187 + $0xde8] sm:$0xff]
        %v688 = vld [vmem:[%s187 + $0xdf0] sm:$0xff]
        %v689 = vld [vmem:[%s187 + $0xdf8] sm:$0xff]
        %v690 = vld [vmem:[%s187 + $0xe00] sm:$0xff]
        %v691 = vld [vmem:[%s187 + $0xe08] sm:$0xff]
        %v692 = vld [vmem:[%s187 + $0xe10] sm:$0xff]
        %v693 = vld [vmem:[%s187 + $0xe18] sm:$0xff]
        %v694 = vld [vmem:[%s187 + $0xe20] sm:$0xff]
        %v695 = vld [vmem:[%s187 + $0xe28] sm:$0xff]
        %v696 = vld [vmem:[%s187 + $0xe30] sm:$0xff]
        %v697 = vld [vmem:[%s187 + $0xe38] sm:$0xff]
        %v698 = vld [vmem:[%s187 + $0xe40] sm:$0xff]
        %v699 = vld [vmem:[%s187 + $0xe48] sm:$0xff]
        %v700 = vld [vmem:[%s187 + $0xe50] sm:$0xff]
        %v701 = vld [vmem:[%s187 + $0xe58] sm:$0xff]
        %v702 = vld [vmem:[%s187 + $0xe60] sm:$0xff]
        %v703 = vld [vmem:[%s187 + $0xe68] sm:$0xff]
        %v704 = vld [vmem:[%s187 + $0xe70] sm:$0xff]
        %v705 = vld [vmem:[%s187 + $0xe78] sm:$0xff]
        %v706 = vld [vmem:[%s187 + $0xe80] sm:$0xff]
        %v707 = vld [vmem:[%s187 + $0xe88] sm:$0xff]
        %v708 = vld [vmem:[%s187 + $0xe90] sm:$0xff]
        %v709 = vld [vmem:[%s187 + $0xe98] sm:$0xff]
        %v710 = vld [vmem:[%s187 + $0xea0] sm:$0xff]
        %v711 = vld [vmem:[%s187 + $0xea8] sm:$0xff]
        %v712 = vld [vmem:[%s187 + $0xeb0] sm:$0xff]
        %v713 = vld [vmem:[%s187 + $0xeb8] sm:$0xff]
        %v714 = vld [vmem:[%s187 + $0xec0] sm:$0xff]
        %v715 = vld [vmem:[%s187 + $0xec8] sm:$0xff]
        %v716 = vld [vmem:[%s187 + $0xed0] sm:$0xff]
        %v717 = vld [vmem:[%s187 + $0xed8] sm:$0xff]
        %v718 = vld [vmem:[%s187 + $0xee0] sm:$0xff]
        %v719 = vld [vmem:[%s187 + $0xee8] sm:$0xff]
        %v720 = vld [vmem:[%s187 + $0xef0] sm:$0xff]
        %v721 = vld [vmem:[%s187 + $0xef8] sm:$0xff]
        %v722 = vld [vmem:[%s187 + $0xf00] sm:$0xff]
        %v723 = vld [vmem:[%s187 + $0xf08] sm:$0xff]
        %v724 = vld [vmem:[%s187 + $0xf10] sm:$0xff]
        %v725 = vld [vmem:[%s187 + $0xf18] sm:$0xff]
        %v726 = vld [vmem:[%s187 + $0xf20] sm:$0xff]
        %v727 = vld [vmem:[%s187 + $0xf28] sm:$0xff]
        %v728 = vld [vmem:[%s187 + $0xf30] sm:$0xff]
        %v729 = vld [vmem:[%s187 + $0xf38] sm:$0xff]
        %v730 = vld [vmem:[%s187 + $0xf40] sm:$0xff]
        %v731 = vld [vmem:[%s187 + $0xf48] sm:$0xff]
        %v732 = vld [vmem:[%s187 + $0xf50] sm:$0xff]
        %v733 = vld [vmem:[%s187 + $0xf58] sm:$0xff]
        %v734 = vld [vmem:[%s187 + $0xf60] sm:$0xff]
        %v735 = vld [vmem:[%s187 + $0xf68] sm:$0xff]
        %v736 = vld [vmem:[%s187 + $0xf70] sm:$0xff]
        %v737 = vld [vmem:[%s187 + $0xf78] sm:$0xff]
        %v738 = vld [vmem:[%s187 + $0xf80] sm:$0xff]
        %v739 = vld [vmem:[%s187 + $0xf88] sm:$0xff]
        %v740 = vld [vmem:[%s187 + $0xf90] sm:$0xff]
        %v741 = vld [vmem:[%s187 + $0xf98] sm:$0xff]
        %v742 = vld [vmem:[%s187 + $0xfa0] sm:$0xff]
        %v743 = vld [vmem:[%s187 + $0xfa8] sm:$0xff]
        %v744 = vld [vmem:[%s187 + $0xfb0] sm:$0xff]
        %v745 = vld [vmem:[%s187 + $0xfb8] sm:$0xff]
        %v746 = vld [vmem:[%s187 + $0xfc0] sm:$0xff]
        %v747 = vld [vmem:[%s187 + $0xfc8] sm:$0xff]
        %v748 = vld [vmem:[%s187 + $0xfd0] sm:$0xff]
        %v749 = vld [vmem:[%s187 + $0xfd8] sm:$0xff]
        %v750 = vld [vmem:[%s187 + $0xfe0] sm:$0xff]
        %v751 = vld [vmem:[%s187 + $0xfe8] sm:$0xff]
        %v752 = vld [vmem:[%s187 + $0xff0] sm:$0xff]
        %v753 = vld [vmem:[%s187 + $0xff8] sm:$0xff]
        %v754 = vld [vmem:[%s187 + $0x1000] sm:$0xff]
        %v755 = vld [vmem:[%s187 + $0x1008] sm:$0xff]
        %v756 = vld [vmem:[%s187 + $0x1010] sm:$0xff]
        %v757 = vld [vmem:[%s187 + $0x1018] sm:$0xff]
        %v758 = vld [vmem:[%s187 + $0x1020] sm:$0xff]
        %v759 = vld [vmem:[%s187 + $0x1028] sm:$0xff]
        %v760 = vld [vmem:[%s187 + $0x1030] sm:$0xff]
        %v761 = vld [vmem:[%s187 + $0x1038] sm:$0xff]
        %v762 = vld [vmem:[%s187 + $0x1040] sm:$0xff]
        %v763 = vld [vmem:[%s187 + $0x1048] sm:$0xff]
        %v764 = vld [vmem:[%s187 + $0x1050] sm:$0xff]
        %v765 = vld [vmem:[%s187 + $0x1058] sm:$0xff]
        %v766 = vld [vmem:[%s187 + $0x1060] sm:$0xff]
        %v767 = vld [vmem:[%s187 + $0x1068] sm:$0xff]
        %v768 = vld [vmem:[%s187 + $0x1070] sm:$0xff]
        %v769 = vld [vmem:[%s187 + $0x1078] sm:$0xff]
        %v770 = vld [vmem:[%s187 + $0x1080] sm:$0xff]
        %v771 = vld [vmem:[%s187 + $0x1088] sm:$0xff]
        %v772 = vld [vmem:[%s187 + $0x1090] sm:$0xff]
        %v773 = vld [vmem:[%s187 + $0x1098] sm:$0xff]
        %v774 = vld [vmem:[%s187 + $0x10a0] sm:$0xff]
        %v775 = vld [vmem:[%s187 + $0x10a8] sm:$0xff]
        %v776 = vld [vmem:[%s187 + $0x10b0] sm:$0xff]
        %v777 = vld [vmem:[%s187 + $0x10b8] sm:$0xff]
        %v778 = vld [vmem:[%s187 + $0x10c0] sm:$0xff]
        %v779 = vld [vmem:[%s187 + $0x10c8] sm:$0xff]
        %v780 = vld [vmem:[%s187 + $0x10d0] sm:$0xff]
        %v781 = vld [vmem:[%s187 + $0x10d8] sm:$0xff]
        %v782 = vld [vmem:[%s187 + $0x10e0] sm:$0xff]
        %v783 = vld [vmem:[%s187 + $0x10e8] sm:$0xff]
        %v784 = vld [vmem:[%s187 + $0x10f0] sm:$0xff]
        %v785 = vld [vmem:[%s187 + $0x10f8] sm:$0xff]
        %v786 = vld [vmem:[%s187 + $0x1100] sm:$0xff]
        %v787 = vld [vmem:[%s187 + $0x1108] sm:$0xff]
        %v788 = vld [vmem:[%s187 + $0x1110] sm:$0xff]
        %v789 = vld [vmem:[%s187 + $0x1118] sm:$0xff]
        %v790 = vld [vmem:[%s187 + $0x1120] sm:$0xff]
        %v791 = vld [vmem:[%s187 + $0x1128] sm:$0xff]
        %v792 = vld [vmem:[%s187 + $0x1130] sm:$0xff]
        %v793 = vld [vmem:[%s187 + $0x1138] sm:$0xff]
        %v794 = vld [vmem:[%s187 + $0x1140] sm:$0xff]
        %v795 = vld [vmem:[%s187 + $0x1148] sm:$0xff]
        %v796 = vld [vmem:[%s187 + $0x1150] sm:$0xff]
        %v797 = vld [vmem:[%s187 + $0x1158] sm:$0xff]
        %v798 = vld [vmem:[%s187 + $0x1160] sm:$0xff]
        %v799 = vld [vmem:[%s187 + $0x1168] sm:$0xff]
        %v800 = vld [vmem:[%s187 + $0x1170] sm:$0xff]
        %v801 = vld [vmem:[%s187 + $0x1178] sm:$0xff]
        %v802 = vld [vmem:[%s187 + $0x1180] sm:$0xff]
        %v803 = vld [vmem:[%s187 + $0x1188] sm:$0xff]
        %v804 = vld [vmem:[%s187 + $0x1190] sm:$0xff]
        %v805 = vld [vmem:[%s187 + $0x1198] sm:$0xff]
        %v806 = vld [vmem:[%s187 + $0x11a0] sm:$0xff]
        %v807 = vld [vmem:[%s187 + $0x11a8] sm:$0xff]
        %v808 = vld [vmem:[%s187 + $0x11b0] sm:$0xff]
        %v809 = vld [vmem:[%s187 + $0x11b8] sm:$0xff]
        %v810 = vld [vmem:[%s187 + $0x11c0] sm:$0xff]
        %v811 = vld [vmem:[%s187 + $0x11c8] sm:$0xff]
        %v812 = vld [vmem:[%s187 + $0x11d0] sm:$0xff]
        %v813 = vld [vmem:[%s187 + $0x11d8] sm:$0xff]
        %v814 = vld [vmem:[%s187 + $0x11e0] sm:$0xff]
        %v815 = vld [vmem:[%s187 + $0x11e8] sm:$0xff]
        %v816 = vld [vmem:[%s187 + $0x11f0] sm:$0xff]
        %v817 = vld [vmem:[%s187 + $0x11f8] sm:$0xff]
        %v818 = vld [vmem:[%s187 + $0x1200] sm:$0xff]
        %v819 = vld [vmem:[%s187 + $0x1208] sm:$0xff]
        %v820 = vld [vmem:[%s187 + $0x1210] sm:$0xff]
        %v821 = vld [vmem:[%s187 + $0x1218] sm:$0xff]
        %v822 = vld [vmem:[%s187 + $0x1220] sm:$0xff]
        %v823 = vld [vmem:[%s187 + $0x1228] sm:$0xff]
        %v824 = vld [vmem:[%s187 + $0x1230] sm:$0xff]
        %v825 = vld [vmem:[%s187 + $0x1238] sm:$0xff]
        %v826 = vld [vmem:[%s187 + $0x1240] sm:$0xff]
        %v827 = vld [vmem:[%s187 + $0x1248] sm:$0xff]
        %v828 = vld [vmem:[%s187 + $0x1250] sm:$0xff]
        %v829 = vld [vmem:[%s187 + $0x1258] sm:$0xff]
        %v830 = vld [vmem:[%s187 + $0x1260] sm:$0xff]
        %v831 = vld [vmem:[%s187 + $0x1268] sm:$0xff]
        %v832 = vld [vmem:[%s187 + $0x1270] sm:$0xff]
        %v833 = vld [vmem:[%s187 + $0x1278] sm:$0xff]
        %v834 = vld [vmem:[%s187 + $0x1280] sm:$0xff]
        %v835 = vld [vmem:[%s187 + $0x1288] sm:$0xff]
        %v836 = vld [vmem:[%s187 + $0x1290] sm:$0xff]
        %v837 = vld [vmem:[%s187 + $0x1298] sm:$0xff]
        %v838 = vld [vmem:[%s187 + $0x12a0] sm:$0xff]
        %v839 = vld [vmem:[%s187 + $0x12a8] sm:$0xff]
        %v840 = vld [vmem:[%s187 + $0x12b0] sm:$0xff]
        %v841 = vld [vmem:[%s187 + $0x12b8] sm:$0xff]
        %v842 = vld [vmem:[%s187 + $0x12c0] sm:$0xff]
        %v843 = vld [vmem:[%s187 + $0x12c8] sm:$0xff]
        %v844 = vld [vmem:[%s187 + $0x12d0] sm:$0xff]
        %v845 = vld [vmem:[%s187 + $0x12d8] sm:$0xff]
        %v846 = vld [vmem:[%s187 + $0x12e0] sm:$0xff]
        %v847 = vld [vmem:[%s187 + $0x12e8] sm:$0xff]
        %v848 = vld [vmem:[%s187 + $0x12f0] sm:$0xff]
        %v849 = vld [vmem:[%s187 + $0x12f8] sm:$0xff]
        %v850 = vld [vmem:[%s187 + $0x1300] sm:$0xff]
        %v851 = vld [vmem:[%s187 + $0x1308] sm:$0xff]
        %v852 = vld [vmem:[%s187 + $0x1310] sm:$0xff]
        %v853 = vld [vmem:[%s187 + $0x1318] sm:$0xff]
        %v854 = vld [vmem:[%s187 + $0x1320] sm:$0xff]
        %v855 = vld [vmem:[%s187 + $0x1328] sm:$0xff]
        %v856 = vld [vmem:[%s187 + $0x1330] sm:$0xff]
        %v857 = vld [vmem:[%s187 + $0x1338] sm:$0xff]
        %v858 = vld [vmem:[%s187 + $0x1340] sm:$0xff]
        %v859 = vld [vmem:[%s187 + $0x1348] sm:$0xff]
        %v860 = vld [vmem:[%s187 + $0x1350] sm:$0xff]
        %v861 = vld [vmem:[%s187 + $0x1358] sm:$0xff]
        %v862 = vld [vmem:[%s187 + $0x1360] sm:$0xff]
        %v863 = vld [vmem:[%s187 + $0x1368] sm:$0xff]
        %v864 = vld [vmem:[%s187 + $0x1370] sm:$0xff]
        %v865 = vld [vmem:[%s187 + $0x1378] sm:$0xff]
        %v866 = vld [vmem:[%s187 + $0x1380] sm:$0xff]
        %v867 = vld [vmem:[%s187 + $0x1388] sm:$0xff]
        %v868 = vld [vmem:[%s187 + $0x1390] sm:$0xff]
        %v869 = vld [vmem:[%s187 + $0x1398] sm:$0xff]
        %v870 = vld [vmem:[%s187 + $0x13a0] sm:$0xff]
        %v871 = vld [vmem:[%s187 + $0x13a8] sm:$0xff]
        %v872 = vld [vmem:[%s187 + $0x13b0] sm:$0xff]
        %v873 = vld [vmem:[%s187 + $0x13b8] sm:$0xff]
        %v874 = vld [vmem:[%s187 + $0x13c0] sm:$0xff]
        %v875 = vld [vmem:[%s187 + $0x13c8] sm:$0xff]
        %v876 = vld [vmem:[%s187 + $0x13d0] sm:$0xff]
        %v877 = vld [vmem:[%s187 + $0x13d8] sm:$0xff]
        %v878 = vld [vmem:[%s187 + $0x13e0] sm:$0xff]
        %v879 = vld [vmem:[%s187 + $0x13e8] sm:$0xff]
        %v880 = vld [vmem:[%s187 + $0x13f0] sm:$0xff]
        %v881 = vld [vmem:[%s187 + $0x13f8] sm:$0xff]
        %v882 = vld [vmem:[%s187 + $0x1400] sm:$0xff]
        %v883 = vld [vmem:[%s187 + $0x1408] sm:$0xff]
        %v884 = vld [vmem:[%s187 + $0x1410] sm:$0xff]
        %v885 = vld [vmem:[%s187 + $0x1418] sm:$0xff]
        %v886 = vld [vmem:[%s187 + $0x1420] sm:$0xff]
        %v887 = vld [vmem:[%s187 + $0x1428] sm:$0xff]
        %v888 = vld [vmem:[%s187 + $0x1430] sm:$0xff]
        %v889 = vld [vmem:[%s187 + $0x1438] sm:$0xff]
        %v890 = vld [vmem:[%s187 + $0x1440] sm:$0xff]
        %v891 = vld [vmem:[%s187 + $0x1448] sm:$0xff]
        %v892 = vld [vmem:[%s187 + $0x1450] sm:$0xff]
        %v893 = vld [vmem:[%s187 + $0x1458] sm:$0xff]
        %v894 = vld [vmem:[%s187 + $0x1460] sm:$0xff]
        %v895 = vld [vmem:[%s187 + $0x1468] sm:$0xff]
        %v896 = vld [vmem:[%s187 + $0x1470] sm:$0xff]
        %v897 = vld [vmem:[%s187 + $0x1478] sm:$0xff]
        %v898 = vld [vmem:[%s187 + $0x1480] sm:$0xff]
        %v899 = vld [vmem:[%s187 + $0x1488] sm:$0xff]
        %v900 = vld [vmem:[%s187 + $0x1490] sm:$0xff]
        %v901 = vld [vmem:[%s187 + $0x1498] sm:$0xff]
        %v902 = vld [vmem:[%s187 + $0x14a0] sm:$0xff]
        %v903 = vld [vmem:[%s187 + $0x14a8] sm:$0xff]
        %v904 = vld [vmem:[%s187 + $0x14b0] sm:$0xff]
        %v905 = vld [vmem:[%s187 + $0x14b8] sm:$0xff]
        %v906 = vld [vmem:[%s187 + $0x14c0] sm:$0xff]
        %v907 = vld [vmem:[%s187 + $0x14c8] sm:$0xff]
        %v908 = vld [vmem:[%s187 + $0x14d0] sm:$0xff]
        %v909 = vld [vmem:[%s187 + $0x14d8] sm:$0xff]
        %v910 = vld [vmem:[%s187 + $0x14e0] sm:$0xff]
        %v911 = vld [vmem:[%s187 + $0x14e8] sm:$0xff]
        %v912 = vld [vmem:[%s187 + $0x14f0] sm:$0xff]
        %v913 = vld [vmem:[%s187 + $0x14f8] sm:$0xff]
        %v914 = vld [vmem:[%s187 + $0x1500] sm:$0xff]
        %v915 = vld [vmem:[%s187 + $0x1508] sm:$0xff]
        %v916 = vld [vmem:[%s187 + $0x1510] sm:$0xff]
        %v917 = vld [vmem:[%s187 + $0x1518] sm:$0xff]
        %v918 = vld [vmem:[%s187 + $0x1520] sm:$0xff]
        %v919 = vld [vmem:[%s187 + $0x1528] sm:$0xff]
        %v920 = vld [vmem:[%s187 + $0x1530] sm:$0xff]
        %v921 = vld [vmem:[%s187 + $0x1538] sm:$0xff]
        %v922 = vld [vmem:[%s187 + $0x1540] sm:$0xff]
        %v923 = vld [vmem:[%s187 + $0x1548] sm:$0xff]
        %v924 = vld [vmem:[%s187 + $0x1550] sm:$0xff]
        %v925 = vld [vmem:[%s187 + $0x1558] sm:$0xff]
        %v926 = vld [vmem:[%s187 + $0x1560] sm:$0xff]
        %v927 = vld [vmem:[%s187 + $0x1568] sm:$0xff]
        %v928 = vld [vmem:[%s187 + $0x1570] sm:$0xff]
        %v929 = vld [vmem:[%s187 + $0x1578] sm:$0xff]
        %v930 = vld [vmem:[%s187 + $0x1580] sm:$0xff]
        %v931 = vld [vmem:[%s187 + $0x1588] sm:$0xff]
        %v932 = vld [vmem:[%s187 + $0x1590] sm:$0xff]
        %v933 = vld [vmem:[%s187 + $0x1598] sm:$0xff]
        %v934 = vld [vmem:[%s187 + $0x15a0] sm:$0xff]
        %v935 = vld [vmem:[%s187 + $0x15a8] sm:$0xff]
        %v936 = vld [vmem:[%s187 + $0x15b0] sm:$0xff]
        %v937 = vld [vmem:[%s187 + $0x15b8] sm:$0xff]
        %v938 = vld [vmem:[%s187 + $0x15c0] sm:$0xff]
        %v939 = vld [vmem:[%s187 + $0x15c8] sm:$0xff]
        %v940 = vld [vmem:[%s187 + $0x15d0] sm:$0xff]
        %v941 = vld [vmem:[%s187 + $0x15d8] sm:$0xff]
        %v942 = vld [vmem:[%s187 + $0x15e0] sm:$0xff]
        %v943 = vld [vmem:[%s187 + $0x15e8] sm:$0xff]
        %v944 = vld [vmem:[%s187 + $0x15f0] sm:$0xff]
        %v945 = vld [vmem:[%s187 + $0x15f8] sm:$0xff]
        %v946 = vld [vmem:[%s187 + $0x1600] sm:$0xff]
        %v947 = vld [vmem:[%s187 + $0x1608] sm:$0xff]
        %v948 = vld [vmem:[%s187 + $0x1610] sm:$0xff]
        %v949 = vld [vmem:[%s187 + $0x1618] sm:$0xff]
        %v950 = vld [vmem:[%s187 + $0x1620] sm:$0xff]
        %v951 = vld [vmem:[%s187 + $0x1628] sm:$0xff]
        %v952 = vld [vmem:[%s187 + $0x1630] sm:$0xff]
        %v953 = vld [vmem:[%s187 + $0x1638] sm:$0xff]
        %v954 = vld [vmem:[%s187 + $0x1640] sm:$0xff]
        %v955 = vld [vmem:[%s187 + $0x1648] sm:$0xff]
        %v956 = vld [vmem:[%s187 + $0x1650] sm:$0xff]
        %v957 = vld [vmem:[%s187 + $0x1658] sm:$0xff]
        %v958 = vld [vmem:[%s187 + $0x1660] sm:$0xff]
        %v959 = vld [vmem:[%s187 + $0x1668] sm:$0xff]
        %v960 = vld [vmem:[%s187 + $0x1670] sm:$0xff]
        %v961 = vld [vmem:[%s187 + $0x1678] sm:$0xff]
        %v962 = vld [vmem:[%s187 + $0x1680] sm:$0xff]
        %v963 = vld [vmem:[%s187 + $0x1688] sm:$0xff]
        %v964 = vld [vmem:[%s187 + $0x1690] sm:$0xff]
        %v965 = vld [vmem:[%s187 + $0x1698] sm:$0xff]
        %v966 = vld [vmem:[%s187 + $0x16a0] sm:$0xff]
        %v967 = vld [vmem:[%s187 + $0x16a8] sm:$0xff]
        %v968 = vld [vmem:[%s187 + $0x16b0] sm:$0xff]
        %v969 = vld [vmem:[%s187 + $0x16b8] sm:$0xff]
        %v970 = vld [vmem:[%s187 + $0x16c0] sm:$0xff]
        %v971 = vld [vmem:[%s187 + $0x16c8] sm:$0xff]
        %v972 = vld [vmem:[%s187 + $0x16d0] sm:$0xff]
        %v973 = vld [vmem:[%s187 + $0x16d8] sm:$0xff]
        %v974 = vld [vmem:[%s187 + $0x16e0] sm:$0xff]
        %v975 = vld [vmem:[%s187 + $0x16e8] sm:$0xff]
        %v976 = vld [vmem:[%s187 + $0x16f0] sm:$0xff]
        %v977 = vld [vmem:[%s187 + $0x16f8] sm:$0xff]
        %v978 = vld [vmem:[%s187 + $0x1700] sm:$0xff]
        %v979 = vld [vmem:[%s187 + $0x1708] sm:$0xff]
        %v980 = vld [vmem:[%s187 + $0x1710] sm:$0xff]
        %v981 = vld [vmem:[%s187 + $0x1718] sm:$0xff]
        %v982 = vld [vmem:[%s187 + $0x1720] sm:$0xff]
        %v983 = vld [vmem:[%s187 + $0x1728] sm:$0xff]
        %v984 = vld [vmem:[%s187 + $0x1730] sm:$0xff]
        %v985 = vld [vmem:[%s187 + $0x1738] sm:$0xff]
        %v986 = vld [vmem:[%s187 + $0x1740] sm:$0xff]
        %v987 = vld [vmem:[%s187 + $0x1748] sm:$0xff]
        %v988 = vld [vmem:[%s187 + $0x1750] sm:$0xff]
        %v989 = vld [vmem:[%s187 + $0x1758] sm:$0xff]
        %v990 = vld [vmem:[%s187 + $0x1760] sm:$0xff]
        %v991 = vld [vmem:[%s187 + $0x1768] sm:$0xff]
        %v992 = vld [vmem:[%s187 + $0x1770] sm:$0xff]
        %v993 = vld [vmem:[%s187 + $0x1778] sm:$0xff]
        %v994 = vld [vmem:[%s187 + $0x1780] sm:$0xff]
        %v995 = vld [vmem:[%s187 + $0x1788] sm:$0xff]
        %v996 = vld [vmem:[%s187 + $0x1790] sm:$0xff]
        %v997 = vld [vmem:[%s187 + $0x1798] sm:$0xff]
        %v998 = vld [vmem:[%s187 + $0x17a0] sm:$0xff]
        %v999 = vld [vmem:[%s187 + $0x17a8] sm:$0xff]
        %v1000 = vld [vmem:[%s187 + $0x17b0] sm:$0xff]
        %v1001 = vld [vmem:[%s187 + $0x17b8] sm:$0xff]
        %v1002 = vld [vmem:[%s187 + $0x17c0] sm:$0xff]
        %v1003 = vld [vmem:[%s187 + $0x17c8] sm:$0xff]
        %v1004 = vld [vmem:[%s187 + $0x17d0] sm:$0xff]
        %v1005 = vld [vmem:[%s187 + $0x17d8] sm:$0xff]
        %v1006 = vld [vmem:[%s187 + $0x17e0] sm:$0xff]
        %v1007 = vld [vmem:[%s187 + $0x17e8] sm:$0xff]
        %v1008 = vld [vmem:[%s187 + $0x17f0] sm:$0xff]
        %v1009 = vld [vmem:[%s187 + $0x17f8] sm:$0xff]
        %v1010 = vld [vmem:[%s187 + $0x1800] sm:$0xff]
        %v1011 = vld [vmem:[%s187 + $0x1808] sm:$0xff]
        %v1012 = vld [vmem:[%s187 + $0x1810] sm:$0xff]
        %v1013 = vld [vmem:[%s187 + $0x1818] sm:$0xff]
        %v1014 = vld [vmem:[%s187 + $0x1820] sm:$0xff]
        %v1015 = vld [vmem:[%s187 + $0x1828] sm:$0xff]
        %v1016 = vld [vmem:[%s187 + $0x1830] sm:$0xff]
        %v1017 = vld [vmem:[%s187 + $0x1838] sm:$0xff]
        %v1018 = vld [vmem:[%s187 + $0x1840] sm:$0xff]
        %v1019 = vld [vmem:[%s187 + $0x1848] sm:$0xff]
        %v1020 = vld [vmem:[%s187 + $0x1850] sm:$0xff]
        %v1021 = vld [vmem:[%s187 + $0x1858] sm:$0xff]
        %v1022 = vld [vmem:[%s187 + $0x1860] sm:$0xff]
        %v1023 = vld [vmem:[%s187 + $0x1868] sm:$0xff]
        %v1024 = vld [vmem:[%s187 + $0x1870] sm:$0xff]
        %v1025 = vld [vmem:[%s187 + $0x1878] sm:$0xff]
        %v1026 = vld [vmem:[%s187 + $0x1880] sm:$0xff]
        %v1027 = vld [vmem:[%s187 + $0x1888] sm:$0xff]
        %v1028 = vld [vmem:[%s187 + $0x1890] sm:$0xff]
        %v1029 = vld [vmem:[%s187 + $0x1898] sm:$0xff]
        %v1030 = vld [vmem:[%s187 + $0x18a0] sm:$0xff]
        %v1031 = vld [vmem:[%s187 + $0x18a8] sm:$0xff]
        %v1032 = vld [vmem:[%s187 + $0x18b0] sm:$0xff]
        %v1033 = vld [vmem:[%s187 + $0x18b8] sm:$0xff]
        %v1034 = vld [vmem:[%s187 + $0x18c0] sm:$0xff]
        %v1035 = vld [vmem:[%s187 + $0x18c8] sm:$0xff]
        %v1036 = vld [vmem:[%s187 + $0x18d0] sm:$0xff]
        %v1037 = vld [vmem:[%s187 + $0x18d8] sm:$0xff]
        %v1038 = vld [vmem:[%s187 + $0x18e0] sm:$0xff]
        %v1039 = vld [vmem:[%s187 + $0x18e8] sm:$0xff]
        %v1040 = vld [vmem:[%s187 + $0x18f0] sm:$0xff]
        %v1041 = vld [vmem:[%s187 + $0x18f8] sm:$0xff]
        %v1042 = vld [vmem:[%s187 + $0x1900] sm:$0xff]
        %v1043 = vld [vmem:[%s187 + $0x1908] sm:$0xff]
        %v1044 = vld [vmem:[%s187 + $0x1910] sm:$0xff]
        %v1045 = vld [vmem:[%s187 + $0x1918] sm:$0xff]
        %v1046 = vld [vmem:[%s187 + $0x1920] sm:$0xff]
        %v1047 = vld [vmem:[%s187 + $0x1928] sm:$0xff]
        %v1048 = vld [vmem:[%s187 + $0x1930] sm:$0xff]
        %v1049 = vld [vmem:[%s187 + $0x1938] sm:$0xff]
        %v1050 = vld [vmem:[%s187 + $0x1940] sm:$0xff]
        %v1051 = vld [vmem:[%s187 + $0x1948] sm:$0xff]
        %v1052 = vld [vmem:[%s187 + $0x1950] sm:$0xff]
        %v1053 = vld [vmem:[%s187 + $0x1958] sm:$0xff]
        %v1054 = vld [vmem:[%s187 + $0x1960] sm:$0xff]
        %v1055 = vld [vmem:[%s187 + $0x1968] sm:$0xff]
        %v1056 = vld [vmem:[%s187 + $0x1970] sm:$0xff]
        %v1057 = vld [vmem:[%s187 + $0x1978] sm:$0xff]
        %v1058 = vld [vmem:[%s187 + $0x1980] sm:$0xff]
        %v1059 = vld [vmem:[%s187 + $0x1988] sm:$0xff]
        %v1060 = vld [vmem:[%s187 + $0x1990] sm:$0xff]
        %v1061 = vld [vmem:[%s187 + $0x1998] sm:$0xff]
        %v1062 = vld [vmem:[%s187 + $0x19a0] sm:$0xff]
        %v1063 = vld [vmem:[%s187 + $0x19a8] sm:$0xff]
        %v1064 = vld [vmem:[%s187 + $0x19b0] sm:$0xff]
        %v1065 = vld [vmem:[%s187 + $0x19b8] sm:$0xff]
        %v1066 = vld [vmem:[%s187 + $0x19c0] sm:$0xff]
        %v1067 = vld [vmem:[%s187 + $0x19c8] sm:$0xff]
        %v1068 = vld [vmem:[%s187 + $0x19d0] sm:$0xff]
        %v1069 = vld [vmem:[%s187 + $0x19d8] sm:$0xff]
        %v1070 = vld [vmem:[%s187 + $0x19e0] sm:$0xff]
        %v1071 = vld [vmem:[%s187 + $0x19e8] sm:$0xff]
        %v1072 = vld [vmem:[%s187 + $0x19f0] sm:$0xff]
        %v1073 = vld [vmem:[%s187 + $0x19f8] sm:$0xff]
        %v1074 = vld [vmem:[%s187 + $0x1a00] sm:$0xff]
        %v1075 = vld [vmem:[%s187 + $0x1a08] sm:$0xff]
        %v1076 = vld [vmem:[%s187 + $0x1a10] sm:$0xff]
        %v1077 = vld [vmem:[%s187 + $0x1a18] sm:$0xff]
        %v1078 = vld [vmem:[%s187 + $0x1a20] sm:$0xff]
        %v1079 = vld [vmem:[%s187 + $0x1a28] sm:$0xff]
        %v1080 = vld [vmem:[%s187 + $0x1a30] sm:$0xff]
        %v1081 = vld [vmem:[%s187 + $0x1a38] sm:$0xff]
        %v1082 = vld [vmem:[%s187 + $0x1a40] sm:$0xff]
        %v1083 = vld [vmem:[%s187 + $0x1a48] sm:$0xff]
        %v1084 = vld [vmem:[%s187 + $0x1a50] sm:$0xff]
        %v1085 = vld [vmem:[%s187 + $0x1a58] sm:$0xff]
        %v1086 = vld [vmem:[%s187 + $0x1a60] sm:$0xff]
        %v1087 = vld [vmem:[%s187 + $0x1a68] sm:$0xff]
        %v1088 = vld [vmem:[%s187 + $0x1a70] sm:$0xff]
        %v1089 = vld [vmem:[%s187 + $0x1a78] sm:$0xff]
        %v1090 = vld [vmem:[%s187 + $0x1a80] sm:$0xff]
        %v1091 = vld [vmem:[%s187 + $0x1a88] sm:$0xff]
        %v1092 = vld [vmem:[%s187 + $0x1a90] sm:$0xff]
        %v1093 = vld [vmem:[%s187 + $0x1a98] sm:$0xff]
        %v1094 = vld [vmem:[%s187 + $0x1aa0] sm:$0xff]
        %v1095 = vld [vmem:[%s187 + $0x1aa8] sm:$0xff]
        %v1096 = vld [vmem:[%s187 + $0x1ab0] sm:$0xff]
        %v1097 = vld [vmem:[%s187 + $0x1ab8] sm:$0xff]
        %v1098 = vld [vmem:[%s187 + $0x1ac0] sm:$0xff]
        %v1099 = vld [vmem:[%s187 + $0x1ac8] sm:$0xff]
        %v1100 = vld [vmem:[%s187 + $0x1ad0] sm:$0xff]
        %v1101 = vld [vmem:[%s187 + $0x1ad8] sm:$0xff]
        %v1102 = vld [vmem:[%s187 + $0x1ae0] sm:$0xff]
        %v1103 = vld [vmem:[%s187 + $0x1ae8] sm:$0xff]
        %v1104 = vld [vmem:[%s187 + $0x1af0] sm:$0xff]
        %v1105 = vld [vmem:[%s187 + $0x1af8] sm:$0xff]
        %v1106 = vld [vmem:[%s187 + $0x1b00] sm:$0xff]
        %v1107 = vld [vmem:[%s187 + $0x1b08] sm:$0xff]
        %v1108 = vld [vmem:[%s187 + $0x1b10] sm:$0xff]
        %v1109 = vld [vmem:[%s187 + $0x1b18] sm:$0xff]
        %v1110 = vld [vmem:[%s187 + $0x1b20] sm:$0xff]
        %v1111 = vld [vmem:[%s187 + $0x1b28] sm:$0xff]
        %v1112 = vld [vmem:[%s187 + $0x1b30] sm:$0xff]
        %v1113 = vld [vmem:[%s187 + $0x1b38] sm:$0xff]
        %v1114 = vld [vmem:[%s187 + $0x1b40] sm:$0xff]
        %v1115 = vld [vmem:[%s187 + $0x1b48] sm:$0xff]
        %v1116 = vld [vmem:[%s187 + $0x1b50] sm:$0xff]
        %v1117 = vld [vmem:[%s187 + $0x1b58] sm:$0xff]
        %v1118 = vld [vmem:[%s187 + $0x1b60] sm:$0xff]
        %v1119 = vld [vmem:[%s187 + $0x1b68] sm:$0xff]
        %v1120 = vld [vmem:[%s187 + $0x1b70] sm:$0xff]
        %v1121 = vld [vmem:[%s187 + $0x1b78] sm:$0xff]
        %v1122 = vld [vmem:[%s187 + $0x1b80] sm:$0xff]
        %v1123 = vld [vmem:[%s187 + $0x1b88] sm:$0xff]
        %v1124 = vld [vmem:[%s187 + $0x1b90] sm:$0xff]
        %v1125 = vld [vmem:[%s187 + $0x1b98] sm:$0xff]
        %v1126 = vld [vmem:[%s187 + $0x1ba0] sm:$0xff]
        %v1127 = vld [vmem:[%s187 + $0x1ba8] sm:$0xff]
        %v1128 = vld [vmem:[%s187 + $0x1bb0] sm:$0xff]
        %v1129 = vld [vmem:[%s187 + $0x1bb8] sm:$0xff]
        %v1130 = vld [vmem:[%s187 + $0x1bc0] sm:$0xff]
        %v1131 = vld [vmem:[%s187 + $0x1bc8] sm:$0xff]
        %v1132 = vld [vmem:[%s187 + $0x1bd0] sm:$0xff]
        %v1133 = vld [vmem:[%s187 + $0x1bd8] sm:$0xff]
        %v1134 = vld [vmem:[%s187 + $0x1be0] sm:$0xff]
        %v1135 = vld [vmem:[%s187 + $0x1be8] sm:$0xff]
        %v1136 = vld [vmem:[%s187 + $0x1bf0] sm:$0xff]
        %v1137 = vld [vmem:[%s187 + $0x1bf8] sm:$0xff]
        %v1138 = vld [vmem:[%s187 + $0x1c00] sm:$0xff]
        %v1139 = vld [vmem:[%s187 + $0x1c08] sm:$0xff]
        %v1140 = vld [vmem:[%s187 + $0x1c10] sm:$0xff]
        %v1141 = vld [vmem:[%s187 + $0x1c18] sm:$0xff]
        %v1142 = vld [vmem:[%s187 + $0x1c20] sm:$0xff]
        %v1143 = vld [vmem:[%s187 + $0x1c28] sm:$0xff]
        %v1144 = vld [vmem:[%s187 + $0x1c30] sm:$0xff]
        %v1145 = vld [vmem:[%s187 + $0x1c38] sm:$0xff]
        %v1146 = vld [vmem:[%s187 + $0x1c40] sm:$0xff]
        %v1147 = vld [vmem:[%s187 + $0x1c48] sm:$0xff]
        %v1148 = vld [vmem:[%s187 + $0x1c50] sm:$0xff]
        %v1149 = vld [vmem:[%s187 + $0x1c58] sm:$0xff]
        %v1150 = vld [vmem:[%s187 + $0x1c60] sm:$0xff]
        %v1151 = vld [vmem:[%s187 + $0x1c68] sm:$0xff]
        %v1152 = vld [vmem:[%s187 + $0x1c70] sm:$0xff]
        %v1153 = vld [vmem:[%s187 + $0x1c78] sm:$0xff]
        %v1154 = vld [vmem:[%s187 + $0x1c80] sm:$0xff]
        %v1155 = vld [vmem:[%s187 + $0x1c88] sm:$0xff]
        %v1156 = vld [vmem:[%s187 + $0x1c90] sm:$0xff]
        %v1157 = vld [vmem:[%s187 + $0x1c98] sm:$0xff]
        %v1158 = vld [vmem:[%s187 + $0x1ca0] sm:$0xff]
        %v1159 = vld [vmem:[%s187 + $0x1ca8] sm:$0xff]
        %v1160 = vld [vmem:[%s187 + $0x1cb0] sm:$0xff]
        %v1161 = vld [vmem:[%s187 + $0x1cb8] sm:$0xff]
        %v1162 = vld [vmem:[%s187 + $0x1cc0] sm:$0xff]
        %v1163 = vld [vmem:[%s187 + $0x1cc8] sm:$0xff]
        %v1164 = vld [vmem:[%s187 + $0x1cd0] sm:$0xff]
        %v1165 = vld [vmem:[%s187 + $0x1cd8] sm:$0xff]
        %v1166 = vld [vmem:[%s187 + $0x1ce0] sm:$0xff]
        %v1167 = vld [vmem:[%s187 + $0x1ce8] sm:$0xff]
        %v1168 = vld [vmem:[%s187 + $0x1cf0] sm:$0xff]
        %v1169 = vld [vmem:[%s187 + $0x1cf8] sm:$0xff]
        %v1170 = vld [vmem:[%s187 + $0x1d00] sm:$0xff]
        %v1171 = vld [vmem:[%s187 + $0x1d08] sm:$0xff]
        %v1172 = vld [vmem:[%s187 + $0x1d10] sm:$0xff]
        %v1173 = vld [vmem:[%s187 + $0x1d18] sm:$0xff]
        %v1174 = vld [vmem:[%s187 + $0x1d20] sm:$0xff]
        %v1175 = vld [vmem:[%s187 + $0x1d28] sm:$0xff]
        %v1176 = vld [vmem:[%s187 + $0x1d30] sm:$0xff]
        %v1177 = vld [vmem:[%s187 + $0x1d38] sm:$0xff]
        %v1178 = vld [vmem:[%s187 + $0x1d40] sm:$0xff]
        %v1179 = vld [vmem:[%s187 + $0x1d48] sm:$0xff]
        %v1180 = vld [vmem:[%s187 + $0x1d50] sm:$0xff]
        %v1181 = vld [vmem:[%s187 + $0x1d58] sm:$0xff]
        %v1182 = vld [vmem:[%s187 + $0x1d60] sm:$0xff]
        %v1183 = vld [vmem:[%s187 + $0x1d68] sm:$0xff]
        %v1184 = vld [vmem:[%s187 + $0x1d70] sm:$0xff]
        %v1185 = vld [vmem:[%s187 + $0x1d78] sm:$0xff]
        %v1186 = vld [vmem:[%s187 + $0x1d80] sm:$0xff]
        %v1187 = vld [vmem:[%s187 + $0x1d88] sm:$0xff]
        %v1188 = vld [vmem:[%s187 + $0x1d90] sm:$0xff]
        %v1189 = vld [vmem:[%s187 + $0x1d98] sm:$0xff]
        %v1190 = vld [vmem:[%s187 + $0x1da0] sm:$0xff]
        %v1191 = vld [vmem:[%s187 + $0x1da8] sm:$0xff]
        %v1192 = vld [vmem:[%s187 + $0x1db0] sm:$0xff]
        %v1193 = vld [vmem:[%s187 + $0x1db8] sm:$0xff]
        %v1194 = vld [vmem:[%s187 + $0x1dc0] sm:$0xff]
        %v1195 = vld [vmem:[%s187 + $0x1dc8] sm:$0xff]
        %v1196 = vld [vmem:[%s187 + $0x1dd0] sm:$0xff]
        %v1197 = vld [vmem:[%s187 + $0x1dd8] sm:$0xff]
        %v1198 = vld [vmem:[%s187 + $0x1de0] sm:$0xff]
        %v1199 = vld [vmem:[%s187 + $0x1de8] sm:$0xff]
        %v1200 = vld [vmem:[%s187 + $0x1df0] sm:$0xff]
        %v1201 = vld [vmem:[%s187 + $0x1df8] sm:$0xff]
        %v1202 = vld [vmem:[%s187 + $0x1e00] sm:$0xff]
        %v1203 = vld [vmem:[%s187 + $0x1e08] sm:$0xff]
        %v1204 = vld [vmem:[%s187 + $0x1e10] sm:$0xff]
        %v1205 = vld [vmem:[%s187 + $0x1e18] sm:$0xff]
        %v1206 = vld [vmem:[%s187 + $0x1e20] sm:$0xff]
        %v1207 = vld [vmem:[%s187 + $0x1e28] sm:$0xff]
        %v1208 = vld [vmem:[%s187 + $0x1e30] sm:$0xff]
        %v1209 = vld [vmem:[%s187 + $0x1e38] sm:$0xff]
        %v1210 = vld [vmem:[%s187 + $0x1e40] sm:$0xff]
        %v1211 = vld [vmem:[%s187 + $0x1e48] sm:$0xff]
        %v1212 = vld [vmem:[%s187 + $0x1e50] sm:$0xff]
        %v1213 = vld [vmem:[%s187 + $0x1e58] sm:$0xff]
        %v1214 = vld [vmem:[%s187 + $0x1e60] sm:$0xff]
        %v1215 = vld [vmem:[%s187 + $0x1e68] sm:$0xff]
        %v1216 = vld [vmem:[%s187 + $0x1e70] sm:$0xff]
        %v1217 = vld [vmem:[%s187 + $0x1e78] sm:$0xff]
        %v1218 = vld [vmem:[%s187 + $0x1e80] sm:$0xff]
        %v1219 = vld [vmem:[%s187 + $0x1e88] sm:$0xff]
        %v1220 = vld [vmem:[%s187 + $0x1e90] sm:$0xff]
        %v1221 = vld [vmem:[%s187 + $0x1e98] sm:$0xff]
        %v1222 = vld [vmem:[%s187 + $0x1ea0] sm:$0xff]
        %v1223 = vld [vmem:[%s187 + $0x1ea8] sm:$0xff]
        %v1224 = vld [vmem:[%s187 + $0x1eb0] sm:$0xff]
        %v1225 = vld [vmem:[%s187 + $0x1eb8] sm:$0xff]
        %v1226 = vld [vmem:[%s187 + $0x1ec0] sm:$0xff]
        %v1227 = vld [vmem:[%s187 + $0x1ec8] sm:$0xff]
        %v1228 = vld [vmem:[%s187 + $0x1ed0] sm:$0xff]
        %v1229 = vld [vmem:[%s187 + $0x1ed8] sm:$0xff]
        %v1230 = vld [vmem:[%s187 + $0x1ee0] sm:$0xff]
        %v1231 = vld [vmem:[%s187 + $0x1ee8] sm:$0xff]
        %v1232 = vld [vmem:[%s187 + $0x1ef0] sm:$0xff]
        %v1233 = vld [vmem:[%s187 + $0x1ef8] sm:$0xff]
        %v1234 = vld [vmem:[%s187 + $0x1f00] sm:$0xff]
        %v1235 = vld [vmem:[%s187 + $0x1f08] sm:$0xff]
        %v1236 = vld [vmem:[%s187 + $0x1f10] sm:$0xff]
        %v1237 = vld [vmem:[%s187 + $0x1f18] sm:$0xff]
        %v1238 = vld [vmem:[%s187 + $0x1f20] sm:$0xff]
        %v1239 = vld [vmem:[%s187 + $0x1f28] sm:$0xff]
        %v1240 = vld [vmem:[%s187 + $0x1f30] sm:$0xff]
        %v1241 = vld [vmem:[%s187 + $0x1f38] sm:$0xff]
        %v1242 = vld [vmem:[%s187 + $0x1f40] sm:$0xff]
        %v1243 = vld [vmem:[%s187 + $0x1f48] sm:$0xff]
        %v1244 = vld [vmem:[%s187 + $0x1f50] sm:$0xff]
        %v1245 = vld [vmem:[%s187 + $0x1f58] sm:$0xff]
        %v1246 = vld [vmem:[%s187 + $0x1f60] sm:$0xff]
        %v1247 = vld [vmem:[%s187 + $0x1f68] sm:$0xff]
        %v1248 = vld [vmem:[%s187 + $0x1f70] sm:$0xff]
        %v1249 = vld [vmem:[%s187 + $0x1f78] sm:$0xff]
        %v1250 = vld [vmem:[%s187 + $0x1f80] sm:$0xff]
        %v1251 = vld [vmem:[%s187 + $0x1f88] sm:$0xff]
        %v1252 = vld [vmem:[%s187 + $0x1f90] sm:$0xff]
        %v1253 = vld [vmem:[%s187 + $0x1f98] sm:$0xff]
        %v1254 = vld [vmem:[%s187 + $0x1fa0] sm:$0xff]
        %v1255 = vld [vmem:[%s187 + $0x1fa8] sm:$0xff]
        %v1256 = vld [vmem:[%s187 + $0x1fb0] sm:$0xff]
        %v1257 = vld [vmem:[%s187 + $0x1fb8] sm:$0xff]
        %v1258 = vld [vmem:[%s187 + $0x1fc0] sm:$0xff]
        %v1259 = vld [vmem:[%s187 + $0x1fc8] sm:$0xff]
        %v1260 = vld [vmem:[%s187 + $0x1fd0] sm:$0xff]
        %v1261 = vld [vmem:[%s187 + $0x1fd8] sm:$0xff]
        %v1262 = vld [vmem:[%s187 + $0x1fe0] sm:$0xff]
        %v1263 = vld [vmem:[%s187 + $0x1fe8] sm:$0xff]
        %v1264 = vld [vmem:[%s187 + $0x1ff0] sm:$0xff]
        %v1265 = vld [vmem:[%s187 + $0x1ff8] sm:$0xff]
        %v1266 = vld [vmem:[%s187 + $0x2000] sm:$0xff]
        %v1267 = vld [vmem:[%s187 + $0x2008] sm:$0xff]
        %v1268 = vld [vmem:[%s187 + $0x2010] sm:$0xff]
        %v1269 = vld [vmem:[%s187 + $0x2018] sm:$0xff]
        %v1270 = vld [vmem:[%s187 + $0x2020] sm:$0xff]
        %v1271 = vld [vmem:[%s187 + $0x2028] sm:$0xff]
        %v1272 = vld [vmem:[%s187 + $0x2030] sm:$0xff]
        %v1273 = vld [vmem:[%s187 + $0x2038] sm:$0xff]
        %v1274 = vld [vmem:[%s187 + $0x2040] sm:$0xff]
        %v1275 = vld [vmem:[%s187 + $0x2048] sm:$0xff]
        %v1276 = vld [vmem:[%s187 + $0x2050] sm:$0xff]
        %v1277 = vld [vmem:[%s187 + $0x2058] sm:$0xff]
        %v1278 = vld [vmem:[%s187 + $0x2060] sm:$0xff]
        %v1279 = vld [vmem:[%s187 + $0x2068] sm:$0xff]
        %v1280 = vld [vmem:[%s187 + $0x2070] sm:$0xff]
        %v1281 = vld [vmem:[%s187 + $0x2078] sm:$0xff]
        %v1282 = vld [vmem:[%s187 + $0x2080] sm:$0xff]
        %v1283 = vld [vmem:[%s187 + $0x2088] sm:$0xff]
        %v1284 = vld [vmem:[%s187 + $0x2090] sm:$0xff]
        %v1285 = vld [vmem:[%s187 + $0x2098] sm:$0xff]
        %v1286 = vld [vmem:[%s187 + $0x20a0] sm:$0xff]
        %v1287 = vld [vmem:[%s187 + $0x20a8] sm:$0xff]
        %v1288 = vld [vmem:[%s187 + $0x20b0] sm:$0xff]
        %v1289 = vld [vmem:[%s187 + $0x20b8] sm:$0xff]
        %v1290 = vld [vmem:[%s187 + $0x20c0] sm:$0xff]
        %v1291 = vld [vmem:[%s187 + $0x20c8] sm:$0xff]
        %v1292 = vld [vmem:[%s187 + $0x20d0] sm:$0xff]
        %v1293 = vld [vmem:[%s187 + $0x20d8] sm:$0xff]
        %v1294 = vld [vmem:[%s187 + $0x20e0] sm:$0xff]
        %v1295 = vld [vmem:[%s187 + $0x20e8] sm:$0xff]
        %v1296 = vld [vmem:[%s187 + $0x20f0] sm:$0xff]
        %v1297 = vld [vmem:[%s187 + $0x20f8] sm:$0xff]
        %v1298 = vld [vmem:[%s187 + $0x2100] sm:$0xff]
        %v1299 = vld [vmem:[%s187 + $0x2108] sm:$0xff]
        %v1300 = vld [vmem:[%s187 + $0x2110] sm:$0xff]
        %v1301 = vld [vmem:[%s187 + $0x2118] sm:$0xff]
        %v1302 = vld [vmem:[%s187 + $0x2120] sm:$0xff]
        %v1303 = vld [vmem:[%s187 + $0x2128] sm:$0xff]
        %v1304 = vld [vmem:[%s187 + $0x2130] sm:$0xff]
        %v1305 = vld [vmem:[%s187 + $0x2138] sm:$0xff]
        %v1306 = vld [vmem:[%s187 + $0x2140] sm:$0xff]
        %v1307 = vld [vmem:[%s187 + $0x2148] sm:$0xff]
        %v1308 = vld [vmem:[%s187 + $0x2150] sm:$0xff]
        %v1309 = vld [vmem:[%s187 + $0x2158] sm:$0xff]
        %v1310 = vld [vmem:[%s187 + $0x2160] sm:$0xff]
        %v1311 = vld [vmem:[%s187 + $0x2168] sm:$0xff]
        %v1312 = vld [vmem:[%s187 + $0x2170] sm:$0xff]
        %v1313 = vld [vmem:[%s187 + $0x2178] sm:$0xff]
        %v1314 = vld [vmem:[%s187 + $0x2180] sm:$0xff]
        %v1315 = vld [vmem:[%s187 + $0x2188] sm:$0xff]
        %v1316 = vld [vmem:[%s187 + $0x2190] sm:$0xff]
        %v1317 = vld [vmem:[%s187 + $0x2198] sm:$0xff]
        %v1318 = vld [vmem:[%s187 + $0x21a0] sm:$0xff]
        %v1319 = vld [vmem:[%s187 + $0x21a8] sm:$0xff]
        %v1320 = vld [vmem:[%s187 + $0x21b0] sm:$0xff]
        %v1321 = vld [vmem:[%s187 + $0x21b8] sm:$0xff]
        %v1322 = vld [vmem:[%s187 + $0x21c0] sm:$0xff]
        %v1323 = vld [vmem:[%s187 + $0x21c8] sm:$0xff]
        %v1324 = vld [vmem:[%s187 + $0x21d0] sm:$0xff]
        %v1325 = vld [vmem:[%s187 + $0x21d8] sm:$0xff]
        %v1326 = vld [vmem:[%s187 + $0x21e0] sm:$0xff]
        %v1327 = vld [vmem:[%s187 + $0x21e8] sm:$0xff]
        %v1328 = vld [vmem:[%s187 + $0x21f0] sm:$0xff]
        %v1329 = vld [vmem:[%s187 + $0x21f8] sm:$0xff]
        %v1330 = vld [vmem:[%s187 + $0x2200] sm:$0xff]
        %v1331 = vld [vmem:[%s187 + $0x2208] sm:$0xff]
        %v1332 = vld [vmem:[%s187 + $0x2210] sm:$0xff]
        %v1333 = vld [vmem:[%s187 + $0x2218] sm:$0xff]
        %v1334 = vld [vmem:[%s187 + $0x2220] sm:$0xff]
        %v1335 = vld [vmem:[%s187 + $0x2228] sm:$0xff]
        %v1336 = vld [vmem:[%s187 + $0x2230] sm:$0xff]
        %v1337 = vld [vmem:[%s187 + $0x2238] sm:$0xff]
        %v1338 = vld [vmem:[%s187 + $0x2240] sm:$0xff]
        %v1339 = vld [vmem:[%s187 + $0x2248] sm:$0xff]
        %v1340 = vld [vmem:[%s187 + $0x2250] sm:$0xff]
        %v1341 = vld [vmem:[%s187 + $0x2258] sm:$0xff]
        %v1342 = vld [vmem:[%s187 + $0x2260] sm:$0xff]
        %v1343 = vld [vmem:[%s187 + $0x2268] sm:$0xff]
        %v1344 = vld [vmem:[%s187 + $0x2270] sm:$0xff]
        %v1345 = vld [vmem:[%s187 + $0x2278] sm:$0xff]
        %v1346 = vld [vmem:[%s187 + $0x2280] sm:$0xff]
        %v1347 = vld [vmem:[%s187 + $0x2288] sm:$0xff]
        %v1348 = vld [vmem:[%s187 + $0x2290] sm:$0xff]
        %v1349 = vld [vmem:[%s187 + $0x2298] sm:$0xff]
        %v1350 = vld [vmem:[%s187 + $0x22a0] sm:$0xff]
        %v1351 = vld [vmem:[%s187 + $0x22a8] sm:$0xff]
        %v1352 = vld [vmem:[%s187 + $0x22b0] sm:$0xff]
        %v1353 = vld [vmem:[%s187 + $0x22b8] sm:$0xff]
        %v1354 = vld [vmem:[%s187 + $0x22c0] sm:$0xff]
        %v1355 = vld [vmem:[%s187 + $0x22c8] sm:$0xff]
        %v1356 = vld [vmem:[%s187 + $0x22d0] sm:$0xff]
        %v1357 = vld [vmem:[%s187 + $0x22d8] sm:$0xff]
        %v1358 = vld [vmem:[%s187 + $0x22e0] sm:$0xff]
        %v1359 = vld [vmem:[%s187 + $0x22e8] sm:$0xff]
        %v1360 = vld [vmem:[%s187 + $0x22f0] sm:$0xff]
        %v1361 = vld [vmem:[%s187 + $0x22f8] sm:$0xff]
        %v1362 = vld [vmem:[%s187 + $0x2300] sm:$0xff]
        %v1363 = vld [vmem:[%s187 + $0x2308] sm:$0xff]
        %v1364 = vld [vmem:[%s187 + $0x2310] sm:$0xff]
        %v1365 = vld [vmem:[%s187 + $0x2318] sm:$0xff]
        %v1366 = vld [vmem:[%s187 + $0x2320] sm:$0xff]
        %v1367 = vld [vmem:[%s187 + $0x2328] sm:$0xff]
        %v1368 = vld [vmem:[%s187 + $0x2330] sm:$0xff]
        %v1369 = vld [vmem:[%s187 + $0x2338] sm:$0xff]
        %v1370 = vld [vmem:[%s187 + $0x2340] sm:$0xff]
        %v1371 = vld [vmem:[%s187 + $0x2348] sm:$0xff]
        %v1372 = vld [vmem:[%s187 + $0x2350] sm:$0xff]
        %v1373 = vld [vmem:[%s187 + $0x2358] sm:$0xff]
        %v1374 = vld [vmem:[%s187 + $0x2360] sm:$0xff]
        %v1375 = vld [vmem:[%s187 + $0x2368] sm:$0xff]
        %v1376 = vld [vmem:[%s187 + $0x2370] sm:$0xff]
        %v1377 = vld [vmem:[%s187 + $0x2378] sm:$0xff]
        %v1378 = vld [vmem:[%s187 + $0x2380] sm:$0xff]
        %v1379 = vld [vmem:[%s187 + $0x2388] sm:$0xff]
        %v1380 = vld [vmem:[%s187 + $0x2390] sm:$0xff]
        %v1381 = vld [vmem:[%s187 + $0x2398] sm:$0xff]
        %v1382 = vld [vmem:[%s187 + $0x23a0] sm:$0xff]
        %v1383 = vld [vmem:[%s187 + $0x23a8] sm:$0xff]
        %v1384 = vld [vmem:[%s187 + $0x23b0] sm:$0xff]
        %v1385 = vld [vmem:[%s187 + $0x23b8] sm:$0xff]
        %v1386 = vld [vmem:[%s187 + $0x23c0] sm:$0xff]
        %v1387 = vld [vmem:[%s187 + $0x23c8] sm:$0xff]
        %v1388 = vld [vmem:[%s187 + $0x23d0] sm:$0xff]
        %v1389 = vld [vmem:[%s187 + $0x23d8] sm:$0xff]
        %v1390 = vld [vmem:[%s187 + $0x23e0] sm:$0xff]
        %v1391 = vld [vmem:[%s187 + $0x23e8] sm:$0xff]
        %v1392 = vld [vmem:[%s187 + $0x23f0] sm:$0xff]
        %v1393 = vld [vmem:[%s187 + $0x23f8] sm:$0xff]
        %v1394 = vld [vmem:[%s187 + $0x2400] sm:$0xff]
        %v1395 = vld [vmem:[%s187 + $0x2408] sm:$0xff]
        %v1396 = vld [vmem:[%s187 + $0x2410] sm:$0xff]
        %v1397 = vld [vmem:[%s187 + $0x2418] sm:$0xff]
        %v1398 = vld [vmem:[%s187 + $0x2420] sm:$0xff]
        %v1399 = vld [vmem:[%s187 + $0x2428] sm:$0xff]
        %v1400 = vld [vmem:[%s187 + $0x2430] sm:$0xff]
        %v1401 = vld [vmem:[%s187 + $0x2438] sm:$0xff]
        %v1402 = vld [vmem:[%s187 + $0x2440] sm:$0xff]
        %v1403 = vld [vmem:[%s187 + $0x2448] sm:$0xff]
        %v1404 = vld [vmem:[%s187 + $0x2450] sm:$0xff]
        %v1405 = vld [vmem:[%s187 + $0x2458] sm:$0xff]
        %v1406 = vld [vmem:[%s187 + $0x2460] sm:$0xff]
        %v1407 = vld [vmem:[%s187 + $0x2468] sm:$0xff]
        %v1408 = vld [vmem:[%s187 + $0x2470] sm:$0xff]
        %v1409 = vld [vmem:[%s187 + $0x2478] sm:$0xff]
        %v1410 = vld [vmem:[%s187 + $0x2480] sm:$0xff]
        %v1411 = vld [vmem:[%s187 + $0x2488] sm:$0xff]
        %v1412 = vld [vmem:[%s187 + $0x2490] sm:$0xff]
        %v1413 = vld [vmem:[%s187 + $0x2498] sm:$0xff]
        %v1414 = vld [vmem:[%s187 + $0x24a0] sm:$0xff]
        %v1415 = vld [vmem:[%s187 + $0x24a8] sm:$0xff]
        %v1416 = vld [vmem:[%s187 + $0x24b0] sm:$0xff]
        %v1417 = vld [vmem:[%s187 + $0x24b8] sm:$0xff]
        %v1418 = vld [vmem:[%s187 + $0x24c0] sm:$0xff]
        %v1419 = vld [vmem:[%s187 + $0x24c8] sm:$0xff]
        %v1420 = vld [vmem:[%s187 + $0x24d0] sm:$0xff]
        %v1421 = vld [vmem:[%s187 + $0x24d8] sm:$0xff]
        %v1422 = vld [vmem:[%s187 + $0x24e0] sm:$0xff]
        %v1423 = vld [vmem:[%s187 + $0x24e8] sm:$0xff]
        %v1424 = vld [vmem:[%s187 + $0x24f0] sm:$0xff]
        %v1425 = vld [vmem:[%s187 + $0x24f8] sm:$0xff]
        %v1426 = vld [vmem:[%s187 + $0x2500] sm:$0xff]
        %v1427 = vld [vmem:[%s187 + $0x2508] sm:$0xff]
        %v1428 = vld [vmem:[%s187 + $0x2510] sm:$0xff]
        %v1429 = vld [vmem:[%s187 + $0x2518] sm:$0xff]
        %v1430 = vld [vmem:[%s187 + $0x2520] sm:$0xff]
        %v1431 = vld [vmem:[%s187 + $0x2528] sm:$0xff]
        %v1432 = vld [vmem:[%s187 + $0x2530] sm:$0xff]
        %v1433 = vld [vmem:[%s187 + $0x2538] sm:$0xff]
        %v1434 = vld [vmem:[%s187 + $0x2540] sm:$0xff]
        %v1435 = vld [vmem:[%s187 + $0x2548] sm:$0xff]
        %v1436 = vld [vmem:[%s187 + $0x2550] sm:$0xff]
        %v1437 = vld [vmem:[%s187 + $0x2558] sm:$0xff]
        %v1438 = vld [vmem:[%s187 + $0x2560] sm:$0xff]
        %v1439 = vld [vmem:[%s187 + $0x2568] sm:$0xff]
        %v1440 = vld [vmem:[%s187 + $0x2570] sm:$0xff]
        %v1441 = vld [vmem:[%s187 + $0x2578] sm:$0xff]
        %v1442 = vld [vmem:[%s187 + $0x2580] sm:$0xff]
        %v1443 = vld [vmem:[%s187 + $0x2588] sm:$0xff]
        %v1444 = vld [vmem:[%s187 + $0x2590] sm:$0xff]
        %v1445 = vld [vmem:[%s187 + $0x2598] sm:$0xff]
        %v1446 = vld [vmem:[%s187 + $0x25a0] sm:$0xff]
        %v1447 = vld [vmem:[%s187 + $0x25a8] sm:$0xff]
        %v1448 = vld [vmem:[%s187 + $0x25b0] sm:$0xff]
        %v1449 = vld [vmem:[%s187 + $0x25b8] sm:$0xff]
        %v1450 = vld [vmem:[%s187 + $0x25c0] sm:$0xff]
        %v1451 = vld [vmem:[%s187 + $0x25c8] sm:$0xff]
        %v1452 = vld [vmem:[%s187 + $0x25d0] sm:$0xff]
        %v1453 = vld [vmem:[%s187 + $0x25d8] sm:$0xff]
        %v1454 = vld [vmem:[%s187 + $0x25e0] sm:$0xff]
        %v1455 = vld [vmem:[%s187 + $0x25e8] sm:$0xff]
        %v1456 = vld [vmem:[%s187 + $0x25f0] sm:$0xff]
        %v1457 = vld [vmem:[%s187 + $0x25f8] sm:$0xff]
        %v1458 = vld [vmem:[%s187 + $0x2600] sm:$0xff]
        %v1459 = vld [vmem:[%s187 + $0x2608] sm:$0xff]
        %v1460 = vld [vmem:[%s187 + $0x2610] sm:$0xff]
        %v1461 = vld [vmem:[%s187 + $0x2618] sm:$0xff]
        %v1462 = vld [vmem:[%s187 + $0x2620] sm:$0xff]
        %v1463 = vld [vmem:[%s187 + $0x2628] sm:$0xff]
        %v1464 = vld [vmem:[%s187 + $0x2630] sm:$0xff]
        %v1465 = vld [vmem:[%s187 + $0x2638] sm:$0xff]
        %v1466 = vld [vmem:[%s187 + $0x2640] sm:$0xff]
        %v1467 = vld [vmem:[%s187 + $0x2648] sm:$0xff]
        %v1468 = vld [vmem:[%s187 + $0x2650] sm:$0xff]
        %v1469 = vld [vmem:[%s187 + $0x2658] sm:$0xff]
        %v1470 = vld [vmem:[%s187 + $0x2660] sm:$0xff]
        %v1471 = vld [vmem:[%s187 + $0x2668] sm:$0xff]
        %v1472 = vld [vmem:[%s187 + $0x2670] sm:$0xff]
        %v1473 = vld [vmem:[%s187 + $0x2678] sm:$0xff]
        %v1474 = vld [vmem:[%s187 + $0x2680] sm:$0xff]
        %v1475 = vld [vmem:[%s187 + $0x2688] sm:$0xff]
        %v1476 = vld [vmem:[%s187 + $0x2690] sm:$0xff]
        %v1477 = vld [vmem:[%s187 + $0x2698] sm:$0xff]
        %v1478 = vld [vmem:[%s187 + $0x26a0] sm:$0xff]
        %v1479 = vld [vmem:[%s187 + $0x26a8] sm:$0xff]
        %v1480 = vld [vmem:[%s187 + $0x26b0] sm:$0xff]
        %v1481 = vld [vmem:[%s187 + $0x26b8] sm:$0xff]
        %v1482 = vld [vmem:[%s187 + $0x26c0] sm:$0xff]
        %v1483 = vld [vmem:[%s187 + $0x26c8] sm:$0xff]
        %v1484 = vld [vmem:[%s187 + $0x26d0] sm:$0xff]
        %v1485 = vld [vmem:[%s187 + $0x26d8] sm:$0xff]
        %v1486 = vld [vmem:[%s187 + $0x26e0] sm:$0xff]
        %v1487 = vld [vmem:[%s187 + $0x26e8] sm:$0xff]
        %v1488 = vld [vmem:[%s187 + $0x26f0] sm:$0xff]
        %v1489 = vld [vmem:[%s187 + $0x26f8] sm:$0xff]
        %v1490 = vld [vmem:[%s187 + $0x2700] sm:$0xff]
        %v1491 = vld [vmem:[%s187 + $0x2708] sm:$0xff]
        %v1492 = vld [vmem:[%s187 + $0x2710] sm:$0xff]
        %v1493 = vld [vmem:[%s187 + $0x2718] sm:$0xff]
        %v1494 = vld [vmem:[%s187 + $0x2720] sm:$0xff]
        %v1495 = vld [vmem:[%s187 + $0x2728] sm:$0xff]
        %v1496 = vld [vmem:[%s187 + $0x2730] sm:$0xff]
        %v1497 = vld [vmem:[%s187 + $0x2738] sm:$0xff]
        %v1498 = vld [vmem:[%s187 + $0x2740] sm:$0xff]
        %v1499 = vld [vmem:[%s187 + $0x2748] sm:$0xff]
        %v1500 = vld [vmem:[%s187 + $0x2750] sm:$0xff]
        %v1501 = vld [vmem:[%s187 + $0x2758] sm:$0xff]
        %v1502 = vld [vmem:[%s187 + $0x2760] sm:$0xff]
        %v1503 = vld [vmem:[%s187 + $0x2768] sm:$0xff]
        %v1504 = vld [vmem:[%s187 + $0x2770] sm:$0xff]
        %v1505 = vld [vmem:[%s187 + $0x2778] sm:$0xff]
        %v1506 = vld [vmem:[%s187 + $0x2780] sm:$0xff]
        %v1507 = vld [vmem:[%s187 + $0x2788] sm:$0xff]
        %v1508 = vld [vmem:[%s187 + $0x2790] sm:$0xff]
        %v1509 = vld [vmem:[%s187 + $0x2798] sm:$0xff]
        %v1510 = vld [vmem:[%s187 + $0x27a0] sm:$0xff]
        %v1511 = vld [vmem:[%s187 + $0x27a8] sm:$0xff]
        %v1512 = vld [vmem:[%s187 + $0x27b0] sm:$0xff]
        %v1513 = vld [vmem:[%s187 + $0x27b8] sm:$0xff]
        %v1514 = vld [vmem:[%s187 + $0x27c0] sm:$0xff]
        %v1515 = vld [vmem:[%s187 + $0x27c8] sm:$0xff]
        %v1516 = vld [vmem:[%s187 + $0x27d0] sm:$0xff]
        %v1517 = vld [vmem:[%s187 + $0x27d8] sm:$0xff]
        %v1518 = vld [vmem:[%s187 + $0x27e0] sm:$0xff]
        %v1519 = vld [vmem:[%s187 + $0x27e8] sm:$0xff]
        %v1520 = vld [vmem:[%s187 + $0x27f0] sm:$0xff]
        %v1521 = vld [vmem:[%s187 + $0x27f8] sm:$0xff]
        %v1522 = vld [vmem:[%s187 + $0x2800] sm:$0xff]
        %v1523 = vld [vmem:[%s187 + $0x2808] sm:$0xff]
        %v1524 = vld [vmem:[%s187 + $0x2810] sm:$0xff]
        %v1525 = vld [vmem:[%s187 + $0x2818] sm:$0xff]
        %v1526 = vld [vmem:[%s187 + $0x2820] sm:$0xff]
        %v1527 = vld [vmem:[%s187 + $0x2828] sm:$0xff]
        %v1528 = vld [vmem:[%s187 + $0x2830] sm:$0xff]
        %v1529 = vld [vmem:[%s187 + $0x2838] sm:$0xff]
        %v1530 = vld [vmem:[%s187 + $0x2840] sm:$0xff]
        %v1531 = vld [vmem:[%s187 + $0x2848] sm:$0xff]
        %v1532 = vld [vmem:[%s187 + $0x2850] sm:$0xff]
        %v1533 = vld [vmem:[%s187 + $0x2858] sm:$0xff]
        %v1534 = vld [vmem:[%s187 + $0x2860] sm:$0xff]
        %v1535 = vld [vmem:[%s187 + $0x2868] sm:$0xff]
        %v1536 = vld [vmem:[%s187 + $0x2870] sm:$0xff]
        %v1537 = vld [vmem:[%s187 + $0x2878] sm:$0xff]
        %v1538 = vld [vmem:[%s187 + $0x2880] sm:$0xff]
        %v1539 = vld [vmem:[%s187 + $0x2888] sm:$0xff]
        %v1540 = vld [vmem:[%s187 + $0x2890] sm:$0xff]
        %v1541 = vld [vmem:[%s187 + $0x2898] sm:$0xff]
        %v1542 = vld [vmem:[%s187 + $0x28a0] sm:$0xff]
        %v1543 = vld [vmem:[%s187 + $0x28a8] sm:$0xff]
        %v1544 = vld [vmem:[%s187 + $0x28b0] sm:$0xff]
        %v1545 = vld [vmem:[%s187 + $0x28b8] sm:$0xff]
        %v1546 = vld [vmem:[%s187 + $0x28c0] sm:$0xff]
        %v1547 = vld [vmem:[%s187 + $0x28c8] sm:$0xff]
        %v1548 = vld [vmem:[%s187 + $0x28d0] sm:$0xff]
        %v1549 = vld [vmem:[%s187 + $0x28d8] sm:$0xff]
        %v1550 = vld [vmem:[%s187 + $0x28e0] sm:$0xff]
        %v1551 = vld [vmem:[%s187 + $0x28e8] sm:$0xff]
        %v1552 = vld [vmem:[%s187 + $0x28f0] sm:$0xff]
        %v1553 = vld [vmem:[%s187 + $0x28f8] sm:$0xff]
        %v1554 = vld [vmem:[%s187 + $0x2900] sm:$0xff]
        %v1555 = vld [vmem:[%s187 + $0x2908] sm:$0xff]
        %v1556 = vld [vmem:[%s187 + $0x2910] sm:$0xff]
        %v1557 = vld [vmem:[%s187 + $0x2918] sm:$0xff]
        %v1558 = vld [vmem:[%s187 + $0x2920] sm:$0xff]
        %v1559 = vld [vmem:[%s187 + $0x2928] sm:$0xff]
        %v1560 = vld [vmem:[%s187 + $0x2930] sm:$0xff]
        %v1561 = vld [vmem:[%s187 + $0x2938] sm:$0xff]
        %v1562 = vld [vmem:[%s187 + $0x2940] sm:$0xff]
        %v1563 = vld [vmem:[%s187 + $0x2948] sm:$0xff]
        %v1564 = vld [vmem:[%s187 + $0x2950] sm:$0xff]
        %v1565 = vld [vmem:[%s187 + $0x2958] sm:$0xff]
        %v1566 = vld [vmem:[%s187 + $0x2960] sm:$0xff]
        %v1567 = vld [vmem:[%s187 + $0x2968] sm:$0xff]
        %v1568 = vld [vmem:[%s187 + $0x2970] sm:$0xff]
        %v1569 = vld [vmem:[%s187 + $0x2978] sm:$0xff]
        %v1570 = vld [vmem:[%s187 + $0x2980] sm:$0xff]
        %v1571 = vld [vmem:[%s187 + $0x2988] sm:$0xff]
        %v1572 = vld [vmem:[%s187 + $0x2990] sm:$0xff]
        %v1573 = vld [vmem:[%s187 + $0x2998] sm:$0xff]
        %v1574 = vld [vmem:[%s187 + $0x29a0] sm:$0xff]
        %v1575 = vld [vmem:[%s187 + $0x29a8] sm:$0xff]
        %v1576 = vld [vmem:[%s187 + $0x29b0] sm:$0xff]
        %v1577 = vld [vmem:[%s187 + $0x29b8] sm:$0xff]
        %v1578 = vld [vmem:[%s187 + $0x29c0] sm:$0xff]
        %v1579 = vld [vmem:[%s187 + $0x29c8] sm:$0xff]
        %v1580 = vld [vmem:[%s187 + $0x29d0] sm:$0xff]
        %v1581 = vld [vmem:[%s187 + $0x29d8] sm:$0xff]
        %v1582 = vld [vmem:[%s187 + $0x29e0] sm:$0xff]
        %v1583 = vld [vmem:[%s187 + $0x29e8] sm:$0xff]
        %v1584 = vld [vmem:[%s187 + $0x29f0] sm:$0xff]
        %v1585 = vld [vmem:[%s187 + $0x29f8] sm:$0xff]
        %v1586 = vld [vmem:[%s187 + $0x2a00] sm:$0xff]
        %v1587 = vld [vmem:[%s187 + $0x2a08] sm:$0xff]
        %v1588 = vld [vmem:[%s187 + $0x2a10] sm:$0xff]
        %v1589 = vld [vmem:[%s187 + $0x2a18] sm:$0xff]
        %v1590 = vld [vmem:[%s187 + $0x2a20] sm:$0xff]
        %v1591 = vld [vmem:[%s187 + $0x2a28] sm:$0xff]
        %v1592 = vld [vmem:[%s187 + $0x2a30] sm:$0xff]
        %v1593 = vld [vmem:[%s187 + $0x2a38] sm:$0xff]
        %v1594 = vld [vmem:[%s187 + $0x2a40] sm:$0xff]
        %v1595 = vld [vmem:[%s187 + $0x2a48] sm:$0xff]
        %v1596 = vld [vmem:[%s187 + $0x2a50] sm:$0xff]
        %v1597 = vld [vmem:[%s187 + $0x2a58] sm:$0xff]
        %v1598 = vld [vmem:[%s187 + $0x2a60] sm:$0xff]
        %v1599 = vld [vmem:[%s187 + $0x2a68] sm:$0xff]
        %v1600 = vld [vmem:[%s187 + $0x2a70] sm:$0xff]
        %v1601 = vld [vmem:[%s187 + $0x2a78] sm:$0xff]
        %v1602 = vld [vmem:[%s187 + $0x2a80] sm:$0xff]
        %v1603 = vld [vmem:[%s187 + $0x2a88] sm:$0xff]
        %v1604 = vld [vmem:[%s187 + $0x2a90] sm:$0xff]
        %v1605 = vld [vmem:[%s187 + $0x2a98] sm:$0xff]
        %v1606 = vld [vmem:[%s187 + $0x2aa0] sm:$0xff]
        %v1607 = vld [vmem:[%s187 + $0x2aa8] sm:$0xff]
        %v1608 = vld [vmem:[%s187 + $0x2ab0] sm:$0xff]
        %v1609 = vld [vmem:[%s187 + $0x2ab8] sm:$0xff]
        %v1610 = vld [vmem:[%s187 + $0x2ac0] sm:$0xff]
        %v1611 = vld [vmem:[%s187 + $0x2ac8] sm:$0xff]
        %v1612 = vld [vmem:[%s187 + $0x2ad0] sm:$0xff]
        %v1613 = vld [vmem:[%s187 + $0x2ad8] sm:$0xff]
        %v1614 = vld [vmem:[%s187 + $0x2ae0] sm:$0xff]
        %v1615 = vld [vmem:[%s187 + $0x2ae8] sm:$0xff]
        %v1616 = vld [vmem:[%s187 + $0x2af0] sm:$0xff]
        %v1617 = vld [vmem:[%s187 + $0x2af8] sm:$0xff]
        %v1618 = vld [vmem:[%s187 + $0x2b00] sm:$0xff]
        %v1619 = vld [vmem:[%s187 + $0x2b08] sm:$0xff]
        %v1620 = vld [vmem:[%s187 + $0x2b10] sm:$0xff]
        %v1621 = vld [vmem:[%s187 + $0x2b18] sm:$0xff]
        %v1622 = vld [vmem:[%s187 + $0x2b20] sm:$0xff]
        %v1623 = vld [vmem:[%s187 + $0x2b28] sm:$0xff]
        %v1624 = vld [vmem:[%s187 + $0x2b30] sm:$0xff]
        %v1625 = vld [vmem:[%s187 + $0x2b38] sm:$0xff]
        %v1626 = vld [vmem:[%s187 + $0x2b40] sm:$0xff]
        %v1627 = vld [vmem:[%s187 + $0x2b48] sm:$0xff]
        %v1628 = vld [vmem:[%s187 + $0x2b50] sm:$0xff]
        %v1629 = vld [vmem:[%s187 + $0x2b58] sm:$0xff]
        %v1630 = vld [vmem:[%s187 + $0x2b60] sm:$0xff]
        %v1631 = vld [vmem:[%s187 + $0x2b68] sm:$0xff]
        %v1632 = vld [vmem:[%s187 + $0x2b70] sm:$0xff]
        %v1633 = vld [vmem:[%s187 + $0x2b78] sm:$0xff]
        %v1634 = vld [vmem:[%s187 + $0x2b80] sm:$0xff]
        %v1635 = vld [vmem:[%s187 + $0x2b88] sm:$0xff]
        %v1636 = vld [vmem:[%s187 + $0x2b90] sm:$0xff]
        %v1637 = vld [vmem:[%s187 + $0x2b98] sm:$0xff]
        %v1638 = vld [vmem:[%s187 + $0x2ba0] sm:$0xff]
        %v1639 = vld [vmem:[%s187 + $0x2ba8] sm:$0xff]
        %v1640 = vld [vmem:[%s187 + $0x2bb0] sm:$0xff]
        %v1641 = vld [vmem:[%s187 + $0x2bb8] sm:$0xff]
        %v1642 = vld [vmem:[%s187 + $0x2bc0] sm:$0xff]
        %v1643 = vld [vmem:[%s187 + $0x2bc8] sm:$0xff]
        %v1644 = vld [vmem:[%s187 + $0x2bd0] sm:$0xff]
        %v1645 = vld [vmem:[%s187 + $0x2bd8] sm:$0xff]
        %v1646 = vld [vmem:[%s187 + $0x2be0] sm:$0xff]
        %v1647 = vld [vmem:[%s187 + $0x2be8] sm:$0xff]
        %v1648 = vld [vmem:[%s187 + $0x2bf0] sm:$0xff]
        %v1649 = vld [vmem:[%s187 + $0x2bf8] sm:$0xff]
        %v1650 = vld [vmem:[%s187 + $0x2c00] sm:$0xff]
        %v1651 = vld [vmem:[%s187 + $0x2c08] sm:$0xff]
        %v1652 = vld [vmem:[%s187 + $0x2c10] sm:$0xff]
        %v1653 = vld [vmem:[%s187 + $0x2c18] sm:$0xff]
        %v1654 = vld [vmem:[%s187 + $0x2c20] sm:$0xff]
        %v1655 = vld [vmem:[%s187 + $0x2c28] sm:$0xff]
        %v1656 = vld [vmem:[%s187 + $0x2c30] sm:$0xff]
        %v1657 = vld [vmem:[%s187 + $0x2c38] sm:$0xff]
        %v1658 = vld [vmem:[%s187 + $0x2c40] sm:$0xff]
        %v1659 = vld [vmem:[%s187 + $0x2c48] sm:$0xff]
        %v1660 = vld [vmem:[%s187 + $0x2c50] sm:$0xff]
        %v1661 = vld [vmem:[%s187 + $0x2c58] sm:$0xff]
        %v1662 = vld [vmem:[%s187 + $0x2c60] sm:$0xff]
        %v1663 = vld [vmem:[%s187 + $0x2c68] sm:$0xff]
        %v1664 = vld [vmem:[%s187 + $0x2c70] sm:$0xff]
        %v1665 = vld [vmem:[%s187 + $0x2c78] sm:$0xff]
        %v1666 = vld [vmem:[%s187 + $0x2c80] sm:$0xff]
        %v1667 = vld [vmem:[%s187 + $0x2c88] sm:$0xff]
        %v1668 = vld [vmem:[%s187 + $0x2c90] sm:$0xff]
        %v1669 = vld [vmem:[%s187 + $0x2c98] sm:$0xff]
        %v1670 = vld [vmem:[%s187 + $0x2ca0] sm:$0xff]
        %v1671 = vld [vmem:[%s187 + $0x2ca8] sm:$0xff]
        %v1672 = vld [vmem:[%s187 + $0x2cb0] sm:$0xff]
        %v1673 = vld [vmem:[%s187 + $0x2cb8] sm:$0xff]
        %v1674 = vld [vmem:[%s187 + $0x2cc0] sm:$0xff]
        %v1675 = vld [vmem:[%s187 + $0x2cc8] sm:$0xff]
        %v1676 = vld [vmem:[%s187 + $0x2cd0] sm:$0xff]
        %v1677 = vld [vmem:[%s187 + $0x2cd8] sm:$0xff]
        %v1678 = vld [vmem:[%s187 + $0x2ce0] sm:$0xff]
        %v1679 = vld [vmem:[%s187 + $0x2ce8] sm:$0xff]
        %v1680 = vld [vmem:[%s187 + $0x2cf0] sm:$0xff]
        %v1681 = vld [vmem:[%s187 + $0x2cf8] sm:$0xff]
        %v1682 = vld [vmem:[%s187 + $0x2d00] sm:$0xff]
        %v1683 = vld [vmem:[%s187 + $0x2d08] sm:$0xff]
        %v1684 = vld [vmem:[%s187 + $0x2d10] sm:$0xff]
        %v1685 = vld [vmem:[%s187 + $0x2d18] sm:$0xff]
        %v1686 = vld [vmem:[%s187 + $0x2d20] sm:$0xff]
        %v1687 = vld [vmem:[%s187 + $0x2d28] sm:$0xff]
        %v1688 = vld [vmem:[%s187 + $0x2d30] sm:$0xff]
        %v1689 = vld [vmem:[%s187 + $0x2d38] sm:$0xff]
        %v1690 = vld [vmem:[%s187 + $0x2d40] sm:$0xff]
        %v1691 = vld [vmem:[%s187 + $0x2d48] sm:$0xff]
        %v1692 = vld [vmem:[%s187 + $0x2d50] sm:$0xff]
        %v1693 = vld [vmem:[%s187 + $0x2d58] sm:$0xff]
        %v1694 = vld [vmem:[%s187 + $0x2d60] sm:$0xff]
        %v1695 = vld [vmem:[%s187 + $0x2d68] sm:$0xff]
        %v1696 = vld [vmem:[%s187 + $0x2d70] sm:$0xff]
        %v1697 = vld [vmem:[%s187 + $0x2d78] sm:$0xff]
        %v1698 = vld [vmem:[%s187 + $0x2d80] sm:$0xff]
        %v1699 = vld [vmem:[%s187 + $0x2d88] sm:$0xff]
        %v1700 = vld [vmem:[%s187 + $0x2d90] sm:$0xff]
        %v1701 = vld [vmem:[%s187 + $0x2d98] sm:$0xff]
        %v1702 = vld [vmem:[%s187 + $0x2da0] sm:$0xff]
        %v1703 = vld [vmem:[%s187 + $0x2da8] sm:$0xff]
        %v1704 = vld [vmem:[%s187 + $0x2db0] sm:$0xff]
        %v1705 = vld [vmem:[%s187 + $0x2db8] sm:$0xff]
        %v1706 = vld [vmem:[%s187 + $0x2dc0] sm:$0xff]
        %v1707 = vld [vmem:[%s187 + $0x2dc8] sm:$0xff]
        %v1708 = vld [vmem:[%s187 + $0x2dd0] sm:$0xff]
        %v1709 = vld [vmem:[%s187 + $0x2dd8] sm:$0xff]
        %v1710 = vld [vmem:[%s187 + $0x2de0] sm:$0xff]
        %v1711 = vld [vmem:[%s187 + $0x2de8] sm:$0xff]
        %v1712 = vld [vmem:[%s187 + $0x2df0] sm:$0xff]
        %v1713 = vld [vmem:[%s187 + $0x2df8] sm:$0xff]
        %v1714 = vld [vmem:[%s187 + $0x2e00] sm:$0xff]
        %v1715 = vld [vmem:[%s187 + $0x2e08] sm:$0xff]
        %v1716 = vld [vmem:[%s187 + $0x2e10] sm:$0xff]
        %v1717 = vld [vmem:[%s187 + $0x2e18] sm:$0xff]
        %v1718 = vld [vmem:[%s187 + $0x2e20] sm:$0xff]
        %v1719 = vld [vmem:[%s187 + $0x2e28] sm:$0xff]
        %v1720 = vld [vmem:[%s187 + $0x2e30] sm:$0xff]
        %v1721 = vld [vmem:[%s187 + $0x2e38] sm:$0xff]
        %v1722 = vld [vmem:[%s187 + $0x2e40] sm:$0xff]
        %v1723 = vld [vmem:[%s187 + $0x2e48] sm:$0xff]
        %v1724 = vld [vmem:[%s187 + $0x2e50] sm:$0xff]
        %v1725 = vld [vmem:[%s187 + $0x2e58] sm:$0xff]
        %v1726 = vld [vmem:[%s187 + $0x2e60] sm:$0xff]
        %v1727 = vld [vmem:[%s187 + $0x2e68] sm:$0xff]
        %v1728 = vld [vmem:[%s187 + $0x2e70] sm:$0xff]
        %v1729 = vld [vmem:[%s187 + $0x2e78] sm:$0xff]
        %v1730 = vld [vmem:[%s187 + $0x2e80] sm:$0xff]
        %v1731 = vld [vmem:[%s187 + $0x2e88] sm:$0xff]
        %v1732 = vld [vmem:[%s187 + $0x2e90] sm:$0xff]
        %v1733 = vld [vmem:[%s187 + $0x2e98] sm:$0xff]
        %v1734 = vld [vmem:[%s187 + $0x2ea0] sm:$0xff]
        %v1735 = vld [vmem:[%s187 + $0x2ea8] sm:$0xff]
        %v1736 = vld [vmem:[%s187 + $0x2eb0] sm:$0xff]
        %v1737 = vld [vmem:[%s187 + $0x2eb8] sm:$0xff]
        %v1738 = vld [vmem:[%s187 + $0x2ec0] sm:$0xff]
        %v1739 = vld [vmem:[%s187 + $0x2ec8] sm:$0xff]
        %v1740 = vld [vmem:[%s187 + $0x2ed0] sm:$0xff]
        %v1741 = vld [vmem:[%s187 + $0x2ed8] sm:$0xff]
        %v1742 = vld [vmem:[%s187 + $0x2ee0] sm:$0xff]
        %v1743 = vld [vmem:[%s187 + $0x2ee8] sm:$0xff]
        %v1744 = vld [vmem:[%s187 + $0x2ef0] sm:$0xff]
        %v1745 = vld [vmem:[%s187 + $0x2ef8] sm:$0xff]
        %v1746 = vld [vmem:[%s187 + $0x2f00] sm:$0xff]
        %v1747 = vld [vmem:[%s187 + $0x2f08] sm:$0xff]
        %v1748 = vld [vmem:[%s187 + $0x2f10] sm:$0xff]
        %v1749 = vld [vmem:[%s187 + $0x2f18] sm:$0xff]
        %v1750 = vld [vmem:[%s187 + $0x2f20] sm:$0xff]
        %v1751 = vld [vmem:[%s187 + $0x2f28] sm:$0xff]
        %v1752 = vld [vmem:[%s187 + $0x2f30] sm:$0xff]
        %v1753 = vld [vmem:[%s187 + $0x2f38] sm:$0xff]
        %v1754 = vld [vmem:[%s187 + $0x2f40] sm:$0xff]
        %v1755 = vld [vmem:[%s187 + $0x2f48] sm:$0xff]
        %v1756 = vld [vmem:[%s187 + $0x2f50] sm:$0xff]
        %v1757 = vld [vmem:[%s187 + $0x2f58] sm:$0xff]
        %v1758 = vld [vmem:[%s187 + $0x2f60] sm:$0xff]
        %v1759 = vld [vmem:[%s187 + $0x2f68] sm:$0xff]
        %v1760 = vld [vmem:[%s187 + $0x2f70] sm:$0xff]
        %v1761 = vld [vmem:[%s187 + $0x2f78] sm:$0xff]
        %v1762 = vld [vmem:[%s187 + $0x2f80] sm:$0xff]
        %v1763 = vld [vmem:[%s187 + $0x2f88] sm:$0xff]
        %v1764 = vld [vmem:[%s187 + $0x2f90] sm:$0xff]
        %v1765 = vld [vmem:[%s187 + $0x2f98] sm:$0xff]
        %v1766 = vld [vmem:[%s187 + $0x2fa0] sm:$0xff]
        %v1767 = vld [vmem:[%s187 + $0x2fa8] sm:$0xff]
        %v1768 = vld [vmem:[%s187 + $0x2fb0] sm:$0xff]
        %v1769 = vld [vmem:[%s187 + $0x2fb8] sm:$0xff]
        %v1770 = vld [vmem:[%s187 + $0x2fc0] sm:$0xff]
        %v1771 = vld [vmem:[%s187 + $0x2fc8] sm:$0xff]
        %v1772 = vld [vmem:[%s187 + $0x2fd0] sm:$0xff]
        %v1773 = vld [vmem:[%s187 + $0x2fd8] sm:$0xff]
        %v1774 = vld [vmem:[%s187 + $0x2fe0] sm:$0xff]
        %v1775 = vld [vmem:[%s187 + $0x2fe8] sm:$0xff]
        %v1776 = vld [vmem:[%s187 + $0x2ff0] sm:$0xff]
        %v1777 = vld [vmem:[%s187 + $0x2ff8] sm:$0xff]
        %v1778 = vld [vmem:[%s196] sm:$0x3]
        %v1780 = vlaneseq
        %v1781 = vshrl.u32 %v1780, 7
        %v1782 = vsub.s32 0, %v1781
        %v1783 = vrot.slane %v1778, %v1782
        %v1784 = vlaneseq
        %v1785 = vshrl.u32 %v1784, 7
        %v1786 = vsub.s32 1, %v1785
        %v1787 = vrot.slane %v1778, %v1786
        %v1802 = vcombine.high %v230, %v230
        %v1804 = vunpack.c.l.s4 1966171168
        %v1805 = vunpack.c.0.s8 %v1804
        %v1806 = vlaneseq
        %v1807 = vshrl.u32 %v1806, 7
        %v1808 = vsub.s32 %v1805, %v1807
        %v1809 = vrot.slane %v230, %v1808
        %v1811 = vunpack.c.l.s4 1966171168
        %v1812 = vunpack.c.0.s8 %v1811
        %v1813 = vlaneseq
        %v1814 = vshrl.u32 %v1813, 7
        %v1815 = vsub.s32 %v1812, %v1814
        %v1816 = vrot.slane %v1802, %v1815
        %v1817 = vcombine.high %v1809, %v1809
        %v1818 = vcombine.high %v1816, %v1816
        %v1820 = vunpack.c.l.s4 1966171168
        %v1821 = vunpack.c.0.s8 %v1820
        %v1822 = vlaneseq
        %v1823 = vshrl.u32 %v1822, 7
        %v1824 = vsub.s32 %v1821, %v1823
        %v1825 = vrot.slane %v1809, %v1824
        %v1827 = vunpack.c.l.s4 1966171168
        %v1828 = vunpack.c.0.s8 %v1827
        %v1829 = vlaneseq
        %v1830 = vshrl.u32 %v1829, 7
        %v1831 = vsub.s32 %v1828, %v1830
        %v1832 = vrot.slane %v1816, %v1831
        %v1834 = vunpack.c.l.s4 1966171168
        %v1835 = vunpack.c.0.s8 %v1834
        %v1836 = vlaneseq
        %v1837 = vshrl.u32 %v1836, 7
        %v1838 = vsub.s32 %v1835, %v1837
        %v1839 = vrot.slane %v1817, %v1838
        %v1841 = vunpack.c.l.s4 1966171168
        %v1842 = vunpack.c.0.s8 %v1841
        %v1843 = vlaneseq
        %v1844 = vshrl.u32 %v1843, 7
        %v1845 = vsub.s32 %v1842, %v1844
        %v1846 = vrot.slane %v1818, %v1845
        %v1847 = vcombine.high %v1825, %v1825
        %v1848 = vcombine.high %v1832, %v1832
        %v1849 = vcombine.high %v1839, %v1839
        %v1850 = vcombine.high %v1846, %v1846
        %v1851 = vcombine.high %v231, %v231
        %v1853 = vunpack.c.l.s4 1966171168
        %v1854 = vunpack.c.0.s8 %v1853
        %v1855 = vlaneseq
        %v1856 = vshrl.u32 %v1855, 7
        %v1857 = vsub.s32 %v1854, %v1856
        %v1858 = vrot.slane %v231, %v1857
        %v1860 = vunpack.c.l.s4 1966171168
        %v1861 = vunpack.c.0.s8 %v1860
        %v1862 = vlaneseq
        %v1863 = vshrl.u32 %v1862, 7
        %v1864 = vsub.s32 %v1861, %v1863
        %v1865 = vrot.slane %v1851, %v1864
        %v1866 = vcombine.high %v1858, %v1858
        %v1867 = vcombine.high %v1865, %v1865
        %v1869 = vunpack.c.l.s4 1966171168
        %v1870 = vunpack.c.0.s8 %v1869
        %v1871 = vlaneseq
        %v1872 = vshrl.u32 %v1871, 7
        %v1873 = vsub.s32 %v1870, %v1872
        %v1874 = vrot.slane %v1858, %v1873
        %v1876 = vunpack.c.l.s4 1966171168
        %v1877 = vunpack.c.0.s8 %v1876
        %v1878 = vlaneseq
        %v1879 = vshrl.u32 %v1878, 7
        %v1880 = vsub.s32 %v1877, %v1879
        %v1881 = vrot.slane %v1865, %v1880
        %v1883 = vunpack.c.l.s4 1966171168
        %v1884 = vunpack.c.0.s8 %v1883
        %v1885 = vlaneseq
        %v1886 = vshrl.u32 %v1885, 7
        %v1887 = vsub.s32 %v1884, %v1886
        %v1888 = vrot.slane %v1866, %v1887
        %v1890 = vunpack.c.l.s4 1966171168
        %v1891 = vunpack.c.0.s8 %v1890
        %v1892 = vlaneseq
        %v1893 = vshrl.u32 %v1892, 7
        %v1894 = vsub.s32 %v1891, %v1893
        %v1895 = vrot.slane %v1867, %v1894
        %v1896 = vcombine.high %v1874, %v1874
        %v1897 = vcombine.high %v1881, %v1881
        %v1898 = vcombine.high %v1888, %v1888
        %v1899 = vcombine.high %v1895, %v1895
        %v1900 = vcombine.high %v232, %v232
        %v1902 = vunpack.c.l.s4 1966171168
        %v1903 = vunpack.c.0.s8 %v1902
        %v1904 = vlaneseq
        %v1905 = vshrl.u32 %v1904, 7
        %v1906 = vsub.s32 %v1903, %v1905
        %v1907 = vrot.slane %v232, %v1906
        %v1909 = vunpack.c.l.s4 1966171168
        %v1910 = vunpack.c.0.s8 %v1909
        %v1911 = vlaneseq
        %v1912 = vshrl.u32 %v1911, 7
        %v1913 = vsub.s32 %v1910, %v1912
        %v1914 = vrot.slane %v1900, %v1913
        %v1915 = vcombine.high %v1907, %v1907
        %v1916 = vcombine.high %v1914, %v1914
        %v1918 = vunpack.c.l.s4 1966171168
        %v1919 = vunpack.c.0.s8 %v1918
        %v1920 = vlaneseq
        %v1921 = vshrl.u32 %v1920, 7
        %v1922 = vsub.s32 %v1919, %v1921
        %v1923 = vrot.slane %v1907, %v1922
        %v1925 = vunpack.c.l.s4 1966171168
        %v1926 = vunpack.c.0.s8 %v1925
        %v1927 = vlaneseq
        %v1928 = vshrl.u32 %v1927, 7
        %v1929 = vsub.s32 %v1926, %v1928
        %v1930 = vrot.slane %v1914, %v1929
        %v1932 = vunpack.c.l.s4 1966171168
        %v1933 = vunpack.c.0.s8 %v1932
        %v1934 = vlaneseq
        %v1935 = vshrl.u32 %v1934, 7
        %v1936 = vsub.s32 %v1933, %v1935
        %v1937 = vrot.slane %v1915, %v1936
        %v1939 = vunpack.c.l.s4 1966171168
        %v1940 = vunpack.c.0.s8 %v1939
        %v1941 = vlaneseq
        %v1942 = vshrl.u32 %v1941, 7
        %v1943 = vsub.s32 %v1940, %v1942
        %v1944 = vrot.slane %v1916, %v1943
        %v1945 = vcombine.high %v1923, %v1923
        %v1946 = vcombine.high %v1930, %v1930
        %v1947 = vcombine.high %v1937, %v1937
        %v1948 = vcombine.high %v1944, %v1944
        %v1949 = vcombine.high %v233, %v233
        %v1951 = vunpack.c.l.s4 1966171168
        %v1952 = vunpack.c.0.s8 %v1951
        %v1953 = vlaneseq
        %v1954 = vshrl.u32 %v1953, 7
        %v1955 = vsub.s32 %v1952, %v1954
        %v1956 = vrot.slane %v233, %v1955
        %v1958 = vunpack.c.l.s4 1966171168
        %v1959 = vunpack.c.0.s8 %v1958
        %v1960 = vlaneseq
        %v1961 = vshrl.u32 %v1960, 7
        %v1962 = vsub.s32 %v1959, %v1961
        %v1963 = vrot.slane %v1949, %v1962
        %v1964 = vcombine.high %v1956, %v1956
        %v1965 = vcombine.high %v1963, %v1963
        %v1967 = vunpack.c.l.s4 1966171168
        %v1968 = vunpack.c.0.s8 %v1967
        %v1969 = vlaneseq
        %v1970 = vshrl.u32 %v1969, 7
        %v1971 = vsub.s32 %v1968, %v1970
        %v1972 = vrot.slane %v1956, %v1971
        %v1974 = vunpack.c.l.s4 1966171168
        %v1975 = vunpack.c.0.s8 %v1974
        %v1976 = vlaneseq
        %v1977 = vshrl.u32 %v1976, 7
        %v1978 = vsub.s32 %v1975, %v1977
        %v1979 = vrot.slane %v1963, %v1978
        %v1981 = vunpack.c.l.s4 1966171168
        %v1982 = vunpack.c.0.s8 %v1981
        %v1983 = vlaneseq
        %v1984 = vshrl.u32 %v1983, 7
        %v1985 = vsub.s32 %v1982, %v1984
        %v1986 = vrot.slane %v1964, %v1985
        %v1988 = vunpack.c.l.s4 1966171168
        %v1989 = vunpack.c.0.s8 %v1988
        %v1990 = vlaneseq
        %v1991 = vshrl.u32 %v1990, 7
        %v1992 = vsub.s32 %v1989, %v1991
        %v1993 = vrot.slane %v1965, %v1992
        %v1994 = vcombine.high %v1972, %v1972
        %v1995 = vcombine.high %v1979, %v1979
        %v1996 = vcombine.high %v1986, %v1986
        %v1997 = vcombine.high %v1993, %v1993
        %v1998 = vcombine.high %v234, %v234
        %v2000 = vunpack.c.l.s4 1966171168
        %v2001 = vunpack.c.0.s8 %v2000
        %v2002 = vlaneseq
        %v2003 = vshrl.u32 %v2002, 7
        %v2004 = vsub.s32 %v2001, %v2003
        %v2005 = vrot.slane %v234, %v2004
        %v2007 = vunpack.c.l.s4 1966171168
        %v2008 = vunpack.c.0.s8 %v2007
        %v2009 = vlaneseq
        %v2010 = vshrl.u32 %v2009, 7
        %v2011 = vsub.s32 %v2008, %v2010
        %v2012 = vrot.slane %v1998, %v2011
        %v2013 = vcombine.high %v2005, %v2005
        %v2014 = vcombine.high %v2012, %v2012
        %v2016 = vunpack.c.l.s4 1966171168
        %v2017 = vunpack.c.0.s8 %v2016
        %v2018 = vlaneseq
        %v2019 = vshrl.u32 %v2018, 7
        %v2020 = vsub.s32 %v2017, %v2019
        %v2021 = vrot.slane %v2005, %v2020
        %v2023 = vunpack.c.l.s4 1966171168
        %v2024 = vunpack.c.0.s8 %v2023
        %v2025 = vlaneseq
        %v2026 = vshrl.u32 %v2025, 7
        %v2027 = vsub.s32 %v2024, %v2026
        %v2028 = vrot.slane %v2012, %v2027
        %v2030 = vunpack.c.l.s4 1966171168
        %v2031 = vunpack.c.0.s8 %v2030
        %v2032 = vlaneseq
        %v2033 = vshrl.u32 %v2032, 7
        %v2034 = vsub.s32 %v2031, %v2033
        %v2035 = vrot.slane %v2013, %v2034
        %v2037 = vunpack.c.l.s4 1966171168
        %v2038 = vunpack.c.0.s8 %v2037
        %v2039 = vlaneseq
        %v2040 = vshrl.u32 %v2039, 7
        %v2041 = vsub.s32 %v2038, %v2040
        %v2042 = vrot.slane %v2014, %v2041
        %v2043 = vcombine.high %v2021, %v2021
        %v2044 = vcombine.high %v2028, %v2028
        %v2045 = vcombine.high %v2035, %v2035
        %v2046 = vcombine.high %v2042, %v2042
        %v2047 = vcombine.high %v235, %v235
        %v2049 = vunpack.c.l.s4 1966171168
        %v2050 = vunpack.c.0.s8 %v2049
        %v2051 = vlaneseq
        %v2052 = vshrl.u32 %v2051, 7
        %v2053 = vsub.s32 %v2050, %v2052
        %v2054 = vrot.slane %v235, %v2053
        %v2056 = vunpack.c.l.s4 1966171168
        %v2057 = vunpack.c.0.s8 %v2056
        %v2058 = vlaneseq
        %v2059 = vshrl.u32 %v2058, 7
        %v2060 = vsub.s32 %v2057, %v2059
        %v2061 = vrot.slane %v2047, %v2060
        %v2062 = vcombine.high %v2054, %v2054
        %v2063 = vcombine.high %v2061, %v2061
        %v2065 = vunpack.c.l.s4 1966171168
        %v2066 = vunpack.c.0.s8 %v2065
        %v2067 = vlaneseq
        %v2068 = vshrl.u32 %v2067, 7
        %v2069 = vsub.s32 %v2066, %v2068
        %v2070 = vrot.slane %v2054, %v2069
        %v2072 = vunpack.c.l.s4 1966171168
        %v2073 = vunpack.c.0.s8 %v2072
        %v2074 = vlaneseq
        %v2075 = vshrl.u32 %v2074, 7
        %v2076 = vsub.s32 %v2073, %v2075
        %v2077 = vrot.slane %v2061, %v2076
        %v2079 = vunpack.c.l.s4 1966171168
        %v2080 = vunpack.c.0.s8 %v2079
        %v2081 = vlaneseq
        %v2082 = vshrl.u32 %v2081, 7
        %v2083 = vsub.s32 %v2080, %v2082
        %v2084 = vrot.slane %v2062, %v2083
        %v2086 = vunpack.c.l.s4 1966171168
        %v2087 = vunpack.c.0.s8 %v2086
        %v2088 = vlaneseq
        %v2089 = vshrl.u32 %v2088, 7
        %v2090 = vsub.s32 %v2087, %v2089
        %v2091 = vrot.slane %v2063, %v2090
        %v2092 = vcombine.high %v2070, %v2070
        %v2093 = vcombine.high %v2077, %v2077
        %v2094 = vcombine.high %v2084, %v2084
        %v2095 = vcombine.high %v2091, %v2091
        %v2096 = vcombine.high %v236, %v236
        %v2098 = vunpack.c.l.s4 1966171168
        %v2099 = vunpack.c.0.s8 %v2098
        %v2100 = vlaneseq
        %v2101 = vshrl.u32 %v2100, 7
        %v2102 = vsub.s32 %v2099, %v2101
        %v2103 = vrot.slane %v236, %v2102
        %v2105 = vunpack.c.l.s4 1966171168
        %v2106 = vunpack.c.0.s8 %v2105
        %v2107 = vlaneseq
        %v2108 = vshrl.u32 %v2107, 7
        %v2109 = vsub.s32 %v2106, %v2108
        %v2110 = vrot.slane %v2096, %v2109
        %v2111 = vcombine.high %v2103, %v2103
        %v2112 = vcombine.high %v2110, %v2110
        %v2114 = vunpack.c.l.s4 1966171168
        %v2115 = vunpack.c.0.s8 %v2114
        %v2116 = vlaneseq
        %v2117 = vshrl.u32 %v2116, 7
        %v2118 = vsub.s32 %v2115, %v2117
        %v2119 = vrot.slane %v2103, %v2118
        %v2121 = vunpack.c.l.s4 1966171168
        %v2122 = vunpack.c.0.s8 %v2121
        %v2123 = vlaneseq
        %v2124 = vshrl.u32 %v2123, 7
        %v2125 = vsub.s32 %v2122, %v2124
        %v2126 = vrot.slane %v2110, %v2125
        %v2128 = vunpack.c.l.s4 1966171168
        %v2129 = vunpack.c.0.s8 %v2128
        %v2130 = vlaneseq
        %v2131 = vshrl.u32 %v2130, 7
        %v2132 = vsub.s32 %v2129, %v2131
        %v2133 = vrot.slane %v2111, %v2132
        %v2135 = vunpack.c.l.s4 1966171168
        %v2136 = vunpack.c.0.s8 %v2135
        %v2137 = vlaneseq
        %v2138 = vshrl.u32 %v2137, 7
        %v2139 = vsub.s32 %v2136, %v2138
        %v2140 = vrot.slane %v2112, %v2139
        %v2141 = vcombine.high %v2119, %v2119
        %v2142 = vcombine.high %v2126, %v2126
        %v2143 = vcombine.high %v2133, %v2133
        %v2144 = vcombine.high %v2140, %v2140
        %v2145 = vcombine.high %v237, %v237
        %v2147 = vunpack.c.l.s4 1966171168
        %v2148 = vunpack.c.0.s8 %v2147
        %v2149 = vlaneseq
        %v2150 = vshrl.u32 %v2149, 7
        %v2151 = vsub.s32 %v2148, %v2150
        %v2152 = vrot.slane %v237, %v2151
        %v2154 = vunpack.c.l.s4 1966171168
        %v2155 = vunpack.c.0.s8 %v2154
        %v2156 = vlaneseq
        %v2157 = vshrl.u32 %v2156, 7
        %v2158 = vsub.s32 %v2155, %v2157
        %v2159 = vrot.slane %v2145, %v2158
        %v2160 = vcombine.high %v2152, %v2152
        %v2161 = vcombine.high %v2159, %v2159
        %v2163 = vunpack.c.l.s4 1966171168
        %v2164 = vunpack.c.0.s8 %v2163
        %v2165 = vlaneseq
        %v2166 = vshrl.u32 %v2165, 7
        %v2167 = vsub.s32 %v2164, %v2166
        %v2168 = vrot.slane %v2152, %v2167
        %v2170 = vunpack.c.l.s4 1966171168
        %v2171 = vunpack.c.0.s8 %v2170
        %v2172 = vlaneseq
        %v2173 = vshrl.u32 %v2172, 7
        %v2174 = vsub.s32 %v2171, %v2173
        %v2175 = vrot.slane %v2159, %v2174
        %v2177 = vunpack.c.l.s4 1966171168
        %v2178 = vunpack.c.0.s8 %v2177
        %v2179 = vlaneseq
        %v2180 = vshrl.u32 %v2179, 7
        %v2181 = vsub.s32 %v2178, %v2180
        %v2182 = vrot.slane %v2160, %v2181
        %v2184 = vunpack.c.l.s4 1966171168
        %v2185 = vunpack.c.0.s8 %v2184
        %v2186 = vlaneseq
        %v2187 = vshrl.u32 %v2186, 7
        %v2188 = vsub.s32 %v2185, %v2187
        %v2189 = vrot.slane %v2161, %v2188
        %v2190 = vcombine.high %v2168, %v2168
        %v2191 = vcombine.high %v2175, %v2175
        %v2192 = vcombine.high %v2182, %v2182
        %v2193 = vcombine.high %v2189, %v2189
        %v2194 = vcombine.high %v238, %v238
        %v2196 = vunpack.c.l.s4 1966171168
        %v2197 = vunpack.c.0.s8 %v2196
        %v2198 = vlaneseq
        %v2199 = vshrl.u32 %v2198, 7
        %v2200 = vsub.s32 %v2197, %v2199
        %v2201 = vrot.slane %v238, %v2200
        %v2203 = vunpack.c.l.s4 1966171168
        %v2204 = vunpack.c.0.s8 %v2203
        %v2205 = vlaneseq
        %v2206 = vshrl.u32 %v2205, 7
        %v2207 = vsub.s32 %v2204, %v2206
        %v2208 = vrot.slane %v2194, %v2207
        %v2209 = vcombine.high %v2201, %v2201
        %v2210 = vcombine.high %v2208, %v2208
        %v2212 = vunpack.c.l.s4 1966171168
        %v2213 = vunpack.c.0.s8 %v2212
        %v2214 = vlaneseq
        %v2215 = vshrl.u32 %v2214, 7
        %v2216 = vsub.s32 %v2213, %v2215
        %v2217 = vrot.slane %v2201, %v2216
        %v2219 = vunpack.c.l.s4 1966171168
        %v2220 = vunpack.c.0.s8 %v2219
        %v2221 = vlaneseq
        %v2222 = vshrl.u32 %v2221, 7
        %v2223 = vsub.s32 %v2220, %v2222
        %v2224 = vrot.slane %v2208, %v2223
        %v2226 = vunpack.c.l.s4 1966171168
        %v2227 = vunpack.c.0.s8 %v2226
        %v2228 = vlaneseq
        %v2229 = vshrl.u32 %v2228, 7
        %v2230 = vsub.s32 %v2227, %v2229
        %v2231 = vrot.slane %v2209, %v2230
        %v2233 = vunpack.c.l.s4 1966171168
        %v2234 = vunpack.c.0.s8 %v2233
        %v2235 = vlaneseq
        %v2236 = vshrl.u32 %v2235, 7
        %v2237 = vsub.s32 %v2234, %v2236
        %v2238 = vrot.slane %v2210, %v2237
        %v2239 = vcombine.high %v2217, %v2217
        %v2240 = vcombine.high %v2224, %v2224
        %v2241 = vcombine.high %v2231, %v2231
        %v2242 = vcombine.high %v2238, %v2238
        %v2243 = vcombine.high %v239, %v239
        %v2245 = vunpack.c.l.s4 1966171168
        %v2246 = vunpack.c.0.s8 %v2245
        %v2247 = vlaneseq
        %v2248 = vshrl.u32 %v2247, 7
        %v2249 = vsub.s32 %v2246, %v2248
        %v2250 = vrot.slane %v239, %v2249
        %v2252 = vunpack.c.l.s4 1966171168
        %v2253 = vunpack.c.0.s8 %v2252
        %v2254 = vlaneseq
        %v2255 = vshrl.u32 %v2254, 7
        %v2256 = vsub.s32 %v2253, %v2255
        %v2257 = vrot.slane %v2243, %v2256
        %v2258 = vcombine.high %v2250, %v2250
        %v2259 = vcombine.high %v2257, %v2257
        %v2261 = vunpack.c.l.s4 1966171168
        %v2262 = vunpack.c.0.s8 %v2261
        %v2263 = vlaneseq
        %v2264 = vshrl.u32 %v2263, 7
        %v2265 = vsub.s32 %v2262, %v2264
        %v2266 = vrot.slane %v2250, %v2265
        %v2268 = vunpack.c.l.s4 1966171168
        %v2269 = vunpack.c.0.s8 %v2268
        %v2270 = vlaneseq
        %v2271 = vshrl.u32 %v2270, 7
        %v2272 = vsub.s32 %v2269, %v2271
        %v2273 = vrot.slane %v2257, %v2272
        %v2275 = vunpack.c.l.s4 1966171168
        %v2276 = vunpack.c.0.s8 %v2275
        %v2277 = vlaneseq
        %v2278 = vshrl.u32 %v2277, 7
        %v2279 = vsub.s32 %v2276, %v2278
        %v2280 = vrot.slane %v2258, %v2279
        %v2282 = vunpack.c.l.s4 1966171168
        %v2283 = vunpack.c.0.s8 %v2282
        %v2284 = vlaneseq
        %v2285 = vshrl.u32 %v2284, 7
        %v2286 = vsub.s32 %v2283, %v2285
        %v2287 = vrot.slane %v2259, %v2286
        %v2288 = vcombine.high %v2266, %v2266
        %v2289 = vcombine.high %v2273, %v2273
        %v2290 = vcombine.high %v2280, %v2280
        %v2291 = vcombine.high %v2287, %v2287
        %v2292 = vcombine.high %v240, %v240
        %v2294 = vunpack.c.l.s4 1966171168
        %v2295 = vunpack.c.0.s8 %v2294
        %v2296 = vlaneseq
        %v2297 = vshrl.u32 %v2296, 7
        %v2298 = vsub.s32 %v2295, %v2297
        %v2299 = vrot.slane %v240, %v2298
        %v2301 = vunpack.c.l.s4 1966171168
        %v2302 = vunpack.c.0.s8 %v2301
        %v2303 = vlaneseq
        %v2304 = vshrl.u32 %v2303, 7
        %v2305 = vsub.s32 %v2302, %v2304
        %v2306 = vrot.slane %v2292, %v2305
        %v2307 = vcombine.high %v2299, %v2299
        %v2308 = vcombine.high %v2306, %v2306
        %v2310 = vunpack.c.l.s4 1966171168
        %v2311 = vunpack.c.0.s8 %v2310
        %v2312 = vlaneseq
        %v2313 = vshrl.u32 %v2312, 7
        %v2314 = vsub.s32 %v2311, %v2313
        %v2315 = vrot.slane %v2299, %v2314
        %v2317 = vunpack.c.l.s4 1966171168
        %v2318 = vunpack.c.0.s8 %v2317
        %v2319 = vlaneseq
        %v2320 = vshrl.u32 %v2319, 7
        %v2321 = vsub.s32 %v2318, %v2320
        %v2322 = vrot.slane %v2306, %v2321
        %v2324 = vunpack.c.l.s4 1966171168
        %v2325 = vunpack.c.0.s8 %v2324
        %v2326 = vlaneseq
        %v2327 = vshrl.u32 %v2326, 7
        %v2328 = vsub.s32 %v2325, %v2327
        %v2329 = vrot.slane %v2307, %v2328
        %v2331 = vunpack.c.l.s4 1966171168
        %v2332 = vunpack.c.0.s8 %v2331
        %v2333 = vlaneseq
        %v2334 = vshrl.u32 %v2333, 7
        %v2335 = vsub.s32 %v2332, %v2334
        %v2336 = vrot.slane %v2308, %v2335
        %v2337 = vcombine.high %v2315, %v2315
        %v2338 = vcombine.high %v2322, %v2322
        %v2339 = vcombine.high %v2329, %v2329
        %v2340 = vcombine.high %v2336, %v2336
        %v2341 = vcombine.high %v241, %v241
        %v2343 = vunpack.c.l.s4 1966171168
        %v2344 = vunpack.c.0.s8 %v2343
        %v2345 = vlaneseq
        %v2346 = vshrl.u32 %v2345, 7
        %v2347 = vsub.s32 %v2344, %v2346
        %v2348 = vrot.slane %v241, %v2347
        %v2350 = vunpack.c.l.s4 1966171168
        %v2351 = vunpack.c.0.s8 %v2350
        %v2352 = vlaneseq
        %v2353 = vshrl.u32 %v2352, 7
        %v2354 = vsub.s32 %v2351, %v2353
        %v2355 = vrot.slane %v2341, %v2354
        %v2356 = vcombine.high %v2348, %v2348
        %v2357 = vcombine.high %v2355, %v2355
        %v2359 = vunpack.c.l.s4 1966171168
        %v2360 = vunpack.c.0.s8 %v2359
        %v2361 = vlaneseq
        %v2362 = vshrl.u32 %v2361, 7
        %v2363 = vsub.s32 %v2360, %v2362
        %v2364 = vrot.slane %v2348, %v2363
        %v2366 = vunpack.c.l.s4 1966171168
        %v2367 = vunpack.c.0.s8 %v2366
        %v2368 = vlaneseq
        %v2369 = vshrl.u32 %v2368, 7
        %v2370 = vsub.s32 %v2367, %v2369
        %v2371 = vrot.slane %v2355, %v2370
        %v2373 = vunpack.c.l.s4 1966171168
        %v2374 = vunpack.c.0.s8 %v2373
        %v2375 = vlaneseq
        %v2376 = vshrl.u32 %v2375, 7
        %v2377 = vsub.s32 %v2374, %v2376
        %v2378 = vrot.slane %v2356, %v2377
        %v2380 = vunpack.c.l.s4 1966171168
        %v2381 = vunpack.c.0.s8 %v2380
        %v2382 = vlaneseq
        %v2383 = vshrl.u32 %v2382, 7
        %v2384 = vsub.s32 %v2381, %v2383
        %v2385 = vrot.slane %v2357, %v2384
        %v2386 = vcombine.high %v2364, %v2364
        %v2387 = vcombine.high %v2371, %v2371
        %v2388 = vcombine.high %v2378, %v2378
        %v2389 = vcombine.high %v2385, %v2385
        %v4022 = vunpack.c.l.b16 %v242
        %v4023 = vunpack.c.h.b16 %v242
        %v4024 = vunpack.c.l.b16 %v243
        %v4025 = vunpack.c.h.b16 %v243
        %v4026 = vunpack.c.l.b16 %v244
        %v4027 = vunpack.c.h.b16 %v244
        %v4028 = vunpack.c.l.b16 %v245
        %v4029 = vunpack.c.h.b16 %v245
        %v4030 = vunpack.c.l.b16 %v246
        %v4031 = vunpack.c.h.b16 %v246
        %v4032 = vunpack.c.l.b16 %v247
        %v4033 = vunpack.c.h.b16 %v247
        %v4034 = vunpack.c.l.b16 %v248
        %v4035 = vunpack.c.h.b16 %v248
        %v4036 = vunpack.c.l.b16 %v249
        %v4037 = vunpack.c.h.b16 %v249
        %v4038 = vunpack.c.l.b16 %v250
        %v4039 = vunpack.c.h.b16 %v250
        %v4040 = vunpack.c.l.b16 %v251
        %v4041 = vunpack.c.h.b16 %v251
        %v4042 = vunpack.c.l.b16 %v252
        %v4043 = vunpack.c.h.b16 %v252
        %v4044 = vunpack.c.l.b16 %v253
        %v4045 = vunpack.c.h.b16 %v253
        %v4046 = vunpack.c.l.b16 %v254
        %v4047 = vunpack.c.h.b16 %v254
        %v4048 = vunpack.c.l.b16 %v255
        %v4049 = vunpack.c.h.b16 %v255
        %v4050 = vunpack.c.l.b16 %v256
        %v4051 = vunpack.c.h.b16 %v256
        %v4052 = vunpack.c.l.b16 %v257
        %v4053 = vunpack.c.h.b16 %v257
        %v4054 = vunpack.c.l.b16 %v258
        %v4055 = vunpack.c.h.b16 %v258
        %v4056 = vunpack.c.l.b16 %v259
        %v4057 = vunpack.c.h.b16 %v259
        %v4058 = vunpack.c.l.b16 %v260
        %v4059 = vunpack.c.h.b16 %v260
        %v4060 = vunpack.c.l.b16 %v261
        %v4061 = vunpack.c.h.b16 %v261
        %v4062 = vunpack.c.l.b16 %v262
        %v4063 = vunpack.c.h.b16 %v262
        %v4064 = vunpack.c.l.b16 %v263
        %v4065 = vunpack.c.h.b16 %v263
        %v4066 = vunpack.c.l.b16 %v264
        %v4067 = vunpack.c.h.b16 %v264
        %v4068 = vunpack.c.l.b16 %v265
        %v4069 = vunpack.c.h.b16 %v265
        %v4070 = vunpack.c.l.b16 %v266
        %v4071 = vunpack.c.h.b16 %v266
        %v4072 = vunpack.c.l.b16 %v267
        %v4073 = vunpack.c.h.b16 %v267
        %v4074 = vunpack.c.l.b16 %v268
        %v4075 = vunpack.c.h.b16 %v268
        %v4076 = vunpack.c.l.b16 %v269
        %v4077 = vunpack.c.h.b16 %v269
        %v4078 = vunpack.c.l.b16 %v270
        %v4079 = vunpack.c.h.b16 %v270
        %v4080 = vunpack.c.l.b16 %v271
        %v4081 = vunpack.c.h.b16 %v271
        %v4082 = vunpack.c.l.b16 %v272
        %v4083 = vunpack.c.h.b16 %v272
        %v4084 = vunpack.c.l.b16 %v273
        %v4085 = vunpack.c.h.b16 %v273
        %v4086 = vunpack.c.l.b16 %v274
        %v4087 = vunpack.c.h.b16 %v274
        %v4088 = vunpack.c.l.b16 %v275
        %v4089 = vunpack.c.h.b16 %v275
        %v4090 = vunpack.c.l.b16 %v276
        %v4091 = vunpack.c.h.b16 %v276
        %v4092 = vunpack.c.l.b16 %v277
        %v4093 = vunpack.c.h.b16 %v277
        %v4094 = vunpack.c.l.b16 %v278
        %v4095 = vunpack.c.h.b16 %v278
        %v4096 = vunpack.c.l.b16 %v279
        %v4097 = vunpack.c.h.b16 %v279
        %v4098 = vunpack.c.l.b16 %v280
        %v4099 = vunpack.c.h.b16 %v280
        %v4100 = vunpack.c.l.b16 %v281
        %v4101 = vunpack.c.h.b16 %v281
        %v4102 = vunpack.c.l.b16 %v282
        %v4103 = vunpack.c.h.b16 %v282
        %v4104 = vunpack.c.l.b16 %v283
        %v4105 = vunpack.c.h.b16 %v283
        %v4106 = vunpack.c.l.b16 %v284
        %v4107 = vunpack.c.h.b16 %v284
        %v4108 = vunpack.c.l.b16 %v285
        %v4109 = vunpack.c.h.b16 %v285
        %v4110 = vunpack.c.l.b16 %v286
        %v4111 = vunpack.c.h.b16 %v286
        %v4112 = vunpack.c.l.b16 %v287
        %v4113 = vunpack.c.h.b16 %v287
        %v4114 = vunpack.c.l.b16 %v288
        %v4115 = vunpack.c.h.b16 %v288
        %v4116 = vunpack.c.l.b16 %v289
        %v4117 = vunpack.c.h.b16 %v289
        %v4118 = vunpack.c.l.b16 %v290
        %v4119 = vunpack.c.h.b16 %v290
        %v4120 = vunpack.c.l.b16 %v291
        %v4121 = vunpack.c.h.b16 %v291
        %v4122 = vunpack.c.l.b16 %v292
        %v4123 = vunpack.c.h.b16 %v292
        %v4124 = vunpack.c.l.b16 %v293
        %v4125 = vunpack.c.h.b16 %v293
        %v4126 = vunpack.c.l.b16 %v294
        %v4127 = vunpack.c.h.b16 %v294
        %v4128 = vunpack.c.l.b16 %v295
        %v4129 = vunpack.c.h.b16 %v295
        %v4130 = vunpack.c.l.b16 %v296
        %v4131 = vunpack.c.h.b16 %v296
        %v4132 = vunpack.c.l.b16 %v297
        %v4133 = vunpack.c.h.b16 %v297
        %v4134 = vunpack.c.l.b16 %v298
        %v4135 = vunpack.c.h.b16 %v298
        %v4136 = vunpack.c.l.b16 %v299
        %v4137 = vunpack.c.h.b16 %v299
        %v4138 = vunpack.c.l.b16 %v300
        %v4139 = vunpack.c.h.b16 %v300
        %v4140 = vunpack.c.l.b16 %v301
        %v4141 = vunpack.c.h.b16 %v301
        %v4142 = vunpack.c.l.b16 %v302
        %v4143 = vunpack.c.h.b16 %v302
        %v4144 = vunpack.c.l.b16 %v303
        %v4145 = vunpack.c.h.b16 %v303
        %v4146 = vunpack.c.l.b16 %v304
        %v4147 = vunpack.c.h.b16 %v304
        %v4148 = vunpack.c.l.b16 %v305
        %v4149 = vunpack.c.h.b16 %v305
        %v4150 = vunpack.c.l.b16 %v306
        %v4151 = vunpack.c.h.b16 %v306
        %v4152 = vunpack.c.l.b16 %v307
        %v4153 = vunpack.c.h.b16 %v307
        %v4154 = vunpack.c.l.b16 %v308
        %v4155 = vunpack.c.h.b16 %v308
        %v4156 = vunpack.c.l.b16 %v309
        %v4157 = vunpack.c.h.b16 %v309
        %v4158 = vunpack.c.l.b16 %v310
        %v4159 = vunpack.c.h.b16 %v310
        %v4160 = vunpack.c.l.b16 %v311
        %v4161 = vunpack.c.h.b16 %v311
        %v4162 = vunpack.c.l.b16 %v312
        %v4163 = vunpack.c.h.b16 %v312
        %v4164 = vunpack.c.l.b16 %v313
        %v4165 = vunpack.c.h.b16 %v313
        %v4166 = vunpack.c.l.b16 %v314
        %v4167 = vunpack.c.h.b16 %v314
        %v4168 = vunpack.c.l.b16 %v315
        %v4169 = vunpack.c.h.b16 %v315
        %v4170 = vunpack.c.l.b16 %v316
        %v4171 = vunpack.c.h.b16 %v316
        %v4172 = vunpack.c.l.b16 %v317
        %v4173 = vunpack.c.h.b16 %v317
        %v4174 = vunpack.c.l.b16 %v318
        %v4175 = vunpack.c.h.b16 %v318
        %v4176 = vunpack.c.l.b16 %v319
        %v4177 = vunpack.c.h.b16 %v319
        %v4178 = vunpack.c.l.b16 %v320
        %v4179 = vunpack.c.h.b16 %v320
        %v4180 = vunpack.c.l.b16 %v321
        %v4181 = vunpack.c.h.b16 %v321
        %v4182 = vunpack.c.l.b16 %v322
        %v4183 = vunpack.c.h.b16 %v322
        %v4184 = vunpack.c.l.b16 %v323
        %v4185 = vunpack.c.h.b16 %v323
        %v4186 = vunpack.c.l.b16 %v324
        %v4187 = vunpack.c.h.b16 %v324
        %v4188 = vunpack.c.l.b16 %v325
        %v4189 = vunpack.c.h.b16 %v325
        %v4190 = vunpack.c.l.b16 %v326
        %v4191 = vunpack.c.h.b16 %v326
        %v4192 = vunpack.c.l.b16 %v327
        %v4193 = vunpack.c.h.b16 %v327
        %v4194 = vunpack.c.l.b16 %v328
        %v4195 = vunpack.c.h.b16 %v328
        %v4196 = vunpack.c.l.b16 %v329
        %v4197 = vunpack.c.h.b16 %v329
        %v4198 = vunpack.c.l.b16 %v330
        %v4199 = vunpack.c.h.b16 %v330
        %v4200 = vunpack.c.l.b16 %v331
        %v4201 = vunpack.c.h.b16 %v331
        %v4202 = vunpack.c.l.b16 %v332
        %v4203 = vunpack.c.h.b16 %v332
        %v4204 = vunpack.c.l.b16 %v333
        %v4205 = vunpack.c.h.b16 %v333
        %v4206 = vunpack.c.l.b16 %v334
        %v4207 = vunpack.c.h.b16 %v334
        %v4208 = vunpack.c.l.b16 %v335
        %v4209 = vunpack.c.h.b16 %v335
        %v4210 = vunpack.c.l.b16 %v336
        %v4211 = vunpack.c.h.b16 %v336
        %v4212 = vunpack.c.l.b16 %v337
        %v4213 = vunpack.c.h.b16 %v337
        %v4214 = vunpack.c.l.b16 %v338
        %v4215 = vunpack.c.h.b16 %v338
        %v4216 = vunpack.c.l.b16 %v339
        %v4217 = vunpack.c.h.b16 %v339
        %v4218 = vunpack.c.l.b16 %v340
        %v4219 = vunpack.c.h.b16 %v340
        %v4220 = vunpack.c.l.b16 %v341
        %v4221 = vunpack.c.h.b16 %v341
        %v4222 = vunpack.c.l.b16 %v342
        %v4223 = vunpack.c.h.b16 %v342
        %v4224 = vunpack.c.l.b16 %v343
        %v4225 = vunpack.c.h.b16 %v343
        %v4226 = vunpack.c.l.b16 %v344
        %v4227 = vunpack.c.h.b16 %v344
        %v4228 = vunpack.c.l.b16 %v345
        %v4229 = vunpack.c.h.b16 %v345
        %v4230 = vunpack.c.l.b16 %v346
        %v4231 = vunpack.c.h.b16 %v346
        %v4232 = vunpack.c.l.b16 %v347
        %v4233 = vunpack.c.h.b16 %v347
        %v4234 = vunpack.c.l.b16 %v348
        %v4235 = vunpack.c.h.b16 %v348
        %v4236 = vunpack.c.l.b16 %v349
        %v4237 = vunpack.c.h.b16 %v349
        %v4238 = vunpack.c.l.b16 %v350
        %v4239 = vunpack.c.h.b16 %v350
        %v4240 = vunpack.c.l.b16 %v351
        %v4241 = vunpack.c.h.b16 %v351
        %v4242 = vunpack.c.l.b16 %v352
        %v4243 = vunpack.c.h.b16 %v352
        %v4244 = vunpack.c.l.b16 %v353
        %v4245 = vunpack.c.h.b16 %v353
        %v4246 = vunpack.c.l.b16 %v354
        %v4247 = vunpack.c.h.b16 %v354
        %v4248 = vunpack.c.l.b16 %v355
        %v4249 = vunpack.c.h.b16 %v355
        %v4250 = vunpack.c.l.b16 %v356
        %v4251 = vunpack.c.h.b16 %v356
        %v4252 = vunpack.c.l.b16 %v357
        %v4253 = vunpack.c.h.b16 %v357
        %v4254 = vunpack.c.l.b16 %v358
        %v4255 = vunpack.c.h.b16 %v358
        %v4256 = vunpack.c.l.b16 %v359
        %v4257 = vunpack.c.h.b16 %v359
        %v4258 = vunpack.c.l.b16 %v360
        %v4259 = vunpack.c.h.b16 %v360
        %v4260 = vunpack.c.l.b16 %v361
        %v4261 = vunpack.c.h.b16 %v361
        %v4262 = vunpack.c.l.b16 %v362
        %v4263 = vunpack.c.h.b16 %v362
        %v4264 = vunpack.c.l.b16 %v363
        %v4265 = vunpack.c.h.b16 %v363
        %v4266 = vunpack.c.l.b16 %v364
        %v4267 = vunpack.c.h.b16 %v364
        %v4268 = vunpack.c.l.b16 %v365
        %v4269 = vunpack.c.h.b16 %v365
        %v4270 = vunpack.c.l.b16 %v366
        %v4271 = vunpack.c.h.b16 %v366
        %v4272 = vunpack.c.l.b16 %v367
        %v4273 = vunpack.c.h.b16 %v367
        %v4274 = vunpack.c.l.b16 %v368
        %v4275 = vunpack.c.h.b16 %v368
        %v4276 = vunpack.c.l.b16 %v369
        %v4277 = vunpack.c.h.b16 %v369
        %v4278 = vunpack.c.l.b16 %v370
        %v4279 = vunpack.c.h.b16 %v370
        %v4280 = vunpack.c.l.b16 %v371
        %v4281 = vunpack.c.h.b16 %v371
        %v4282 = vunpack.c.l.b16 %v372
        %v4283 = vunpack.c.h.b16 %v372
        %v4284 = vunpack.c.l.b16 %v373
        %v4285 = vunpack.c.h.b16 %v373
        %v4286 = vunpack.c.l.b16 %v374
        %v4287 = vunpack.c.h.b16 %v374
        %v4288 = vunpack.c.l.b16 %v375
        %v4289 = vunpack.c.h.b16 %v375
        %v4290 = vunpack.c.l.b16 %v376
        %v4291 = vunpack.c.h.b16 %v376
        %v4292 = vunpack.c.l.b16 %v377
        %v4293 = vunpack.c.h.b16 %v377
        %v4294 = vunpack.c.l.b16 %v378
        %v4295 = vunpack.c.h.b16 %v378
        %v4296 = vunpack.c.l.b16 %v379
        %v4297 = vunpack.c.h.b16 %v379
        %v4298 = vunpack.c.l.b16 %v380
        %v4299 = vunpack.c.h.b16 %v380
        %v4300 = vunpack.c.l.b16 %v381
        %v4301 = vunpack.c.h.b16 %v381
        %v4302 = vunpack.c.l.b16 %v382
        %v4303 = vunpack.c.h.b16 %v382
        %v4304 = vunpack.c.l.b16 %v383
        %v4305 = vunpack.c.h.b16 %v383
        %v4306 = vunpack.c.l.b16 %v384
        %v4307 = vunpack.c.h.b16 %v384
        %v4308 = vunpack.c.l.b16 %v385
        %v4309 = vunpack.c.h.b16 %v385
        %v4310 = vunpack.c.l.b16 %v386
        %v4311 = vunpack.c.h.b16 %v386
        %v4312 = vunpack.c.l.b16 %v387
        %v4313 = vunpack.c.h.b16 %v387
        %v4314 = vunpack.c.l.b16 %v388
        %v4315 = vunpack.c.h.b16 %v388
        %v4316 = vunpack.c.l.b16 %v389
        %v4317 = vunpack.c.h.b16 %v389
        %v4318 = vunpack.c.l.b16 %v390
        %v4319 = vunpack.c.h.b16 %v390
        %v4320 = vunpack.c.l.b16 %v391
        %v4321 = vunpack.c.h.b16 %v391
        %v4322 = vunpack.c.l.b16 %v392
        %v4323 = vunpack.c.h.b16 %v392
        %v4324 = vunpack.c.l.b16 %v393
        %v4325 = vunpack.c.h.b16 %v393
        %v4326 = vunpack.c.l.b16 %v394
        %v4327 = vunpack.c.h.b16 %v394
        %v4328 = vunpack.c.l.b16 %v395
        %v4329 = vunpack.c.h.b16 %v395
        %v4330 = vunpack.c.l.b16 %v396
        %v4331 = vunpack.c.h.b16 %v396
        %v4332 = vunpack.c.l.b16 %v397
        %v4333 = vunpack.c.h.b16 %v397
        %v4334 = vunpack.c.l.b16 %v398
        %v4335 = vunpack.c.h.b16 %v398
        %v4336 = vunpack.c.l.b16 %v399
        %v4337 = vunpack.c.h.b16 %v399
        %v4338 = vunpack.c.l.b16 %v400
        %v4339 = vunpack.c.h.b16 %v400
        %v4340 = vunpack.c.l.b16 %v401
        %v4341 = vunpack.c.h.b16 %v401
        %v4342 = vunpack.c.l.b16 %v402
        %v4343 = vunpack.c.h.b16 %v402
        %v4344 = vunpack.c.l.b16 %v403
        %v4345 = vunpack.c.h.b16 %v403
        %v4346 = vunpack.c.l.b16 %v404
        %v4347 = vunpack.c.h.b16 %v404
        %v4348 = vunpack.c.l.b16 %v405
        %v4349 = vunpack.c.h.b16 %v405
        %v4350 = vunpack.c.l.b16 %v406
        %v4351 = vunpack.c.h.b16 %v406
        %v4352 = vunpack.c.l.b16 %v407
        %v4353 = vunpack.c.h.b16 %v407
        %v4354 = vunpack.c.l.b16 %v408
        %v4355 = vunpack.c.h.b16 %v408
        %v4356 = vunpack.c.l.b16 %v409
        %v4357 = vunpack.c.h.b16 %v409
        %v4358 = vunpack.c.l.b16 %v410
        %v4359 = vunpack.c.h.b16 %v410
        %v4360 = vunpack.c.l.b16 %v411
        %v4361 = vunpack.c.h.b16 %v411
        %v4362 = vunpack.c.l.b16 %v412
        %v4363 = vunpack.c.h.b16 %v412
        %v4364 = vunpack.c.l.b16 %v413
        %v4365 = vunpack.c.h.b16 %v413
        %v4366 = vunpack.c.l.b16 %v414
        %v4367 = vunpack.c.h.b16 %v414
        %v4368 = vunpack.c.l.b16 %v415
        %v4369 = vunpack.c.h.b16 %v415
        %v4370 = vunpack.c.l.b16 %v416
        %v4371 = vunpack.c.h.b16 %v416
        %v4372 = vunpack.c.l.b16 %v417
        %v4373 = vunpack.c.h.b16 %v417
        %v4374 = vunpack.c.l.b16 %v418
        %v4375 = vunpack.c.h.b16 %v418
        %v4376 = vunpack.c.l.b16 %v419
        %v4377 = vunpack.c.h.b16 %v419
        %v4378 = vunpack.c.l.b16 %v420
        %v4379 = vunpack.c.h.b16 %v420
        %v4380 = vunpack.c.l.b16 %v421
        %v4381 = vunpack.c.h.b16 %v421
        %v4382 = vunpack.c.l.b16 %v422
        %v4383 = vunpack.c.h.b16 %v422
        %v4384 = vunpack.c.l.b16 %v423
        %v4385 = vunpack.c.h.b16 %v423
        %v4386 = vunpack.c.l.b16 %v424
        %v4387 = vunpack.c.h.b16 %v424
        %v4388 = vunpack.c.l.b16 %v425
        %v4389 = vunpack.c.h.b16 %v425
        %v4390 = vunpack.c.l.b16 %v426
        %v4391 = vunpack.c.h.b16 %v426
        %v4392 = vunpack.c.l.b16 %v427
        %v4393 = vunpack.c.h.b16 %v427
        %v4394 = vunpack.c.l.b16 %v428
        %v4395 = vunpack.c.h.b16 %v428
        %v4396 = vunpack.c.l.b16 %v429
        %v4397 = vunpack.c.h.b16 %v429
        %v4398 = vunpack.c.l.b16 %v430
        %v4399 = vunpack.c.h.b16 %v430
        %v4400 = vunpack.c.l.b16 %v431
        %v4401 = vunpack.c.h.b16 %v431
        %v4402 = vunpack.c.l.b16 %v432
        %v4403 = vunpack.c.h.b16 %v432
        %v4404 = vunpack.c.l.b16 %v433
        %v4405 = vunpack.c.h.b16 %v433
        %v4406 = vunpack.c.l.b16 %v434
        %v4407 = vunpack.c.h.b16 %v434
        %v4408 = vunpack.c.l.b16 %v435
        %v4409 = vunpack.c.h.b16 %v435
        %v4410 = vunpack.c.l.b16 %v436
        %v4411 = vunpack.c.h.b16 %v436
        %v4412 = vunpack.c.l.b16 %v437
        %v4413 = vunpack.c.h.b16 %v437
        %v4414 = vunpack.c.l.b16 %v438
        %v4415 = vunpack.c.h.b16 %v438
        %v4416 = vunpack.c.l.b16 %v439
        %v4417 = vunpack.c.h.b16 %v439
        %v4418 = vunpack.c.l.b16 %v440
        %v4419 = vunpack.c.h.b16 %v440
        %v4420 = vunpack.c.l.b16 %v441
        %v4421 = vunpack.c.h.b16 %v441
        %v4422 = vunpack.c.l.b16 %v442
        %v4423 = vunpack.c.h.b16 %v442
        %v4424 = vunpack.c.l.b16 %v443
        %v4425 = vunpack.c.h.b16 %v443
        %v4426 = vunpack.c.l.b16 %v444
        %v4427 = vunpack.c.h.b16 %v444
        %v4428 = vunpack.c.l.b16 %v445
        %v4429 = vunpack.c.h.b16 %v445
        %v4430 = vunpack.c.l.b16 %v446
        %v4431 = vunpack.c.h.b16 %v446
        %v4432 = vunpack.c.l.b16 %v447
        %v4433 = vunpack.c.h.b16 %v447
        %v4434 = vunpack.c.l.b16 %v448
        %v4435 = vunpack.c.h.b16 %v448
        %v4436 = vunpack.c.l.b16 %v449
        %v4437 = vunpack.c.h.b16 %v449
        %v4438 = vunpack.c.l.b16 %v450
        %v4439 = vunpack.c.h.b16 %v450
        %v4440 = vunpack.c.l.b16 %v451
        %v4441 = vunpack.c.h.b16 %v451
        %v4442 = vunpack.c.l.b16 %v452
        %v4443 = vunpack.c.h.b16 %v452
        %v4444 = vunpack.c.l.b16 %v453
        %v4445 = vunpack.c.h.b16 %v453
        %v4446 = vunpack.c.l.b16 %v454
        %v4447 = vunpack.c.h.b16 %v454
        %v4448 = vunpack.c.l.b16 %v455
        %v4449 = vunpack.c.h.b16 %v455
        %v4450 = vunpack.c.l.b16 %v456
        %v4451 = vunpack.c.h.b16 %v456
        %v4452 = vunpack.c.l.b16 %v457
        %v4453 = vunpack.c.h.b16 %v457
        %v4454 = vunpack.c.l.b16 %v458
        %v4455 = vunpack.c.h.b16 %v458
        %v4456 = vunpack.c.l.b16 %v459
        %v4457 = vunpack.c.h.b16 %v459
        %v4458 = vunpack.c.l.b16 %v460
        %v4459 = vunpack.c.h.b16 %v460
        %v4460 = vunpack.c.l.b16 %v461
        %v4461 = vunpack.c.h.b16 %v461
        %v4462 = vunpack.c.l.b16 %v462
        %v4463 = vunpack.c.h.b16 %v462
        %v4464 = vunpack.c.l.b16 %v463
        %v4465 = vunpack.c.h.b16 %v463
        %v4466 = vunpack.c.l.b16 %v464
        %v4467 = vunpack.c.h.b16 %v464
        %v4468 = vunpack.c.l.b16 %v465
        %v4469 = vunpack.c.h.b16 %v465
        %v4470 = vunpack.c.l.b16 %v466
        %v4471 = vunpack.c.h.b16 %v466
        %v4472 = vunpack.c.l.b16 %v467
        %v4473 = vunpack.c.h.b16 %v467
        %v4474 = vunpack.c.l.b16 %v468
        %v4475 = vunpack.c.h.b16 %v468
        %v4476 = vunpack.c.l.b16 %v469
        %v4477 = vunpack.c.h.b16 %v469
        %v4478 = vunpack.c.l.b16 %v470
        %v4479 = vunpack.c.h.b16 %v470
        %v4480 = vunpack.c.l.b16 %v471
        %v4481 = vunpack.c.h.b16 %v471
        %v4482 = vunpack.c.l.b16 %v472
        %v4483 = vunpack.c.h.b16 %v472
        %v4484 = vunpack.c.l.b16 %v473
        %v4485 = vunpack.c.h.b16 %v473
        %v4486 = vunpack.c.l.b16 %v474
        %v4487 = vunpack.c.h.b16 %v474
        %v4488 = vunpack.c.l.b16 %v475
        %v4489 = vunpack.c.h.b16 %v475
        %v4490 = vunpack.c.l.b16 %v476
        %v4491 = vunpack.c.h.b16 %v476
        %v4492 = vunpack.c.l.b16 %v477
        %v4493 = vunpack.c.h.b16 %v477
        %v4494 = vunpack.c.l.b16 %v478
        %v4495 = vunpack.c.h.b16 %v478
        %v4496 = vunpack.c.l.b16 %v479
        %v4497 = vunpack.c.h.b16 %v479
        %v4498 = vunpack.c.l.b16 %v480
        %v4499 = vunpack.c.h.b16 %v480
        %v4500 = vunpack.c.l.b16 %v481
        %v4501 = vunpack.c.h.b16 %v481
        %v4502 = vunpack.c.l.b16 %v482
        %v4503 = vunpack.c.h.b16 %v482
        %v4504 = vunpack.c.l.b16 %v483
        %v4505 = vunpack.c.h.b16 %v483
        %v4506 = vunpack.c.l.b16 %v484
        %v4507 = vunpack.c.h.b16 %v484
        %v4508 = vunpack.c.l.b16 %v485
        %v4509 = vunpack.c.h.b16 %v485
        %v4510 = vunpack.c.l.b16 %v486
        %v4511 = vunpack.c.h.b16 %v486
        %v4512 = vunpack.c.l.b16 %v487
        %v4513 = vunpack.c.h.b16 %v487
        %v4514 = vunpack.c.l.b16 %v488
        %v4515 = vunpack.c.h.b16 %v488
        %v4516 = vunpack.c.l.b16 %v489
        %v4517 = vunpack.c.h.b16 %v489
        %v4518 = vunpack.c.l.b16 %v490
        %v4519 = vunpack.c.h.b16 %v490
        %v4520 = vunpack.c.l.b16 %v491
        %v4521 = vunpack.c.h.b16 %v491
        %v4522 = vunpack.c.l.b16 %v492
        %v4523 = vunpack.c.h.b16 %v492
        %v4524 = vunpack.c.l.b16 %v493
        %v4525 = vunpack.c.h.b16 %v493
        %v4526 = vunpack.c.l.b16 %v494
        %v4527 = vunpack.c.h.b16 %v494
        %v4528 = vunpack.c.l.b16 %v495
        %v4529 = vunpack.c.h.b16 %v495
        %v4530 = vunpack.c.l.b16 %v496
        %v4531 = vunpack.c.h.b16 %v496
        %v4532 = vunpack.c.l.b16 %v497
        %v4533 = vunpack.c.h.b16 %v497
        %v4534 = vunpack.c.l.b16 %v498
        %v4535 = vunpack.c.h.b16 %v498
        %v4536 = vunpack.c.l.b16 %v499
        %v4537 = vunpack.c.h.b16 %v499
        %v4538 = vunpack.c.l.b16 %v500
        %v4539 = vunpack.c.h.b16 %v500
        %v4540 = vunpack.c.l.b16 %v501
        %v4541 = vunpack.c.h.b16 %v501
        %v4542 = vunpack.c.l.b16 %v502
        %v4543 = vunpack.c.h.b16 %v502
        %v4544 = vunpack.c.l.b16 %v503
        %v4545 = vunpack.c.h.b16 %v503
        %v4546 = vunpack.c.l.b16 %v504
        %v4547 = vunpack.c.h.b16 %v504
        %v4548 = vunpack.c.l.b16 %v505
        %v4549 = vunpack.c.h.b16 %v505
        %v4550 = vunpack.c.l.b16 %v506
        %v4551 = vunpack.c.h.b16 %v506
        %v4552 = vunpack.c.l.b16 %v507
        %v4553 = vunpack.c.h.b16 %v507
        %v4554 = vunpack.c.l.b16 %v508
        %v4555 = vunpack.c.h.b16 %v508
        %v4556 = vunpack.c.l.b16 %v509
        %v4557 = vunpack.c.h.b16 %v509
        %v4558 = vunpack.c.l.b16 %v510
        %v4559 = vunpack.c.h.b16 %v510
        %v4560 = vunpack.c.l.b16 %v511
        %v4561 = vunpack.c.h.b16 %v511
        %v4562 = vunpack.c.l.b16 %v512
        %v4563 = vunpack.c.h.b16 %v512
        %v4564 = vunpack.c.l.b16 %v513
        %v4565 = vunpack.c.h.b16 %v513
        %v4566 = vunpack.c.l.b16 %v514
        %v4567 = vunpack.c.h.b16 %v514
        %v4568 = vunpack.c.l.b16 %v515
        %v4569 = vunpack.c.h.b16 %v515
        %v4570 = vunpack.c.l.b16 %v516
        %v4571 = vunpack.c.h.b16 %v516
        %v4572 = vunpack.c.l.b16 %v517
        %v4573 = vunpack.c.h.b16 %v517
        %v4574 = vunpack.c.l.b16 %v518
        %v4575 = vunpack.c.h.b16 %v518
        %v4576 = vunpack.c.l.b16 %v519
        %v4577 = vunpack.c.h.b16 %v519
        %v4578 = vunpack.c.l.b16 %v520
        %v4579 = vunpack.c.h.b16 %v520
        %v4580 = vunpack.c.l.b16 %v521
        %v4581 = vunpack.c.h.b16 %v521
        %v4582 = vunpack.c.l.b16 %v522
        %v4583 = vunpack.c.h.b16 %v522
        %v4584 = vunpack.c.l.b16 %v523
        %v4585 = vunpack.c.h.b16 %v523
        %v4586 = vunpack.c.l.b16 %v524
        %v4587 = vunpack.c.h.b16 %v524
        %v4588 = vunpack.c.l.b16 %v525
        %v4589 = vunpack.c.h.b16 %v525
        %v4590 = vunpack.c.l.b16 %v526
        %v4591 = vunpack.c.h.b16 %v526
        %v4592 = vunpack.c.l.b16 %v527
        %v4593 = vunpack.c.h.b16 %v527
        %v4594 = vunpack.c.l.b16 %v528
        %v4595 = vunpack.c.h.b16 %v528
        %v4596 = vunpack.c.l.b16 %v529
        %v4597 = vunpack.c.h.b16 %v529
        %v4598 = vunpack.c.l.b16 %v530
        %v4599 = vunpack.c.h.b16 %v530
        %v4600 = vunpack.c.l.b16 %v531
        %v4601 = vunpack.c.h.b16 %v531
        %v4602 = vunpack.c.l.b16 %v532
        %v4603 = vunpack.c.h.b16 %v532
        %v4604 = vunpack.c.l.b16 %v533
        %v4605 = vunpack.c.h.b16 %v533
        %v4606 = vunpack.c.l.b16 %v534
        %v4607 = vunpack.c.h.b16 %v534
        %v4608 = vunpack.c.l.b16 %v535
        %v4609 = vunpack.c.h.b16 %v535
        %v4610 = vunpack.c.l.b16 %v536
        %v4611 = vunpack.c.h.b16 %v536
        %v4612 = vunpack.c.l.b16 %v537
        %v4613 = vunpack.c.h.b16 %v537
        %v4614 = vunpack.c.l.b16 %v538
        %v4615 = vunpack.c.h.b16 %v538
        %v4616 = vunpack.c.l.b16 %v539
        %v4617 = vunpack.c.h.b16 %v539
        %v4618 = vunpack.c.l.b16 %v540
        %v4619 = vunpack.c.h.b16 %v540
        %v4620 = vunpack.c.l.b16 %v541
        %v4621 = vunpack.c.h.b16 %v541
        %v4622 = vunpack.c.l.b16 %v542
        %v4623 = vunpack.c.h.b16 %v542
        %v4624 = vunpack.c.l.b16 %v543
        %v4625 = vunpack.c.h.b16 %v543
        %v4626 = vunpack.c.l.b16 %v544
        %v4627 = vunpack.c.h.b16 %v544
        %v4628 = vunpack.c.l.b16 %v545
        %v4629 = vunpack.c.h.b16 %v545
        %v4630 = vunpack.c.l.b16 %v546
        %v4631 = vunpack.c.h.b16 %v546
        %v4632 = vunpack.c.l.b16 %v547
        %v4633 = vunpack.c.h.b16 %v547
        %v4634 = vunpack.c.l.b16 %v548
        %v4635 = vunpack.c.h.b16 %v548
        %v4636 = vunpack.c.l.b16 %v549
        %v4637 = vunpack.c.h.b16 %v549
        %v4638 = vunpack.c.l.b16 %v550
        %v4639 = vunpack.c.h.b16 %v550
        %v4640 = vunpack.c.l.b16 %v551
        %v4641 = vunpack.c.h.b16 %v551
        %v4642 = vunpack.c.l.b16 %v552
        %v4643 = vunpack.c.h.b16 %v552
        %v4644 = vunpack.c.l.b16 %v553
        %v4645 = vunpack.c.h.b16 %v553
        %v4646 = vunpack.c.l.b16 %v554
        %v4647 = vunpack.c.h.b16 %v554
        %v4648 = vunpack.c.l.b16 %v555
        %v4649 = vunpack.c.h.b16 %v555
        %v4650 = vunpack.c.l.b16 %v556
        %v4651 = vunpack.c.h.b16 %v556
        %v4652 = vunpack.c.l.b16 %v557
        %v4653 = vunpack.c.h.b16 %v557
        %v4654 = vunpack.c.l.b16 %v558
        %v4655 = vunpack.c.h.b16 %v558
        %v4656 = vunpack.c.l.b16 %v559
        %v4657 = vunpack.c.h.b16 %v559
        %v4658 = vunpack.c.l.b16 %v560
        %v4659 = vunpack.c.h.b16 %v560
        %v4660 = vunpack.c.l.b16 %v561
        %v4661 = vunpack.c.h.b16 %v561
        %v4662 = vunpack.c.l.b16 %v562
        %v4663 = vunpack.c.h.b16 %v562
        %v4664 = vunpack.c.l.b16 %v563
        %v4665 = vunpack.c.h.b16 %v563
        %v4666 = vunpack.c.l.b16 %v564
        %v4667 = vunpack.c.h.b16 %v564
        %v4668 = vunpack.c.l.b16 %v565
        %v4669 = vunpack.c.h.b16 %v565
        %v4670 = vunpack.c.l.b16 %v566
        %v4671 = vunpack.c.h.b16 %v566
        %v4672 = vunpack.c.l.b16 %v567
        %v4673 = vunpack.c.h.b16 %v567
        %v4674 = vunpack.c.l.b16 %v568
        %v4675 = vunpack.c.h.b16 %v568
        %v4676 = vunpack.c.l.b16 %v569
        %v4677 = vunpack.c.h.b16 %v569
        %v4678 = vunpack.c.l.b16 %v570
        %v4679 = vunpack.c.h.b16 %v570
        %v4680 = vunpack.c.l.b16 %v571
        %v4681 = vunpack.c.h.b16 %v571
        %v4682 = vunpack.c.l.b16 %v572
        %v4683 = vunpack.c.h.b16 %v572
        %v4684 = vunpack.c.l.b16 %v573
        %v4685 = vunpack.c.h.b16 %v573
        %v4686 = vunpack.c.l.b16 %v574
        %v4687 = vunpack.c.h.b16 %v574
        %v4688 = vunpack.c.l.b16 %v575
        %v4689 = vunpack.c.h.b16 %v575
        %v4690 = vunpack.c.l.b16 %v576
        %v4691 = vunpack.c.h.b16 %v576
        %v4692 = vunpack.c.l.b16 %v577
        %v4693 = vunpack.c.h.b16 %v577
        %v4694 = vunpack.c.l.b16 %v578
        %v4695 = vunpack.c.h.b16 %v578
        %v4696 = vunpack.c.l.b16 %v579
        %v4697 = vunpack.c.h.b16 %v579
        %v4698 = vunpack.c.l.b16 %v580
        %v4699 = vunpack.c.h.b16 %v580
        %v4700 = vunpack.c.l.b16 %v581
        %v4701 = vunpack.c.h.b16 %v581
        %v4702 = vunpack.c.l.b16 %v582
        %v4703 = vunpack.c.h.b16 %v582
        %v4704 = vunpack.c.l.b16 %v583
        %v4705 = vunpack.c.h.b16 %v583
        %v4706 = vunpack.c.l.b16 %v584
        %v4707 = vunpack.c.h.b16 %v584
        %v4708 = vunpack.c.l.b16 %v585
        %v4709 = vunpack.c.h.b16 %v585
        %v4710 = vunpack.c.l.b16 %v586
        %v4711 = vunpack.c.h.b16 %v586
        %v4712 = vunpack.c.l.b16 %v587
        %v4713 = vunpack.c.h.b16 %v587
        %v4714 = vunpack.c.l.b16 %v588
        %v4715 = vunpack.c.h.b16 %v588
        %v4716 = vunpack.c.l.b16 %v589
        %v4717 = vunpack.c.h.b16 %v589
        %v4718 = vunpack.c.l.b16 %v590
        %v4719 = vunpack.c.h.b16 %v590
        %v4720 = vunpack.c.l.b16 %v591
        %v4721 = vunpack.c.h.b16 %v591
        %v4722 = vunpack.c.l.b16 %v592
        %v4723 = vunpack.c.h.b16 %v592
        %v4724 = vunpack.c.l.b16 %v593
        %v4725 = vunpack.c.h.b16 %v593
        %v4726 = vunpack.c.l.b16 %v594
        %v4727 = vunpack.c.h.b16 %v594
        %v4728 = vunpack.c.l.b16 %v595
        %v4729 = vunpack.c.h.b16 %v595
        %v4730 = vunpack.c.l.b16 %v596
        %v4731 = vunpack.c.h.b16 %v596
        %v4732 = vunpack.c.l.b16 %v597
        %v4733 = vunpack.c.h.b16 %v597
        %v4734 = vunpack.c.l.b16 %v598
        %v4735 = vunpack.c.h.b16 %v598
        %v4736 = vunpack.c.l.b16 %v599
        %v4737 = vunpack.c.h.b16 %v599
        %v4738 = vunpack.c.l.b16 %v600
        %v4739 = vunpack.c.h.b16 %v600
        %v4740 = vunpack.c.l.b16 %v601
        %v4741 = vunpack.c.h.b16 %v601
        %v4742 = vunpack.c.l.b16 %v602
        %v4743 = vunpack.c.h.b16 %v602
        %v4744 = vunpack.c.l.b16 %v603
        %v4745 = vunpack.c.h.b16 %v603
        %v4746 = vunpack.c.l.b16 %v604
        %v4747 = vunpack.c.h.b16 %v604
        %v4748 = vunpack.c.l.b16 %v605
        %v4749 = vunpack.c.h.b16 %v605
        %v4750 = vunpack.c.l.b16 %v606
        %v4751 = vunpack.c.h.b16 %v606
        %v4752 = vunpack.c.l.b16 %v607
        %v4753 = vunpack.c.h.b16 %v607
        %v4754 = vunpack.c.l.b16 %v608
        %v4755 = vunpack.c.h.b16 %v608
        %v4756 = vunpack.c.l.b16 %v609
        %v4757 = vunpack.c.h.b16 %v609
        %v4758 = vunpack.c.l.b16 %v610
        %v4759 = vunpack.c.h.b16 %v610
        %v4760 = vunpack.c.l.b16 %v611
        %v4761 = vunpack.c.h.b16 %v611
        %v4762 = vunpack.c.l.b16 %v612
        %v4763 = vunpack.c.h.b16 %v612
        %v4764 = vunpack.c.l.b16 %v613
        %v4765 = vunpack.c.h.b16 %v613
        %v4766 = vunpack.c.l.b16 %v614
        %v4767 = vunpack.c.h.b16 %v614
        %v4768 = vunpack.c.l.b16 %v615
        %v4769 = vunpack.c.h.b16 %v615
        %v4770 = vunpack.c.l.b16 %v616
        %v4771 = vunpack.c.h.b16 %v616
        %v4772 = vunpack.c.l.b16 %v617
        %v4773 = vunpack.c.h.b16 %v617
        %v4774 = vunpack.c.l.b16 %v618
        %v4775 = vunpack.c.h.b16 %v618
        %v4776 = vunpack.c.l.b16 %v619
        %v4777 = vunpack.c.h.b16 %v619
        %v4778 = vunpack.c.l.b16 %v620
        %v4779 = vunpack.c.h.b16 %v620
        %v4780 = vunpack.c.l.b16 %v621
        %v4781 = vunpack.c.h.b16 %v621
        %v4782 = vunpack.c.l.b16 %v622
        %v4783 = vunpack.c.h.b16 %v622
        %v4784 = vunpack.c.l.b16 %v623
        %v4785 = vunpack.c.h.b16 %v623
        %v4786 = vunpack.c.l.b16 %v624
        %v4787 = vunpack.c.h.b16 %v624
        %v4788 = vunpack.c.l.b16 %v625
        %v4789 = vunpack.c.h.b16 %v625
        %v4790 = vunpack.c.l.b16 %v626
        %v4791 = vunpack.c.h.b16 %v626
        %v4792 = vunpack.c.l.b16 %v627
        %v4793 = vunpack.c.h.b16 %v627
        %v4794 = vunpack.c.l.b16 %v628
        %v4795 = vunpack.c.h.b16 %v628
        %v4796 = vunpack.c.l.b16 %v629
        %v4797 = vunpack.c.h.b16 %v629
        %v4798 = vunpack.c.l.b16 %v630
        %v4799 = vunpack.c.h.b16 %v630
        %v4800 = vunpack.c.l.b16 %v631
        %v4801 = vunpack.c.h.b16 %v631
        %v4802 = vunpack.c.l.b16 %v632
        %v4803 = vunpack.c.h.b16 %v632
        %v4804 = vunpack.c.l.b16 %v633
        %v4805 = vunpack.c.h.b16 %v633
        %v4806 = vunpack.c.l.b16 %v634
        %v4807 = vunpack.c.h.b16 %v634
        %v4808 = vunpack.c.l.b16 %v635
        %v4809 = vunpack.c.h.b16 %v635
        %v4810 = vunpack.c.l.b16 %v636
        %v4811 = vunpack.c.h.b16 %v636
        %v4812 = vunpack.c.l.b16 %v637
        %v4813 = vunpack.c.h.b16 %v637
        %v4814 = vunpack.c.l.b16 %v638
        %v4815 = vunpack.c.h.b16 %v638
        %v4816 = vunpack.c.l.b16 %v639
        %v4817 = vunpack.c.h.b16 %v639
        %v4818 = vunpack.c.l.b16 %v640
        %v4819 = vunpack.c.h.b16 %v640
        %v4820 = vunpack.c.l.b16 %v641
        %v4821 = vunpack.c.h.b16 %v641
        %v4822 = vunpack.c.l.b16 %v642
        %v4823 = vunpack.c.h.b16 %v642
        %v4824 = vunpack.c.l.b16 %v643
        %v4825 = vunpack.c.h.b16 %v643
        %v4826 = vunpack.c.l.b16 %v644
        %v4827 = vunpack.c.h.b16 %v644
        %v4828 = vunpack.c.l.b16 %v645
        %v4829 = vunpack.c.h.b16 %v645
        %v4830 = vunpack.c.l.b16 %v646
        %v4831 = vunpack.c.h.b16 %v646
        %v4832 = vunpack.c.l.b16 %v647
        %v4833 = vunpack.c.h.b16 %v647
        %v4834 = vunpack.c.l.b16 %v648
        %v4835 = vunpack.c.h.b16 %v648
        %v4836 = vunpack.c.l.b16 %v649
        %v4837 = vunpack.c.h.b16 %v649
        %v4838 = vunpack.c.l.b16 %v650
        %v4839 = vunpack.c.h.b16 %v650
        %v4840 = vunpack.c.l.b16 %v651
        %v4841 = vunpack.c.h.b16 %v651
        %v4842 = vunpack.c.l.b16 %v652
        %v4843 = vunpack.c.h.b16 %v652
        %v4844 = vunpack.c.l.b16 %v653
        %v4845 = vunpack.c.h.b16 %v653
        %v4846 = vunpack.c.l.b16 %v654
        %v4847 = vunpack.c.h.b16 %v654
        %v4848 = vunpack.c.l.b16 %v655
        %v4849 = vunpack.c.h.b16 %v655
        %v4850 = vunpack.c.l.b16 %v656
        %v4851 = vunpack.c.h.b16 %v656
        %v4852 = vunpack.c.l.b16 %v657
        %v4853 = vunpack.c.h.b16 %v657
        %v4854 = vunpack.c.l.b16 %v658
        %v4855 = vunpack.c.h.b16 %v658
        %v4856 = vunpack.c.l.b16 %v659
        %v4857 = vunpack.c.h.b16 %v659
        %v4858 = vunpack.c.l.b16 %v660
        %v4859 = vunpack.c.h.b16 %v660
        %v4860 = vunpack.c.l.b16 %v661
        %v4861 = vunpack.c.h.b16 %v661
        %v4862 = vunpack.c.l.b16 %v662
        %v4863 = vunpack.c.h.b16 %v662
        %v4864 = vunpack.c.l.b16 %v663
        %v4865 = vunpack.c.h.b16 %v663
        %v4866 = vunpack.c.l.b16 %v664
        %v4867 = vunpack.c.h.b16 %v664
        %v4868 = vunpack.c.l.b16 %v665
        %v4869 = vunpack.c.h.b16 %v665
        %v4870 = vunpack.c.l.b16 %v666
        %v4871 = vunpack.c.h.b16 %v666
        %v4872 = vunpack.c.l.b16 %v667
        %v4873 = vunpack.c.h.b16 %v667
        %v4874 = vunpack.c.l.b16 %v668
        %v4875 = vunpack.c.h.b16 %v668
        %v4876 = vunpack.c.l.b16 %v669
        %v4877 = vunpack.c.h.b16 %v669
        %v4878 = vunpack.c.l.b16 %v670
        %v4879 = vunpack.c.h.b16 %v670
        %v4880 = vunpack.c.l.b16 %v671
        %v4881 = vunpack.c.h.b16 %v671
        %v4882 = vunpack.c.l.b16 %v672
        %v4883 = vunpack.c.h.b16 %v672
        %v4884 = vunpack.c.l.b16 %v673
        %v4885 = vunpack.c.h.b16 %v673
        %v4886 = vunpack.c.l.b16 %v674
        %v4887 = vunpack.c.h.b16 %v674
        %v4888 = vunpack.c.l.b16 %v675
        %v4889 = vunpack.c.h.b16 %v675
        %v4890 = vunpack.c.l.b16 %v676
        %v4891 = vunpack.c.h.b16 %v676
        %v4892 = vunpack.c.l.b16 %v677
        %v4893 = vunpack.c.h.b16 %v677
        %v4894 = vunpack.c.l.b16 %v678
        %v4895 = vunpack.c.h.b16 %v678
        %v4896 = vunpack.c.l.b16 %v679
        %v4897 = vunpack.c.h.b16 %v679
        %v4898 = vunpack.c.l.b16 %v680
        %v4899 = vunpack.c.h.b16 %v680
        %v4900 = vunpack.c.l.b16 %v681
        %v4901 = vunpack.c.h.b16 %v681
        %v4902 = vunpack.c.l.b16 %v682
        %v4903 = vunpack.c.h.b16 %v682
        %v4904 = vunpack.c.l.b16 %v683
        %v4905 = vunpack.c.h.b16 %v683
        %v4906 = vunpack.c.l.b16 %v684
        %v4907 = vunpack.c.h.b16 %v684
        %v4908 = vunpack.c.l.b16 %v685
        %v4909 = vunpack.c.h.b16 %v685
        %v4910 = vunpack.c.l.b16 %v686
        %v4911 = vunpack.c.h.b16 %v686
        %v4912 = vunpack.c.l.b16 %v687
        %v4913 = vunpack.c.h.b16 %v687
        %v4914 = vunpack.c.l.b16 %v688
        %v4915 = vunpack.c.h.b16 %v688
        %v4916 = vunpack.c.l.b16 %v689
        %v4917 = vunpack.c.h.b16 %v689
        %v4918 = vunpack.c.l.b16 %v690
        %v4919 = vunpack.c.h.b16 %v690
        %v4920 = vunpack.c.l.b16 %v691
        %v4921 = vunpack.c.h.b16 %v691
        %v4922 = vunpack.c.l.b16 %v692
        %v4923 = vunpack.c.h.b16 %v692
        %v4924 = vunpack.c.l.b16 %v693
        %v4925 = vunpack.c.h.b16 %v693
        %v4926 = vunpack.c.l.b16 %v694
        %v4927 = vunpack.c.h.b16 %v694
        %v4928 = vunpack.c.l.b16 %v695
        %v4929 = vunpack.c.h.b16 %v695
        %v4930 = vunpack.c.l.b16 %v696
        %v4931 = vunpack.c.h.b16 %v696
        %v4932 = vunpack.c.l.b16 %v697
        %v4933 = vunpack.c.h.b16 %v697
        %v4934 = vunpack.c.l.b16 %v698
        %v4935 = vunpack.c.h.b16 %v698
        %v4936 = vunpack.c.l.b16 %v699
        %v4937 = vunpack.c.h.b16 %v699
        %v4938 = vunpack.c.l.b16 %v700
        %v4939 = vunpack.c.h.b16 %v700
        %v4940 = vunpack.c.l.b16 %v701
        %v4941 = vunpack.c.h.b16 %v701
        %v4942 = vunpack.c.l.b16 %v702
        %v4943 = vunpack.c.h.b16 %v702
        %v4944 = vunpack.c.l.b16 %v703
        %v4945 = vunpack.c.h.b16 %v703
        %v4946 = vunpack.c.l.b16 %v704
        %v4947 = vunpack.c.h.b16 %v704
        %v4948 = vunpack.c.l.b16 %v705
        %v4949 = vunpack.c.h.b16 %v705
        %v4950 = vunpack.c.l.b16 %v706
        %v4951 = vunpack.c.h.b16 %v706
        %v4952 = vunpack.c.l.b16 %v707
        %v4953 = vunpack.c.h.b16 %v707
        %v4954 = vunpack.c.l.b16 %v708
        %v4955 = vunpack.c.h.b16 %v708
        %v4956 = vunpack.c.l.b16 %v709
        %v4957 = vunpack.c.h.b16 %v709
        %v4958 = vunpack.c.l.b16 %v710
        %v4959 = vunpack.c.h.b16 %v710
        %v4960 = vunpack.c.l.b16 %v711
        %v4961 = vunpack.c.h.b16 %v711
        %v4962 = vunpack.c.l.b16 %v712
        %v4963 = vunpack.c.h.b16 %v712
        %v4964 = vunpack.c.l.b16 %v713
        %v4965 = vunpack.c.h.b16 %v713
        %v4966 = vunpack.c.l.b16 %v714
        %v4967 = vunpack.c.h.b16 %v714
        %v4968 = vunpack.c.l.b16 %v715
        %v4969 = vunpack.c.h.b16 %v715
        %v4970 = vunpack.c.l.b16 %v716
        %v4971 = vunpack.c.h.b16 %v716
        %v4972 = vunpack.c.l.b16 %v717
        %v4973 = vunpack.c.h.b16 %v717
        %v4974 = vunpack.c.l.b16 %v718
        %v4975 = vunpack.c.h.b16 %v718
        %v4976 = vunpack.c.l.b16 %v719
        %v4977 = vunpack.c.h.b16 %v719
        %v4978 = vunpack.c.l.b16 %v720
        %v4979 = vunpack.c.h.b16 %v720
        %v4980 = vunpack.c.l.b16 %v721
        %v4981 = vunpack.c.h.b16 %v721
        %v4982 = vunpack.c.l.b16 %v722
        %v4983 = vunpack.c.h.b16 %v722
        %v4984 = vunpack.c.l.b16 %v723
        %v4985 = vunpack.c.h.b16 %v723
        %v4986 = vunpack.c.l.b16 %v724
        %v4987 = vunpack.c.h.b16 %v724
        %v4988 = vunpack.c.l.b16 %v725
        %v4989 = vunpack.c.h.b16 %v725
        %v4990 = vunpack.c.l.b16 %v726
        %v4991 = vunpack.c.h.b16 %v726
        %v4992 = vunpack.c.l.b16 %v727
        %v4993 = vunpack.c.h.b16 %v727
        %v4994 = vunpack.c.l.b16 %v728
        %v4995 = vunpack.c.h.b16 %v728
        %v4996 = vunpack.c.l.b16 %v729
        %v4997 = vunpack.c.h.b16 %v729
        %v4998 = vunpack.c.l.b16 %v730
        %v4999 = vunpack.c.h.b16 %v730
        %v5000 = vunpack.c.l.b16 %v731
        %v5001 = vunpack.c.h.b16 %v731
        %v5002 = vunpack.c.l.b16 %v732
        %v5003 = vunpack.c.h.b16 %v732
        %v5004 = vunpack.c.l.b16 %v733
        %v5005 = vunpack.c.h.b16 %v733
        %v5006 = vunpack.c.l.b16 %v734
        %v5007 = vunpack.c.h.b16 %v734
        %v5008 = vunpack.c.l.b16 %v735
        %v5009 = vunpack.c.h.b16 %v735
        %v5010 = vunpack.c.l.b16 %v736
        %v5011 = vunpack.c.h.b16 %v736
        %v5012 = vunpack.c.l.b16 %v737
        %v5013 = vunpack.c.h.b16 %v737
        %v5014 = vunpack.c.l.b16 %v738
        %v5015 = vunpack.c.h.b16 %v738
        %v5016 = vunpack.c.l.b16 %v739
        %v5017 = vunpack.c.h.b16 %v739
        %v5018 = vunpack.c.l.b16 %v740
        %v5019 = vunpack.c.h.b16 %v740
        %v5020 = vunpack.c.l.b16 %v741
        %v5021 = vunpack.c.h.b16 %v741
        %v5022 = vunpack.c.l.b16 %v742
        %v5023 = vunpack.c.h.b16 %v742
        %v5024 = vunpack.c.l.b16 %v743
        %v5025 = vunpack.c.h.b16 %v743
        %v5026 = vunpack.c.l.b16 %v744
        %v5027 = vunpack.c.h.b16 %v744
        %v5028 = vunpack.c.l.b16 %v745
        %v5029 = vunpack.c.h.b16 %v745
        %v5030 = vunpack.c.l.b16 %v746
        %v5031 = vunpack.c.h.b16 %v746
        %v5032 = vunpack.c.l.b16 %v747
        %v5033 = vunpack.c.h.b16 %v747
        %v5034 = vunpack.c.l.b16 %v748
        %v5035 = vunpack.c.h.b16 %v748
        %v5036 = vunpack.c.l.b16 %v749
        %v5037 = vunpack.c.h.b16 %v749
        %v5038 = vunpack.c.l.b16 %v750
        %v5039 = vunpack.c.h.b16 %v750
        %v5040 = vunpack.c.l.b16 %v751
        %v5041 = vunpack.c.h.b16 %v751
        %v5042 = vunpack.c.l.b16 %v752
        %v5043 = vunpack.c.h.b16 %v752
        %v5044 = vunpack.c.l.b16 %v753
        %v5045 = vunpack.c.h.b16 %v753
        %v5046 = vunpack.c.l.b16 %v754
        %v5047 = vunpack.c.h.b16 %v754
        %v5048 = vunpack.c.l.b16 %v755
        %v5049 = vunpack.c.h.b16 %v755
        %v5050 = vunpack.c.l.b16 %v756
        %v5051 = vunpack.c.h.b16 %v756
        %v5052 = vunpack.c.l.b16 %v757
        %v5053 = vunpack.c.h.b16 %v757
        %v5054 = vunpack.c.l.b16 %v758
        %v5055 = vunpack.c.h.b16 %v758
        %v5056 = vunpack.c.l.b16 %v759
        %v5057 = vunpack.c.h.b16 %v759
        %v5058 = vunpack.c.l.b16 %v760
        %v5059 = vunpack.c.h.b16 %v760
        %v5060 = vunpack.c.l.b16 %v761
        %v5061 = vunpack.c.h.b16 %v761
        %v5062 = vunpack.c.l.b16 %v762
        %v5063 = vunpack.c.h.b16 %v762
        %v5064 = vunpack.c.l.b16 %v763
        %v5065 = vunpack.c.h.b16 %v763
        %v5066 = vunpack.c.l.b16 %v764
        %v5067 = vunpack.c.h.b16 %v764
        %v5068 = vunpack.c.l.b16 %v765
        %v5069 = vunpack.c.h.b16 %v765
        %v5070 = vunpack.c.l.b16 %v766
        %v5071 = vunpack.c.h.b16 %v766
        %v5072 = vunpack.c.l.b16 %v767
        %v5073 = vunpack.c.h.b16 %v767
        %v5074 = vunpack.c.l.b16 %v768
        %v5075 = vunpack.c.h.b16 %v768
        %v5076 = vunpack.c.l.b16 %v769
        %v5077 = vunpack.c.h.b16 %v769
        %v5078 = vunpack.c.l.b16 %v770
        %v5079 = vunpack.c.h.b16 %v770
        %v5080 = vunpack.c.l.b16 %v771
        %v5081 = vunpack.c.h.b16 %v771
        %v5082 = vunpack.c.l.b16 %v772
        %v5083 = vunpack.c.h.b16 %v772
        %v5084 = vunpack.c.l.b16 %v773
        %v5085 = vunpack.c.h.b16 %v773
        %v5086 = vunpack.c.l.b16 %v774
        %v5087 = vunpack.c.h.b16 %v774
        %v5088 = vunpack.c.l.b16 %v775
        %v5089 = vunpack.c.h.b16 %v775
        %v5090 = vunpack.c.l.b16 %v776
        %v5091 = vunpack.c.h.b16 %v776
        %v5092 = vunpack.c.l.b16 %v777
        %v5093 = vunpack.c.h.b16 %v777
        %v5094 = vunpack.c.l.b16 %v778
        %v5095 = vunpack.c.h.b16 %v778
        %v5096 = vunpack.c.l.b16 %v779
        %v5097 = vunpack.c.h.b16 %v779
        %v5098 = vunpack.c.l.b16 %v780
        %v5099 = vunpack.c.h.b16 %v780
        %v5100 = vunpack.c.l.b16 %v781
        %v5101 = vunpack.c.h.b16 %v781
        %v5102 = vunpack.c.l.b16 %v782
        %v5103 = vunpack.c.h.b16 %v782
        %v5104 = vunpack.c.l.b16 %v783
        %v5105 = vunpack.c.h.b16 %v783
        %v5106 = vunpack.c.l.b16 %v784
        %v5107 = vunpack.c.h.b16 %v784
        %v5108 = vunpack.c.l.b16 %v785
        %v5109 = vunpack.c.h.b16 %v785
        %v5110 = vunpack.c.l.b16 %v786
        %v5111 = vunpack.c.h.b16 %v786
        %v5112 = vunpack.c.l.b16 %v787
        %v5113 = vunpack.c.h.b16 %v787
        %v5114 = vunpack.c.l.b16 %v788
        %v5115 = vunpack.c.h.b16 %v788
        %v5116 = vunpack.c.l.b16 %v789
        %v5117 = vunpack.c.h.b16 %v789
        %v5118 = vunpack.c.l.b16 %v790
        %v5119 = vunpack.c.h.b16 %v790
        %v5120 = vunpack.c.l.b16 %v791
        %v5121 = vunpack.c.h.b16 %v791
        %v5122 = vunpack.c.l.b16 %v792
        %v5123 = vunpack.c.h.b16 %v792
        %v5124 = vunpack.c.l.b16 %v793
        %v5125 = vunpack.c.h.b16 %v793
        %v5126 = vunpack.c.l.b16 %v794
        %v5127 = vunpack.c.h.b16 %v794
        %v5128 = vunpack.c.l.b16 %v795
        %v5129 = vunpack.c.h.b16 %v795
        %v5130 = vunpack.c.l.b16 %v796
        %v5131 = vunpack.c.h.b16 %v796
        %v5132 = vunpack.c.l.b16 %v797
        %v5133 = vunpack.c.h.b16 %v797
        %v5134 = vunpack.c.l.b16 %v798
        %v5135 = vunpack.c.h.b16 %v798
        %v5136 = vunpack.c.l.b16 %v799
        %v5137 = vunpack.c.h.b16 %v799
        %v5138 = vunpack.c.l.b16 %v800
        %v5139 = vunpack.c.h.b16 %v800
        %v5140 = vunpack.c.l.b16 %v801
        %v5141 = vunpack.c.h.b16 %v801
        %v5142 = vunpack.c.l.b16 %v802
        %v5143 = vunpack.c.h.b16 %v802
        %v5144 = vunpack.c.l.b16 %v803
        %v5145 = vunpack.c.h.b16 %v803
        %v5146 = vunpack.c.l.b16 %v804
        %v5147 = vunpack.c.h.b16 %v804
        %v5148 = vunpack.c.l.b16 %v805
        %v5149 = vunpack.c.h.b16 %v805
        %v5150 = vunpack.c.l.b16 %v806
        %v5151 = vunpack.c.h.b16 %v806
        %v5152 = vunpack.c.l.b16 %v807
        %v5153 = vunpack.c.h.b16 %v807
        %v5154 = vunpack.c.l.b16 %v808
        %v5155 = vunpack.c.h.b16 %v808
        %v5156 = vunpack.c.l.b16 %v809
        %v5157 = vunpack.c.h.b16 %v809
        %v5158 = vunpack.c.l.b16 %v810
        %v5159 = vunpack.c.h.b16 %v810
        %v5160 = vunpack.c.l.b16 %v811
        %v5161 = vunpack.c.h.b16 %v811
        %v5162 = vunpack.c.l.b16 %v812
        %v5163 = vunpack.c.h.b16 %v812
        %v5164 = vunpack.c.l.b16 %v813
        %v5165 = vunpack.c.h.b16 %v813
        %v5166 = vunpack.c.l.b16 %v814
        %v5167 = vunpack.c.h.b16 %v814
        %v5168 = vunpack.c.l.b16 %v815
        %v5169 = vunpack.c.h.b16 %v815
        %v5170 = vunpack.c.l.b16 %v816
        %v5171 = vunpack.c.h.b16 %v816
        %v5172 = vunpack.c.l.b16 %v817
        %v5173 = vunpack.c.h.b16 %v817
        %v5174 = vunpack.c.l.b16 %v818
        %v5175 = vunpack.c.h.b16 %v818
        %v5176 = vunpack.c.l.b16 %v819
        %v5177 = vunpack.c.h.b16 %v819
        %v5178 = vunpack.c.l.b16 %v820
        %v5179 = vunpack.c.h.b16 %v820
        %v5180 = vunpack.c.l.b16 %v821
        %v5181 = vunpack.c.h.b16 %v821
        %v5182 = vunpack.c.l.b16 %v822
        %v5183 = vunpack.c.h.b16 %v822
        %v5184 = vunpack.c.l.b16 %v823
        %v5185 = vunpack.c.h.b16 %v823
        %v5186 = vunpack.c.l.b16 %v824
        %v5187 = vunpack.c.h.b16 %v824
        %v5188 = vunpack.c.l.b16 %v825
        %v5189 = vunpack.c.h.b16 %v825
        %v5190 = vunpack.c.l.b16 %v826
        %v5191 = vunpack.c.h.b16 %v826
        %v5192 = vunpack.c.l.b16 %v827
        %v5193 = vunpack.c.h.b16 %v827
        %v5194 = vunpack.c.l.b16 %v828
        %v5195 = vunpack.c.h.b16 %v828
        %v5196 = vunpack.c.l.b16 %v829
        %v5197 = vunpack.c.h.b16 %v829
        %v5198 = vunpack.c.l.b16 %v830
        %v5199 = vunpack.c.h.b16 %v830
        %v5200 = vunpack.c.l.b16 %v831
        %v5201 = vunpack.c.h.b16 %v831
        %v5202 = vunpack.c.l.b16 %v832
        %v5203 = vunpack.c.h.b16 %v832
        %v5204 = vunpack.c.l.b16 %v833
        %v5205 = vunpack.c.h.b16 %v833
        %v5206 = vunpack.c.l.b16 %v834
        %v5207 = vunpack.c.h.b16 %v834
        %v5208 = vunpack.c.l.b16 %v835
        %v5209 = vunpack.c.h.b16 %v835
        %v5210 = vunpack.c.l.b16 %v836
        %v5211 = vunpack.c.h.b16 %v836
        %v5212 = vunpack.c.l.b16 %v837
        %v5213 = vunpack.c.h.b16 %v837
        %v5214 = vunpack.c.l.b16 %v838
        %v5215 = vunpack.c.h.b16 %v838
        %v5216 = vunpack.c.l.b16 %v839
        %v5217 = vunpack.c.h.b16 %v839
        %v5218 = vunpack.c.l.b16 %v840
        %v5219 = vunpack.c.h.b16 %v840
        %v5220 = vunpack.c.l.b16 %v841
        %v5221 = vunpack.c.h.b16 %v841
        %v5222 = vunpack.c.l.b16 %v842
        %v5223 = vunpack.c.h.b16 %v842
        %v5224 = vunpack.c.l.b16 %v843
        %v5225 = vunpack.c.h.b16 %v843
        %v5226 = vunpack.c.l.b16 %v844
        %v5227 = vunpack.c.h.b16 %v844
        %v5228 = vunpack.c.l.b16 %v845
        %v5229 = vunpack.c.h.b16 %v845
        %v5230 = vunpack.c.l.b16 %v846
        %v5231 = vunpack.c.h.b16 %v846
        %v5232 = vunpack.c.l.b16 %v847
        %v5233 = vunpack.c.h.b16 %v847
        %v5234 = vunpack.c.l.b16 %v848
        %v5235 = vunpack.c.h.b16 %v848
        %v5236 = vunpack.c.l.b16 %v849
        %v5237 = vunpack.c.h.b16 %v849
        %v5238 = vunpack.c.l.b16 %v850
        %v5239 = vunpack.c.h.b16 %v850
        %v5240 = vunpack.c.l.b16 %v851
        %v5241 = vunpack.c.h.b16 %v851
        %v5242 = vunpack.c.l.b16 %v852
        %v5243 = vunpack.c.h.b16 %v852
        %v5244 = vunpack.c.l.b16 %v853
        %v5245 = vunpack.c.h.b16 %v853
        %v5246 = vunpack.c.l.b16 %v854
        %v5247 = vunpack.c.h.b16 %v854
        %v5248 = vunpack.c.l.b16 %v855
        %v5249 = vunpack.c.h.b16 %v855
        %v5250 = vunpack.c.l.b16 %v856
        %v5251 = vunpack.c.h.b16 %v856
        %v5252 = vunpack.c.l.b16 %v857
        %v5253 = vunpack.c.h.b16 %v857
        %v5254 = vunpack.c.l.b16 %v858
        %v5255 = vunpack.c.h.b16 %v858
        %v5256 = vunpack.c.l.b16 %v859
        %v5257 = vunpack.c.h.b16 %v859
        %v5258 = vunpack.c.l.b16 %v860
        %v5259 = vunpack.c.h.b16 %v860
        %v5260 = vunpack.c.l.b16 %v861
        %v5261 = vunpack.c.h.b16 %v861
        %v5262 = vunpack.c.l.b16 %v862
        %v5263 = vunpack.c.h.b16 %v862
        %v5264 = vunpack.c.l.b16 %v863
        %v5265 = vunpack.c.h.b16 %v863
        %v5266 = vunpack.c.l.b16 %v864
        %v5267 = vunpack.c.h.b16 %v864
        %v5268 = vunpack.c.l.b16 %v865
        %v5269 = vunpack.c.h.b16 %v865
        %v5270 = vunpack.c.l.b16 %v866
        %v5271 = vunpack.c.h.b16 %v866
        %v5272 = vunpack.c.l.b16 %v867
        %v5273 = vunpack.c.h.b16 %v867
        %v5274 = vunpack.c.l.b16 %v868
        %v5275 = vunpack.c.h.b16 %v868
        %v5276 = vunpack.c.l.b16 %v869
        %v5277 = vunpack.c.h.b16 %v869
        %v5278 = vunpack.c.l.b16 %v870
        %v5279 = vunpack.c.h.b16 %v870
        %v5280 = vunpack.c.l.b16 %v871
        %v5281 = vunpack.c.h.b16 %v871
        %v5282 = vunpack.c.l.b16 %v872
        %v5283 = vunpack.c.h.b16 %v872
        %v5284 = vunpack.c.l.b16 %v873
        %v5285 = vunpack.c.h.b16 %v873
        %v5286 = vunpack.c.l.b16 %v874
        %v5287 = vunpack.c.h.b16 %v874
        %v5288 = vunpack.c.l.b16 %v875
        %v5289 = vunpack.c.h.b16 %v875
        %v5290 = vunpack.c.l.b16 %v876
        %v5291 = vunpack.c.h.b16 %v876
        %v5292 = vunpack.c.l.b16 %v877
        %v5293 = vunpack.c.h.b16 %v877
        %v5294 = vunpack.c.l.b16 %v878
        %v5295 = vunpack.c.h.b16 %v878
        %v5296 = vunpack.c.l.b16 %v879
        %v5297 = vunpack.c.h.b16 %v879
        %v5298 = vunpack.c.l.b16 %v880
        %v5299 = vunpack.c.h.b16 %v880
        %v5300 = vunpack.c.l.b16 %v881
        %v5301 = vunpack.c.h.b16 %v881
        %v5302 = vunpack.c.l.b16 %v882
        %v5303 = vunpack.c.h.b16 %v882
        %v5304 = vunpack.c.l.b16 %v883
        %v5305 = vunpack.c.h.b16 %v883
        %v5306 = vunpack.c.l.b16 %v884
        %v5307 = vunpack.c.h.b16 %v884
        %v5308 = vunpack.c.l.b16 %v885
        %v5309 = vunpack.c.h.b16 %v885
        %v5310 = vunpack.c.l.b16 %v886
        %v5311 = vunpack.c.h.b16 %v886
        %v5312 = vunpack.c.l.b16 %v887
        %v5313 = vunpack.c.h.b16 %v887
        %v5314 = vunpack.c.l.b16 %v888
        %v5315 = vunpack.c.h.b16 %v888
        %v5316 = vunpack.c.l.b16 %v889
        %v5317 = vunpack.c.h.b16 %v889
        %v5318 = vunpack.c.l.b16 %v890
        %v5319 = vunpack.c.h.b16 %v890
        %v5320 = vunpack.c.l.b16 %v891
        %v5321 = vunpack.c.h.b16 %v891
        %v5322 = vunpack.c.l.b16 %v892
        %v5323 = vunpack.c.h.b16 %v892
        %v5324 = vunpack.c.l.b16 %v893
        %v5325 = vunpack.c.h.b16 %v893
        %v5326 = vunpack.c.l.b16 %v894
        %v5327 = vunpack.c.h.b16 %v894
        %v5328 = vunpack.c.l.b16 %v895
        %v5329 = vunpack.c.h.b16 %v895
        %v5330 = vunpack.c.l.b16 %v896
        %v5331 = vunpack.c.h.b16 %v896
        %v5332 = vunpack.c.l.b16 %v897
        %v5333 = vunpack.c.h.b16 %v897
        %v5334 = vunpack.c.l.b16 %v898
        %v5335 = vunpack.c.h.b16 %v898
        %v5336 = vunpack.c.l.b16 %v899
        %v5337 = vunpack.c.h.b16 %v899
        %v5338 = vunpack.c.l.b16 %v900
        %v5339 = vunpack.c.h.b16 %v900
        %v5340 = vunpack.c.l.b16 %v901
        %v5341 = vunpack.c.h.b16 %v901
        %v5342 = vunpack.c.l.b16 %v902
        %v5343 = vunpack.c.h.b16 %v902
        %v5344 = vunpack.c.l.b16 %v903
        %v5345 = vunpack.c.h.b16 %v903
        %v5346 = vunpack.c.l.b16 %v904
        %v5347 = vunpack.c.h.b16 %v904
        %v5348 = vunpack.c.l.b16 %v905
        %v5349 = vunpack.c.h.b16 %v905
        %v5350 = vunpack.c.l.b16 %v906
        %v5351 = vunpack.c.h.b16 %v906
        %v5352 = vunpack.c.l.b16 %v907
        %v5353 = vunpack.c.h.b16 %v907
        %v5354 = vunpack.c.l.b16 %v908
        %v5355 = vunpack.c.h.b16 %v908
        %v5356 = vunpack.c.l.b16 %v909
        %v5357 = vunpack.c.h.b16 %v909
        %v5358 = vunpack.c.l.b16 %v910
        %v5359 = vunpack.c.h.b16 %v910
        %v5360 = vunpack.c.l.b16 %v911
        %v5361 = vunpack.c.h.b16 %v911
        %v5362 = vunpack.c.l.b16 %v912
        %v5363 = vunpack.c.h.b16 %v912
        %v5364 = vunpack.c.l.b16 %v913
        %v5365 = vunpack.c.h.b16 %v913
        %v5366 = vunpack.c.l.b16 %v914
        %v5367 = vunpack.c.h.b16 %v914
        %v5368 = vunpack.c.l.b16 %v915
        %v5369 = vunpack.c.h.b16 %v915
        %v5370 = vunpack.c.l.b16 %v916
        %v5371 = vunpack.c.h.b16 %v916
        %v5372 = vunpack.c.l.b16 %v917
        %v5373 = vunpack.c.h.b16 %v917
        %v5374 = vunpack.c.l.b16 %v918
        %v5375 = vunpack.c.h.b16 %v918
        %v5376 = vunpack.c.l.b16 %v919
        %v5377 = vunpack.c.h.b16 %v919
        %v5378 = vunpack.c.l.b16 %v920
        %v5379 = vunpack.c.h.b16 %v920
        %v5380 = vunpack.c.l.b16 %v921
        %v5381 = vunpack.c.h.b16 %v921
        %v5382 = vunpack.c.l.b16 %v922
        %v5383 = vunpack.c.h.b16 %v922
        %v5384 = vunpack.c.l.b16 %v923
        %v5385 = vunpack.c.h.b16 %v923
        %v5386 = vunpack.c.l.b16 %v924
        %v5387 = vunpack.c.h.b16 %v924
        %v5388 = vunpack.c.l.b16 %v925
        %v5389 = vunpack.c.h.b16 %v925
        %v5390 = vunpack.c.l.b16 %v926
        %v5391 = vunpack.c.h.b16 %v926
        %v5392 = vunpack.c.l.b16 %v927
        %v5393 = vunpack.c.h.b16 %v927
        %v5394 = vunpack.c.l.b16 %v928
        %v5395 = vunpack.c.h.b16 %v928
        %v5396 = vunpack.c.l.b16 %v929
        %v5397 = vunpack.c.h.b16 %v929
        %v5398 = vunpack.c.l.b16 %v930
        %v5399 = vunpack.c.h.b16 %v930
        %v5400 = vunpack.c.l.b16 %v931
        %v5401 = vunpack.c.h.b16 %v931
        %v5402 = vunpack.c.l.b16 %v932
        %v5403 = vunpack.c.h.b16 %v932
        %v5404 = vunpack.c.l.b16 %v933
        %v5405 = vunpack.c.h.b16 %v933
        %v5406 = vunpack.c.l.b16 %v934
        %v5407 = vunpack.c.h.b16 %v934
        %v5408 = vunpack.c.l.b16 %v935
        %v5409 = vunpack.c.h.b16 %v935
        %v5410 = vunpack.c.l.b16 %v936
        %v5411 = vunpack.c.h.b16 %v936
        %v5412 = vunpack.c.l.b16 %v937
        %v5413 = vunpack.c.h.b16 %v937
        %v5414 = vunpack.c.l.b16 %v938
        %v5415 = vunpack.c.h.b16 %v938
        %v5416 = vunpack.c.l.b16 %v939
        %v5417 = vunpack.c.h.b16 %v939
        %v5418 = vunpack.c.l.b16 %v940
        %v5419 = vunpack.c.h.b16 %v940
        %v5420 = vunpack.c.l.b16 %v941
        %v5421 = vunpack.c.h.b16 %v941
        %v5422 = vunpack.c.l.b16 %v942
        %v5423 = vunpack.c.h.b16 %v942
        %v5424 = vunpack.c.l.b16 %v943
        %v5425 = vunpack.c.h.b16 %v943
        %v5426 = vunpack.c.l.b16 %v944
        %v5427 = vunpack.c.h.b16 %v944
        %v5428 = vunpack.c.l.b16 %v945
        %v5429 = vunpack.c.h.b16 %v945
        %v5430 = vunpack.c.l.b16 %v946
        %v5431 = vunpack.c.h.b16 %v946
        %v5432 = vunpack.c.l.b16 %v947
        %v5433 = vunpack.c.h.b16 %v947
        %v5434 = vunpack.c.l.b16 %v948
        %v5435 = vunpack.c.h.b16 %v948
        %v5436 = vunpack.c.l.b16 %v949
        %v5437 = vunpack.c.h.b16 %v949
        %v5438 = vunpack.c.l.b16 %v950
        %v5439 = vunpack.c.h.b16 %v950
        %v5440 = vunpack.c.l.b16 %v951
        %v5441 = vunpack.c.h.b16 %v951
        %v5442 = vunpack.c.l.b16 %v952
        %v5443 = vunpack.c.h.b16 %v952
        %v5444 = vunpack.c.l.b16 %v953
        %v5445 = vunpack.c.h.b16 %v953
        %v5446 = vunpack.c.l.b16 %v954
        %v5447 = vunpack.c.h.b16 %v954
        %v5448 = vunpack.c.l.b16 %v955
        %v5449 = vunpack.c.h.b16 %v955
        %v5450 = vunpack.c.l.b16 %v956
        %v5451 = vunpack.c.h.b16 %v956
        %v5452 = vunpack.c.l.b16 %v957
        %v5453 = vunpack.c.h.b16 %v957
        %v5454 = vunpack.c.l.b16 %v958
        %v5455 = vunpack.c.h.b16 %v958
        %v5456 = vunpack.c.l.b16 %v959
        %v5457 = vunpack.c.h.b16 %v959
        %v5458 = vunpack.c.l.b16 %v960
        %v5459 = vunpack.c.h.b16 %v960
        %v5460 = vunpack.c.l.b16 %v961
        %v5461 = vunpack.c.h.b16 %v961
        %v5462 = vunpack.c.l.b16 %v962
        %v5463 = vunpack.c.h.b16 %v962
        %v5464 = vunpack.c.l.b16 %v963
        %v5465 = vunpack.c.h.b16 %v963
        %v5466 = vunpack.c.l.b16 %v964
        %v5467 = vunpack.c.h.b16 %v964
        %v5468 = vunpack.c.l.b16 %v965
        %v5469 = vunpack.c.h.b16 %v965
        %v5470 = vunpack.c.l.b16 %v966
        %v5471 = vunpack.c.h.b16 %v966
        %v5472 = vunpack.c.l.b16 %v967
        %v5473 = vunpack.c.h.b16 %v967
        %v5474 = vunpack.c.l.b16 %v968
        %v5475 = vunpack.c.h.b16 %v968
        %v5476 = vunpack.c.l.b16 %v969
        %v5477 = vunpack.c.h.b16 %v969
        %v5478 = vunpack.c.l.b16 %v970
        %v5479 = vunpack.c.h.b16 %v970
        %v5480 = vunpack.c.l.b16 %v971
        %v5481 = vunpack.c.h.b16 %v971
        %v5482 = vunpack.c.l.b16 %v972
        %v5483 = vunpack.c.h.b16 %v972
        %v5484 = vunpack.c.l.b16 %v973
        %v5485 = vunpack.c.h.b16 %v973
        %v5486 = vunpack.c.l.b16 %v974
        %v5487 = vunpack.c.h.b16 %v974
        %v5488 = vunpack.c.l.b16 %v975
        %v5489 = vunpack.c.h.b16 %v975
        %v5490 = vunpack.c.l.b16 %v976
        %v5491 = vunpack.c.h.b16 %v976
        %v5492 = vunpack.c.l.b16 %v977
        %v5493 = vunpack.c.h.b16 %v977
        %v5494 = vunpack.c.l.b16 %v978
        %v5495 = vunpack.c.h.b16 %v978
        %v5496 = vunpack.c.l.b16 %v979
        %v5497 = vunpack.c.h.b16 %v979
        %v5498 = vunpack.c.l.b16 %v980
        %v5499 = vunpack.c.h.b16 %v980
        %v5500 = vunpack.c.l.b16 %v981
        %v5501 = vunpack.c.h.b16 %v981
        %v5502 = vunpack.c.l.b16 %v982
        %v5503 = vunpack.c.h.b16 %v982
        %v5504 = vunpack.c.l.b16 %v983
        %v5505 = vunpack.c.h.b16 %v983
        %v5506 = vunpack.c.l.b16 %v984
        %v5507 = vunpack.c.h.b16 %v984
        %v5508 = vunpack.c.l.b16 %v985
        %v5509 = vunpack.c.h.b16 %v985
        %v5510 = vunpack.c.l.b16 %v986
        %v5511 = vunpack.c.h.b16 %v986
        %v5512 = vunpack.c.l.b16 %v987
        %v5513 = vunpack.c.h.b16 %v987
        %v5514 = vunpack.c.l.b16 %v988
        %v5515 = vunpack.c.h.b16 %v988
        %v5516 = vunpack.c.l.b16 %v989
        %v5517 = vunpack.c.h.b16 %v989
        %v5518 = vunpack.c.l.b16 %v990
        %v5519 = vunpack.c.h.b16 %v990
        %v5520 = vunpack.c.l.b16 %v991
        %v5521 = vunpack.c.h.b16 %v991
        %v5522 = vunpack.c.l.b16 %v992
        %v5523 = vunpack.c.h.b16 %v992
        %v5524 = vunpack.c.l.b16 %v993
        %v5525 = vunpack.c.h.b16 %v993
        %v5526 = vunpack.c.l.b16 %v994
        %v5527 = vunpack.c.h.b16 %v994
        %v5528 = vunpack.c.l.b16 %v995
        %v5529 = vunpack.c.h.b16 %v995
        %v5530 = vunpack.c.l.b16 %v996
        %v5531 = vunpack.c.h.b16 %v996
        %v5532 = vunpack.c.l.b16 %v997
        %v5533 = vunpack.c.h.b16 %v997
        %v5534 = vunpack.c.l.b16 %v998
        %v5535 = vunpack.c.h.b16 %v998
        %v5536 = vunpack.c.l.b16 %v999
        %v5537 = vunpack.c.h.b16 %v999
        %v5538 = vunpack.c.l.b16 %v1000
        %v5539 = vunpack.c.h.b16 %v1000
        %v5540 = vunpack.c.l.b16 %v1001
        %v5541 = vunpack.c.h.b16 %v1001
        %v5542 = vunpack.c.l.b16 %v1002
        %v5543 = vunpack.c.h.b16 %v1002
        %v5544 = vunpack.c.l.b16 %v1003
        %v5545 = vunpack.c.h.b16 %v1003
        %v5546 = vunpack.c.l.b16 %v1004
        %v5547 = vunpack.c.h.b16 %v1004
        %v5548 = vunpack.c.l.b16 %v1005
        %v5549 = vunpack.c.h.b16 %v1005
        %v5550 = vunpack.c.l.b16 %v1006
        %v5551 = vunpack.c.h.b16 %v1006
        %v5552 = vunpack.c.l.b16 %v1007
        %v5553 = vunpack.c.h.b16 %v1007
        %v5554 = vunpack.c.l.b16 %v1008
        %v5555 = vunpack.c.h.b16 %v1008
        %v5556 = vunpack.c.l.b16 %v1009
        %v5557 = vunpack.c.h.b16 %v1009
        %v5558 = vunpack.c.l.b16 %v1010
        %v5559 = vunpack.c.h.b16 %v1010
        %v5560 = vunpack.c.l.b16 %v1011
        %v5561 = vunpack.c.h.b16 %v1011
        %v5562 = vunpack.c.l.b16 %v1012
        %v5563 = vunpack.c.h.b16 %v1012
        %v5564 = vunpack.c.l.b16 %v1013
        %v5565 = vunpack.c.h.b16 %v1013
        %v5566 = vunpack.c.l.b16 %v1014
        %v5567 = vunpack.c.h.b16 %v1014
        %v5568 = vunpack.c.l.b16 %v1015
        %v5569 = vunpack.c.h.b16 %v1015
        %v5570 = vunpack.c.l.b16 %v1016
        %v5571 = vunpack.c.h.b16 %v1016
        %v5572 = vunpack.c.l.b16 %v1017
        %v5573 = vunpack.c.h.b16 %v1017
        %v5574 = vunpack.c.l.b16 %v1018
        %v5575 = vunpack.c.h.b16 %v1018
        %v5576 = vunpack.c.l.b16 %v1019
        %v5577 = vunpack.c.h.b16 %v1019
        %v5578 = vunpack.c.l.b16 %v1020
        %v5579 = vunpack.c.h.b16 %v1020
        %v5580 = vunpack.c.l.b16 %v1021
        %v5581 = vunpack.c.h.b16 %v1021
        %v5582 = vunpack.c.l.b16 %v1022
        %v5583 = vunpack.c.h.b16 %v1022
        %v5584 = vunpack.c.l.b16 %v1023
        %v5585 = vunpack.c.h.b16 %v1023
        %v5586 = vunpack.c.l.b16 %v1024
        %v5587 = vunpack.c.h.b16 %v1024
        %v5588 = vunpack.c.l.b16 %v1025
        %v5589 = vunpack.c.h.b16 %v1025
        %v5590 = vunpack.c.l.b16 %v1026
        %v5591 = vunpack.c.h.b16 %v1026
        %v5592 = vunpack.c.l.b16 %v1027
        %v5593 = vunpack.c.h.b16 %v1027
        %v5594 = vunpack.c.l.b16 %v1028
        %v5595 = vunpack.c.h.b16 %v1028
        %v5596 = vunpack.c.l.b16 %v1029
        %v5597 = vunpack.c.h.b16 %v1029
        %v5598 = vunpack.c.l.b16 %v1030
        %v5599 = vunpack.c.h.b16 %v1030
        %v5600 = vunpack.c.l.b16 %v1031
        %v5601 = vunpack.c.h.b16 %v1031
        %v5602 = vunpack.c.l.b16 %v1032
        %v5603 = vunpack.c.h.b16 %v1032
        %v5604 = vunpack.c.l.b16 %v1033
        %v5605 = vunpack.c.h.b16 %v1033
        %v5606 = vunpack.c.l.b16 %v1034
        %v5607 = vunpack.c.h.b16 %v1034
        %v5608 = vunpack.c.l.b16 %v1035
        %v5609 = vunpack.c.h.b16 %v1035
        %v5610 = vunpack.c.l.b16 %v1036
        %v5611 = vunpack.c.h.b16 %v1036
        %v5612 = vunpack.c.l.b16 %v1037
        %v5613 = vunpack.c.h.b16 %v1037
        %v5614 = vunpack.c.l.b16 %v1038
        %v5615 = vunpack.c.h.b16 %v1038
        %v5616 = vunpack.c.l.b16 %v1039
        %v5617 = vunpack.c.h.b16 %v1039
        %v5618 = vunpack.c.l.b16 %v1040
        %v5619 = vunpack.c.h.b16 %v1040
        %v5620 = vunpack.c.l.b16 %v1041
        %v5621 = vunpack.c.h.b16 %v1041
        %v5622 = vunpack.c.l.b16 %v1042
        %v5623 = vunpack.c.h.b16 %v1042
        %v5624 = vunpack.c.l.b16 %v1043
        %v5625 = vunpack.c.h.b16 %v1043
        %v5626 = vunpack.c.l.b16 %v1044
        %v5627 = vunpack.c.h.b16 %v1044
        %v5628 = vunpack.c.l.b16 %v1045
        %v5629 = vunpack.c.h.b16 %v1045
        %v5630 = vunpack.c.l.b16 %v1046
        %v5631 = vunpack.c.h.b16 %v1046
        %v5632 = vunpack.c.l.b16 %v1047
        %v5633 = vunpack.c.h.b16 %v1047
        %v5634 = vunpack.c.l.b16 %v1048
        %v5635 = vunpack.c.h.b16 %v1048
        %v5636 = vunpack.c.l.b16 %v1049
        %v5637 = vunpack.c.h.b16 %v1049
        %v5638 = vunpack.c.l.b16 %v1050
        %v5639 = vunpack.c.h.b16 %v1050
        %v5640 = vunpack.c.l.b16 %v1051
        %v5641 = vunpack.c.h.b16 %v1051
        %v5642 = vunpack.c.l.b16 %v1052
        %v5643 = vunpack.c.h.b16 %v1052
        %v5644 = vunpack.c.l.b16 %v1053
        %v5645 = vunpack.c.h.b16 %v1053
        %v5646 = vunpack.c.l.b16 %v1054
        %v5647 = vunpack.c.h.b16 %v1054
        %v5648 = vunpack.c.l.b16 %v1055
        %v5649 = vunpack.c.h.b16 %v1055
        %v5650 = vunpack.c.l.b16 %v1056
        %v5651 = vunpack.c.h.b16 %v1056
        %v5652 = vunpack.c.l.b16 %v1057
        %v5653 = vunpack.c.h.b16 %v1057
        %v5654 = vunpack.c.l.b16 %v1058
        %v5655 = vunpack.c.h.b16 %v1058
        %v5656 = vunpack.c.l.b16 %v1059
        %v5657 = vunpack.c.h.b16 %v1059
        %v5658 = vunpack.c.l.b16 %v1060
        %v5659 = vunpack.c.h.b16 %v1060
        %v5660 = vunpack.c.l.b16 %v1061
        %v5661 = vunpack.c.h.b16 %v1061
        %v5662 = vunpack.c.l.b16 %v1062
        %v5663 = vunpack.c.h.b16 %v1062
        %v5664 = vunpack.c.l.b16 %v1063
        %v5665 = vunpack.c.h.b16 %v1063
        %v5666 = vunpack.c.l.b16 %v1064
        %v5667 = vunpack.c.h.b16 %v1064
        %v5668 = vunpack.c.l.b16 %v1065
        %v5669 = vunpack.c.h.b16 %v1065
        %v5670 = vunpack.c.l.b16 %v1066
        %v5671 = vunpack.c.h.b16 %v1066
        %v5672 = vunpack.c.l.b16 %v1067
        %v5673 = vunpack.c.h.b16 %v1067
        %v5674 = vunpack.c.l.b16 %v1068
        %v5675 = vunpack.c.h.b16 %v1068
        %v5676 = vunpack.c.l.b16 %v1069
        %v5677 = vunpack.c.h.b16 %v1069
        %v5678 = vunpack.c.l.b16 %v1070
        %v5679 = vunpack.c.h.b16 %v1070
        %v5680 = vunpack.c.l.b16 %v1071
        %v5681 = vunpack.c.h.b16 %v1071
        %v5682 = vunpack.c.l.b16 %v1072
        %v5683 = vunpack.c.h.b16 %v1072
        %v5684 = vunpack.c.l.b16 %v1073
        %v5685 = vunpack.c.h.b16 %v1073
        %v5686 = vunpack.c.l.b16 %v1074
        %v5687 = vunpack.c.h.b16 %v1074
        %v5688 = vunpack.c.l.b16 %v1075
        %v5689 = vunpack.c.h.b16 %v1075
        %v5690 = vunpack.c.l.b16 %v1076
        %v5691 = vunpack.c.h.b16 %v1076
        %v5692 = vunpack.c.l.b16 %v1077
        %v5693 = vunpack.c.h.b16 %v1077
        %v5694 = vunpack.c.l.b16 %v1078
        %v5695 = vunpack.c.h.b16 %v1078
        %v5696 = vunpack.c.l.b16 %v1079
        %v5697 = vunpack.c.h.b16 %v1079
        %v5698 = vunpack.c.l.b16 %v1080
        %v5699 = vunpack.c.h.b16 %v1080
        %v5700 = vunpack.c.l.b16 %v1081
        %v5701 = vunpack.c.h.b16 %v1081
        %v5702 = vunpack.c.l.b16 %v1082
        %v5703 = vunpack.c.h.b16 %v1082
        %v5704 = vunpack.c.l.b16 %v1083
        %v5705 = vunpack.c.h.b16 %v1083
        %v5706 = vunpack.c.l.b16 %v1084
        %v5707 = vunpack.c.h.b16 %v1084
        %v5708 = vunpack.c.l.b16 %v1085
        %v5709 = vunpack.c.h.b16 %v1085
        %v5710 = vunpack.c.l.b16 %v1086
        %v5711 = vunpack.c.h.b16 %v1086
        %v5712 = vunpack.c.l.b16 %v1087
        %v5713 = vunpack.c.h.b16 %v1087
        %v5714 = vunpack.c.l.b16 %v1088
        %v5715 = vunpack.c.h.b16 %v1088
        %v5716 = vunpack.c.l.b16 %v1089
        %v5717 = vunpack.c.h.b16 %v1089
        %v5718 = vunpack.c.l.b16 %v1090
        %v5719 = vunpack.c.h.b16 %v1090
        %v5720 = vunpack.c.l.b16 %v1091
        %v5721 = vunpack.c.h.b16 %v1091
        %v5722 = vunpack.c.l.b16 %v1092
        %v5723 = vunpack.c.h.b16 %v1092
        %v5724 = vunpack.c.l.b16 %v1093
        %v5725 = vunpack.c.h.b16 %v1093
        %v5726 = vunpack.c.l.b16 %v1094
        %v5727 = vunpack.c.h.b16 %v1094
        %v5728 = vunpack.c.l.b16 %v1095
        %v5729 = vunpack.c.h.b16 %v1095
        %v5730 = vunpack.c.l.b16 %v1096
        %v5731 = vunpack.c.h.b16 %v1096
        %v5732 = vunpack.c.l.b16 %v1097
        %v5733 = vunpack.c.h.b16 %v1097
        %v5734 = vunpack.c.l.b16 %v1098
        %v5735 = vunpack.c.h.b16 %v1098
        %v5736 = vunpack.c.l.b16 %v1099
        %v5737 = vunpack.c.h.b16 %v1099
        %v5738 = vunpack.c.l.b16 %v1100
        %v5739 = vunpack.c.h.b16 %v1100
        %v5740 = vunpack.c.l.b16 %v1101
        %v5741 = vunpack.c.h.b16 %v1101
        %v5742 = vunpack.c.l.b16 %v1102
        %v5743 = vunpack.c.h.b16 %v1102
        %v5744 = vunpack.c.l.b16 %v1103
        %v5745 = vunpack.c.h.b16 %v1103
        %v5746 = vunpack.c.l.b16 %v1104
        %v5747 = vunpack.c.h.b16 %v1104
        %v5748 = vunpack.c.l.b16 %v1105
        %v5749 = vunpack.c.h.b16 %v1105
        %v5750 = vunpack.c.l.b16 %v1106
        %v5751 = vunpack.c.h.b16 %v1106
        %v5752 = vunpack.c.l.b16 %v1107
        %v5753 = vunpack.c.h.b16 %v1107
        %v5754 = vunpack.c.l.b16 %v1108
        %v5755 = vunpack.c.h.b16 %v1108
        %v5756 = vunpack.c.l.b16 %v1109
        %v5757 = vunpack.c.h.b16 %v1109
        %v5758 = vunpack.c.l.b16 %v1110
        %v5759 = vunpack.c.h.b16 %v1110
        %v5760 = vunpack.c.l.b16 %v1111
        %v5761 = vunpack.c.h.b16 %v1111
        %v5762 = vunpack.c.l.b16 %v1112
        %v5763 = vunpack.c.h.b16 %v1112
        %v5764 = vunpack.c.l.b16 %v1113
        %v5765 = vunpack.c.h.b16 %v1113
        %v5766 = vunpack.c.l.b16 %v1114
        %v5767 = vunpack.c.h.b16 %v1114
        %v5768 = vunpack.c.l.b16 %v1115
        %v5769 = vunpack.c.h.b16 %v1115
        %v5770 = vunpack.c.l.b16 %v1116
        %v5771 = vunpack.c.h.b16 %v1116
        %v5772 = vunpack.c.l.b16 %v1117
        %v5773 = vunpack.c.h.b16 %v1117
        %v5774 = vunpack.c.l.b16 %v1118
        %v5775 = vunpack.c.h.b16 %v1118
        %v5776 = vunpack.c.l.b16 %v1119
        %v5777 = vunpack.c.h.b16 %v1119
        %v5778 = vunpack.c.l.b16 %v1120
        %v5779 = vunpack.c.h.b16 %v1120
        %v5780 = vunpack.c.l.b16 %v1121
        %v5781 = vunpack.c.h.b16 %v1121
        %v5782 = vunpack.c.l.b16 %v1122
        %v5783 = vunpack.c.h.b16 %v1122
        %v5784 = vunpack.c.l.b16 %v1123
        %v5785 = vunpack.c.h.b16 %v1123
        %v5786 = vunpack.c.l.b16 %v1124
        %v5787 = vunpack.c.h.b16 %v1124
        %v5788 = vunpack.c.l.b16 %v1125
        %v5789 = vunpack.c.h.b16 %v1125
        %v5790 = vunpack.c.l.b16 %v1126
        %v5791 = vunpack.c.h.b16 %v1126
        %v5792 = vunpack.c.l.b16 %v1127
        %v5793 = vunpack.c.h.b16 %v1127
        %v5794 = vunpack.c.l.b16 %v1128
        %v5795 = vunpack.c.h.b16 %v1128
        %v5796 = vunpack.c.l.b16 %v1129
        %v5797 = vunpack.c.h.b16 %v1129
        %v5798 = vunpack.c.l.b16 %v1130
        %v5799 = vunpack.c.h.b16 %v1130
        %v5800 = vunpack.c.l.b16 %v1131
        %v5801 = vunpack.c.h.b16 %v1131
        %v5802 = vunpack.c.l.b16 %v1132
        %v5803 = vunpack.c.h.b16 %v1132
        %v5804 = vunpack.c.l.b16 %v1133
        %v5805 = vunpack.c.h.b16 %v1133
        %v5806 = vunpack.c.l.b16 %v1134
        %v5807 = vunpack.c.h.b16 %v1134
        %v5808 = vunpack.c.l.b16 %v1135
        %v5809 = vunpack.c.h.b16 %v1135
        %v5810 = vunpack.c.l.b16 %v1136
        %v5811 = vunpack.c.h.b16 %v1136
        %v5812 = vunpack.c.l.b16 %v1137
        %v5813 = vunpack.c.h.b16 %v1137
        %v5814 = vunpack.c.l.b16 %v1138
        %v5815 = vunpack.c.h.b16 %v1138
        %v5816 = vunpack.c.l.b16 %v1139
        %v5817 = vunpack.c.h.b16 %v1139
        %v5818 = vunpack.c.l.b16 %v1140
        %v5819 = vunpack.c.h.b16 %v1140
        %v5820 = vunpack.c.l.b16 %v1141
        %v5821 = vunpack.c.h.b16 %v1141
        %v5822 = vunpack.c.l.b16 %v1142
        %v5823 = vunpack.c.h.b16 %v1142
        %v5824 = vunpack.c.l.b16 %v1143
        %v5825 = vunpack.c.h.b16 %v1143
        %v5826 = vunpack.c.l.b16 %v1144
        %v5827 = vunpack.c.h.b16 %v1144
        %v5828 = vunpack.c.l.b16 %v1145
        %v5829 = vunpack.c.h.b16 %v1145
        %v5830 = vunpack.c.l.b16 %v1146
        %v5831 = vunpack.c.h.b16 %v1146
        %v5832 = vunpack.c.l.b16 %v1147
        %v5833 = vunpack.c.h.b16 %v1147
        %v5834 = vunpack.c.l.b16 %v1148
        %v5835 = vunpack.c.h.b16 %v1148
        %v5836 = vunpack.c.l.b16 %v1149
        %v5837 = vunpack.c.h.b16 %v1149
        %v5838 = vunpack.c.l.b16 %v1150
        %v5839 = vunpack.c.h.b16 %v1150
        %v5840 = vunpack.c.l.b16 %v1151
        %v5841 = vunpack.c.h.b16 %v1151
        %v5842 = vunpack.c.l.b16 %v1152
        %v5843 = vunpack.c.h.b16 %v1152
        %v5844 = vunpack.c.l.b16 %v1153
        %v5845 = vunpack.c.h.b16 %v1153
        %v5846 = vunpack.c.l.b16 %v1154
        %v5847 = vunpack.c.h.b16 %v1154
        %v5848 = vunpack.c.l.b16 %v1155
        %v5849 = vunpack.c.h.b16 %v1155
        %v5850 = vunpack.c.l.b16 %v1156
        %v5851 = vunpack.c.h.b16 %v1156
        %v5852 = vunpack.c.l.b16 %v1157
        %v5853 = vunpack.c.h.b16 %v1157
        %v5854 = vunpack.c.l.b16 %v1158
        %v5855 = vunpack.c.h.b16 %v1158
        %v5856 = vunpack.c.l.b16 %v1159
        %v5857 = vunpack.c.h.b16 %v1159
        %v5858 = vunpack.c.l.b16 %v1160
        %v5859 = vunpack.c.h.b16 %v1160
        %v5860 = vunpack.c.l.b16 %v1161
        %v5861 = vunpack.c.h.b16 %v1161
        %v5862 = vunpack.c.l.b16 %v1162
        %v5863 = vunpack.c.h.b16 %v1162
        %v5864 = vunpack.c.l.b16 %v1163
        %v5865 = vunpack.c.h.b16 %v1163
        %v5866 = vunpack.c.l.b16 %v1164
        %v5867 = vunpack.c.h.b16 %v1164
        %v5868 = vunpack.c.l.b16 %v1165
        %v5869 = vunpack.c.h.b16 %v1165
        %v5870 = vunpack.c.l.b16 %v1166
        %v5871 = vunpack.c.h.b16 %v1166
        %v5872 = vunpack.c.l.b16 %v1167
        %v5873 = vunpack.c.h.b16 %v1167
        %v5874 = vunpack.c.l.b16 %v1168
        %v5875 = vunpack.c.h.b16 %v1168
        %v5876 = vunpack.c.l.b16 %v1169
        %v5877 = vunpack.c.h.b16 %v1169
        %v5878 = vunpack.c.l.b16 %v1170
        %v5879 = vunpack.c.h.b16 %v1170
        %v5880 = vunpack.c.l.b16 %v1171
        %v5881 = vunpack.c.h.b16 %v1171
        %v5882 = vunpack.c.l.b16 %v1172
        %v5883 = vunpack.c.h.b16 %v1172
        %v5884 = vunpack.c.l.b16 %v1173
        %v5885 = vunpack.c.h.b16 %v1173
        %v5886 = vunpack.c.l.b16 %v1174
        %v5887 = vunpack.c.h.b16 %v1174
        %v5888 = vunpack.c.l.b16 %v1175
        %v5889 = vunpack.c.h.b16 %v1175
        %v5890 = vunpack.c.l.b16 %v1176
        %v5891 = vunpack.c.h.b16 %v1176
        %v5892 = vunpack.c.l.b16 %v1177
        %v5893 = vunpack.c.h.b16 %v1177
        %v5894 = vunpack.c.l.b16 %v1178
        %v5895 = vunpack.c.h.b16 %v1178
        %v5896 = vunpack.c.l.b16 %v1179
        %v5897 = vunpack.c.h.b16 %v1179
        %v5898 = vunpack.c.l.b16 %v1180
        %v5899 = vunpack.c.h.b16 %v1180
        %v5900 = vunpack.c.l.b16 %v1181
        %v5901 = vunpack.c.h.b16 %v1181
        %v5902 = vunpack.c.l.b16 %v1182
        %v5903 = vunpack.c.h.b16 %v1182
        %v5904 = vunpack.c.l.b16 %v1183
        %v5905 = vunpack.c.h.b16 %v1183
        %v5906 = vunpack.c.l.b16 %v1184
        %v5907 = vunpack.c.h.b16 %v1184
        %v5908 = vunpack.c.l.b16 %v1185
        %v5909 = vunpack.c.h.b16 %v1185
        %v5910 = vunpack.c.l.b16 %v1186
        %v5911 = vunpack.c.h.b16 %v1186
        %v5912 = vunpack.c.l.b16 %v1187
        %v5913 = vunpack.c.h.b16 %v1187
        %v5914 = vunpack.c.l.b16 %v1188
        %v5915 = vunpack.c.h.b16 %v1188
        %v5916 = vunpack.c.l.b16 %v1189
        %v5917 = vunpack.c.h.b16 %v1189
        %v5918 = vunpack.c.l.b16 %v1190
        %v5919 = vunpack.c.h.b16 %v1190
        %v5920 = vunpack.c.l.b16 %v1191
        %v5921 = vunpack.c.h.b16 %v1191
        %v5922 = vunpack.c.l.b16 %v1192
        %v5923 = vunpack.c.h.b16 %v1192
        %v5924 = vunpack.c.l.b16 %v1193
        %v5925 = vunpack.c.h.b16 %v1193
        %v5926 = vunpack.c.l.b16 %v1194
        %v5927 = vunpack.c.h.b16 %v1194
        %v5928 = vunpack.c.l.b16 %v1195
        %v5929 = vunpack.c.h.b16 %v1195
        %v5930 = vunpack.c.l.b16 %v1196
        %v5931 = vunpack.c.h.b16 %v1196
        %v5932 = vunpack.c.l.b16 %v1197
        %v5933 = vunpack.c.h.b16 %v1197
        %v5934 = vunpack.c.l.b16 %v1198
        %v5935 = vunpack.c.h.b16 %v1198
        %v5936 = vunpack.c.l.b16 %v1199
        %v5937 = vunpack.c.h.b16 %v1199
        %v5938 = vunpack.c.l.b16 %v1200
        %v5939 = vunpack.c.h.b16 %v1200
        %v5940 = vunpack.c.l.b16 %v1201
        %v5941 = vunpack.c.h.b16 %v1201
        %v5942 = vunpack.c.l.b16 %v1202
        %v5943 = vunpack.c.h.b16 %v1202
        %v5944 = vunpack.c.l.b16 %v1203
        %v5945 = vunpack.c.h.b16 %v1203
        %v5946 = vunpack.c.l.b16 %v1204
        %v5947 = vunpack.c.h.b16 %v1204
        %v5948 = vunpack.c.l.b16 %v1205
        %v5949 = vunpack.c.h.b16 %v1205
        %v5950 = vunpack.c.l.b16 %v1206
        %v5951 = vunpack.c.h.b16 %v1206
        %v5952 = vunpack.c.l.b16 %v1207
        %v5953 = vunpack.c.h.b16 %v1207
        %v5954 = vunpack.c.l.b16 %v1208
        %v5955 = vunpack.c.h.b16 %v1208
        %v5956 = vunpack.c.l.b16 %v1209
        %v5957 = vunpack.c.h.b16 %v1209
        %v5958 = vunpack.c.l.b16 %v1210
        %v5959 = vunpack.c.h.b16 %v1210
        %v5960 = vunpack.c.l.b16 %v1211
        %v5961 = vunpack.c.h.b16 %v1211
        %v5962 = vunpack.c.l.b16 %v1212
        %v5963 = vunpack.c.h.b16 %v1212
        %v5964 = vunpack.c.l.b16 %v1213
        %v5965 = vunpack.c.h.b16 %v1213
        %v5966 = vunpack.c.l.b16 %v1214
        %v5967 = vunpack.c.h.b16 %v1214
        %v5968 = vunpack.c.l.b16 %v1215
        %v5969 = vunpack.c.h.b16 %v1215
        %v5970 = vunpack.c.l.b16 %v1216
        %v5971 = vunpack.c.h.b16 %v1216
        %v5972 = vunpack.c.l.b16 %v1217
        %v5973 = vunpack.c.h.b16 %v1217
        %v5974 = vunpack.c.l.b16 %v1218
        %v5975 = vunpack.c.h.b16 %v1218
        %v5976 = vunpack.c.l.b16 %v1219
        %v5977 = vunpack.c.h.b16 %v1219
        %v5978 = vunpack.c.l.b16 %v1220
        %v5979 = vunpack.c.h.b16 %v1220
        %v5980 = vunpack.c.l.b16 %v1221
        %v5981 = vunpack.c.h.b16 %v1221
        %v5982 = vunpack.c.l.b16 %v1222
        %v5983 = vunpack.c.h.b16 %v1222
        %v5984 = vunpack.c.l.b16 %v1223
        %v5985 = vunpack.c.h.b16 %v1223
        %v5986 = vunpack.c.l.b16 %v1224
        %v5987 = vunpack.c.h.b16 %v1224
        %v5988 = vunpack.c.l.b16 %v1225
        %v5989 = vunpack.c.h.b16 %v1225
        %v5990 = vunpack.c.l.b16 %v1226
        %v5991 = vunpack.c.h.b16 %v1226
        %v5992 = vunpack.c.l.b16 %v1227
        %v5993 = vunpack.c.h.b16 %v1227
        %v5994 = vunpack.c.l.b16 %v1228
        %v5995 = vunpack.c.h.b16 %v1228
        %v5996 = vunpack.c.l.b16 %v1229
        %v5997 = vunpack.c.h.b16 %v1229
        %v5998 = vunpack.c.l.b16 %v1230
        %v5999 = vunpack.c.h.b16 %v1230
        %v6000 = vunpack.c.l.b16 %v1231
        %v6001 = vunpack.c.h.b16 %v1231
        %v6002 = vunpack.c.l.b16 %v1232
        %v6003 = vunpack.c.h.b16 %v1232
        %v6004 = vunpack.c.l.b16 %v1233
        %v6005 = vunpack.c.h.b16 %v1233
        %v6006 = vunpack.c.l.b16 %v1234
        %v6007 = vunpack.c.h.b16 %v1234
        %v6008 = vunpack.c.l.b16 %v1235
        %v6009 = vunpack.c.h.b16 %v1235
        %v6010 = vunpack.c.l.b16 %v1236
        %v6011 = vunpack.c.h.b16 %v1236
        %v6012 = vunpack.c.l.b16 %v1237
        %v6013 = vunpack.c.h.b16 %v1237
        %v6014 = vunpack.c.l.b16 %v1238
        %v6015 = vunpack.c.h.b16 %v1238
        %v6016 = vunpack.c.l.b16 %v1239
        %v6017 = vunpack.c.h.b16 %v1239
        %v6018 = vunpack.c.l.b16 %v1240
        %v6019 = vunpack.c.h.b16 %v1240
        %v6020 = vunpack.c.l.b16 %v1241
        %v6021 = vunpack.c.h.b16 %v1241
        %v6022 = vunpack.c.l.b16 %v1242
        %v6023 = vunpack.c.h.b16 %v1242
        %v6024 = vunpack.c.l.b16 %v1243
        %v6025 = vunpack.c.h.b16 %v1243
        %v6026 = vunpack.c.l.b16 %v1244
        %v6027 = vunpack.c.h.b16 %v1244
        %v6028 = vunpack.c.l.b16 %v1245
        %v6029 = vunpack.c.h.b16 %v1245
        %v6030 = vunpack.c.l.b16 %v1246
        %v6031 = vunpack.c.h.b16 %v1246
        %v6032 = vunpack.c.l.b16 %v1247
        %v6033 = vunpack.c.h.b16 %v1247
        %v6034 = vunpack.c.l.b16 %v1248
        %v6035 = vunpack.c.h.b16 %v1248
        %v6036 = vunpack.c.l.b16 %v1249
        %v6037 = vunpack.c.h.b16 %v1249
        %v6038 = vunpack.c.l.b16 %v1250
        %v6039 = vunpack.c.h.b16 %v1250
        %v6040 = vunpack.c.l.b16 %v1251
        %v6041 = vunpack.c.h.b16 %v1251
        %v6042 = vunpack.c.l.b16 %v1252
        %v6043 = vunpack.c.h.b16 %v1252
        %v6044 = vunpack.c.l.b16 %v1253
        %v6045 = vunpack.c.h.b16 %v1253
        %v6046 = vunpack.c.l.b16 %v1254
        %v6047 = vunpack.c.h.b16 %v1254
        %v6048 = vunpack.c.l.b16 %v1255
        %v6049 = vunpack.c.h.b16 %v1255
        %v6050 = vunpack.c.l.b16 %v1256
        %v6051 = vunpack.c.h.b16 %v1256
        %v6052 = vunpack.c.l.b16 %v1257
        %v6053 = vunpack.c.h.b16 %v1257
        %v6054 = vunpack.c.l.b16 %v1258
        %v6055 = vunpack.c.h.b16 %v1258
        %v6056 = vunpack.c.l.b16 %v1259
        %v6057 = vunpack.c.h.b16 %v1259
        %v6058 = vunpack.c.l.b16 %v1260
        %v6059 = vunpack.c.h.b16 %v1260
        %v6060 = vunpack.c.l.b16 %v1261
        %v6061 = vunpack.c.h.b16 %v1261
        %v6062 = vunpack.c.l.b16 %v1262
        %v6063 = vunpack.c.h.b16 %v1262
        %v6064 = vunpack.c.l.b16 %v1263
        %v6065 = vunpack.c.h.b16 %v1263
        %v6066 = vunpack.c.l.b16 %v1264
        %v6067 = vunpack.c.h.b16 %v1264
        %v6068 = vunpack.c.l.b16 %v1265
        %v6069 = vunpack.c.h.b16 %v1265
        %v6070 = vunpack.c.l.b16 %v1266
        %v6071 = vunpack.c.h.b16 %v1266
        %v6072 = vunpack.c.l.b16 %v1267
        %v6073 = vunpack.c.h.b16 %v1267
        %v6074 = vunpack.c.l.b16 %v1268
        %v6075 = vunpack.c.h.b16 %v1268
        %v6076 = vunpack.c.l.b16 %v1269
        %v6077 = vunpack.c.h.b16 %v1269
        %v6078 = vunpack.c.l.b16 %v1270
        %v6079 = vunpack.c.h.b16 %v1270
        %v6080 = vunpack.c.l.b16 %v1271
        %v6081 = vunpack.c.h.b16 %v1271
        %v6082 = vunpack.c.l.b16 %v1272
        %v6083 = vunpack.c.h.b16 %v1272
        %v6084 = vunpack.c.l.b16 %v1273
        %v6085 = vunpack.c.h.b16 %v1273
        %v6086 = vunpack.c.l.b16 %v1274
        %v6087 = vunpack.c.h.b16 %v1274
        %v6088 = vunpack.c.l.b16 %v1275
        %v6089 = vunpack.c.h.b16 %v1275
        %v6090 = vunpack.c.l.b16 %v1276
        %v6091 = vunpack.c.h.b16 %v1276
        %v6092 = vunpack.c.l.b16 %v1277
        %v6093 = vunpack.c.h.b16 %v1277
        %v6094 = vunpack.c.l.b16 %v1278
        %v6095 = vunpack.c.h.b16 %v1278
        %v6096 = vunpack.c.l.b16 %v1279
        %v6097 = vunpack.c.h.b16 %v1279
        %v6098 = vunpack.c.l.b16 %v1280
        %v6099 = vunpack.c.h.b16 %v1280
        %v6100 = vunpack.c.l.b16 %v1281
        %v6101 = vunpack.c.h.b16 %v1281
        %v6102 = vunpack.c.l.b16 %v1282
        %v6103 = vunpack.c.h.b16 %v1282
        %v6104 = vunpack.c.l.b16 %v1283
        %v6105 = vunpack.c.h.b16 %v1283
        %v6106 = vunpack.c.l.b16 %v1284
        %v6107 = vunpack.c.h.b16 %v1284
        %v6108 = vunpack.c.l.b16 %v1285
        %v6109 = vunpack.c.h.b16 %v1285
        %v6110 = vunpack.c.l.b16 %v1286
        %v6111 = vunpack.c.h.b16 %v1286
        %v6112 = vunpack.c.l.b16 %v1287
        %v6113 = vunpack.c.h.b16 %v1287
        %v6114 = vunpack.c.l.b16 %v1288
        %v6115 = vunpack.c.h.b16 %v1288
        %v6116 = vunpack.c.l.b16 %v1289
        %v6117 = vunpack.c.h.b16 %v1289
        %v6118 = vunpack.c.l.b16 %v1290
        %v6119 = vunpack.c.h.b16 %v1290
        %v6120 = vunpack.c.l.b16 %v1291
        %v6121 = vunpack.c.h.b16 %v1291
        %v6122 = vunpack.c.l.b16 %v1292
        %v6123 = vunpack.c.h.b16 %v1292
        %v6124 = vunpack.c.l.b16 %v1293
        %v6125 = vunpack.c.h.b16 %v1293
        %v6126 = vunpack.c.l.b16 %v1294
        %v6127 = vunpack.c.h.b16 %v1294
        %v6128 = vunpack.c.l.b16 %v1295
        %v6129 = vunpack.c.h.b16 %v1295
        %v6130 = vunpack.c.l.b16 %v1296
        %v6131 = vunpack.c.h.b16 %v1296
        %v6132 = vunpack.c.l.b16 %v1297
        %v6133 = vunpack.c.h.b16 %v1297
        %v6134 = vunpack.c.l.b16 %v1298
        %v6135 = vunpack.c.h.b16 %v1298
        %v6136 = vunpack.c.l.b16 %v1299
        %v6137 = vunpack.c.h.b16 %v1299
        %v6138 = vunpack.c.l.b16 %v1300
        %v6139 = vunpack.c.h.b16 %v1300
        %v6140 = vunpack.c.l.b16 %v1301
        %v6141 = vunpack.c.h.b16 %v1301
        %v6142 = vunpack.c.l.b16 %v1302
        %v6143 = vunpack.c.h.b16 %v1302
        %v6144 = vunpack.c.l.b16 %v1303
        %v6145 = vunpack.c.h.b16 %v1303
        %v6146 = vunpack.c.l.b16 %v1304
        %v6147 = vunpack.c.h.b16 %v1304
        %v6148 = vunpack.c.l.b16 %v1305
        %v6149 = vunpack.c.h.b16 %v1305
        %v6150 = vunpack.c.l.b16 %v1306
        %v6151 = vunpack.c.h.b16 %v1306
        %v6152 = vunpack.c.l.b16 %v1307
        %v6153 = vunpack.c.h.b16 %v1307
        %v6154 = vunpack.c.l.b16 %v1308
        %v6155 = vunpack.c.h.b16 %v1308
        %v6156 = vunpack.c.l.b16 %v1309
        %v6157 = vunpack.c.h.b16 %v1309
        %v6158 = vunpack.c.l.b16 %v1310
        %v6159 = vunpack.c.h.b16 %v1310
        %v6160 = vunpack.c.l.b16 %v1311
        %v6161 = vunpack.c.h.b16 %v1311
        %v6162 = vunpack.c.l.b16 %v1312
        %v6163 = vunpack.c.h.b16 %v1312
        %v6164 = vunpack.c.l.b16 %v1313
        %v6165 = vunpack.c.h.b16 %v1313
        %v6166 = vunpack.c.l.b16 %v1314
        %v6167 = vunpack.c.h.b16 %v1314
        %v6168 = vunpack.c.l.b16 %v1315
        %v6169 = vunpack.c.h.b16 %v1315
        %v6170 = vunpack.c.l.b16 %v1316
        %v6171 = vunpack.c.h.b16 %v1316
        %v6172 = vunpack.c.l.b16 %v1317
        %v6173 = vunpack.c.h.b16 %v1317
        %v6174 = vunpack.c.l.b16 %v1318
        %v6175 = vunpack.c.h.b16 %v1318
        %v6176 = vunpack.c.l.b16 %v1319
        %v6177 = vunpack.c.h.b16 %v1319
        %v6178 = vunpack.c.l.b16 %v1320
        %v6179 = vunpack.c.h.b16 %v1320
        %v6180 = vunpack.c.l.b16 %v1321
        %v6181 = vunpack.c.h.b16 %v1321
        %v6182 = vunpack.c.l.b16 %v1322
        %v6183 = vunpack.c.h.b16 %v1322
        %v6184 = vunpack.c.l.b16 %v1323
        %v6185 = vunpack.c.h.b16 %v1323
        %v6186 = vunpack.c.l.b16 %v1324
        %v6187 = vunpack.c.h.b16 %v1324
        %v6188 = vunpack.c.l.b16 %v1325
        %v6189 = vunpack.c.h.b16 %v1325
        %v6190 = vunpack.c.l.b16 %v1326
        %v6191 = vunpack.c.h.b16 %v1326
        %v6192 = vunpack.c.l.b16 %v1327
        %v6193 = vunpack.c.h.b16 %v1327
        %v6194 = vunpack.c.l.b16 %v1328
        %v6195 = vunpack.c.h.b16 %v1328
        %v6196 = vunpack.c.l.b16 %v1329
        %v6197 = vunpack.c.h.b16 %v1329
        %v6198 = vunpack.c.l.b16 %v1330
        %v6199 = vunpack.c.h.b16 %v1330
        %v6200 = vunpack.c.l.b16 %v1331
        %v6201 = vunpack.c.h.b16 %v1331
        %v6202 = vunpack.c.l.b16 %v1332
        %v6203 = vunpack.c.h.b16 %v1332
        %v6204 = vunpack.c.l.b16 %v1333
        %v6205 = vunpack.c.h.b16 %v1333
        %v6206 = vunpack.c.l.b16 %v1334
        %v6207 = vunpack.c.h.b16 %v1334
        %v6208 = vunpack.c.l.b16 %v1335
        %v6209 = vunpack.c.h.b16 %v1335
        %v6210 = vunpack.c.l.b16 %v1336
        %v6211 = vunpack.c.h.b16 %v1336
        %v6212 = vunpack.c.l.b16 %v1337
        %v6213 = vunpack.c.h.b16 %v1337
        %v6214 = vunpack.c.l.b16 %v1338
        %v6215 = vunpack.c.h.b16 %v1338
        %v6216 = vunpack.c.l.b16 %v1339
        %v6217 = vunpack.c.h.b16 %v1339
        %v6218 = vunpack.c.l.b16 %v1340
        %v6219 = vunpack.c.h.b16 %v1340
        %v6220 = vunpack.c.l.b16 %v1341
        %v6221 = vunpack.c.h.b16 %v1341
        %v6222 = vunpack.c.l.b16 %v1342
        %v6223 = vunpack.c.h.b16 %v1342
        %v6224 = vunpack.c.l.b16 %v1343
        %v6225 = vunpack.c.h.b16 %v1343
        %v6226 = vunpack.c.l.b16 %v1344
        %v6227 = vunpack.c.h.b16 %v1344
        %v6228 = vunpack.c.l.b16 %v1345
        %v6229 = vunpack.c.h.b16 %v1345
        %v6230 = vunpack.c.l.b16 %v1346
        %v6231 = vunpack.c.h.b16 %v1346
        %v6232 = vunpack.c.l.b16 %v1347
        %v6233 = vunpack.c.h.b16 %v1347
        %v6234 = vunpack.c.l.b16 %v1348
        %v6235 = vunpack.c.h.b16 %v1348
        %v6236 = vunpack.c.l.b16 %v1349
        %v6237 = vunpack.c.h.b16 %v1349
        %v6238 = vunpack.c.l.b16 %v1350
        %v6239 = vunpack.c.h.b16 %v1350
        %v6240 = vunpack.c.l.b16 %v1351
        %v6241 = vunpack.c.h.b16 %v1351
        %v6242 = vunpack.c.l.b16 %v1352
        %v6243 = vunpack.c.h.b16 %v1352
        %v6244 = vunpack.c.l.b16 %v1353
        %v6245 = vunpack.c.h.b16 %v1353
        %v6246 = vunpack.c.l.b16 %v1354
        %v6247 = vunpack.c.h.b16 %v1354
        %v6248 = vunpack.c.l.b16 %v1355
        %v6249 = vunpack.c.h.b16 %v1355
        %v6250 = vunpack.c.l.b16 %v1356
        %v6251 = vunpack.c.h.b16 %v1356
        %v6252 = vunpack.c.l.b16 %v1357
        %v6253 = vunpack.c.h.b16 %v1357
        %v6254 = vunpack.c.l.b16 %v1358
        %v6255 = vunpack.c.h.b16 %v1358
        %v6256 = vunpack.c.l.b16 %v1359
        %v6257 = vunpack.c.h.b16 %v1359
        %v6258 = vunpack.c.l.b16 %v1360
        %v6259 = vunpack.c.h.b16 %v1360
        %v6260 = vunpack.c.l.b16 %v1361
        %v6261 = vunpack.c.h.b16 %v1361
        %v6262 = vunpack.c.l.b16 %v1362
        %v6263 = vunpack.c.h.b16 %v1362
        %v6264 = vunpack.c.l.b16 %v1363
        %v6265 = vunpack.c.h.b16 %v1363
        %v6266 = vunpack.c.l.b16 %v1364
        %v6267 = vunpack.c.h.b16 %v1364
        %v6268 = vunpack.c.l.b16 %v1365
        %v6269 = vunpack.c.h.b16 %v1365
        %v6270 = vunpack.c.l.b16 %v1366
        %v6271 = vunpack.c.h.b16 %v1366
        %v6272 = vunpack.c.l.b16 %v1367
        %v6273 = vunpack.c.h.b16 %v1367
        %v6274 = vunpack.c.l.b16 %v1368
        %v6275 = vunpack.c.h.b16 %v1368
        %v6276 = vunpack.c.l.b16 %v1369
        %v6277 = vunpack.c.h.b16 %v1369
        %v6278 = vunpack.c.l.b16 %v1370
        %v6279 = vunpack.c.h.b16 %v1370
        %v6280 = vunpack.c.l.b16 %v1371
        %v6281 = vunpack.c.h.b16 %v1371
        %v6282 = vunpack.c.l.b16 %v1372
        %v6283 = vunpack.c.h.b16 %v1372
        %v6284 = vunpack.c.l.b16 %v1373
        %v6285 = vunpack.c.h.b16 %v1373
        %v6286 = vunpack.c.l.b16 %v1374
        %v6287 = vunpack.c.h.b16 %v1374
        %v6288 = vunpack.c.l.b16 %v1375
        %v6289 = vunpack.c.h.b16 %v1375
        %v6290 = vunpack.c.l.b16 %v1376
        %v6291 = vunpack.c.h.b16 %v1376
        %v6292 = vunpack.c.l.b16 %v1377
        %v6293 = vunpack.c.h.b16 %v1377
        %v6294 = vunpack.c.l.b16 %v1378
        %v6295 = vunpack.c.h.b16 %v1378
        %v6296 = vunpack.c.l.b16 %v1379
        %v6297 = vunpack.c.h.b16 %v1379
        %v6298 = vunpack.c.l.b16 %v1380
        %v6299 = vunpack.c.h.b16 %v1380
        %v6300 = vunpack.c.l.b16 %v1381
        %v6301 = vunpack.c.h.b16 %v1381
        %v6302 = vunpack.c.l.b16 %v1382
        %v6303 = vunpack.c.h.b16 %v1382
        %v6304 = vunpack.c.l.b16 %v1383
        %v6305 = vunpack.c.h.b16 %v1383
        %v6306 = vunpack.c.l.b16 %v1384
        %v6307 = vunpack.c.h.b16 %v1384
        %v6308 = vunpack.c.l.b16 %v1385
        %v6309 = vunpack.c.h.b16 %v1385
        %v6310 = vunpack.c.l.b16 %v1386
        %v6311 = vunpack.c.h.b16 %v1386
        %v6312 = vunpack.c.l.b16 %v1387
        %v6313 = vunpack.c.h.b16 %v1387
        %v6314 = vunpack.c.l.b16 %v1388
        %v6315 = vunpack.c.h.b16 %v1388
        %v6316 = vunpack.c.l.b16 %v1389
        %v6317 = vunpack.c.h.b16 %v1389
        %v6318 = vunpack.c.l.b16 %v1390
        %v6319 = vunpack.c.h.b16 %v1390
        %v6320 = vunpack.c.l.b16 %v1391
        %v6321 = vunpack.c.h.b16 %v1391
        %v6322 = vunpack.c.l.b16 %v1392
        %v6323 = vunpack.c.h.b16 %v1392
        %v6324 = vunpack.c.l.b16 %v1393
        %v6325 = vunpack.c.h.b16 %v1393
        %v6326 = vunpack.c.l.b16 %v1394
        %v6327 = vunpack.c.h.b16 %v1394
        %v6328 = vunpack.c.l.b16 %v1395
        %v6329 = vunpack.c.h.b16 %v1395
        %v6330 = vunpack.c.l.b16 %v1396
        %v6331 = vunpack.c.h.b16 %v1396
        %v6332 = vunpack.c.l.b16 %v1397
        %v6333 = vunpack.c.h.b16 %v1397
        %v6334 = vunpack.c.l.b16 %v1398
        %v6335 = vunpack.c.h.b16 %v1398
        %v6336 = vunpack.c.l.b16 %v1399
        %v6337 = vunpack.c.h.b16 %v1399
        %v6338 = vunpack.c.l.b16 %v1400
        %v6339 = vunpack.c.h.b16 %v1400
        %v6340 = vunpack.c.l.b16 %v1401
        %v6341 = vunpack.c.h.b16 %v1401
        %v6342 = vunpack.c.l.b16 %v1402
        %v6343 = vunpack.c.h.b16 %v1402
        %v6344 = vunpack.c.l.b16 %v1403
        %v6345 = vunpack.c.h.b16 %v1403
        %v6346 = vunpack.c.l.b16 %v1404
        %v6347 = vunpack.c.h.b16 %v1404
        %v6348 = vunpack.c.l.b16 %v1405
        %v6349 = vunpack.c.h.b16 %v1405
        %v6350 = vunpack.c.l.b16 %v1406
        %v6351 = vunpack.c.h.b16 %v1406
        %v6352 = vunpack.c.l.b16 %v1407
        %v6353 = vunpack.c.h.b16 %v1407
        %v6354 = vunpack.c.l.b16 %v1408
        %v6355 = vunpack.c.h.b16 %v1408
        %v6356 = vunpack.c.l.b16 %v1409
        %v6357 = vunpack.c.h.b16 %v1409
        %v6358 = vunpack.c.l.b16 %v1410
        %v6359 = vunpack.c.h.b16 %v1410
        %v6360 = vunpack.c.l.b16 %v1411
        %v6361 = vunpack.c.h.b16 %v1411
        %v6362 = vunpack.c.l.b16 %v1412
        %v6363 = vunpack.c.h.b16 %v1412
        %v6364 = vunpack.c.l.b16 %v1413
        %v6365 = vunpack.c.h.b16 %v1413
        %v6366 = vunpack.c.l.b16 %v1414
        %v6367 = vunpack.c.h.b16 %v1414
        %v6368 = vunpack.c.l.b16 %v1415
        %v6369 = vunpack.c.h.b16 %v1415
        %v6370 = vunpack.c.l.b16 %v1416
        %v6371 = vunpack.c.h.b16 %v1416
        %v6372 = vunpack.c.l.b16 %v1417
        %v6373 = vunpack.c.h.b16 %v1417
        %v6374 = vunpack.c.l.b16 %v1418
        %v6375 = vunpack.c.h.b16 %v1418
        %v6376 = vunpack.c.l.b16 %v1419
        %v6377 = vunpack.c.h.b16 %v1419
        %v6378 = vunpack.c.l.b16 %v1420
        %v6379 = vunpack.c.h.b16 %v1420
        %v6380 = vunpack.c.l.b16 %v1421
        %v6381 = vunpack.c.h.b16 %v1421
        %v6382 = vunpack.c.l.b16 %v1422
        %v6383 = vunpack.c.h.b16 %v1422
        %v6384 = vunpack.c.l.b16 %v1423
        %v6385 = vunpack.c.h.b16 %v1423
        %v6386 = vunpack.c.l.b16 %v1424
        %v6387 = vunpack.c.h.b16 %v1424
        %v6388 = vunpack.c.l.b16 %v1425
        %v6389 = vunpack.c.h.b16 %v1425
        %v6390 = vunpack.c.l.b16 %v1426
        %v6391 = vunpack.c.h.b16 %v1426
        %v6392 = vunpack.c.l.b16 %v1427
        %v6393 = vunpack.c.h.b16 %v1427
        %v6394 = vunpack.c.l.b16 %v1428
        %v6395 = vunpack.c.h.b16 %v1428
        %v6396 = vunpack.c.l.b16 %v1429
        %v6397 = vunpack.c.h.b16 %v1429
        %v6398 = vunpack.c.l.b16 %v1430
        %v6399 = vunpack.c.h.b16 %v1430
        %v6400 = vunpack.c.l.b16 %v1431
        %v6401 = vunpack.c.h.b16 %v1431
        %v6402 = vunpack.c.l.b16 %v1432
        %v6403 = vunpack.c.h.b16 %v1432
        %v6404 = vunpack.c.l.b16 %v1433
        %v6405 = vunpack.c.h.b16 %v1433
        %v6406 = vunpack.c.l.b16 %v1434
        %v6407 = vunpack.c.h.b16 %v1434
        %v6408 = vunpack.c.l.b16 %v1435
        %v6409 = vunpack.c.h.b16 %v1435
        %v6410 = vunpack.c.l.b16 %v1436
        %v6411 = vunpack.c.h.b16 %v1436
        %v6412 = vunpack.c.l.b16 %v1437
        %v6413 = vunpack.c.h.b16 %v1437
        %v6414 = vunpack.c.l.b16 %v1438
        %v6415 = vunpack.c.h.b16 %v1438
        %v6416 = vunpack.c.l.b16 %v1439
        %v6417 = vunpack.c.h.b16 %v1439
        %v6418 = vunpack.c.l.b16 %v1440
        %v6419 = vunpack.c.h.b16 %v1440
        %v6420 = vunpack.c.l.b16 %v1441
        %v6421 = vunpack.c.h.b16 %v1441
        %v6422 = vunpack.c.l.b16 %v1442
        %v6423 = vunpack.c.h.b16 %v1442
        %v6424 = vunpack.c.l.b16 %v1443
        %v6425 = vunpack.c.h.b16 %v1443
        %v6426 = vunpack.c.l.b16 %v1444
        %v6427 = vunpack.c.h.b16 %v1444
        %v6428 = vunpack.c.l.b16 %v1445
        %v6429 = vunpack.c.h.b16 %v1445
        %v6430 = vunpack.c.l.b16 %v1446
        %v6431 = vunpack.c.h.b16 %v1446
        %v6432 = vunpack.c.l.b16 %v1447
        %v6433 = vunpack.c.h.b16 %v1447
        %v6434 = vunpack.c.l.b16 %v1448
        %v6435 = vunpack.c.h.b16 %v1448
        %v6436 = vunpack.c.l.b16 %v1449
        %v6437 = vunpack.c.h.b16 %v1449
        %v6438 = vunpack.c.l.b16 %v1450
        %v6439 = vunpack.c.h.b16 %v1450
        %v6440 = vunpack.c.l.b16 %v1451
        %v6441 = vunpack.c.h.b16 %v1451
        %v6442 = vunpack.c.l.b16 %v1452
        %v6443 = vunpack.c.h.b16 %v1452
        %v6444 = vunpack.c.l.b16 %v1453
        %v6445 = vunpack.c.h.b16 %v1453
        %v6446 = vunpack.c.l.b16 %v1454
        %v6447 = vunpack.c.h.b16 %v1454
        %v6448 = vunpack.c.l.b16 %v1455
        %v6449 = vunpack.c.h.b16 %v1455
        %v6450 = vunpack.c.l.b16 %v1456
        %v6451 = vunpack.c.h.b16 %v1456
        %v6452 = vunpack.c.l.b16 %v1457
        %v6453 = vunpack.c.h.b16 %v1457
        %v6454 = vunpack.c.l.b16 %v1458
        %v6455 = vunpack.c.h.b16 %v1458
        %v6456 = vunpack.c.l.b16 %v1459
        %v6457 = vunpack.c.h.b16 %v1459
        %v6458 = vunpack.c.l.b16 %v1460
        %v6459 = vunpack.c.h.b16 %v1460
        %v6460 = vunpack.c.l.b16 %v1461
        %v6461 = vunpack.c.h.b16 %v1461
        %v6462 = vunpack.c.l.b16 %v1462
        %v6463 = vunpack.c.h.b16 %v1462
        %v6464 = vunpack.c.l.b16 %v1463
        %v6465 = vunpack.c.h.b16 %v1463
        %v6466 = vunpack.c.l.b16 %v1464
        %v6467 = vunpack.c.h.b16 %v1464
        %v6468 = vunpack.c.l.b16 %v1465
        %v6469 = vunpack.c.h.b16 %v1465
        %v6470 = vunpack.c.l.b16 %v1466
        %v6471 = vunpack.c.h.b16 %v1466
        %v6472 = vunpack.c.l.b16 %v1467
        %v6473 = vunpack.c.h.b16 %v1467
        %v6474 = vunpack.c.l.b16 %v1468
        %v6475 = vunpack.c.h.b16 %v1468
        %v6476 = vunpack.c.l.b16 %v1469
        %v6477 = vunpack.c.h.b16 %v1469
        %v6478 = vunpack.c.l.b16 %v1470
        %v6479 = vunpack.c.h.b16 %v1470
        %v6480 = vunpack.c.l.b16 %v1471
        %v6481 = vunpack.c.h.b16 %v1471
        %v6482 = vunpack.c.l.b16 %v1472
        %v6483 = vunpack.c.h.b16 %v1472
        %v6484 = vunpack.c.l.b16 %v1473
        %v6485 = vunpack.c.h.b16 %v1473
        %v6486 = vunpack.c.l.b16 %v1474
        %v6487 = vunpack.c.h.b16 %v1474
        %v6488 = vunpack.c.l.b16 %v1475
        %v6489 = vunpack.c.h.b16 %v1475
        %v6490 = vunpack.c.l.b16 %v1476
        %v6491 = vunpack.c.h.b16 %v1476
        %v6492 = vunpack.c.l.b16 %v1477
        %v6493 = vunpack.c.h.b16 %v1477
        %v6494 = vunpack.c.l.b16 %v1478
        %v6495 = vunpack.c.h.b16 %v1478
        %v6496 = vunpack.c.l.b16 %v1479
        %v6497 = vunpack.c.h.b16 %v1479
        %v6498 = vunpack.c.l.b16 %v1480
        %v6499 = vunpack.c.h.b16 %v1480
        %v6500 = vunpack.c.l.b16 %v1481
        %v6501 = vunpack.c.h.b16 %v1481
        %v6502 = vunpack.c.l.b16 %v1482
        %v6503 = vunpack.c.h.b16 %v1482
        %v6504 = vunpack.c.l.b16 %v1483
        %v6505 = vunpack.c.h.b16 %v1483
        %v6506 = vunpack.c.l.b16 %v1484
        %v6507 = vunpack.c.h.b16 %v1484
        %v6508 = vunpack.c.l.b16 %v1485
        %v6509 = vunpack.c.h.b16 %v1485
        %v6510 = vunpack.c.l.b16 %v1486
        %v6511 = vunpack.c.h.b16 %v1486
        %v6512 = vunpack.c.l.b16 %v1487
        %v6513 = vunpack.c.h.b16 %v1487
        %v6514 = vunpack.c.l.b16 %v1488
        %v6515 = vunpack.c.h.b16 %v1488
        %v6516 = vunpack.c.l.b16 %v1489
        %v6517 = vunpack.c.h.b16 %v1489
        %v6518 = vunpack.c.l.b16 %v1490
        %v6519 = vunpack.c.h.b16 %v1490
        %v6520 = vunpack.c.l.b16 %v1491
        %v6521 = vunpack.c.h.b16 %v1491
        %v6522 = vunpack.c.l.b16 %v1492
        %v6523 = vunpack.c.h.b16 %v1492
        %v6524 = vunpack.c.l.b16 %v1493
        %v6525 = vunpack.c.h.b16 %v1493
        %v6526 = vunpack.c.l.b16 %v1494
        %v6527 = vunpack.c.h.b16 %v1494
        %v6528 = vunpack.c.l.b16 %v1495
        %v6529 = vunpack.c.h.b16 %v1495
        %v6530 = vunpack.c.l.b16 %v1496
        %v6531 = vunpack.c.h.b16 %v1496
        %v6532 = vunpack.c.l.b16 %v1497
        %v6533 = vunpack.c.h.b16 %v1497
        %v6534 = vunpack.c.l.b16 %v1498
        %v6535 = vunpack.c.h.b16 %v1498
        %v6536 = vunpack.c.l.b16 %v1499
        %v6537 = vunpack.c.h.b16 %v1499
        %v6538 = vunpack.c.l.b16 %v1500
        %v6539 = vunpack.c.h.b16 %v1500
        %v6540 = vunpack.c.l.b16 %v1501
        %v6541 = vunpack.c.h.b16 %v1501
        %v6542 = vunpack.c.l.b16 %v1502
        %v6543 = vunpack.c.h.b16 %v1502
        %v6544 = vunpack.c.l.b16 %v1503
        %v6545 = vunpack.c.h.b16 %v1503
        %v6546 = vunpack.c.l.b16 %v1504
        %v6547 = vunpack.c.h.b16 %v1504
        %v6548 = vunpack.c.l.b16 %v1505
        %v6549 = vunpack.c.h.b16 %v1505
        %v6550 = vunpack.c.l.b16 %v1506
        %v6551 = vunpack.c.h.b16 %v1506
        %v6552 = vunpack.c.l.b16 %v1507
        %v6553 = vunpack.c.h.b16 %v1507
        %v6554 = vunpack.c.l.b16 %v1508
        %v6555 = vunpack.c.h.b16 %v1508
        %v6556 = vunpack.c.l.b16 %v1509
        %v6557 = vunpack.c.h.b16 %v1509
        %v6558 = vunpack.c.l.b16 %v1510
        %v6559 = vunpack.c.h.b16 %v1510
        %v6560 = vunpack.c.l.b16 %v1511
        %v6561 = vunpack.c.h.b16 %v1511
        %v6562 = vunpack.c.l.b16 %v1512
        %v6563 = vunpack.c.h.b16 %v1512
        %v6564 = vunpack.c.l.b16 %v1513
        %v6565 = vunpack.c.h.b16 %v1513
        %v6566 = vunpack.c.l.b16 %v1514
        %v6567 = vunpack.c.h.b16 %v1514
        %v6568 = vunpack.c.l.b16 %v1515
        %v6569 = vunpack.c.h.b16 %v1515
        %v6570 = vunpack.c.l.b16 %v1516
        %v6571 = vunpack.c.h.b16 %v1516
        %v6572 = vunpack.c.l.b16 %v1517
        %v6573 = vunpack.c.h.b16 %v1517
        %v6574 = vunpack.c.l.b16 %v1518
        %v6575 = vunpack.c.h.b16 %v1518
        %v6576 = vunpack.c.l.b16 %v1519
        %v6577 = vunpack.c.h.b16 %v1519
        %v6578 = vunpack.c.l.b16 %v1520
        %v6579 = vunpack.c.h.b16 %v1520
        %v6580 = vunpack.c.l.b16 %v1521
        %v6581 = vunpack.c.h.b16 %v1521
        %v6582 = vunpack.c.l.b16 %v1522
        %v6583 = vunpack.c.h.b16 %v1522
        %v6584 = vunpack.c.l.b16 %v1523
        %v6585 = vunpack.c.h.b16 %v1523
        %v6586 = vunpack.c.l.b16 %v1524
        %v6587 = vunpack.c.h.b16 %v1524
        %v6588 = vunpack.c.l.b16 %v1525
        %v6589 = vunpack.c.h.b16 %v1525
        %v6590 = vunpack.c.l.b16 %v1526
        %v6591 = vunpack.c.h.b16 %v1526
        %v6592 = vunpack.c.l.b16 %v1527
        %v6593 = vunpack.c.h.b16 %v1527
        %v6594 = vunpack.c.l.b16 %v1528
        %v6595 = vunpack.c.h.b16 %v1528
        %v6596 = vunpack.c.l.b16 %v1529
        %v6597 = vunpack.c.h.b16 %v1529
        %v6598 = vunpack.c.l.b16 %v1530
        %v6599 = vunpack.c.h.b16 %v1530
        %v6600 = vunpack.c.l.b16 %v1531
        %v6601 = vunpack.c.h.b16 %v1531
        %v6602 = vunpack.c.l.b16 %v1532
        %v6603 = vunpack.c.h.b16 %v1532
        %v6604 = vunpack.c.l.b16 %v1533
        %v6605 = vunpack.c.h.b16 %v1533
        %v6606 = vunpack.c.l.b16 %v1534
        %v6607 = vunpack.c.h.b16 %v1534
        %v6608 = vunpack.c.l.b16 %v1535
        %v6609 = vunpack.c.h.b16 %v1535
        %v6610 = vunpack.c.l.b16 %v1536
        %v6611 = vunpack.c.h.b16 %v1536
        %v6612 = vunpack.c.l.b16 %v1537
        %v6613 = vunpack.c.h.b16 %v1537
        %v6614 = vunpack.c.l.b16 %v1538
        %v6615 = vunpack.c.h.b16 %v1538
        %v6616 = vunpack.c.l.b16 %v1539
        %v6617 = vunpack.c.h.b16 %v1539
        %v6618 = vunpack.c.l.b16 %v1540
        %v6619 = vunpack.c.h.b16 %v1540
        %v6620 = vunpack.c.l.b16 %v1541
        %v6621 = vunpack.c.h.b16 %v1541
        %v6622 = vunpack.c.l.b16 %v1542
        %v6623 = vunpack.c.h.b16 %v1542
        %v6624 = vunpack.c.l.b16 %v1543
        %v6625 = vunpack.c.h.b16 %v1543
        %v6626 = vunpack.c.l.b16 %v1544
        %v6627 = vunpack.c.h.b16 %v1544
        %v6628 = vunpack.c.l.b16 %v1545
        %v6629 = vunpack.c.h.b16 %v1545
        %v6630 = vunpack.c.l.b16 %v1546
        %v6631 = vunpack.c.h.b16 %v1546
        %v6632 = vunpack.c.l.b16 %v1547
        %v6633 = vunpack.c.h.b16 %v1547
        %v6634 = vunpack.c.l.b16 %v1548
        %v6635 = vunpack.c.h.b16 %v1548
        %v6636 = vunpack.c.l.b16 %v1549
        %v6637 = vunpack.c.h.b16 %v1549
        %v6638 = vunpack.c.l.b16 %v1550
        %v6639 = vunpack.c.h.b16 %v1550
        %v6640 = vunpack.c.l.b16 %v1551
        %v6641 = vunpack.c.h.b16 %v1551
        %v6642 = vunpack.c.l.b16 %v1552
        %v6643 = vunpack.c.h.b16 %v1552
        %v6644 = vunpack.c.l.b16 %v1553
        %v6645 = vunpack.c.h.b16 %v1553
        %v6646 = vunpack.c.l.b16 %v1554
        %v6647 = vunpack.c.h.b16 %v1554
        %v6648 = vunpack.c.l.b16 %v1555
        %v6649 = vunpack.c.h.b16 %v1555
        %v6650 = vunpack.c.l.b16 %v1556
        %v6651 = vunpack.c.h.b16 %v1556
        %v6652 = vunpack.c.l.b16 %v1557
        %v6653 = vunpack.c.h.b16 %v1557
        %v6654 = vunpack.c.l.b16 %v1558
        %v6655 = vunpack.c.h.b16 %v1558
        %v6656 = vunpack.c.l.b16 %v1559
        %v6657 = vunpack.c.h.b16 %v1559
        %v6658 = vunpack.c.l.b16 %v1560
        %v6659 = vunpack.c.h.b16 %v1560
        %v6660 = vunpack.c.l.b16 %v1561
        %v6661 = vunpack.c.h.b16 %v1561
        %v6662 = vunpack.c.l.b16 %v1562
        %v6663 = vunpack.c.h.b16 %v1562
        %v6664 = vunpack.c.l.b16 %v1563
        %v6665 = vunpack.c.h.b16 %v1563
        %v6666 = vunpack.c.l.b16 %v1564
        %v6667 = vunpack.c.h.b16 %v1564
        %v6668 = vunpack.c.l.b16 %v1565
        %v6669 = vunpack.c.h.b16 %v1565
        %v6670 = vunpack.c.l.b16 %v1566
        %v6671 = vunpack.c.h.b16 %v1566
        %v6672 = vunpack.c.l.b16 %v1567
        %v6673 = vunpack.c.h.b16 %v1567
        %v6674 = vunpack.c.l.b16 %v1568
        %v6675 = vunpack.c.h.b16 %v1568
        %v6676 = vunpack.c.l.b16 %v1569
        %v6677 = vunpack.c.h.b16 %v1569
        %v6678 = vunpack.c.l.b16 %v1570
        %v6679 = vunpack.c.h.b16 %v1570
        %v6680 = vunpack.c.l.b16 %v1571
        %v6681 = vunpack.c.h.b16 %v1571
        %v6682 = vunpack.c.l.b16 %v1572
        %v6683 = vunpack.c.h.b16 %v1572
        %v6684 = vunpack.c.l.b16 %v1573
        %v6685 = vunpack.c.h.b16 %v1573
        %v6686 = vunpack.c.l.b16 %v1574
        %v6687 = vunpack.c.h.b16 %v1574
        %v6688 = vunpack.c.l.b16 %v1575
        %v6689 = vunpack.c.h.b16 %v1575
        %v6690 = vunpack.c.l.b16 %v1576
        %v6691 = vunpack.c.h.b16 %v1576
        %v6692 = vunpack.c.l.b16 %v1577
        %v6693 = vunpack.c.h.b16 %v1577
        %v6694 = vunpack.c.l.b16 %v1578
        %v6695 = vunpack.c.h.b16 %v1578
        %v6696 = vunpack.c.l.b16 %v1579
        %v6697 = vunpack.c.h.b16 %v1579
        %v6698 = vunpack.c.l.b16 %v1580
        %v6699 = vunpack.c.h.b16 %v1580
        %v6700 = vunpack.c.l.b16 %v1581
        %v6701 = vunpack.c.h.b16 %v1581
        %v6702 = vunpack.c.l.b16 %v1582
        %v6703 = vunpack.c.h.b16 %v1582
        %v6704 = vunpack.c.l.b16 %v1583
        %v6705 = vunpack.c.h.b16 %v1583
        %v6706 = vunpack.c.l.b16 %v1584
        %v6707 = vunpack.c.h.b16 %v1584
        %v6708 = vunpack.c.l.b16 %v1585
        %v6709 = vunpack.c.h.b16 %v1585
        %v6710 = vunpack.c.l.b16 %v1586
        %v6711 = vunpack.c.h.b16 %v1586
        %v6712 = vunpack.c.l.b16 %v1587
        %v6713 = vunpack.c.h.b16 %v1587
        %v6714 = vunpack.c.l.b16 %v1588
        %v6715 = vunpack.c.h.b16 %v1588
        %v6716 = vunpack.c.l.b16 %v1589
        %v6717 = vunpack.c.h.b16 %v1589
        %v6718 = vunpack.c.l.b16 %v1590
        %v6719 = vunpack.c.h.b16 %v1590
        %v6720 = vunpack.c.l.b16 %v1591
        %v6721 = vunpack.c.h.b16 %v1591
        %v6722 = vunpack.c.l.b16 %v1592
        %v6723 = vunpack.c.h.b16 %v1592
        %v6724 = vunpack.c.l.b16 %v1593
        %v6725 = vunpack.c.h.b16 %v1593
        %v6726 = vunpack.c.l.b16 %v1594
        %v6727 = vunpack.c.h.b16 %v1594
        %v6728 = vunpack.c.l.b16 %v1595
        %v6729 = vunpack.c.h.b16 %v1595
        %v6730 = vunpack.c.l.b16 %v1596
        %v6731 = vunpack.c.h.b16 %v1596
        %v6732 = vunpack.c.l.b16 %v1597
        %v6733 = vunpack.c.h.b16 %v1597
        %v6734 = vunpack.c.l.b16 %v1598
        %v6735 = vunpack.c.h.b16 %v1598
        %v6736 = vunpack.c.l.b16 %v1599
        %v6737 = vunpack.c.h.b16 %v1599
        %v6738 = vunpack.c.l.b16 %v1600
        %v6739 = vunpack.c.h.b16 %v1600
        %v6740 = vunpack.c.l.b16 %v1601
        %v6741 = vunpack.c.h.b16 %v1601
        %v6742 = vunpack.c.l.b16 %v1602
        %v6743 = vunpack.c.h.b16 %v1602
        %v6744 = vunpack.c.l.b16 %v1603
        %v6745 = vunpack.c.h.b16 %v1603
        %v6746 = vunpack.c.l.b16 %v1604
        %v6747 = vunpack.c.h.b16 %v1604
        %v6748 = vunpack.c.l.b16 %v1605
        %v6749 = vunpack.c.h.b16 %v1605
        %v6750 = vunpack.c.l.b16 %v1606
        %v6751 = vunpack.c.h.b16 %v1606
        %v6752 = vunpack.c.l.b16 %v1607
        %v6753 = vunpack.c.h.b16 %v1607
        %v6754 = vunpack.c.l.b16 %v1608
        %v6755 = vunpack.c.h.b16 %v1608
        %v6756 = vunpack.c.l.b16 %v1609
        %v6757 = vunpack.c.h.b16 %v1609
        %v6758 = vunpack.c.l.b16 %v1610
        %v6759 = vunpack.c.h.b16 %v1610
        %v6760 = vunpack.c.l.b16 %v1611
        %v6761 = vunpack.c.h.b16 %v1611
        %v6762 = vunpack.c.l.b16 %v1612
        %v6763 = vunpack.c.h.b16 %v1612
        %v6764 = vunpack.c.l.b16 %v1613
        %v6765 = vunpack.c.h.b16 %v1613
        %v6766 = vunpack.c.l.b16 %v1614
        %v6767 = vunpack.c.h.b16 %v1614
        %v6768 = vunpack.c.l.b16 %v1615
        %v6769 = vunpack.c.h.b16 %v1615
        %v6770 = vunpack.c.l.b16 %v1616
        %v6771 = vunpack.c.h.b16 %v1616
        %v6772 = vunpack.c.l.b16 %v1617
        %v6773 = vunpack.c.h.b16 %v1617
        %v6774 = vunpack.c.l.b16 %v1618
        %v6775 = vunpack.c.h.b16 %v1618
        %v6776 = vunpack.c.l.b16 %v1619
        %v6777 = vunpack.c.h.b16 %v1619
        %v6778 = vunpack.c.l.b16 %v1620
        %v6779 = vunpack.c.h.b16 %v1620
        %v6780 = vunpack.c.l.b16 %v1621
        %v6781 = vunpack.c.h.b16 %v1621
        %v6782 = vunpack.c.l.b16 %v1622
        %v6783 = vunpack.c.h.b16 %v1622
        %v6784 = vunpack.c.l.b16 %v1623
        %v6785 = vunpack.c.h.b16 %v1623
        %v6786 = vunpack.c.l.b16 %v1624
        %v6787 = vunpack.c.h.b16 %v1624
        %v6788 = vunpack.c.l.b16 %v1625
        %v6789 = vunpack.c.h.b16 %v1625
        %v6790 = vunpack.c.l.b16 %v1626
        %v6791 = vunpack.c.h.b16 %v1626
        %v6792 = vunpack.c.l.b16 %v1627
        %v6793 = vunpack.c.h.b16 %v1627
        %v6794 = vunpack.c.l.b16 %v1628
        %v6795 = vunpack.c.h.b16 %v1628
        %v6796 = vunpack.c.l.b16 %v1629
        %v6797 = vunpack.c.h.b16 %v1629
        %v6798 = vunpack.c.l.b16 %v1630
        %v6799 = vunpack.c.h.b16 %v1630
        %v6800 = vunpack.c.l.b16 %v1631
        %v6801 = vunpack.c.h.b16 %v1631
        %v6802 = vunpack.c.l.b16 %v1632
        %v6803 = vunpack.c.h.b16 %v1632
        %v6804 = vunpack.c.l.b16 %v1633
        %v6805 = vunpack.c.h.b16 %v1633
        %v6806 = vunpack.c.l.b16 %v1634
        %v6807 = vunpack.c.h.b16 %v1634
        %v6808 = vunpack.c.l.b16 %v1635
        %v6809 = vunpack.c.h.b16 %v1635
        %v6810 = vunpack.c.l.b16 %v1636
        %v6811 = vunpack.c.h.b16 %v1636
        %v6812 = vunpack.c.l.b16 %v1637
        %v6813 = vunpack.c.h.b16 %v1637
        %v6814 = vunpack.c.l.b16 %v1638
        %v6815 = vunpack.c.h.b16 %v1638
        %v6816 = vunpack.c.l.b16 %v1639
        %v6817 = vunpack.c.h.b16 %v1639
        %v6818 = vunpack.c.l.b16 %v1640
        %v6819 = vunpack.c.h.b16 %v1640
        %v6820 = vunpack.c.l.b16 %v1641
        %v6821 = vunpack.c.h.b16 %v1641
        %v6822 = vunpack.c.l.b16 %v1642
        %v6823 = vunpack.c.h.b16 %v1642
        %v6824 = vunpack.c.l.b16 %v1643
        %v6825 = vunpack.c.h.b16 %v1643
        %v6826 = vunpack.c.l.b16 %v1644
        %v6827 = vunpack.c.h.b16 %v1644
        %v6828 = vunpack.c.l.b16 %v1645
        %v6829 = vunpack.c.h.b16 %v1645
        %v6830 = vunpack.c.l.b16 %v1646
        %v6831 = vunpack.c.h.b16 %v1646
        %v6832 = vunpack.c.l.b16 %v1647
        %v6833 = vunpack.c.h.b16 %v1647
        %v6834 = vunpack.c.l.b16 %v1648
        %v6835 = vunpack.c.h.b16 %v1648
        %v6836 = vunpack.c.l.b16 %v1649
        %v6837 = vunpack.c.h.b16 %v1649
        %v6838 = vunpack.c.l.b16 %v1650
        %v6839 = vunpack.c.h.b16 %v1650
        %v6840 = vunpack.c.l.b16 %v1651
        %v6841 = vunpack.c.h.b16 %v1651
        %v6842 = vunpack.c.l.b16 %v1652
        %v6843 = vunpack.c.h.b16 %v1652
        %v6844 = vunpack.c.l.b16 %v1653
        %v6845 = vunpack.c.h.b16 %v1653
        %v6846 = vunpack.c.l.b16 %v1654
        %v6847 = vunpack.c.h.b16 %v1654
        %v6848 = vunpack.c.l.b16 %v1655
        %v6849 = vunpack.c.h.b16 %v1655
        %v6850 = vunpack.c.l.b16 %v1656
        %v6851 = vunpack.c.h.b16 %v1656
        %v6852 = vunpack.c.l.b16 %v1657
        %v6853 = vunpack.c.h.b16 %v1657
        %v6854 = vunpack.c.l.b16 %v1658
        %v6855 = vunpack.c.h.b16 %v1658
        %v6856 = vunpack.c.l.b16 %v1659
        %v6857 = vunpack.c.h.b16 %v1659
        %v6858 = vunpack.c.l.b16 %v1660
        %v6859 = vunpack.c.h.b16 %v1660
        %v6860 = vunpack.c.l.b16 %v1661
        %v6861 = vunpack.c.h.b16 %v1661
        %v6862 = vunpack.c.l.b16 %v1662
        %v6863 = vunpack.c.h.b16 %v1662
        %v6864 = vunpack.c.l.b16 %v1663
        %v6865 = vunpack.c.h.b16 %v1663
        %v6866 = vunpack.c.l.b16 %v1664
        %v6867 = vunpack.c.h.b16 %v1664
        %v6868 = vunpack.c.l.b16 %v1665
        %v6869 = vunpack.c.h.b16 %v1665
        %v6870 = vunpack.c.l.b16 %v1666
        %v6871 = vunpack.c.h.b16 %v1666
        %v6872 = vunpack.c.l.b16 %v1667
        %v6873 = vunpack.c.h.b16 %v1667
        %v6874 = vunpack.c.l.b16 %v1668
        %v6875 = vunpack.c.h.b16 %v1668
        %v6876 = vunpack.c.l.b16 %v1669
        %v6877 = vunpack.c.h.b16 %v1669
        %v6878 = vunpack.c.l.b16 %v1670
        %v6879 = vunpack.c.h.b16 %v1670
        %v6880 = vunpack.c.l.b16 %v1671
        %v6881 = vunpack.c.h.b16 %v1671
        %v6882 = vunpack.c.l.b16 %v1672
        %v6883 = vunpack.c.h.b16 %v1672
        %v6884 = vunpack.c.l.b16 %v1673
        %v6885 = vunpack.c.h.b16 %v1673
        %v6886 = vunpack.c.l.b16 %v1674
        %v6887 = vunpack.c.h.b16 %v1674
        %v6888 = vunpack.c.l.b16 %v1675
        %v6889 = vunpack.c.h.b16 %v1675
        %v6890 = vunpack.c.l.b16 %v1676
        %v6891 = vunpack.c.h.b16 %v1676
        %v6892 = vunpack.c.l.b16 %v1677
        %v6893 = vunpack.c.h.b16 %v1677
        %v6894 = vunpack.c.l.b16 %v1678
        %v6895 = vunpack.c.h.b16 %v1678
        %v6896 = vunpack.c.l.b16 %v1679
        %v6897 = vunpack.c.h.b16 %v1679
        %v6898 = vunpack.c.l.b16 %v1680
        %v6899 = vunpack.c.h.b16 %v1680
        %v6900 = vunpack.c.l.b16 %v1681
        %v6901 = vunpack.c.h.b16 %v1681
        %v6902 = vunpack.c.l.b16 %v1682
        %v6903 = vunpack.c.h.b16 %v1682
        %v6904 = vunpack.c.l.b16 %v1683
        %v6905 = vunpack.c.h.b16 %v1683
        %v6906 = vunpack.c.l.b16 %v1684
        %v6907 = vunpack.c.h.b16 %v1684
        %v6908 = vunpack.c.l.b16 %v1685
        %v6909 = vunpack.c.h.b16 %v1685
        %v6910 = vunpack.c.l.b16 %v1686
        %v6911 = vunpack.c.h.b16 %v1686
        %v6912 = vunpack.c.l.b16 %v1687
        %v6913 = vunpack.c.h.b16 %v1687
        %v6914 = vunpack.c.l.b16 %v1688
        %v6915 = vunpack.c.h.b16 %v1688
        %v6916 = vunpack.c.l.b16 %v1689
        %v6917 = vunpack.c.h.b16 %v1689
        %v6918 = vunpack.c.l.b16 %v1690
        %v6919 = vunpack.c.h.b16 %v1690
        %v6920 = vunpack.c.l.b16 %v1691
        %v6921 = vunpack.c.h.b16 %v1691
        %v6922 = vunpack.c.l.b16 %v1692
        %v6923 = vunpack.c.h.b16 %v1692
        %v6924 = vunpack.c.l.b16 %v1693
        %v6925 = vunpack.c.h.b16 %v1693
        %v6926 = vunpack.c.l.b16 %v1694
        %v6927 = vunpack.c.h.b16 %v1694
        %v6928 = vunpack.c.l.b16 %v1695
        %v6929 = vunpack.c.h.b16 %v1695
        %v6930 = vunpack.c.l.b16 %v1696
        %v6931 = vunpack.c.h.b16 %v1696
        %v6932 = vunpack.c.l.b16 %v1697
        %v6933 = vunpack.c.h.b16 %v1697
        %v6934 = vunpack.c.l.b16 %v1698
        %v6935 = vunpack.c.h.b16 %v1698
        %v6936 = vunpack.c.l.b16 %v1699
        %v6937 = vunpack.c.h.b16 %v1699
        %v6938 = vunpack.c.l.b16 %v1700
        %v6939 = vunpack.c.h.b16 %v1700
        %v6940 = vunpack.c.l.b16 %v1701
        %v6941 = vunpack.c.h.b16 %v1701
        %v6942 = vunpack.c.l.b16 %v1702
        %v6943 = vunpack.c.h.b16 %v1702
        %v6944 = vunpack.c.l.b16 %v1703
        %v6945 = vunpack.c.h.b16 %v1703
        %v6946 = vunpack.c.l.b16 %v1704
        %v6947 = vunpack.c.h.b16 %v1704
        %v6948 = vunpack.c.l.b16 %v1705
        %v6949 = vunpack.c.h.b16 %v1705
        %v6950 = vunpack.c.l.b16 %v1706
        %v6951 = vunpack.c.h.b16 %v1706
        %v6952 = vunpack.c.l.b16 %v1707
        %v6953 = vunpack.c.h.b16 %v1707
        %v6954 = vunpack.c.l.b16 %v1708
        %v6955 = vunpack.c.h.b16 %v1708
        %v6956 = vunpack.c.l.b16 %v1709
        %v6957 = vunpack.c.h.b16 %v1709
        %v6958 = vunpack.c.l.b16 %v1710
        %v6959 = vunpack.c.h.b16 %v1710
        %v6960 = vunpack.c.l.b16 %v1711
        %v6961 = vunpack.c.h.b16 %v1711
        %v6962 = vunpack.c.l.b16 %v1712
        %v6963 = vunpack.c.h.b16 %v1712
        %v6964 = vunpack.c.l.b16 %v1713
        %v6965 = vunpack.c.h.b16 %v1713
        %v6966 = vunpack.c.l.b16 %v1714
        %v6967 = vunpack.c.h.b16 %v1714
        %v6968 = vunpack.c.l.b16 %v1715
        %v6969 = vunpack.c.h.b16 %v1715
        %v6970 = vunpack.c.l.b16 %v1716
        %v6971 = vunpack.c.h.b16 %v1716
        %v6972 = vunpack.c.l.b16 %v1717
        %v6973 = vunpack.c.h.b16 %v1717
        %v6974 = vunpack.c.l.b16 %v1718
        %v6975 = vunpack.c.h.b16 %v1718
        %v6976 = vunpack.c.l.b16 %v1719
        %v6977 = vunpack.c.h.b16 %v1719
        %v6978 = vunpack.c.l.b16 %v1720
        %v6979 = vunpack.c.h.b16 %v1720
        %v6980 = vunpack.c.l.b16 %v1721
        %v6981 = vunpack.c.h.b16 %v1721
        %v6982 = vunpack.c.l.b16 %v1722
        %v6983 = vunpack.c.h.b16 %v1722
        %v6984 = vunpack.c.l.b16 %v1723
        %v6985 = vunpack.c.h.b16 %v1723
        %v6986 = vunpack.c.l.b16 %v1724
        %v6987 = vunpack.c.h.b16 %v1724
        %v6988 = vunpack.c.l.b16 %v1725
        %v6989 = vunpack.c.h.b16 %v1725
        %v6990 = vunpack.c.l.b16 %v1726
        %v6991 = vunpack.c.h.b16 %v1726
        %v6992 = vunpack.c.l.b16 %v1727
        %v6993 = vunpack.c.h.b16 %v1727
        %v6994 = vunpack.c.l.b16 %v1728
        %v6995 = vunpack.c.h.b16 %v1728
        %v6996 = vunpack.c.l.b16 %v1729
        %v6997 = vunpack.c.h.b16 %v1729
        %v6998 = vunpack.c.l.b16 %v1730
        %v6999 = vunpack.c.h.b16 %v1730
        %v7000 = vunpack.c.l.b16 %v1731
        %v7001 = vunpack.c.h.b16 %v1731
        %v7002 = vunpack.c.l.b16 %v1732
        %v7003 = vunpack.c.h.b16 %v1732
        %v7004 = vunpack.c.l.b16 %v1733
        %v7005 = vunpack.c.h.b16 %v1733
        %v7006 = vunpack.c.l.b16 %v1734
        %v7007 = vunpack.c.h.b16 %v1734
        %v7008 = vunpack.c.l.b16 %v1735
        %v7009 = vunpack.c.h.b16 %v1735
        %v7010 = vunpack.c.l.b16 %v1736
        %v7011 = vunpack.c.h.b16 %v1736
        %v7012 = vunpack.c.l.b16 %v1737
        %v7013 = vunpack.c.h.b16 %v1737
        %v7014 = vunpack.c.l.b16 %v1738
        %v7015 = vunpack.c.h.b16 %v1738
        %v7016 = vunpack.c.l.b16 %v1739
        %v7017 = vunpack.c.h.b16 %v1739
        %v7018 = vunpack.c.l.b16 %v1740
        %v7019 = vunpack.c.h.b16 %v1740
        %v7020 = vunpack.c.l.b16 %v1741
        %v7021 = vunpack.c.h.b16 %v1741
        %v7022 = vunpack.c.l.b16 %v1742
        %v7023 = vunpack.c.h.b16 %v1742
        %v7024 = vunpack.c.l.b16 %v1743
        %v7025 = vunpack.c.h.b16 %v1743
        %v7026 = vunpack.c.l.b16 %v1744
        %v7027 = vunpack.c.h.b16 %v1744
        %v7028 = vunpack.c.l.b16 %v1745
        %v7029 = vunpack.c.h.b16 %v1745
        %v7030 = vunpack.c.l.b16 %v1746
        %v7031 = vunpack.c.h.b16 %v1746
        %v7032 = vunpack.c.l.b16 %v1747
        %v7033 = vunpack.c.h.b16 %v1747
        %v7034 = vunpack.c.l.b16 %v1748
        %v7035 = vunpack.c.h.b16 %v1748
        %v7036 = vunpack.c.l.b16 %v1749
        %v7037 = vunpack.c.h.b16 %v1749
        %v7038 = vunpack.c.l.b16 %v1750
        %v7039 = vunpack.c.h.b16 %v1750
        %v7040 = vunpack.c.l.b16 %v1751
        %v7041 = vunpack.c.h.b16 %v1751
        %v7042 = vunpack.c.l.b16 %v1752
        %v7043 = vunpack.c.h.b16 %v1752
        %v7044 = vunpack.c.l.b16 %v1753
        %v7045 = vunpack.c.h.b16 %v1753
        %v7046 = vunpack.c.l.b16 %v1754
        %v7047 = vunpack.c.h.b16 %v1754
        %v7048 = vunpack.c.l.b16 %v1755
        %v7049 = vunpack.c.h.b16 %v1755
        %v7050 = vunpack.c.l.b16 %v1756
        %v7051 = vunpack.c.h.b16 %v1756
        %v7052 = vunpack.c.l.b16 %v1757
        %v7053 = vunpack.c.h.b16 %v1757
        %v7054 = vunpack.c.l.b16 %v1758
        %v7055 = vunpack.c.h.b16 %v1758
        %v7056 = vunpack.c.l.b16 %v1759
        %v7057 = vunpack.c.h.b16 %v1759
        %v7058 = vunpack.c.l.b16 %v1760
        %v7059 = vunpack.c.h.b16 %v1760
        %v7060 = vunpack.c.l.b16 %v1761
        %v7061 = vunpack.c.h.b16 %v1761
        %v7062 = vunpack.c.l.b16 %v1762
        %v7063 = vunpack.c.h.b16 %v1762
        %v7064 = vunpack.c.l.b16 %v1763
        %v7065 = vunpack.c.h.b16 %v1763
        %v7066 = vunpack.c.l.b16 %v1764
        %v7067 = vunpack.c.h.b16 %v1764
        %v7068 = vunpack.c.l.b16 %v1765
        %v7069 = vunpack.c.h.b16 %v1765
        %v7070 = vunpack.c.l.b16 %v1766
        %v7071 = vunpack.c.h.b16 %v1766
        %v7072 = vunpack.c.l.b16 %v1767
        %v7073 = vunpack.c.h.b16 %v1767
        %v7074 = vunpack.c.l.b16 %v1768
        %v7075 = vunpack.c.h.b16 %v1768
        %v7076 = vunpack.c.l.b16 %v1769
        %v7077 = vunpack.c.h.b16 %v1769
        %v7078 = vunpack.c.l.b16 %v1770
        %v7079 = vunpack.c.h.b16 %v1770
        %v7080 = vunpack.c.l.b16 %v1771
        %v7081 = vunpack.c.h.b16 %v1771
        %v7082 = vunpack.c.l.b16 %v1772
        %v7083 = vunpack.c.h.b16 %v1772
        %v7084 = vunpack.c.l.b16 %v1773
        %v7085 = vunpack.c.h.b16 %v1773
        %v7086 = vunpack.c.l.b16 %v1774
        %v7087 = vunpack.c.h.b16 %v1774
        %v7088 = vunpack.c.l.b16 %v1775
        %v7089 = vunpack.c.h.b16 %v1775
        %v7090 = vunpack.c.l.b16 %v1776
        %v7091 = vunpack.c.h.b16 %v1776
        %v7092 = vunpack.c.l.b16 %v1777
        %v7093 = vunpack.c.h.b16 %v1777
        %v7094 = vpack.c.b16 %v4024, %v4022
        %v7095 = vpack.c.b16 %v4025, %v4023
        %v7096 = vpack.c.b16 %v4028, %v4026
        %v7097 = vpack.c.b16 %v4029, %v4027
        %v7098 = vpack.c.b16 %v4032, %v4030
        %v7099 = vpack.c.b16 %v4033, %v4031
        %v7100 = vpack.c.b16 %v4036, %v4034
        %v7101 = vpack.c.b16 %v4037, %v4035
        %v7102 = vpack.c.b16 %v4040, %v4038
        %v7103 = vpack.c.b16 %v4041, %v4039
        %v7104 = vpack.c.b16 %v4044, %v4042
        %v7105 = vpack.c.b16 %v4045, %v4043
        %v7106 = vpack.c.b16 %v4048, %v4046
        %v7107 = vpack.c.b16 %v4049, %v4047
        %v7108 = vpack.c.b16 %v4052, %v4050
        %v7109 = vpack.c.b16 %v4053, %v4051
        %v7110 = vpack.c.b16 %v4056, %v4054
        %v7111 = vpack.c.b16 %v4057, %v4055
        %v7112 = vpack.c.b16 %v4060, %v4058
        %v7113 = vpack.c.b16 %v4061, %v4059
        %v7114 = vpack.c.b16 %v4064, %v4062
        %v7115 = vpack.c.b16 %v4065, %v4063
        %v7116 = vpack.c.b16 %v4068, %v4066
        %v7117 = vpack.c.b16 %v4069, %v4067
        %v7118 = vpack.c.b16 %v4072, %v4070
        %v7119 = vpack.c.b16 %v4073, %v4071
        %v7120 = vpack.c.b16 %v4076, %v4074
        %v7121 = vpack.c.b16 %v4077, %v4075
        %v7122 = vpack.c.b16 %v4080, %v4078
        %v7123 = vpack.c.b16 %v4081, %v4079
        %v7124 = vpack.c.b16 %v4084, %v4082
        %v7125 = vpack.c.b16 %v4085, %v4083
        %v7126 = vpack.c.b16 %v4088, %v4086
        %v7127 = vpack.c.b16 %v4089, %v4087
        %v7128 = vpack.c.b16 %v4092, %v4090
        %v7129 = vpack.c.b16 %v4093, %v4091
        %v7130 = vpack.c.b16 %v4096, %v4094
        %v7131 = vpack.c.b16 %v4097, %v4095
        %v7132 = vpack.c.b16 %v4100, %v4098
        %v7133 = vpack.c.b16 %v4101, %v4099
        %v7134 = vpack.c.b16 %v4104, %v4102
        %v7135 = vpack.c.b16 %v4105, %v4103
        %v7136 = vpack.c.b16 %v4108, %v4106
        %v7137 = vpack.c.b16 %v4109, %v4107
        %v7138 = vpack.c.b16 %v4112, %v4110
        %v7139 = vpack.c.b16 %v4113, %v4111
        %v7140 = vpack.c.b16 %v4116, %v4114
        %v7141 = vpack.c.b16 %v4117, %v4115
        %v7142 = vpack.c.b16 %v4120, %v4118
        %v7143 = vpack.c.b16 %v4121, %v4119
        %v7144 = vpack.c.b16 %v4124, %v4122
        %v7145 = vpack.c.b16 %v4125, %v4123
        %v7146 = vpack.c.b16 %v4128, %v4126
        %v7147 = vpack.c.b16 %v4129, %v4127
        %v7148 = vpack.c.b16 %v4132, %v4130
        %v7149 = vpack.c.b16 %v4133, %v4131
        %v7150 = vpack.c.b16 %v4136, %v4134
        %v7151 = vpack.c.b16 %v4137, %v4135
        %v7152 = vpack.c.b16 %v4140, %v4138
        %v7153 = vpack.c.b16 %v4141, %v4139
        %v7154 = vpack.c.b16 %v4144, %v4142
        %v7155 = vpack.c.b16 %v4145, %v4143
        %v7156 = vpack.c.b16 %v4148, %v4146
        %v7157 = vpack.c.b16 %v4149, %v4147
        %v7158 = vpack.c.b16 %v4152, %v4150
        %v7159 = vpack.c.b16 %v4153, %v4151
        %v7160 = vpack.c.b16 %v4156, %v4154
        %v7161 = vpack.c.b16 %v4157, %v4155
        %v7162 = vpack.c.b16 %v4160, %v4158
        %v7163 = vpack.c.b16 %v4161, %v4159
        %v7164 = vpack.c.b16 %v4164, %v4162
        %v7165 = vpack.c.b16 %v4165, %v4163
        %v7166 = vpack.c.b16 %v4168, %v4166
        %v7167 = vpack.c.b16 %v4169, %v4167
        %v7168 = vpack.c.b16 %v4172, %v4170
        %v7169 = vpack.c.b16 %v4173, %v4171
        %v7170 = vpack.c.b16 %v4176, %v4174
        %v7171 = vpack.c.b16 %v4177, %v4175
        %v7172 = vpack.c.b16 %v4180, %v4178
        %v7173 = vpack.c.b16 %v4181, %v4179
        %v7174 = vpack.c.b16 %v4184, %v4182
        %v7175 = vpack.c.b16 %v4185, %v4183
        %v7176 = vpack.c.b16 %v4188, %v4186
        %v7177 = vpack.c.b16 %v4189, %v4187
        %v7178 = vpack.c.b16 %v4192, %v4190
        %v7179 = vpack.c.b16 %v4193, %v4191
        %v7180 = vpack.c.b16 %v4196, %v4194
        %v7181 = vpack.c.b16 %v4197, %v4195
        %v7182 = vpack.c.b16 %v4200, %v4198
        %v7183 = vpack.c.b16 %v4201, %v4199
        %v7184 = vpack.c.b16 %v4204, %v4202
        %v7185 = vpack.c.b16 %v4205, %v4203
        %v7186 = vpack.c.b16 %v4208, %v4206
        %v7187 = vpack.c.b16 %v4209, %v4207
        %v7188 = vpack.c.b16 %v4212, %v4210
        %v7189 = vpack.c.b16 %v4213, %v4211
        %v7190 = vpack.c.b16 %v4216, %v4214
        %v7191 = vpack.c.b16 %v4217, %v4215
        %v7192 = vpack.c.b16 %v4220, %v4218
        %v7193 = vpack.c.b16 %v4221, %v4219
        %v7194 = vpack.c.b16 %v4224, %v4222
        %v7195 = vpack.c.b16 %v4225, %v4223
        %v7196 = vpack.c.b16 %v4228, %v4226
        %v7197 = vpack.c.b16 %v4229, %v4227
        %v7198 = vpack.c.b16 %v4232, %v4230
        %v7199 = vpack.c.b16 %v4233, %v4231
        %v7200 = vpack.c.b16 %v4236, %v4234
        %v7201 = vpack.c.b16 %v4237, %v4235
        %v7202 = vpack.c.b16 %v4240, %v4238
        %v7203 = vpack.c.b16 %v4241, %v4239
        %v7204 = vpack.c.b16 %v4244, %v4242
        %v7205 = vpack.c.b16 %v4245, %v4243
        %v7206 = vpack.c.b16 %v4248, %v4246
        %v7207 = vpack.c.b16 %v4249, %v4247
        %v7208 = vpack.c.b16 %v4252, %v4250
        %v7209 = vpack.c.b16 %v4253, %v4251
        %v7210 = vpack.c.b16 %v4256, %v4254
        %v7211 = vpack.c.b16 %v4257, %v4255
        %v7212 = vpack.c.b16 %v4260, %v4258
        %v7213 = vpack.c.b16 %v4261, %v4259
        %v7214 = vpack.c.b16 %v4264, %v4262
        %v7215 = vpack.c.b16 %v4265, %v4263
        %v7216 = vpack.c.b16 %v4268, %v4266
        %v7217 = vpack.c.b16 %v4269, %v4267
        %v7218 = vpack.c.b16 %v4272, %v4270
        %v7219 = vpack.c.b16 %v4273, %v4271
        %v7220 = vpack.c.b16 %v4276, %v4274
        %v7221 = vpack.c.b16 %v4277, %v4275
        %v7222 = vpack.c.b16 %v4280, %v4278
        %v7223 = vpack.c.b16 %v4281, %v4279
        %v7224 = vpack.c.b16 %v4284, %v4282
        %v7225 = vpack.c.b16 %v4285, %v4283
        %v7226 = vpack.c.b16 %v4288, %v4286
        %v7227 = vpack.c.b16 %v4289, %v4287
        %v7228 = vpack.c.b16 %v4292, %v4290
        %v7229 = vpack.c.b16 %v4293, %v4291
        %v7230 = vpack.c.b16 %v4296, %v4294
        %v7231 = vpack.c.b16 %v4297, %v4295
        %v7232 = vpack.c.b16 %v4300, %v4298
        %v7233 = vpack.c.b16 %v4301, %v4299
        %v7234 = vpack.c.b16 %v4304, %v4302
        %v7235 = vpack.c.b16 %v4305, %v4303
        %v7236 = vpack.c.b16 %v4308, %v4306
        %v7237 = vpack.c.b16 %v4309, %v4307
        %v7238 = vpack.c.b16 %v4312, %v4310
        %v7239 = vpack.c.b16 %v4313, %v4311
        %v7240 = vpack.c.b16 %v4316, %v4314
        %v7241 = vpack.c.b16 %v4317, %v4315
        %v7242 = vpack.c.b16 %v4320, %v4318
        %v7243 = vpack.c.b16 %v4321, %v4319
        %v7244 = vpack.c.b16 %v4324, %v4322
        %v7245 = vpack.c.b16 %v4325, %v4323
        %v7246 = vpack.c.b16 %v4328, %v4326
        %v7247 = vpack.c.b16 %v4329, %v4327
        %v7248 = vpack.c.b16 %v4332, %v4330
        %v7249 = vpack.c.b16 %v4333, %v4331
        %v7250 = vpack.c.b16 %v4336, %v4334
        %v7251 = vpack.c.b16 %v4337, %v4335
        %v7252 = vpack.c.b16 %v4340, %v4338
        %v7253 = vpack.c.b16 %v4341, %v4339
        %v7254 = vpack.c.b16 %v4344, %v4342
        %v7255 = vpack.c.b16 %v4345, %v4343
        %v7256 = vpack.c.b16 %v4348, %v4346
        %v7257 = vpack.c.b16 %v4349, %v4347
        %v7258 = vpack.c.b16 %v4352, %v4350
        %v7259 = vpack.c.b16 %v4353, %v4351
        %v7260 = vpack.c.b16 %v4356, %v4354
        %v7261 = vpack.c.b16 %v4357, %v4355
        %v7262 = vpack.c.b16 %v4360, %v4358
        %v7263 = vpack.c.b16 %v4361, %v4359
        %v7264 = vpack.c.b16 %v4364, %v4362
        %v7265 = vpack.c.b16 %v4365, %v4363
        %v7266 = vpack.c.b16 %v4368, %v4366
        %v7267 = vpack.c.b16 %v4369, %v4367
        %v7268 = vpack.c.b16 %v4372, %v4370
        %v7269 = vpack.c.b16 %v4373, %v4371
        %v7270 = vpack.c.b16 %v4376, %v4374
        %v7271 = vpack.c.b16 %v4377, %v4375
        %v7272 = vpack.c.b16 %v4380, %v4378
        %v7273 = vpack.c.b16 %v4381, %v4379
        %v7274 = vpack.c.b16 %v4384, %v4382
        %v7275 = vpack.c.b16 %v4385, %v4383
        %v7276 = vpack.c.b16 %v4388, %v4386
        %v7277 = vpack.c.b16 %v4389, %v4387
        %v7278 = vpack.c.b16 %v4392, %v4390
        %v7279 = vpack.c.b16 %v4393, %v4391
        %v7280 = vpack.c.b16 %v4396, %v4394
        %v7281 = vpack.c.b16 %v4397, %v4395
        %v7282 = vpack.c.b16 %v4400, %v4398
        %v7283 = vpack.c.b16 %v4401, %v4399
        %v7284 = vpack.c.b16 %v4404, %v4402
        %v7285 = vpack.c.b16 %v4405, %v4403
        %v7286 = vpack.c.b16 %v4408, %v4406
        %v7287 = vpack.c.b16 %v4409, %v4407
        %v7288 = vpack.c.b16 %v4412, %v4410
        %v7289 = vpack.c.b16 %v4413, %v4411
        %v7290 = vpack.c.b16 %v4416, %v4414
        %v7291 = vpack.c.b16 %v4417, %v4415
        %v7292 = vpack.c.b16 %v4420, %v4418
        %v7293 = vpack.c.b16 %v4421, %v4419
        %v7294 = vpack.c.b16 %v4424, %v4422
        %v7295 = vpack.c.b16 %v4425, %v4423
        %v7296 = vpack.c.b16 %v4428, %v4426
        %v7297 = vpack.c.b16 %v4429, %v4427
        %v7298 = vpack.c.b16 %v4432, %v4430
        %v7299 = vpack.c.b16 %v4433, %v4431
        %v7300 = vpack.c.b16 %v4436, %v4434
        %v7301 = vpack.c.b16 %v4437, %v4435
        %v7302 = vpack.c.b16 %v4440, %v4438
        %v7303 = vpack.c.b16 %v4441, %v4439
        %v7304 = vpack.c.b16 %v4444, %v4442
        %v7305 = vpack.c.b16 %v4445, %v4443
        %v7306 = vpack.c.b16 %v4448, %v4446
        %v7307 = vpack.c.b16 %v4449, %v4447
        %v7308 = vpack.c.b16 %v4452, %v4450
        %v7309 = vpack.c.b16 %v4453, %v4451
        %v7310 = vpack.c.b16 %v4456, %v4454
        %v7311 = vpack.c.b16 %v4457, %v4455
        %v7312 = vpack.c.b16 %v4460, %v4458
        %v7313 = vpack.c.b16 %v4461, %v4459
        %v7314 = vpack.c.b16 %v4464, %v4462
        %v7315 = vpack.c.b16 %v4465, %v4463
        %v7316 = vpack.c.b16 %v4468, %v4466
        %v7317 = vpack.c.b16 %v4469, %v4467
        %v7318 = vpack.c.b16 %v4472, %v4470
        %v7319 = vpack.c.b16 %v4473, %v4471
        %v7320 = vpack.c.b16 %v4476, %v4474
        %v7321 = vpack.c.b16 %v4477, %v4475
        %v7322 = vpack.c.b16 %v4480, %v4478
        %v7323 = vpack.c.b16 %v4481, %v4479
        %v7324 = vpack.c.b16 %v4484, %v4482
        %v7325 = vpack.c.b16 %v4485, %v4483
        %v7326 = vpack.c.b16 %v4488, %v4486
        %v7327 = vpack.c.b16 %v4489, %v4487
        %v7328 = vpack.c.b16 %v4492, %v4490
        %v7329 = vpack.c.b16 %v4493, %v4491
        %v7330 = vpack.c.b16 %v4496, %v4494
        %v7331 = vpack.c.b16 %v4497, %v4495
        %v7332 = vpack.c.b16 %v4500, %v4498
        %v7333 = vpack.c.b16 %v4501, %v4499
        %v7334 = vpack.c.b16 %v4504, %v4502
        %v7335 = vpack.c.b16 %v4505, %v4503
        %v7336 = vpack.c.b16 %v4508, %v4506
        %v7337 = vpack.c.b16 %v4509, %v4507
        %v7338 = vpack.c.b16 %v4512, %v4510
        %v7339 = vpack.c.b16 %v4513, %v4511
        %v7340 = vpack.c.b16 %v4516, %v4514
        %v7341 = vpack.c.b16 %v4517, %v4515
        %v7342 = vpack.c.b16 %v4520, %v4518
        %v7343 = vpack.c.b16 %v4521, %v4519
        %v7344 = vpack.c.b16 %v4524, %v4522
        %v7345 = vpack.c.b16 %v4525, %v4523
        %v7346 = vpack.c.b16 %v4528, %v4526
        %v7347 = vpack.c.b16 %v4529, %v4527
        %v7348 = vpack.c.b16 %v4532, %v4530
        %v7349 = vpack.c.b16 %v4533, %v4531
        %v7350 = vpack.c.b16 %v4536, %v4534
        %v7351 = vpack.c.b16 %v4537, %v4535
        %v7352 = vpack.c.b16 %v4540, %v4538
        %v7353 = vpack.c.b16 %v4541, %v4539
        %v7354 = vpack.c.b16 %v4544, %v4542
        %v7355 = vpack.c.b16 %v4545, %v4543
        %v7356 = vpack.c.b16 %v4548, %v4546
        %v7357 = vpack.c.b16 %v4549, %v4547
        %v7358 = vpack.c.b16 %v4552, %v4550
        %v7359 = vpack.c.b16 %v4553, %v4551
        %v7360 = vpack.c.b16 %v4556, %v4554
        %v7361 = vpack.c.b16 %v4557, %v4555
        %v7362 = vpack.c.b16 %v4560, %v4558
        %v7363 = vpack.c.b16 %v4561, %v4559
        %v7364 = vpack.c.b16 %v4564, %v4562
        %v7365 = vpack.c.b16 %v4565, %v4563
        %v7366 = vpack.c.b16 %v4568, %v4566
        %v7367 = vpack.c.b16 %v4569, %v4567
        %v7368 = vpack.c.b16 %v4572, %v4570
        %v7369 = vpack.c.b16 %v4573, %v4571
        %v7370 = vpack.c.b16 %v4576, %v4574
        %v7371 = vpack.c.b16 %v4577, %v4575
        %v7372 = vpack.c.b16 %v4580, %v4578
        %v7373 = vpack.c.b16 %v4581, %v4579
        %v7374 = vpack.c.b16 %v4584, %v4582
        %v7375 = vpack.c.b16 %v4585, %v4583
        %v7376 = vpack.c.b16 %v4588, %v4586
        %v7377 = vpack.c.b16 %v4589, %v4587
        %v7378 = vpack.c.b16 %v4592, %v4590
        %v7379 = vpack.c.b16 %v4593, %v4591
        %v7380 = vpack.c.b16 %v4596, %v4594
        %v7381 = vpack.c.b16 %v4597, %v4595
        %v7382 = vpack.c.b16 %v4600, %v4598
        %v7383 = vpack.c.b16 %v4601, %v4599
        %v7384 = vpack.c.b16 %v4604, %v4602
        %v7385 = vpack.c.b16 %v4605, %v4603
        %v7386 = vpack.c.b16 %v4608, %v4606
        %v7387 = vpack.c.b16 %v4609, %v4607
        %v7388 = vpack.c.b16 %v4612, %v4610
        %v7389 = vpack.c.b16 %v4613, %v4611
        %v7390 = vpack.c.b16 %v4616, %v4614
        %v7391 = vpack.c.b16 %v4617, %v4615
        %v7392 = vpack.c.b16 %v4620, %v4618
        %v7393 = vpack.c.b16 %v4621, %v4619
        %v7394 = vpack.c.b16 %v4624, %v4622
        %v7395 = vpack.c.b16 %v4625, %v4623
        %v7396 = vpack.c.b16 %v4628, %v4626
        %v7397 = vpack.c.b16 %v4629, %v4627
        %v7398 = vpack.c.b16 %v4632, %v4630
        %v7399 = vpack.c.b16 %v4633, %v4631
        %v7400 = vpack.c.b16 %v4636, %v4634
        %v7401 = vpack.c.b16 %v4637, %v4635
        %v7402 = vpack.c.b16 %v4640, %v4638
        %v7403 = vpack.c.b16 %v4641, %v4639
        %v7404 = vpack.c.b16 %v4644, %v4642
        %v7405 = vpack.c.b16 %v4645, %v4643
        %v7406 = vpack.c.b16 %v4648, %v4646
        %v7407 = vpack.c.b16 %v4649, %v4647
        %v7408 = vpack.c.b16 %v4652, %v4650
        %v7409 = vpack.c.b16 %v4653, %v4651
        %v7410 = vpack.c.b16 %v4656, %v4654
        %v7411 = vpack.c.b16 %v4657, %v4655
        %v7412 = vpack.c.b16 %v4660, %v4658
        %v7413 = vpack.c.b16 %v4661, %v4659
        %v7414 = vpack.c.b16 %v4664, %v4662
        %v7415 = vpack.c.b16 %v4665, %v4663
        %v7416 = vpack.c.b16 %v4668, %v4666
        %v7417 = vpack.c.b16 %v4669, %v4667
        %v7418 = vpack.c.b16 %v4672, %v4670
        %v7419 = vpack.c.b16 %v4673, %v4671
        %v7420 = vpack.c.b16 %v4676, %v4674
        %v7421 = vpack.c.b16 %v4677, %v4675
        %v7422 = vpack.c.b16 %v4680, %v4678
        %v7423 = vpack.c.b16 %v4681, %v4679
        %v7424 = vpack.c.b16 %v4684, %v4682
        %v7425 = vpack.c.b16 %v4685, %v4683
        %v7426 = vpack.c.b16 %v4688, %v4686
        %v7427 = vpack.c.b16 %v4689, %v4687
        %v7428 = vpack.c.b16 %v4692, %v4690
        %v7429 = vpack.c.b16 %v4693, %v4691
        %v7430 = vpack.c.b16 %v4696, %v4694
        %v7431 = vpack.c.b16 %v4697, %v4695
        %v7432 = vpack.c.b16 %v4700, %v4698
        %v7433 = vpack.c.b16 %v4701, %v4699
        %v7434 = vpack.c.b16 %v4704, %v4702
        %v7435 = vpack.c.b16 %v4705, %v4703
        %v7436 = vpack.c.b16 %v4708, %v4706
        %v7437 = vpack.c.b16 %v4709, %v4707
        %v7438 = vpack.c.b16 %v4712, %v4710
        %v7439 = vpack.c.b16 %v4713, %v4711
        %v7440 = vpack.c.b16 %v4716, %v4714
        %v7441 = vpack.c.b16 %v4717, %v4715
        %v7442 = vpack.c.b16 %v4720, %v4718
        %v7443 = vpack.c.b16 %v4721, %v4719
        %v7444 = vpack.c.b16 %v4724, %v4722
        %v7445 = vpack.c.b16 %v4725, %v4723
        %v7446 = vpack.c.b16 %v4728, %v4726
        %v7447 = vpack.c.b16 %v4729, %v4727
        %v7448 = vpack.c.b16 %v4732, %v4730
        %v7449 = vpack.c.b16 %v4733, %v4731
        %v7450 = vpack.c.b16 %v4736, %v4734
        %v7451 = vpack.c.b16 %v4737, %v4735
        %v7452 = vpack.c.b16 %v4740, %v4738
        %v7453 = vpack.c.b16 %v4741, %v4739
        %v7454 = vpack.c.b16 %v4744, %v4742
        %v7455 = vpack.c.b16 %v4745, %v4743
        %v7456 = vpack.c.b16 %v4748, %v4746
        %v7457 = vpack.c.b16 %v4749, %v4747
        %v7458 = vpack.c.b16 %v4752, %v4750
        %v7459 = vpack.c.b16 %v4753, %v4751
        %v7460 = vpack.c.b16 %v4756, %v4754
        %v7461 = vpack.c.b16 %v4757, %v4755
        %v7462 = vpack.c.b16 %v4760, %v4758
        %v7463 = vpack.c.b16 %v4761, %v4759
        %v7464 = vpack.c.b16 %v4764, %v4762
        %v7465 = vpack.c.b16 %v4765, %v4763
        %v7466 = vpack.c.b16 %v4768, %v4766
        %v7467 = vpack.c.b16 %v4769, %v4767
        %v7468 = vpack.c.b16 %v4772, %v4770
        %v7469 = vpack.c.b16 %v4773, %v4771
        %v7470 = vpack.c.b16 %v4776, %v4774
        %v7471 = vpack.c.b16 %v4777, %v4775
        %v7472 = vpack.c.b16 %v4780, %v4778
        %v7473 = vpack.c.b16 %v4781, %v4779
        %v7474 = vpack.c.b16 %v4784, %v4782
        %v7475 = vpack.c.b16 %v4785, %v4783
        %v7476 = vpack.c.b16 %v4788, %v4786
        %v7477 = vpack.c.b16 %v4789, %v4787
        %v7478 = vpack.c.b16 %v4792, %v4790
        %v7479 = vpack.c.b16 %v4793, %v4791
        %v7480 = vpack.c.b16 %v4796, %v4794
        %v7481 = vpack.c.b16 %v4797, %v4795
        %v7482 = vpack.c.b16 %v4800, %v4798
        %v7483 = vpack.c.b16 %v4801, %v4799
        %v7484 = vpack.c.b16 %v4804, %v4802
        %v7485 = vpack.c.b16 %v4805, %v4803
        %v7486 = vpack.c.b16 %v4808, %v4806
        %v7487 = vpack.c.b16 %v4809, %v4807
        %v7488 = vpack.c.b16 %v4812, %v4810
        %v7489 = vpack.c.b16 %v4813, %v4811
        %v7490 = vpack.c.b16 %v4816, %v4814
        %v7491 = vpack.c.b16 %v4817, %v4815
        %v7492 = vpack.c.b16 %v4820, %v4818
        %v7493 = vpack.c.b16 %v4821, %v4819
        %v7494 = vpack.c.b16 %v4824, %v4822
        %v7495 = vpack.c.b16 %v4825, %v4823
        %v7496 = vpack.c.b16 %v4828, %v4826
        %v7497 = vpack.c.b16 %v4829, %v4827
        %v7498 = vpack.c.b16 %v4832, %v4830
        %v7499 = vpack.c.b16 %v4833, %v4831
        %v7500 = vpack.c.b16 %v4836, %v4834
        %v7501 = vpack.c.b16 %v4837, %v4835
        %v7502 = vpack.c.b16 %v4840, %v4838
        %v7503 = vpack.c.b16 %v4841, %v4839
        %v7504 = vpack.c.b16 %v4844, %v4842
        %v7505 = vpack.c.b16 %v4845, %v4843
        %v7506 = vpack.c.b16 %v4848, %v4846
        %v7507 = vpack.c.b16 %v4849, %v4847
        %v7508 = vpack.c.b16 %v4852, %v4850
        %v7509 = vpack.c.b16 %v4853, %v4851
        %v7510 = vpack.c.b16 %v4856, %v4854
        %v7511 = vpack.c.b16 %v4857, %v4855
        %v7512 = vpack.c.b16 %v4860, %v4858
        %v7513 = vpack.c.b16 %v4861, %v4859
        %v7514 = vpack.c.b16 %v4864, %v4862
        %v7515 = vpack.c.b16 %v4865, %v4863
        %v7516 = vpack.c.b16 %v4868, %v4866
        %v7517 = vpack.c.b16 %v4869, %v4867
        %v7518 = vpack.c.b16 %v4872, %v4870
        %v7519 = vpack.c.b16 %v4873, %v4871
        %v7520 = vpack.c.b16 %v4876, %v4874
        %v7521 = vpack.c.b16 %v4877, %v4875
        %v7522 = vpack.c.b16 %v4880, %v4878
        %v7523 = vpack.c.b16 %v4881, %v4879
        %v7524 = vpack.c.b16 %v4884, %v4882
        %v7525 = vpack.c.b16 %v4885, %v4883
        %v7526 = vpack.c.b16 %v4888, %v4886
        %v7527 = vpack.c.b16 %v4889, %v4887
        %v7528 = vpack.c.b16 %v4892, %v4890
        %v7529 = vpack.c.b16 %v4893, %v4891
        %v7530 = vpack.c.b16 %v4896, %v4894
        %v7531 = vpack.c.b16 %v4897, %v4895
        %v7532 = vpack.c.b16 %v4900, %v4898
        %v7533 = vpack.c.b16 %v4901, %v4899
        %v7534 = vpack.c.b16 %v4904, %v4902
        %v7535 = vpack.c.b16 %v4905, %v4903
        %v7536 = vpack.c.b16 %v4908, %v4906
        %v7537 = vpack.c.b16 %v4909, %v4907
        %v7538 = vpack.c.b16 %v4912, %v4910
        %v7539 = vpack.c.b16 %v4913, %v4911
        %v7540 = vpack.c.b16 %v4916, %v4914
        %v7541 = vpack.c.b16 %v4917, %v4915
        %v7542 = vpack.c.b16 %v4920, %v4918
        %v7543 = vpack.c.b16 %v4921, %v4919
        %v7544 = vpack.c.b16 %v4924, %v4922
        %v7545 = vpack.c.b16 %v4925, %v4923
        %v7546 = vpack.c.b16 %v4928, %v4926
        %v7547 = vpack.c.b16 %v4929, %v4927
        %v7548 = vpack.c.b16 %v4932, %v4930
        %v7549 = vpack.c.b16 %v4933, %v4931
        %v7550 = vpack.c.b16 %v4936, %v4934
        %v7551 = vpack.c.b16 %v4937, %v4935
        %v7552 = vpack.c.b16 %v4940, %v4938
        %v7553 = vpack.c.b16 %v4941, %v4939
        %v7554 = vpack.c.b16 %v4944, %v4942
        %v7555 = vpack.c.b16 %v4945, %v4943
        %v7556 = vpack.c.b16 %v4948, %v4946
        %v7557 = vpack.c.b16 %v4949, %v4947
        %v7558 = vpack.c.b16 %v4952, %v4950
        %v7559 = vpack.c.b16 %v4953, %v4951
        %v7560 = vpack.c.b16 %v4956, %v4954
        %v7561 = vpack.c.b16 %v4957, %v4955
        %v7562 = vpack.c.b16 %v4960, %v4958
        %v7563 = vpack.c.b16 %v4961, %v4959
        %v7564 = vpack.c.b16 %v4964, %v4962
        %v7565 = vpack.c.b16 %v4965, %v4963
        %v7566 = vpack.c.b16 %v4968, %v4966
        %v7567 = vpack.c.b16 %v4969, %v4967
        %v7568 = vpack.c.b16 %v4972, %v4970
        %v7569 = vpack.c.b16 %v4973, %v4971
        %v7570 = vpack.c.b16 %v4976, %v4974
        %v7571 = vpack.c.b16 %v4977, %v4975
        %v7572 = vpack.c.b16 %v4980, %v4978
        %v7573 = vpack.c.b16 %v4981, %v4979
        %v7574 = vpack.c.b16 %v4984, %v4982
        %v7575 = vpack.c.b16 %v4985, %v4983
        %v7576 = vpack.c.b16 %v4988, %v4986
        %v7577 = vpack.c.b16 %v4989, %v4987
        %v7578 = vpack.c.b16 %v4992, %v4990
        %v7579 = vpack.c.b16 %v4993, %v4991
        %v7580 = vpack.c.b16 %v4996, %v4994
        %v7581 = vpack.c.b16 %v4997, %v4995
        %v7582 = vpack.c.b16 %v5000, %v4998
        %v7583 = vpack.c.b16 %v5001, %v4999
        %v7584 = vpack.c.b16 %v5004, %v5002
        %v7585 = vpack.c.b16 %v5005, %v5003
        %v7586 = vpack.c.b16 %v5008, %v5006
        %v7587 = vpack.c.b16 %v5009, %v5007
        %v7588 = vpack.c.b16 %v5012, %v5010
        %v7589 = vpack.c.b16 %v5013, %v5011
        %v7590 = vpack.c.b16 %v5016, %v5014
        %v7591 = vpack.c.b16 %v5017, %v5015
        %v7592 = vpack.c.b16 %v5020, %v5018
        %v7593 = vpack.c.b16 %v5021, %v5019
        %v7594 = vpack.c.b16 %v5024, %v5022
        %v7595 = vpack.c.b16 %v5025, %v5023
        %v7596 = vpack.c.b16 %v5028, %v5026
        %v7597 = vpack.c.b16 %v5029, %v5027
        %v7598 = vpack.c.b16 %v5032, %v5030
        %v7599 = vpack.c.b16 %v5033, %v5031
        %v7600 = vpack.c.b16 %v5036, %v5034
        %v7601 = vpack.c.b16 %v5037, %v5035
        %v7602 = vpack.c.b16 %v5040, %v5038
        %v7603 = vpack.c.b16 %v5041, %v5039
        %v7604 = vpack.c.b16 %v5044, %v5042
        %v7605 = vpack.c.b16 %v5045, %v5043
        %v7606 = vpack.c.b16 %v5048, %v5046
        %v7607 = vpack.c.b16 %v5049, %v5047
        %v7608 = vpack.c.b16 %v5052, %v5050
        %v7609 = vpack.c.b16 %v5053, %v5051
        %v7610 = vpack.c.b16 %v5056, %v5054
        %v7611 = vpack.c.b16 %v5057, %v5055
        %v7612 = vpack.c.b16 %v5060, %v5058
        %v7613 = vpack.c.b16 %v5061, %v5059
        %v7614 = vpack.c.b16 %v5064, %v5062
        %v7615 = vpack.c.b16 %v5065, %v5063
        %v7616 = vpack.c.b16 %v5068, %v5066
        %v7617 = vpack.c.b16 %v5069, %v5067
        %v7618 = vpack.c.b16 %v5072, %v5070
        %v7619 = vpack.c.b16 %v5073, %v5071
        %v7620 = vpack.c.b16 %v5076, %v5074
        %v7621 = vpack.c.b16 %v5077, %v5075
        %v7622 = vpack.c.b16 %v5080, %v5078
        %v7623 = vpack.c.b16 %v5081, %v5079
        %v7624 = vpack.c.b16 %v5084, %v5082
        %v7625 = vpack.c.b16 %v5085, %v5083
        %v7626 = vpack.c.b16 %v5088, %v5086
        %v7627 = vpack.c.b16 %v5089, %v5087
        %v7628 = vpack.c.b16 %v5092, %v5090
        %v7629 = vpack.c.b16 %v5093, %v5091
        %v7630 = vpack.c.b16 %v5096, %v5094
        %v7631 = vpack.c.b16 %v5097, %v5095
        %v7632 = vpack.c.b16 %v5100, %v5098
        %v7633 = vpack.c.b16 %v5101, %v5099
        %v7634 = vpack.c.b16 %v5104, %v5102
        %v7635 = vpack.c.b16 %v5105, %v5103
        %v7636 = vpack.c.b16 %v5108, %v5106
        %v7637 = vpack.c.b16 %v5109, %v5107
        %v7638 = vpack.c.b16 %v5112, %v5110
        %v7639 = vpack.c.b16 %v5113, %v5111
        %v7640 = vpack.c.b16 %v5116, %v5114
        %v7641 = vpack.c.b16 %v5117, %v5115
        %v7642 = vpack.c.b16 %v5120, %v5118
        %v7643 = vpack.c.b16 %v5121, %v5119
        %v7644 = vpack.c.b16 %v5124, %v5122
        %v7645 = vpack.c.b16 %v5125, %v5123
        %v7646 = vpack.c.b16 %v5128, %v5126
        %v7647 = vpack.c.b16 %v5129, %v5127
        %v7648 = vpack.c.b16 %v5132, %v5130
        %v7649 = vpack.c.b16 %v5133, %v5131
        %v7650 = vpack.c.b16 %v5136, %v5134
        %v7651 = vpack.c.b16 %v5137, %v5135
        %v7652 = vpack.c.b16 %v5140, %v5138
        %v7653 = vpack.c.b16 %v5141, %v5139
        %v7654 = vpack.c.b16 %v5144, %v5142
        %v7655 = vpack.c.b16 %v5145, %v5143
        %v7656 = vpack.c.b16 %v5148, %v5146
        %v7657 = vpack.c.b16 %v5149, %v5147
        %v7658 = vpack.c.b16 %v5152, %v5150
        %v7659 = vpack.c.b16 %v5153, %v5151
        %v7660 = vpack.c.b16 %v5156, %v5154
        %v7661 = vpack.c.b16 %v5157, %v5155
        %v7662 = vpack.c.b16 %v5160, %v5158
        %v7663 = vpack.c.b16 %v5161, %v5159
        %v7664 = vpack.c.b16 %v5164, %v5162
        %v7665 = vpack.c.b16 %v5165, %v5163
        %v7666 = vpack.c.b16 %v5168, %v5166
        %v7667 = vpack.c.b16 %v5169, %v5167
        %v7668 = vpack.c.b16 %v5172, %v5170
        %v7669 = vpack.c.b16 %v5173, %v5171
        %v7670 = vpack.c.b16 %v5176, %v5174
        %v7671 = vpack.c.b16 %v5177, %v5175
        %v7672 = vpack.c.b16 %v5180, %v5178
        %v7673 = vpack.c.b16 %v5181, %v5179
        %v7674 = vpack.c.b16 %v5184, %v5182
        %v7675 = vpack.c.b16 %v5185, %v5183
        %v7676 = vpack.c.b16 %v5188, %v5186
        %v7677 = vpack.c.b16 %v5189, %v5187
        %v7678 = vpack.c.b16 %v5192, %v5190
        %v7679 = vpack.c.b16 %v5193, %v5191
        %v7680 = vpack.c.b16 %v5196, %v5194
        %v7681 = vpack.c.b16 %v5197, %v5195
        %v7682 = vpack.c.b16 %v5200, %v5198
        %v7683 = vpack.c.b16 %v5201, %v5199
        %v7684 = vpack.c.b16 %v5204, %v5202
        %v7685 = vpack.c.b16 %v5205, %v5203
        %v7686 = vpack.c.b16 %v5208, %v5206
        %v7687 = vpack.c.b16 %v5209, %v5207
        %v7688 = vpack.c.b16 %v5212, %v5210
        %v7689 = vpack.c.b16 %v5213, %v5211
        %v7690 = vpack.c.b16 %v5216, %v5214
        %v7691 = vpack.c.b16 %v5217, %v5215
        %v7692 = vpack.c.b16 %v5220, %v5218
        %v7693 = vpack.c.b16 %v5221, %v5219
        %v7694 = vpack.c.b16 %v5224, %v5222
        %v7695 = vpack.c.b16 %v5225, %v5223
        %v7696 = vpack.c.b16 %v5228, %v5226
        %v7697 = vpack.c.b16 %v5229, %v5227
        %v7698 = vpack.c.b16 %v5232, %v5230
        %v7699 = vpack.c.b16 %v5233, %v5231
        %v7700 = vpack.c.b16 %v5236, %v5234
        %v7701 = vpack.c.b16 %v5237, %v5235
        %v7702 = vpack.c.b16 %v5240, %v5238
        %v7703 = vpack.c.b16 %v5241, %v5239
        %v7704 = vpack.c.b16 %v5244, %v5242
        %v7705 = vpack.c.b16 %v5245, %v5243
        %v7706 = vpack.c.b16 %v5248, %v5246
        %v7707 = vpack.c.b16 %v5249, %v5247
        %v7708 = vpack.c.b16 %v5252, %v5250
        %v7709 = vpack.c.b16 %v5253, %v5251
        %v7710 = vpack.c.b16 %v5256, %v5254
        %v7711 = vpack.c.b16 %v5257, %v5255
        %v7712 = vpack.c.b16 %v5260, %v5258
        %v7713 = vpack.c.b16 %v5261, %v5259
        %v7714 = vpack.c.b16 %v5264, %v5262
        %v7715 = vpack.c.b16 %v5265, %v5263
        %v7716 = vpack.c.b16 %v5268, %v5266
        %v7717 = vpack.c.b16 %v5269, %v5267
        %v7718 = vpack.c.b16 %v5272, %v5270
        %v7719 = vpack.c.b16 %v5273, %v5271
        %v7720 = vpack.c.b16 %v5276, %v5274
        %v7721 = vpack.c.b16 %v5277, %v5275
        %v7722 = vpack.c.b16 %v5280, %v5278
        %v7723 = vpack.c.b16 %v5281, %v5279
        %v7724 = vpack.c.b16 %v5284, %v5282
        %v7725 = vpack.c.b16 %v5285, %v5283
        %v7726 = vpack.c.b16 %v5288, %v5286
        %v7727 = vpack.c.b16 %v5289, %v5287
        %v7728 = vpack.c.b16 %v5292, %v5290
        %v7729 = vpack.c.b16 %v5293, %v5291
        %v7730 = vpack.c.b16 %v5296, %v5294
        %v7731 = vpack.c.b16 %v5297, %v5295
        %v7732 = vpack.c.b16 %v5300, %v5298
        %v7733 = vpack.c.b16 %v5301, %v5299
        %v7734 = vpack.c.b16 %v5304, %v5302
        %v7735 = vpack.c.b16 %v5305, %v5303
        %v7736 = vpack.c.b16 %v5308, %v5306
        %v7737 = vpack.c.b16 %v5309, %v5307
        %v7738 = vpack.c.b16 %v5312, %v5310
        %v7739 = vpack.c.b16 %v5313, %v5311
        %v7740 = vpack.c.b16 %v5316, %v5314
        %v7741 = vpack.c.b16 %v5317, %v5315
        %v7742 = vpack.c.b16 %v5320, %v5318
        %v7743 = vpack.c.b16 %v5321, %v5319
        %v7744 = vpack.c.b16 %v5324, %v5322
        %v7745 = vpack.c.b16 %v5325, %v5323
        %v7746 = vpack.c.b16 %v5328, %v5326
        %v7747 = vpack.c.b16 %v5329, %v5327
        %v7748 = vpack.c.b16 %v5332, %v5330
        %v7749 = vpack.c.b16 %v5333, %v5331
        %v7750 = vpack.c.b16 %v5336, %v5334
        %v7751 = vpack.c.b16 %v5337, %v5335
        %v7752 = vpack.c.b16 %v5340, %v5338
        %v7753 = vpack.c.b16 %v5341, %v5339
        %v7754 = vpack.c.b16 %v5344, %v5342
        %v7755 = vpack.c.b16 %v5345, %v5343
        %v7756 = vpack.c.b16 %v5348, %v5346
        %v7757 = vpack.c.b16 %v5349, %v5347
        %v7758 = vpack.c.b16 %v5352, %v5350
        %v7759 = vpack.c.b16 %v5353, %v5351
        %v7760 = vpack.c.b16 %v5356, %v5354
        %v7761 = vpack.c.b16 %v5357, %v5355
        %v7762 = vpack.c.b16 %v5360, %v5358
        %v7763 = vpack.c.b16 %v5361, %v5359
        %v7764 = vpack.c.b16 %v5364, %v5362
        %v7765 = vpack.c.b16 %v5365, %v5363
        %v7766 = vpack.c.b16 %v5368, %v5366
        %v7767 = vpack.c.b16 %v5369, %v5367
        %v7768 = vpack.c.b16 %v5372, %v5370
        %v7769 = vpack.c.b16 %v5373, %v5371
        %v7770 = vpack.c.b16 %v5376, %v5374
        %v7771 = vpack.c.b16 %v5377, %v5375
        %v7772 = vpack.c.b16 %v5380, %v5378
        %v7773 = vpack.c.b16 %v5381, %v5379
        %v7774 = vpack.c.b16 %v5384, %v5382
        %v7775 = vpack.c.b16 %v5385, %v5383
        %v7776 = vpack.c.b16 %v5388, %v5386
        %v7777 = vpack.c.b16 %v5389, %v5387
        %v7778 = vpack.c.b16 %v5392, %v5390
        %v7779 = vpack.c.b16 %v5393, %v5391
        %v7780 = vpack.c.b16 %v5396, %v5394
        %v7781 = vpack.c.b16 %v5397, %v5395
        %v7782 = vpack.c.b16 %v5400, %v5398
        %v7783 = vpack.c.b16 %v5401, %v5399
        %v7784 = vpack.c.b16 %v5404, %v5402
        %v7785 = vpack.c.b16 %v5405, %v5403
        %v7786 = vpack.c.b16 %v5408, %v5406
        %v7787 = vpack.c.b16 %v5409, %v5407
        %v7788 = vpack.c.b16 %v5412, %v5410
        %v7789 = vpack.c.b16 %v5413, %v5411
        %v7790 = vpack.c.b16 %v5416, %v5414
        %v7791 = vpack.c.b16 %v5417, %v5415
        %v7792 = vpack.c.b16 %v5420, %v5418
        %v7793 = vpack.c.b16 %v5421, %v5419
        %v7794 = vpack.c.b16 %v5424, %v5422
        %v7795 = vpack.c.b16 %v5425, %v5423
        %v7796 = vpack.c.b16 %v5428, %v5426
        %v7797 = vpack.c.b16 %v5429, %v5427
        %v7798 = vpack.c.b16 %v5432, %v5430
        %v7799 = vpack.c.b16 %v5433, %v5431
        %v7800 = vpack.c.b16 %v5436, %v5434
        %v7801 = vpack.c.b16 %v5437, %v5435
        %v7802 = vpack.c.b16 %v5440, %v5438
        %v7803 = vpack.c.b16 %v5441, %v5439
        %v7804 = vpack.c.b16 %v5444, %v5442
        %v7805 = vpack.c.b16 %v5445, %v5443
        %v7806 = vpack.c.b16 %v5448, %v5446
        %v7807 = vpack.c.b16 %v5449, %v5447
        %v7808 = vpack.c.b16 %v5452, %v5450
        %v7809 = vpack.c.b16 %v5453, %v5451
        %v7810 = vpack.c.b16 %v5456, %v5454
        %v7811 = vpack.c.b16 %v5457, %v5455
        %v7812 = vpack.c.b16 %v5460, %v5458
        %v7813 = vpack.c.b16 %v5461, %v5459
        %v7814 = vpack.c.b16 %v5464, %v5462
        %v7815 = vpack.c.b16 %v5465, %v5463
        %v7816 = vpack.c.b16 %v5468, %v5466
        %v7817 = vpack.c.b16 %v5469, %v5467
        %v7818 = vpack.c.b16 %v5472, %v5470
        %v7819 = vpack.c.b16 %v5473, %v5471
        %v7820 = vpack.c.b16 %v5476, %v5474
        %v7821 = vpack.c.b16 %v5477, %v5475
        %v7822 = vpack.c.b16 %v5480, %v5478
        %v7823 = vpack.c.b16 %v5481, %v5479
        %v7824 = vpack.c.b16 %v5484, %v5482
        %v7825 = vpack.c.b16 %v5485, %v5483
        %v7826 = vpack.c.b16 %v5488, %v5486
        %v7827 = vpack.c.b16 %v5489, %v5487
        %v7828 = vpack.c.b16 %v5492, %v5490
        %v7829 = vpack.c.b16 %v5493, %v5491
        %v7830 = vpack.c.b16 %v5496, %v5494
        %v7831 = vpack.c.b16 %v5497, %v5495
        %v7832 = vpack.c.b16 %v5500, %v5498
        %v7833 = vpack.c.b16 %v5501, %v5499
        %v7834 = vpack.c.b16 %v5504, %v5502
        %v7835 = vpack.c.b16 %v5505, %v5503
        %v7836 = vpack.c.b16 %v5508, %v5506
        %v7837 = vpack.c.b16 %v5509, %v5507
        %v7838 = vpack.c.b16 %v5512, %v5510
        %v7839 = vpack.c.b16 %v5513, %v5511
        %v7840 = vpack.c.b16 %v5516, %v5514
        %v7841 = vpack.c.b16 %v5517, %v5515
        %v7842 = vpack.c.b16 %v5520, %v5518
        %v7843 = vpack.c.b16 %v5521, %v5519
        %v7844 = vpack.c.b16 %v5524, %v5522
        %v7845 = vpack.c.b16 %v5525, %v5523
        %v7846 = vpack.c.b16 %v5528, %v5526
        %v7847 = vpack.c.b16 %v5529, %v5527
        %v7848 = vpack.c.b16 %v5532, %v5530
        %v7849 = vpack.c.b16 %v5533, %v5531
        %v7850 = vpack.c.b16 %v5536, %v5534
        %v7851 = vpack.c.b16 %v5537, %v5535
        %v7852 = vpack.c.b16 %v5540, %v5538
        %v7853 = vpack.c.b16 %v5541, %v5539
        %v7854 = vpack.c.b16 %v5544, %v5542
        %v7855 = vpack.c.b16 %v5545, %v5543
        %v7856 = vpack.c.b16 %v5548, %v5546
        %v7857 = vpack.c.b16 %v5549, %v5547
        %v7858 = vpack.c.b16 %v5552, %v5550
        %v7859 = vpack.c.b16 %v5553, %v5551
        %v7860 = vpack.c.b16 %v5556, %v5554
        %v7861 = vpack.c.b16 %v5557, %v5555
        %v7862 = vpack.c.b16 %v5560, %v5558
        %v7863 = vpack.c.b16 %v5561, %v5559
        %v7864 = vpack.c.b16 %v5564, %v5562
        %v7865 = vpack.c.b16 %v5565, %v5563
        %v7866 = vpack.c.b16 %v5568, %v5566
        %v7867 = vpack.c.b16 %v5569, %v5567
        %v7868 = vpack.c.b16 %v5572, %v5570
        %v7869 = vpack.c.b16 %v5573, %v5571
        %v7870 = vpack.c.b16 %v5576, %v5574
        %v7871 = vpack.c.b16 %v5577, %v5575
        %v7872 = vpack.c.b16 %v5580, %v5578
        %v7873 = vpack.c.b16 %v5581, %v5579
        %v7874 = vpack.c.b16 %v5584, %v5582
        %v7875 = vpack.c.b16 %v5585, %v5583
        %v7876 = vpack.c.b16 %v5588, %v5586
        %v7877 = vpack.c.b16 %v5589, %v5587
        %v7878 = vpack.c.b16 %v5592, %v5590
        %v7879 = vpack.c.b16 %v5593, %v5591
        %v7880 = vpack.c.b16 %v5596, %v5594
        %v7881 = vpack.c.b16 %v5597, %v5595
        %v7882 = vpack.c.b16 %v5600, %v5598
        %v7883 = vpack.c.b16 %v5601, %v5599
        %v7884 = vpack.c.b16 %v5604, %v5602
        %v7885 = vpack.c.b16 %v5605, %v5603
        %v7886 = vpack.c.b16 %v5608, %v5606
        %v7887 = vpack.c.b16 %v5609, %v5607
        %v7888 = vpack.c.b16 %v5612, %v5610
        %v7889 = vpack.c.b16 %v5613, %v5611
        %v7890 = vpack.c.b16 %v5616, %v5614
        %v7891 = vpack.c.b16 %v5617, %v5615
        %v7892 = vpack.c.b16 %v5620, %v5618
        %v7893 = vpack.c.b16 %v5621, %v5619
        %v7894 = vpack.c.b16 %v5624, %v5622
        %v7895 = vpack.c.b16 %v5625, %v5623
        %v7896 = vpack.c.b16 %v5628, %v5626
        %v7897 = vpack.c.b16 %v5629, %v5627
        %v7898 = vpack.c.b16 %v5632, %v5630
        %v7899 = vpack.c.b16 %v5633, %v5631
        %v7900 = vpack.c.b16 %v5636, %v5634
        %v7901 = vpack.c.b16 %v5637, %v5635
        %v7902 = vpack.c.b16 %v5640, %v5638
        %v7903 = vpack.c.b16 %v5641, %v5639
        %v7904 = vpack.c.b16 %v5644, %v5642
        %v7905 = vpack.c.b16 %v5645, %v5643
        %v7906 = vpack.c.b16 %v5648, %v5646
        %v7907 = vpack.c.b16 %v5649, %v5647
        %v7908 = vpack.c.b16 %v5652, %v5650
        %v7909 = vpack.c.b16 %v5653, %v5651
        %v7910 = vpack.c.b16 %v5656, %v5654
        %v7911 = vpack.c.b16 %v5657, %v5655
        %v7912 = vpack.c.b16 %v5660, %v5658
        %v7913 = vpack.c.b16 %v5661, %v5659
        %v7914 = vpack.c.b16 %v5664, %v5662
        %v7915 = vpack.c.b16 %v5665, %v5663
        %v7916 = vpack.c.b16 %v5668, %v5666
        %v7917 = vpack.c.b16 %v5669, %v5667
        %v7918 = vpack.c.b16 %v5672, %v5670
        %v7919 = vpack.c.b16 %v5673, %v5671
        %v7920 = vpack.c.b16 %v5676, %v5674
        %v7921 = vpack.c.b16 %v5677, %v5675
        %v7922 = vpack.c.b16 %v5680, %v5678
        %v7923 = vpack.c.b16 %v5681, %v5679
        %v7924 = vpack.c.b16 %v5684, %v5682
        %v7925 = vpack.c.b16 %v5685, %v5683
        %v7926 = vpack.c.b16 %v5688, %v5686
        %v7927 = vpack.c.b16 %v5689, %v5687
        %v7928 = vpack.c.b16 %v5692, %v5690
        %v7929 = vpack.c.b16 %v5693, %v5691
        %v7930 = vpack.c.b16 %v5696, %v5694
        %v7931 = vpack.c.b16 %v5697, %v5695
        %v7932 = vpack.c.b16 %v5700, %v5698
        %v7933 = vpack.c.b16 %v5701, %v5699
        %v7934 = vpack.c.b16 %v5704, %v5702
        %v7935 = vpack.c.b16 %v5705, %v5703
        %v7936 = vpack.c.b16 %v5708, %v5706
        %v7937 = vpack.c.b16 %v5709, %v5707
        %v7938 = vpack.c.b16 %v5712, %v5710
        %v7939 = vpack.c.b16 %v5713, %v5711
        %v7940 = vpack.c.b16 %v5716, %v5714
        %v7941 = vpack.c.b16 %v5717, %v5715
        %v7942 = vpack.c.b16 %v5720, %v5718
        %v7943 = vpack.c.b16 %v5721, %v5719
        %v7944 = vpack.c.b16 %v5724, %v5722
        %v7945 = vpack.c.b16 %v5725, %v5723
        %v7946 = vpack.c.b16 %v5728, %v5726
        %v7947 = vpack.c.b16 %v5729, %v5727
        %v7948 = vpack.c.b16 %v5732, %v5730
        %v7949 = vpack.c.b16 %v5733, %v5731
        %v7950 = vpack.c.b16 %v5736, %v5734
        %v7951 = vpack.c.b16 %v5737, %v5735
        %v7952 = vpack.c.b16 %v5740, %v5738
        %v7953 = vpack.c.b16 %v5741, %v5739
        %v7954 = vpack.c.b16 %v5744, %v5742
        %v7955 = vpack.c.b16 %v5745, %v5743
        %v7956 = vpack.c.b16 %v5748, %v5746
        %v7957 = vpack.c.b16 %v5749, %v5747
        %v7958 = vpack.c.b16 %v5752, %v5750
        %v7959 = vpack.c.b16 %v5753, %v5751
        %v7960 = vpack.c.b16 %v5756, %v5754
        %v7961 = vpack.c.b16 %v5757, %v5755
        %v7962 = vpack.c.b16 %v5760, %v5758
        %v7963 = vpack.c.b16 %v5761, %v5759
        %v7964 = vpack.c.b16 %v5764, %v5762
        %v7965 = vpack.c.b16 %v5765, %v5763
        %v7966 = vpack.c.b16 %v5768, %v5766
        %v7967 = vpack.c.b16 %v5769, %v5767
        %v7968 = vpack.c.b16 %v5772, %v5770
        %v7969 = vpack.c.b16 %v5773, %v5771
        %v7970 = vpack.c.b16 %v5776, %v5774
        %v7971 = vpack.c.b16 %v5777, %v5775
        %v7972 = vpack.c.b16 %v5780, %v5778
        %v7973 = vpack.c.b16 %v5781, %v5779
        %v7974 = vpack.c.b16 %v5784, %v5782
        %v7975 = vpack.c.b16 %v5785, %v5783
        %v7976 = vpack.c.b16 %v5788, %v5786
        %v7977 = vpack.c.b16 %v5789, %v5787
        %v7978 = vpack.c.b16 %v5792, %v5790
        %v7979 = vpack.c.b16 %v5793, %v5791
        %v7980 = vpack.c.b16 %v5796, %v5794
        %v7981 = vpack.c.b16 %v5797, %v5795
        %v7982 = vpack.c.b16 %v5800, %v5798
        %v7983 = vpack.c.b16 %v5801, %v5799
        %v7984 = vpack.c.b16 %v5804, %v5802
        %v7985 = vpack.c.b16 %v5805, %v5803
        %v7986 = vpack.c.b16 %v5808, %v5806
        %v7987 = vpack.c.b16 %v5809, %v5807
        %v7988 = vpack.c.b16 %v5812, %v5810
        %v7989 = vpack.c.b16 %v5813, %v5811
        %v7990 = vpack.c.b16 %v5816, %v5814
        %v7991 = vpack.c.b16 %v5817, %v5815
        %v7992 = vpack.c.b16 %v5820, %v5818
        %v7993 = vpack.c.b16 %v5821, %v5819
        %v7994 = vpack.c.b16 %v5824, %v5822
        %v7995 = vpack.c.b16 %v5825, %v5823
        %v7996 = vpack.c.b16 %v5828, %v5826
        %v7997 = vpack.c.b16 %v5829, %v5827
        %v7998 = vpack.c.b16 %v5832, %v5830
        %v7999 = vpack.c.b16 %v5833, %v5831
        %v8000 = vpack.c.b16 %v5836, %v5834
        %v8001 = vpack.c.b16 %v5837, %v5835
        %v8002 = vpack.c.b16 %v5840, %v5838
        %v8003 = vpack.c.b16 %v5841, %v5839
        %v8004 = vpack.c.b16 %v5844, %v5842
        %v8005 = vpack.c.b16 %v5845, %v5843
        %v8006 = vpack.c.b16 %v5848, %v5846
        %v8007 = vpack.c.b16 %v5849, %v5847
        %v8008 = vpack.c.b16 %v5852, %v5850
        %v8009 = vpack.c.b16 %v5853, %v5851
        %v8010 = vpack.c.b16 %v5856, %v5854
        %v8011 = vpack.c.b16 %v5857, %v5855
        %v8012 = vpack.c.b16 %v5860, %v5858
        %v8013 = vpack.c.b16 %v5861, %v5859
        %v8014 = vpack.c.b16 %v5864, %v5862
        %v8015 = vpack.c.b16 %v5865, %v5863
        %v8016 = vpack.c.b16 %v5868, %v5866
        %v8017 = vpack.c.b16 %v5869, %v5867
        %v8018 = vpack.c.b16 %v5872, %v5870
        %v8019 = vpack.c.b16 %v5873, %v5871
        %v8020 = vpack.c.b16 %v5876, %v5874
        %v8021 = vpack.c.b16 %v5877, %v5875
        %v8022 = vpack.c.b16 %v5880, %v5878
        %v8023 = vpack.c.b16 %v5881, %v5879
        %v8024 = vpack.c.b16 %v5884, %v5882
        %v8025 = vpack.c.b16 %v5885, %v5883
        %v8026 = vpack.c.b16 %v5888, %v5886
        %v8027 = vpack.c.b16 %v5889, %v5887
        %v8028 = vpack.c.b16 %v5892, %v5890
        %v8029 = vpack.c.b16 %v5893, %v5891
        %v8030 = vpack.c.b16 %v5896, %v5894
        %v8031 = vpack.c.b16 %v5897, %v5895
        %v8032 = vpack.c.b16 %v5900, %v5898
        %v8033 = vpack.c.b16 %v5901, %v5899
        %v8034 = vpack.c.b16 %v5904, %v5902
        %v8035 = vpack.c.b16 %v5905, %v5903
        %v8036 = vpack.c.b16 %v5908, %v5906
        %v8037 = vpack.c.b16 %v5909, %v5907
        %v8038 = vpack.c.b16 %v5912, %v5910
        %v8039 = vpack.c.b16 %v5913, %v5911
        %v8040 = vpack.c.b16 %v5916, %v5914
        %v8041 = vpack.c.b16 %v5917, %v5915
        %v8042 = vpack.c.b16 %v5920, %v5918
        %v8043 = vpack.c.b16 %v5921, %v5919
        %v8044 = vpack.c.b16 %v5924, %v5922
        %v8045 = vpack.c.b16 %v5925, %v5923
        %v8046 = vpack.c.b16 %v5928, %v5926
        %v8047 = vpack.c.b16 %v5929, %v5927
        %v8048 = vpack.c.b16 %v5932, %v5930
        %v8049 = vpack.c.b16 %v5933, %v5931
        %v8050 = vpack.c.b16 %v5936, %v5934
        %v8051 = vpack.c.b16 %v5937, %v5935
        %v8052 = vpack.c.b16 %v5940, %v5938
        %v8053 = vpack.c.b16 %v5941, %v5939
        %v8054 = vpack.c.b16 %v5944, %v5942
        %v8055 = vpack.c.b16 %v5945, %v5943
        %v8056 = vpack.c.b16 %v5948, %v5946
        %v8057 = vpack.c.b16 %v5949, %v5947
        %v8058 = vpack.c.b16 %v5952, %v5950
        %v8059 = vpack.c.b16 %v5953, %v5951
        %v8060 = vpack.c.b16 %v5956, %v5954
        %v8061 = vpack.c.b16 %v5957, %v5955
        %v8062 = vpack.c.b16 %v5960, %v5958
        %v8063 = vpack.c.b16 %v5961, %v5959
        %v8064 = vpack.c.b16 %v5964, %v5962
        %v8065 = vpack.c.b16 %v5965, %v5963
        %v8066 = vpack.c.b16 %v5968, %v5966
        %v8067 = vpack.c.b16 %v5969, %v5967
        %v8068 = vpack.c.b16 %v5972, %v5970
        %v8069 = vpack.c.b16 %v5973, %v5971
        %v8070 = vpack.c.b16 %v5976, %v5974
        %v8071 = vpack.c.b16 %v5977, %v5975
        %v8072 = vpack.c.b16 %v5980, %v5978
        %v8073 = vpack.c.b16 %v5981, %v5979
        %v8074 = vpack.c.b16 %v5984, %v5982
        %v8075 = vpack.c.b16 %v5985, %v5983
        %v8076 = vpack.c.b16 %v5988, %v5986
        %v8077 = vpack.c.b16 %v5989, %v5987
        %v8078 = vpack.c.b16 %v5992, %v5990
        %v8079 = vpack.c.b16 %v5993, %v5991
        %v8080 = vpack.c.b16 %v5996, %v5994
        %v8081 = vpack.c.b16 %v5997, %v5995
        %v8082 = vpack.c.b16 %v6000, %v5998
        %v8083 = vpack.c.b16 %v6001, %v5999
        %v8084 = vpack.c.b16 %v6004, %v6002
        %v8085 = vpack.c.b16 %v6005, %v6003
        %v8086 = vpack.c.b16 %v6008, %v6006
        %v8087 = vpack.c.b16 %v6009, %v6007
        %v8088 = vpack.c.b16 %v6012, %v6010
        %v8089 = vpack.c.b16 %v6013, %v6011
        %v8090 = vpack.c.b16 %v6016, %v6014
        %v8091 = vpack.c.b16 %v6017, %v6015
        %v8092 = vpack.c.b16 %v6020, %v6018
        %v8093 = vpack.c.b16 %v6021, %v6019
        %v8094 = vpack.c.b16 %v6024, %v6022
        %v8095 = vpack.c.b16 %v6025, %v6023
        %v8096 = vpack.c.b16 %v6028, %v6026
        %v8097 = vpack.c.b16 %v6029, %v6027
        %v8098 = vpack.c.b16 %v6032, %v6030
        %v8099 = vpack.c.b16 %v6033, %v6031
        %v8100 = vpack.c.b16 %v6036, %v6034
        %v8101 = vpack.c.b16 %v6037, %v6035
        %v8102 = vpack.c.b16 %v6040, %v6038
        %v8103 = vpack.c.b16 %v6041, %v6039
        %v8104 = vpack.c.b16 %v6044, %v6042
        %v8105 = vpack.c.b16 %v6045, %v6043
        %v8106 = vpack.c.b16 %v6048, %v6046
        %v8107 = vpack.c.b16 %v6049, %v6047
        %v8108 = vpack.c.b16 %v6052, %v6050
        %v8109 = vpack.c.b16 %v6053, %v6051
        %v8110 = vpack.c.b16 %v6056, %v6054
        %v8111 = vpack.c.b16 %v6057, %v6055
        %v8112 = vpack.c.b16 %v6060, %v6058
        %v8113 = vpack.c.b16 %v6061, %v6059
        %v8114 = vpack.c.b16 %v6064, %v6062
        %v8115 = vpack.c.b16 %v6065, %v6063
        %v8116 = vpack.c.b16 %v6068, %v6066
        %v8117 = vpack.c.b16 %v6069, %v6067
        %v8118 = vpack.c.b16 %v6072, %v6070
        %v8119 = vpack.c.b16 %v6073, %v6071
        %v8120 = vpack.c.b16 %v6076, %v6074
        %v8121 = vpack.c.b16 %v6077, %v6075
        %v8122 = vpack.c.b16 %v6080, %v6078
        %v8123 = vpack.c.b16 %v6081, %v6079
        %v8124 = vpack.c.b16 %v6084, %v6082
        %v8125 = vpack.c.b16 %v6085, %v6083
        %v8126 = vpack.c.b16 %v6088, %v6086
        %v8127 = vpack.c.b16 %v6089, %v6087
        %v8128 = vpack.c.b16 %v6092, %v6090
        %v8129 = vpack.c.b16 %v6093, %v6091
        %v8130 = vpack.c.b16 %v6096, %v6094
        %v8131 = vpack.c.b16 %v6097, %v6095
        %v8132 = vpack.c.b16 %v6100, %v6098
        %v8133 = vpack.c.b16 %v6101, %v6099
        %v8134 = vpack.c.b16 %v6104, %v6102
        %v8135 = vpack.c.b16 %v6105, %v6103
        %v8136 = vpack.c.b16 %v6108, %v6106
        %v8137 = vpack.c.b16 %v6109, %v6107
        %v8138 = vpack.c.b16 %v6112, %v6110
        %v8139 = vpack.c.b16 %v6113, %v6111
        %v8140 = vpack.c.b16 %v6116, %v6114
        %v8141 = vpack.c.b16 %v6117, %v6115
        %v8142 = vpack.c.b16 %v6120, %v6118
        %v8143 = vpack.c.b16 %v6121, %v6119
        %v8144 = vpack.c.b16 %v6124, %v6122
        %v8145 = vpack.c.b16 %v6125, %v6123
        %v8146 = vpack.c.b16 %v6128, %v6126
        %v8147 = vpack.c.b16 %v6129, %v6127
        %v8148 = vpack.c.b16 %v6132, %v6130
        %v8149 = vpack.c.b16 %v6133, %v6131
        %v8150 = vpack.c.b16 %v6136, %v6134
        %v8151 = vpack.c.b16 %v6137, %v6135
        %v8152 = vpack.c.b16 %v6140, %v6138
        %v8153 = vpack.c.b16 %v6141, %v6139
        %v8154 = vpack.c.b16 %v6144, %v6142
        %v8155 = vpack.c.b16 %v6145, %v6143
        %v8156 = vpack.c.b16 %v6148, %v6146
        %v8157 = vpack.c.b16 %v6149, %v6147
        %v8158 = vpack.c.b16 %v6152, %v6150
        %v8159 = vpack.c.b16 %v6153, %v6151
        %v8160 = vpack.c.b16 %v6156, %v6154
        %v8161 = vpack.c.b16 %v6157, %v6155
        %v8162 = vpack.c.b16 %v6160, %v6158
        %v8163 = vpack.c.b16 %v6161, %v6159
        %v8164 = vpack.c.b16 %v6164, %v6162
        %v8165 = vpack.c.b16 %v6165, %v6163
        %v8166 = vpack.c.b16 %v6168, %v6166
        %v8167 = vpack.c.b16 %v6169, %v6167
        %v8168 = vpack.c.b16 %v6172, %v6170
        %v8169 = vpack.c.b16 %v6173, %v6171
        %v8170 = vpack.c.b16 %v6176, %v6174
        %v8171 = vpack.c.b16 %v6177, %v6175
        %v8172 = vpack.c.b16 %v6180, %v6178
        %v8173 = vpack.c.b16 %v6181, %v6179
        %v8174 = vpack.c.b16 %v6184, %v6182
        %v8175 = vpack.c.b16 %v6185, %v6183
        %v8176 = vpack.c.b16 %v6188, %v6186
        %v8177 = vpack.c.b16 %v6189, %v6187
        %v8178 = vpack.c.b16 %v6192, %v6190
        %v8179 = vpack.c.b16 %v6193, %v6191
        %v8180 = vpack.c.b16 %v6196, %v6194
        %v8181 = vpack.c.b16 %v6197, %v6195
        %v8182 = vpack.c.b16 %v6200, %v6198
        %v8183 = vpack.c.b16 %v6201, %v6199
        %v8184 = vpack.c.b16 %v6204, %v6202
        %v8185 = vpack.c.b16 %v6205, %v6203
        %v8186 = vpack.c.b16 %v6208, %v6206
        %v8187 = vpack.c.b16 %v6209, %v6207
        %v8188 = vpack.c.b16 %v6212, %v6210
        %v8189 = vpack.c.b16 %v6213, %v6211
        %v8190 = vpack.c.b16 %v6216, %v6214
        %v8191 = vpack.c.b16 %v6217, %v6215
        %v8192 = vpack.c.b16 %v6220, %v6218
        %v8193 = vpack.c.b16 %v6221, %v6219
        %v8194 = vpack.c.b16 %v6224, %v6222
        %v8195 = vpack.c.b16 %v6225, %v6223
        %v8196 = vpack.c.b16 %v6228, %v6226
        %v8197 = vpack.c.b16 %v6229, %v6227
        %v8198 = vpack.c.b16 %v6232, %v6230
        %v8199 = vpack.c.b16 %v6233, %v6231
        %v8200 = vpack.c.b16 %v6236, %v6234
        %v8201 = vpack.c.b16 %v6237, %v6235
        %v8202 = vpack.c.b16 %v6240, %v6238
        %v8203 = vpack.c.b16 %v6241, %v6239
        %v8204 = vpack.c.b16 %v6244, %v6242
        %v8205 = vpack.c.b16 %v6245, %v6243
        %v8206 = vpack.c.b16 %v6248, %v6246
        %v8207 = vpack.c.b16 %v6249, %v6247
        %v8208 = vpack.c.b16 %v6252, %v6250
        %v8209 = vpack.c.b16 %v6253, %v6251
        %v8210 = vpack.c.b16 %v6256, %v6254
        %v8211 = vpack.c.b16 %v6257, %v6255
        %v8212 = vpack.c.b16 %v6260, %v6258
        %v8213 = vpack.c.b16 %v6261, %v6259
        %v8214 = vpack.c.b16 %v6264, %v6262
        %v8215 = vpack.c.b16 %v6265, %v6263
        %v8216 = vpack.c.b16 %v6268, %v6266
        %v8217 = vpack.c.b16 %v6269, %v6267
        %v8218 = vpack.c.b16 %v6272, %v6270
        %v8219 = vpack.c.b16 %v6273, %v6271
        %v8220 = vpack.c.b16 %v6276, %v6274
        %v8221 = vpack.c.b16 %v6277, %v6275
        %v8222 = vpack.c.b16 %v6280, %v6278
        %v8223 = vpack.c.b16 %v6281, %v6279
        %v8224 = vpack.c.b16 %v6284, %v6282
        %v8225 = vpack.c.b16 %v6285, %v6283
        %v8226 = vpack.c.b16 %v6288, %v6286
        %v8227 = vpack.c.b16 %v6289, %v6287
        %v8228 = vpack.c.b16 %v6292, %v6290
        %v8229 = vpack.c.b16 %v6293, %v6291
        %v8230 = vpack.c.b16 %v6296, %v6294
        %v8231 = vpack.c.b16 %v6297, %v6295
        %v8232 = vpack.c.b16 %v6300, %v6298
        %v8233 = vpack.c.b16 %v6301, %v6299
        %v8234 = vpack.c.b16 %v6304, %v6302
        %v8235 = vpack.c.b16 %v6305, %v6303
        %v8236 = vpack.c.b16 %v6308, %v6306
        %v8237 = vpack.c.b16 %v6309, %v6307
        %v8238 = vpack.c.b16 %v6312, %v6310
        %v8239 = vpack.c.b16 %v6313, %v6311
        %v8240 = vpack.c.b16 %v6316, %v6314
        %v8241 = vpack.c.b16 %v6317, %v6315
        %v8242 = vpack.c.b16 %v6320, %v6318
        %v8243 = vpack.c.b16 %v6321, %v6319
        %v8244 = vpack.c.b16 %v6324, %v6322
        %v8245 = vpack.c.b16 %v6325, %v6323
        %v8246 = vpack.c.b16 %v6328, %v6326
        %v8247 = vpack.c.b16 %v6329, %v6327
        %v8248 = vpack.c.b16 %v6332, %v6330
        %v8249 = vpack.c.b16 %v6333, %v6331
        %v8250 = vpack.c.b16 %v6336, %v6334
        %v8251 = vpack.c.b16 %v6337, %v6335
        %v8252 = vpack.c.b16 %v6340, %v6338
        %v8253 = vpack.c.b16 %v6341, %v6339
        %v8254 = vpack.c.b16 %v6344, %v6342
        %v8255 = vpack.c.b16 %v6345, %v6343
        %v8256 = vpack.c.b16 %v6348, %v6346
        %v8257 = vpack.c.b16 %v6349, %v6347
        %v8258 = vpack.c.b16 %v6352, %v6350
        %v8259 = vpack.c.b16 %v6353, %v6351
        %v8260 = vpack.c.b16 %v6356, %v6354
        %v8261 = vpack.c.b16 %v6357, %v6355
        %v8262 = vpack.c.b16 %v6360, %v6358
        %v8263 = vpack.c.b16 %v6361, %v6359
        %v8264 = vpack.c.b16 %v6364, %v6362
        %v8265 = vpack.c.b16 %v6365, %v6363
        %v8266 = vpack.c.b16 %v6368, %v6366
        %v8267 = vpack.c.b16 %v6369, %v6367
        %v8268 = vpack.c.b16 %v6372, %v6370
        %v8269 = vpack.c.b16 %v6373, %v6371
        %v8270 = vpack.c.b16 %v6376, %v6374
        %v8271 = vpack.c.b16 %v6377, %v6375
        %v8272 = vpack.c.b16 %v6380, %v6378
        %v8273 = vpack.c.b16 %v6381, %v6379
        %v8274 = vpack.c.b16 %v6384, %v6382
        %v8275 = vpack.c.b16 %v6385, %v6383
        %v8276 = vpack.c.b16 %v6388, %v6386
        %v8277 = vpack.c.b16 %v6389, %v6387
        %v8278 = vpack.c.b16 %v6392, %v6390
        %v8279 = vpack.c.b16 %v6393, %v6391
        %v8280 = vpack.c.b16 %v6396, %v6394
        %v8281 = vpack.c.b16 %v6397, %v6395
        %v8282 = vpack.c.b16 %v6400, %v6398
        %v8283 = vpack.c.b16 %v6401, %v6399
        %v8284 = vpack.c.b16 %v6404, %v6402
        %v8285 = vpack.c.b16 %v6405, %v6403
        %v8286 = vpack.c.b16 %v6408, %v6406
        %v8287 = vpack.c.b16 %v6409, %v6407
        %v8288 = vpack.c.b16 %v6412, %v6410
        %v8289 = vpack.c.b16 %v6413, %v6411
        %v8290 = vpack.c.b16 %v6416, %v6414
        %v8291 = vpack.c.b16 %v6417, %v6415
        %v8292 = vpack.c.b16 %v6420, %v6418
        %v8293 = vpack.c.b16 %v6421, %v6419
        %v8294 = vpack.c.b16 %v6424, %v6422
        %v8295 = vpack.c.b16 %v6425, %v6423
        %v8296 = vpack.c.b16 %v6428, %v6426
        %v8297 = vpack.c.b16 %v6429, %v6427
        %v8298 = vpack.c.b16 %v6432, %v6430
        %v8299 = vpack.c.b16 %v6433, %v6431
        %v8300 = vpack.c.b16 %v6436, %v6434
        %v8301 = vpack.c.b16 %v6437, %v6435
        %v8302 = vpack.c.b16 %v6440, %v6438
        %v8303 = vpack.c.b16 %v6441, %v6439
        %v8304 = vpack.c.b16 %v6444, %v6442
        %v8305 = vpack.c.b16 %v6445, %v6443
        %v8306 = vpack.c.b16 %v6448, %v6446
        %v8307 = vpack.c.b16 %v6449, %v6447
        %v8308 = vpack.c.b16 %v6452, %v6450
        %v8309 = vpack.c.b16 %v6453, %v6451
        %v8310 = vpack.c.b16 %v6456, %v6454
        %v8311 = vpack.c.b16 %v6457, %v6455
        %v8312 = vpack.c.b16 %v6460, %v6458
        %v8313 = vpack.c.b16 %v6461, %v6459
        %v8314 = vpack.c.b16 %v6464, %v6462
        %v8315 = vpack.c.b16 %v6465, %v6463
        %v8316 = vpack.c.b16 %v6468, %v6466
        %v8317 = vpack.c.b16 %v6469, %v6467
        %v8318 = vpack.c.b16 %v6472, %v6470
        %v8319 = vpack.c.b16 %v6473, %v6471
        %v8320 = vpack.c.b16 %v6476, %v6474
        %v8321 = vpack.c.b16 %v6477, %v6475
        %v8322 = vpack.c.b16 %v6480, %v6478
        %v8323 = vpack.c.b16 %v6481, %v6479
        %v8324 = vpack.c.b16 %v6484, %v6482
        %v8325 = vpack.c.b16 %v6485, %v6483
        %v8326 = vpack.c.b16 %v6488, %v6486
        %v8327 = vpack.c.b16 %v6489, %v6487
        %v8328 = vpack.c.b16 %v6492, %v6490
        %v8329 = vpack.c.b16 %v6493, %v6491
        %v8330 = vpack.c.b16 %v6496, %v6494
        %v8331 = vpack.c.b16 %v6497, %v6495
        %v8332 = vpack.c.b16 %v6500, %v6498
        %v8333 = vpack.c.b16 %v6501, %v6499
        %v8334 = vpack.c.b16 %v6504, %v6502
        %v8335 = vpack.c.b16 %v6505, %v6503
        %v8336 = vpack.c.b16 %v6508, %v6506
        %v8337 = vpack.c.b16 %v6509, %v6507
        %v8338 = vpack.c.b16 %v6512, %v6510
        %v8339 = vpack.c.b16 %v6513, %v6511
        %v8340 = vpack.c.b16 %v6516, %v6514
        %v8341 = vpack.c.b16 %v6517, %v6515
        %v8342 = vpack.c.b16 %v6520, %v6518
        %v8343 = vpack.c.b16 %v6521, %v6519
        %v8344 = vpack.c.b16 %v6524, %v6522
        %v8345 = vpack.c.b16 %v6525, %v6523
        %v8346 = vpack.c.b16 %v6528, %v6526
        %v8347 = vpack.c.b16 %v6529, %v6527
        %v8348 = vpack.c.b16 %v6532, %v6530
        %v8349 = vpack.c.b16 %v6533, %v6531
        %v8350 = vpack.c.b16 %v6536, %v6534
        %v8351 = vpack.c.b16 %v6537, %v6535
        %v8352 = vpack.c.b16 %v6540, %v6538
        %v8353 = vpack.c.b16 %v6541, %v6539
        %v8354 = vpack.c.b16 %v6544, %v6542
        %v8355 = vpack.c.b16 %v6545, %v6543
        %v8356 = vpack.c.b16 %v6548, %v6546
        %v8357 = vpack.c.b16 %v6549, %v6547
        %v8358 = vpack.c.b16 %v6552, %v6550
        %v8359 = vpack.c.b16 %v6553, %v6551
        %v8360 = vpack.c.b16 %v6556, %v6554
        %v8361 = vpack.c.b16 %v6557, %v6555
        %v8362 = vpack.c.b16 %v6560, %v6558
        %v8363 = vpack.c.b16 %v6561, %v6559
        %v8364 = vpack.c.b16 %v6564, %v6562
        %v8365 = vpack.c.b16 %v6565, %v6563
        %v8366 = vpack.c.b16 %v6568, %v6566
        %v8367 = vpack.c.b16 %v6569, %v6567
        %v8368 = vpack.c.b16 %v6572, %v6570
        %v8369 = vpack.c.b16 %v6573, %v6571
        %v8370 = vpack.c.b16 %v6576, %v6574
        %v8371 = vpack.c.b16 %v6577, %v6575
        %v8372 = vpack.c.b16 %v6580, %v6578
        %v8373 = vpack.c.b16 %v6581, %v6579
        %v8374 = vpack.c.b16 %v6584, %v6582
        %v8375 = vpack.c.b16 %v6585, %v6583
        %v8376 = vpack.c.b16 %v6588, %v6586
        %v8377 = vpack.c.b16 %v6589, %v6587
        %v8378 = vpack.c.b16 %v6592, %v6590
        %v8379 = vpack.c.b16 %v6593, %v6591
        %v8380 = vpack.c.b16 %v6596, %v6594
        %v8381 = vpack.c.b16 %v6597, %v6595
        %v8382 = vpack.c.b16 %v6600, %v6598
        %v8383 = vpack.c.b16 %v6601, %v6599
        %v8384 = vpack.c.b16 %v6604, %v6602
        %v8385 = vpack.c.b16 %v6605, %v6603
        %v8386 = vpack.c.b16 %v6608, %v6606
        %v8387 = vpack.c.b16 %v6609, %v6607
        %v8388 = vpack.c.b16 %v6612, %v6610
        %v8389 = vpack.c.b16 %v6613, %v6611
        %v8390 = vpack.c.b16 %v6616, %v6614
        %v8391 = vpack.c.b16 %v6617, %v6615
        %v8392 = vpack.c.b16 %v6620, %v6618
        %v8393 = vpack.c.b16 %v6621, %v6619
        %v8394 = vpack.c.b16 %v6624, %v6622
        %v8395 = vpack.c.b16 %v6625, %v6623
        %v8396 = vpack.c.b16 %v6628, %v6626
        %v8397 = vpack.c.b16 %v6629, %v6627
        %v8398 = vpack.c.b16 %v6632, %v6630
        %v8399 = vpack.c.b16 %v6633, %v6631
        %v8400 = vpack.c.b16 %v6636, %v6634
        %v8401 = vpack.c.b16 %v6637, %v6635
        %v8402 = vpack.c.b16 %v6640, %v6638
        %v8403 = vpack.c.b16 %v6641, %v6639
        %v8404 = vpack.c.b16 %v6644, %v6642
        %v8405 = vpack.c.b16 %v6645, %v6643
        %v8406 = vpack.c.b16 %v6648, %v6646
        %v8407 = vpack.c.b16 %v6649, %v6647
        %v8408 = vpack.c.b16 %v6652, %v6650
        %v8409 = vpack.c.b16 %v6653, %v6651
        %v8410 = vpack.c.b16 %v6656, %v6654
        %v8411 = vpack.c.b16 %v6657, %v6655
        %v8412 = vpack.c.b16 %v6660, %v6658
        %v8413 = vpack.c.b16 %v6661, %v6659
        %v8414 = vpack.c.b16 %v6664, %v6662
        %v8415 = vpack.c.b16 %v6665, %v6663
        %v8416 = vpack.c.b16 %v6668, %v6666
        %v8417 = vpack.c.b16 %v6669, %v6667
        %v8418 = vpack.c.b16 %v6672, %v6670
        %v8419 = vpack.c.b16 %v6673, %v6671
        %v8420 = vpack.c.b16 %v6676, %v6674
        %v8421 = vpack.c.b16 %v6677, %v6675
        %v8422 = vpack.c.b16 %v6680, %v6678
        %v8423 = vpack.c.b16 %v6681, %v6679
        %v8424 = vpack.c.b16 %v6684, %v6682
        %v8425 = vpack.c.b16 %v6685, %v6683
        %v8426 = vpack.c.b16 %v6688, %v6686
        %v8427 = vpack.c.b16 %v6689, %v6687
        %v8428 = vpack.c.b16 %v6692, %v6690
        %v8429 = vpack.c.b16 %v6693, %v6691
        %v8430 = vpack.c.b16 %v6696, %v6694
        %v8431 = vpack.c.b16 %v6697, %v6695
        %v8432 = vpack.c.b16 %v6700, %v6698
        %v8433 = vpack.c.b16 %v6701, %v6699
        %v8434 = vpack.c.b16 %v6704, %v6702
        %v8435 = vpack.c.b16 %v6705, %v6703
        %v8436 = vpack.c.b16 %v6708, %v6706
        %v8437 = vpack.c.b16 %v6709, %v6707
        %v8438 = vpack.c.b16 %v6712, %v6710
        %v8439 = vpack.c.b16 %v6713, %v6711
        %v8440 = vpack.c.b16 %v6716, %v6714
        %v8441 = vpack.c.b16 %v6717, %v6715
        %v8442 = vpack.c.b16 %v6720, %v6718
        %v8443 = vpack.c.b16 %v6721, %v6719
        %v8444 = vpack.c.b16 %v6724, %v6722
        %v8445 = vpack.c.b16 %v6725, %v6723
        %v8446 = vpack.c.b16 %v6728, %v6726
        %v8447 = vpack.c.b16 %v6729, %v6727
        %v8448 = vpack.c.b16 %v6732, %v6730
        %v8449 = vpack.c.b16 %v6733, %v6731
        %v8450 = vpack.c.b16 %v6736, %v6734
        %v8451 = vpack.c.b16 %v6737, %v6735
        %v8452 = vpack.c.b16 %v6740, %v6738
        %v8453 = vpack.c.b16 %v6741, %v6739
        %v8454 = vpack.c.b16 %v6744, %v6742
        %v8455 = vpack.c.b16 %v6745, %v6743
        %v8456 = vpack.c.b16 %v6748, %v6746
        %v8457 = vpack.c.b16 %v6749, %v6747
        %v8458 = vpack.c.b16 %v6752, %v6750
        %v8459 = vpack.c.b16 %v6753, %v6751
        %v8460 = vpack.c.b16 %v6756, %v6754
        %v8461 = vpack.c.b16 %v6757, %v6755
        %v8462 = vpack.c.b16 %v6760, %v6758
        %v8463 = vpack.c.b16 %v6761, %v6759
        %v8464 = vpack.c.b16 %v6764, %v6762
        %v8465 = vpack.c.b16 %v6765, %v6763
        %v8466 = vpack.c.b16 %v6768, %v6766
        %v8467 = vpack.c.b16 %v6769, %v6767
        %v8468 = vpack.c.b16 %v6772, %v6770
        %v8469 = vpack.c.b16 %v6773, %v6771
        %v8470 = vpack.c.b16 %v6776, %v6774
        %v8471 = vpack.c.b16 %v6777, %v6775
        %v8472 = vpack.c.b16 %v6780, %v6778
        %v8473 = vpack.c.b16 %v6781, %v6779
        %v8474 = vpack.c.b16 %v6784, %v6782
        %v8475 = vpack.c.b16 %v6785, %v6783
        %v8476 = vpack.c.b16 %v6788, %v6786
        %v8477 = vpack.c.b16 %v6789, %v6787
        %v8478 = vpack.c.b16 %v6792, %v6790
        %v8479 = vpack.c.b16 %v6793, %v6791
        %v8480 = vpack.c.b16 %v6796, %v6794
        %v8481 = vpack.c.b16 %v6797, %v6795
        %v8482 = vpack.c.b16 %v6800, %v6798
        %v8483 = vpack.c.b16 %v6801, %v6799
        %v8484 = vpack.c.b16 %v6804, %v6802
        %v8485 = vpack.c.b16 %v6805, %v6803
        %v8486 = vpack.c.b16 %v6808, %v6806
        %v8487 = vpack.c.b16 %v6809, %v6807
        %v8488 = vpack.c.b16 %v6812, %v6810
        %v8489 = vpack.c.b16 %v6813, %v6811
        %v8490 = vpack.c.b16 %v6816, %v6814
        %v8491 = vpack.c.b16 %v6817, %v6815
        %v8492 = vpack.c.b16 %v6820, %v6818
        %v8493 = vpack.c.b16 %v6821, %v6819
        %v8494 = vpack.c.b16 %v6824, %v6822
        %v8495 = vpack.c.b16 %v6825, %v6823
        %v8496 = vpack.c.b16 %v6828, %v6826
        %v8497 = vpack.c.b16 %v6829, %v6827
        %v8498 = vpack.c.b16 %v6832, %v6830
        %v8499 = vpack.c.b16 %v6833, %v6831
        %v8500 = vpack.c.b16 %v6836, %v6834
        %v8501 = vpack.c.b16 %v6837, %v6835
        %v8502 = vpack.c.b16 %v6840, %v6838
        %v8503 = vpack.c.b16 %v6841, %v6839
        %v8504 = vpack.c.b16 %v6844, %v6842
        %v8505 = vpack.c.b16 %v6845, %v6843
        %v8506 = vpack.c.b16 %v6848, %v6846
        %v8507 = vpack.c.b16 %v6849, %v6847
        %v8508 = vpack.c.b16 %v6852, %v6850
        %v8509 = vpack.c.b16 %v6853, %v6851
        %v8510 = vpack.c.b16 %v6856, %v6854
        %v8511 = vpack.c.b16 %v6857, %v6855
        %v8512 = vpack.c.b16 %v6860, %v6858
        %v8513 = vpack.c.b16 %v6861, %v6859
        %v8514 = vpack.c.b16 %v6864, %v6862
        %v8515 = vpack.c.b16 %v6865, %v6863
        %v8516 = vpack.c.b16 %v6868, %v6866
        %v8517 = vpack.c.b16 %v6869, %v6867
        %v8518 = vpack.c.b16 %v6872, %v6870
        %v8519 = vpack.c.b16 %v6873, %v6871
        %v8520 = vpack.c.b16 %v6876, %v6874
        %v8521 = vpack.c.b16 %v6877, %v6875
        %v8522 = vpack.c.b16 %v6880, %v6878
        %v8523 = vpack.c.b16 %v6881, %v6879
        %v8524 = vpack.c.b16 %v6884, %v6882
        %v8525 = vpack.c.b16 %v6885, %v6883
        %v8526 = vpack.c.b16 %v6888, %v6886
        %v8527 = vpack.c.b16 %v6889, %v6887
        %v8528 = vpack.c.b16 %v6892, %v6890
        %v8529 = vpack.c.b16 %v6893, %v6891
        %v8530 = vpack.c.b16 %v6896, %v6894
        %v8531 = vpack.c.b16 %v6897, %v6895
        %v8532 = vpack.c.b16 %v6900, %v6898
        %v8533 = vpack.c.b16 %v6901, %v6899
        %v8534 = vpack.c.b16 %v6904, %v6902
        %v8535 = vpack.c.b16 %v6905, %v6903
        %v8536 = vpack.c.b16 %v6908, %v6906
        %v8537 = vpack.c.b16 %v6909, %v6907
        %v8538 = vpack.c.b16 %v6912, %v6910
        %v8539 = vpack.c.b16 %v6913, %v6911
        %v8540 = vpack.c.b16 %v6916, %v6914
        %v8541 = vpack.c.b16 %v6917, %v6915
        %v8542 = vpack.c.b16 %v6920, %v6918
        %v8543 = vpack.c.b16 %v6921, %v6919
        %v8544 = vpack.c.b16 %v6924, %v6922
        %v8545 = vpack.c.b16 %v6925, %v6923
        %v8546 = vpack.c.b16 %v6928, %v6926
        %v8547 = vpack.c.b16 %v6929, %v6927
        %v8548 = vpack.c.b16 %v6932, %v6930
        %v8549 = vpack.c.b16 %v6933, %v6931
        %v8550 = vpack.c.b16 %v6936, %v6934
        %v8551 = vpack.c.b16 %v6937, %v6935
        %v8552 = vpack.c.b16 %v6940, %v6938
        %v8553 = vpack.c.b16 %v6941, %v6939
        %v8554 = vpack.c.b16 %v6944, %v6942
        %v8555 = vpack.c.b16 %v6945, %v6943
        %v8556 = vpack.c.b16 %v6948, %v6946
        %v8557 = vpack.c.b16 %v6949, %v6947
        %v8558 = vpack.c.b16 %v6952, %v6950
        %v8559 = vpack.c.b16 %v6953, %v6951
        %v8560 = vpack.c.b16 %v6956, %v6954
        %v8561 = vpack.c.b16 %v6957, %v6955
        %v8562 = vpack.c.b16 %v6960, %v6958
        %v8563 = vpack.c.b16 %v6961, %v6959
        %v8564 = vpack.c.b16 %v6964, %v6962
        %v8565 = vpack.c.b16 %v6965, %v6963
        %v8566 = vpack.c.b16 %v6968, %v6966
        %v8567 = vpack.c.b16 %v6969, %v6967
        %v8568 = vpack.c.b16 %v6972, %v6970
        %v8569 = vpack.c.b16 %v6973, %v6971
        %v8570 = vpack.c.b16 %v6976, %v6974
        %v8571 = vpack.c.b16 %v6977, %v6975
        %v8572 = vpack.c.b16 %v6980, %v6978
        %v8573 = vpack.c.b16 %v6981, %v6979
        %v8574 = vpack.c.b16 %v6984, %v6982
        %v8575 = vpack.c.b16 %v6985, %v6983
        %v8576 = vpack.c.b16 %v6988, %v6986
        %v8577 = vpack.c.b16 %v6989, %v6987
        %v8578 = vpack.c.b16 %v6992, %v6990
        %v8579 = vpack.c.b16 %v6993, %v6991
        %v8580 = vpack.c.b16 %v6996, %v6994
        %v8581 = vpack.c.b16 %v6997, %v6995
        %v8582 = vpack.c.b16 %v7000, %v6998
        %v8583 = vpack.c.b16 %v7001, %v6999
        %v8584 = vpack.c.b16 %v7004, %v7002
        %v8585 = vpack.c.b16 %v7005, %v7003
        %v8586 = vpack.c.b16 %v7008, %v7006
        %v8587 = vpack.c.b16 %v7009, %v7007
        %v8588 = vpack.c.b16 %v7012, %v7010
        %v8589 = vpack.c.b16 %v7013, %v7011
        %v8590 = vpack.c.b16 %v7016, %v7014
        %v8591 = vpack.c.b16 %v7017, %v7015
        %v8592 = vpack.c.b16 %v7020, %v7018
        %v8593 = vpack.c.b16 %v7021, %v7019
        %v8594 = vpack.c.b16 %v7024, %v7022
        %v8595 = vpack.c.b16 %v7025, %v7023
        %v8596 = vpack.c.b16 %v7028, %v7026
        %v8597 = vpack.c.b16 %v7029, %v7027
        %v8598 = vpack.c.b16 %v7032, %v7030
        %v8599 = vpack.c.b16 %v7033, %v7031
        %v8600 = vpack.c.b16 %v7036, %v7034
        %v8601 = vpack.c.b16 %v7037, %v7035
        %v8602 = vpack.c.b16 %v7040, %v7038
        %v8603 = vpack.c.b16 %v7041, %v7039
        %v8604 = vpack.c.b16 %v7044, %v7042
        %v8605 = vpack.c.b16 %v7045, %v7043
        %v8606 = vpack.c.b16 %v7048, %v7046
        %v8607 = vpack.c.b16 %v7049, %v7047
        %v8608 = vpack.c.b16 %v7052, %v7050
        %v8609 = vpack.c.b16 %v7053, %v7051
        %v8610 = vpack.c.b16 %v7056, %v7054
        %v8611 = vpack.c.b16 %v7057, %v7055
        %v8612 = vpack.c.b16 %v7060, %v7058
        %v8613 = vpack.c.b16 %v7061, %v7059
        %v8614 = vpack.c.b16 %v7064, %v7062
        %v8615 = vpack.c.b16 %v7065, %v7063
        %v8616 = vpack.c.b16 %v7068, %v7066
        %v8617 = vpack.c.b16 %v7069, %v7067
        %v8618 = vpack.c.b16 %v7072, %v7070
        %v8619 = vpack.c.b16 %v7073, %v7071
        %v8620 = vpack.c.b16 %v7076, %v7074
        %v8621 = vpack.c.b16 %v7077, %v7075
        %v8622 = vpack.c.b16 %v7080, %v7078
        %v8623 = vpack.c.b16 %v7081, %v7079
        %v8624 = vpack.c.b16 %v7084, %v7082
        %v8625 = vpack.c.b16 %v7085, %v7083
        %v8626 = vpack.c.b16 %v7088, %v7086
        %v8627 = vpack.c.b16 %v7089, %v7087
        %v8628 = vpack.c.b16 %v7092, %v7090
        %v8629 = vpack.c.b16 %v7093, %v7091
        %10166 = vmatprep.subr.bf16.mxu0 %v7109
        %10167 = vmatpush1.bf16.msra.mxu0 %v7108
        %10168 = vmatprep.subr.bf16.mxu0 %v7107
        %10169 = vmatpush1.bf16.msra.mxu0 %v7106
        %10170 = vmatprep.subr.bf16.mxu0 %v7105
        %10171 = vmatpush1.bf16.msra.mxu0 %v7104
        %10172 = vmatprep.subr.bf16.mxu0 %v7103
        %10173 = vmatpush1.bf16.msra.mxu0 %v7102
        %10174 = vmatprep.subr.bf16.mxu0 %v7101
        %10175 = vmatpush1.bf16.msra.mxu0 %v7100
        %10176 = vmatprep.subr.bf16.mxu0 %v7099
        %10177 = vmatpush1.bf16.msra.mxu0 %v7098
        %10178 = vmatprep.subr.bf16.mxu0 %v7097
        %10179 = vmatpush1.bf16.msra.mxu0 %v7096
        %10180 = vmatprep.subr.bf16.mxu0 %v7095
        %10181 = vmatpush1.bf16.msra.mxu0 %v7094
        %10182 = vmatprep.subr.bf16.mxu0 %v7125
        %10183 = vmatpush2.bf16.msra.mxu0 %v7124
        %10184 = vmatprep.subr.bf16.mxu0 %v7123
        %10185 = vmatpush2.bf16.msra.mxu0 %v7122
        %10186 = vmatprep.subr.bf16.mxu0 %v7121
        %10187 = vmatpush2.bf16.msra.mxu0 %v7120
        %10188 = vmatprep.subr.bf16.mxu0 %v7119
        %10189 = vmatpush2.bf16.msra.mxu0 %v7118
        %10190 = vmatprep.subr.bf16.mxu0 %v7117
        %10191 = vmatpush2.bf16.msra.mxu0 %v7116
        %10192 = vmatprep.subr.bf16.mxu0 %v7115
        %10193 = vmatpush2.bf16.msra.mxu0 %v7114
        %10194 = vmatprep.subr.bf16.mxu0 %v7113
        %10195 = vmatpush2.bf16.msra.mxu0 %v7112
        %10196 = vmatprep.subr.bf16.mxu0 %v7111
        %10197 = vmatpush2.bf16.msra.mxu0 %v7110
        %10198 = vmatprep.mubr.bf16.mxu0 %v1839
        %10199 = vmatmul.mubr.bf16.gmra.mxu0 %v1825
        %v10200 = vpop.f32.mrf.mxu0
        %v10201 = vadd.f32 %v1783, %v10200
        %v10202 = vpop.f32.mrf.mxu0
        %v10203 = vadd.f32 %v1787, %v10202
        %v10204 = vpop.f32.mrf.mxu0
        %v10205 = vpop.f32.mrf.mxu0
        %10206 = vdwg.mxu0
        %10207 = vmatprep.subr.bf16.mxu0 %v7141
        %10208 = vmatpush1.bf16.msra.mxu0 %v7140
        %10209 = vmatprep.subr.bf16.mxu0 %v7139
        %10210 = vmatpush1.bf16.msra.mxu0 %v7138
        %10211 = vmatprep.subr.bf16.mxu0 %v7137
        %10212 = vmatpush1.bf16.msra.mxu0 %v7136
        %10213 = vmatprep.subr.bf16.mxu0 %v7135
        %10214 = vmatpush1.bf16.msra.mxu0 %v7134
        %10215 = vmatprep.subr.bf16.mxu0 %v7133
        %10216 = vmatpush1.bf16.msra.mxu0 %v7132
        %10217 = vmatprep.subr.bf16.mxu0 %v7131
        %10218 = vmatpush1.bf16.msra.mxu0 %v7130
        %10219 = vmatprep.subr.bf16.mxu0 %v7129
        %10220 = vmatpush1.bf16.msra.mxu0 %v7128
        %10221 = vmatprep.subr.bf16.mxu0 %v7127
        %10222 = vmatpush1.bf16.msra.mxu0 %v7126
        %10223 = vmatprep.subr.bf16.mxu0 %v7157
        %10224 = vmatpush2.bf16.msra.mxu0 %v7156
        %10225 = vmatprep.subr.bf16.mxu0 %v7155
        %10226 = vmatpush2.bf16.msra.mxu0 %v7154
        %10227 = vmatprep.subr.bf16.mxu0 %v7153
        %10228 = vmatpush2.bf16.msra.mxu0 %v7152
        %10229 = vmatprep.subr.bf16.mxu0 %v7151
        %10230 = vmatpush2.bf16.msra.mxu0 %v7150
        %10231 = vmatprep.subr.bf16.mxu0 %v7149
        %10232 = vmatpush2.bf16.msra.mxu0 %v7148
        %10233 = vmatprep.subr.bf16.mxu0 %v7147
        %10234 = vmatpush2.bf16.msra.mxu0 %v7146
        %10235 = vmatprep.subr.bf16.mxu0 %v7145
        %10236 = vmatpush2.bf16.msra.mxu0 %v7144
        %10237 = vmatprep.subr.bf16.mxu0 %v7143
        %10238 = vmatpush2.bf16.msra.mxu0 %v7142
        %10239 = vmatprep.mubr.bf16.mxu0 %v1849
        %10240 = vmatmul.mubr.bf16.gmra.mxu0 %v1847
        %v10241 = vpop.f32.mrf.mxu0
        %v10242 = vadd.f32 %v10201, %v10241
        %v10243 = vpop.f32.mrf.mxu0
        %v10244 = vadd.f32 %v10203, %v10243
        %v10245 = vpop.f32.mrf.mxu0
        %v10246 = vpop.f32.mrf.mxu0
        %10247 = vdwg.mxu0
        %10248 = vmatprep.subr.bf16.mxu0 %v7173
        %10249 = vmatpush1.bf16.msra.mxu0 %v7172
        %10250 = vmatprep.subr.bf16.mxu0 %v7171
        %10251 = vmatpush1.bf16.msra.mxu0 %v7170
        %10252 = vmatprep.subr.bf16.mxu0 %v7169
        %10253 = vmatpush1.bf16.msra.mxu0 %v7168
        %10254 = vmatprep.subr.bf16.mxu0 %v7167
        %10255 = vmatpush1.bf16.msra.mxu0 %v7166
        %10256 = vmatprep.subr.bf16.mxu0 %v7165
        %10257 = vmatpush1.bf16.msra.mxu0 %v7164
        %10258 = vmatprep.subr.bf16.mxu0 %v7163
        %10259 = vmatpush1.bf16.msra.mxu0 %v7162
        %10260 = vmatprep.subr.bf16.mxu0 %v7161
        %10261 = vmatpush1.bf16.msra.mxu0 %v7160
        %10262 = vmatprep.subr.bf16.mxu0 %v7159
        %10263 = vmatpush1.bf16.msra.mxu0 %v7158
        %10264 = vmatprep.subr.bf16.mxu0 %v7189
        %10265 = vmatpush2.bf16.msra.mxu0 %v7188
        %10266 = vmatprep.subr.bf16.mxu0 %v7187
        %10267 = vmatpush2.bf16.msra.mxu0 %v7186
        %10268 = vmatprep.subr.bf16.mxu0 %v7185
        %10269 = vmatpush2.bf16.msra.mxu0 %v7184
        %10270 = vmatprep.subr.bf16.mxu0 %v7183
        %10271 = vmatpush2.bf16.msra.mxu0 %v7182
        %10272 = vmatprep.subr.bf16.mxu0 %v7181
        %10273 = vmatpush2.bf16.msra.mxu0 %v7180
        %10274 = vmatprep.subr.bf16.mxu0 %v7179
        %10275 = vmatpush2.bf16.msra.mxu0 %v7178
        %10276 = vmatprep.subr.bf16.mxu0 %v7177
        %10277 = vmatpush2.bf16.msra.mxu0 %v7176
        %10278 = vmatprep.subr.bf16.mxu0 %v7175
        %10279 = vmatpush2.bf16.msra.mxu0 %v7174
        %10280 = vmatprep.mubr.bf16.mxu0 %v1846
        %10281 = vmatmul.mubr.bf16.gmra.mxu0 %v1832
        %v10282 = vpop.f32.mrf.mxu0
        %v10283 = vadd.f32 %v10242, %v10282
        %v10284 = vpop.f32.mrf.mxu0
        %v10285 = vadd.f32 %v10244, %v10284
        %v10286 = vpop.f32.mrf.mxu0
        %v10287 = vpop.f32.mrf.mxu0
        %10288 = vdwg.mxu0
        %10289 = vmatprep.subr.bf16.mxu0 %v7205
        %10290 = vmatpush1.bf16.msra.mxu0 %v7204
        %10291 = vmatprep.subr.bf16.mxu0 %v7203
        %10292 = vmatpush1.bf16.msra.mxu0 %v7202
        %10293 = vmatprep.subr.bf16.mxu0 %v7201
        %10294 = vmatpush1.bf16.msra.mxu0 %v7200
        %10295 = vmatprep.subr.bf16.mxu0 %v7199
        %10296 = vmatpush1.bf16.msra.mxu0 %v7198
        %10297 = vmatprep.subr.bf16.mxu0 %v7197
        %10298 = vmatpush1.bf16.msra.mxu0 %v7196
        %10299 = vmatprep.subr.bf16.mxu0 %v7195
        %10300 = vmatpush1.bf16.msra.mxu0 %v7194
        %10301 = vmatprep.subr.bf16.mxu0 %v7193
        %10302 = vmatpush1.bf16.msra.mxu0 %v7192
        %10303 = vmatprep.subr.bf16.mxu0 %v7191
        %10304 = vmatpush1.bf16.msra.mxu0 %v7190
        %10305 = vmatprep.subr.bf16.mxu0 %v7221
        %10306 = vmatpush2.bf16.msra.mxu0 %v7220
        %10307 = vmatprep.subr.bf16.mxu0 %v7219
        %10308 = vmatpush2.bf16.msra.mxu0 %v7218
        %10309 = vmatprep.subr.bf16.mxu0 %v7217
        %10310 = vmatpush2.bf16.msra.mxu0 %v7216
        %10311 = vmatprep.subr.bf16.mxu0 %v7215
        %10312 = vmatpush2.bf16.msra.mxu0 %v7214
        %10313 = vmatprep.subr.bf16.mxu0 %v7213
        %10314 = vmatpush2.bf16.msra.mxu0 %v7212
        %10315 = vmatprep.subr.bf16.mxu0 %v7211
        %10316 = vmatpush2.bf16.msra.mxu0 %v7210
        %10317 = vmatprep.subr.bf16.mxu0 %v7209
        %10318 = vmatpush2.bf16.msra.mxu0 %v7208
        %10319 = vmatprep.subr.bf16.mxu0 %v7207
        %10320 = vmatpush2.bf16.msra.mxu0 %v7206
        %10321 = vmatprep.mubr.bf16.mxu0 %v1850
        %10322 = vmatmul.mubr.bf16.gmra.mxu0 %v1848
        %v10323 = vpop.f32.mrf.mxu0
        %v10324 = vadd.f32 %v10283, %v10323
        %v10325 = vpop.f32.mrf.mxu0
        %v10326 = vadd.f32 %v10285, %v10325
        %v10327 = vpop.f32.mrf.mxu0
        %v10328 = vpop.f32.mrf.mxu0
        %10329 = vdwg.mxu0
        %10330 = vmatprep.subr.bf16.mxu0 %v7237
        %10331 = vmatpush1.bf16.msra.mxu0 %v7236
        %10332 = vmatprep.subr.bf16.mxu0 %v7235
        %10333 = vmatpush1.bf16.msra.mxu0 %v7234
        %10334 = vmatprep.subr.bf16.mxu0 %v7233
        %10335 = vmatpush1.bf16.msra.mxu0 %v7232
        %10336 = vmatprep.subr.bf16.mxu0 %v7231
        %10337 = vmatpush1.bf16.msra.mxu0 %v7230
        %10338 = vmatprep.subr.bf16.mxu0 %v7229
        %10339 = vmatpush1.bf16.msra.mxu0 %v7228
        %10340 = vmatprep.subr.bf16.mxu0 %v7227
        %10341 = vmatpush1.bf16.msra.mxu0 %v7226
        %10342 = vmatprep.subr.bf16.mxu0 %v7225
        %10343 = vmatpush1.bf16.msra.mxu0 %v7224
        %10344 = vmatprep.subr.bf16.mxu0 %v7223
        %10345 = vmatpush1.bf16.msra.mxu0 %v7222
        %10346 = vmatprep.subr.bf16.mxu0 %v7253
        %10347 = vmatpush2.bf16.msra.mxu0 %v7252
        %10348 = vmatprep.subr.bf16.mxu0 %v7251
        %10349 = vmatpush2.bf16.msra.mxu0 %v7250
        %10350 = vmatprep.subr.bf16.mxu0 %v7249
        %10351 = vmatpush2.bf16.msra.mxu0 %v7248
        %10352 = vmatprep.subr.bf16.mxu0 %v7247
        %10353 = vmatpush2.bf16.msra.mxu0 %v7246
        %10354 = vmatprep.subr.bf16.mxu0 %v7245
        %10355 = vmatpush2.bf16.msra.mxu0 %v7244
        %10356 = vmatprep.subr.bf16.mxu0 %v7243
        %10357 = vmatpush2.bf16.msra.mxu0 %v7242
        %10358 = vmatprep.subr.bf16.mxu0 %v7241
        %10359 = vmatpush2.bf16.msra.mxu0 %v7240
        %10360 = vmatprep.subr.bf16.mxu0 %v7239
        %10361 = vmatpush2.bf16.msra.mxu0 %v7238
        %10362 = vmatprep.mubr.bf16.mxu0 %v1888
        %10363 = vmatmul.mubr.bf16.gmra.mxu0 %v1874
        %v10364 = vpop.f32.mrf.mxu0
        %v10365 = vadd.f32 %v10324, %v10364
        %v10366 = vpop.f32.mrf.mxu0
        %v10367 = vadd.f32 %v10326, %v10366
        %v10368 = vpop.f32.mrf.mxu0
        %v10369 = vpop.f32.mrf.mxu0
        %10370 = vdwg.mxu0
        %10371 = vmatprep.subr.bf16.mxu0 %v7269
        %10372 = vmatpush1.bf16.msra.mxu0 %v7268
        %10373 = vmatprep.subr.bf16.mxu0 %v7267
        %10374 = vmatpush1.bf16.msra.mxu0 %v7266
        %10375 = vmatprep.subr.bf16.mxu0 %v7265
        %10376 = vmatpush1.bf16.msra.mxu0 %v7264
        %10377 = vmatprep.subr.bf16.mxu0 %v7263
        %10378 = vmatpush1.bf16.msra.mxu0 %v7262
        %10379 = vmatprep.subr.bf16.mxu0 %v7261
        %10380 = vmatpush1.bf16.msra.mxu0 %v7260
        %10381 = vmatprep.subr.bf16.mxu0 %v7259
        %10382 = vmatpush1.bf16.msra.mxu0 %v7258
        %10383 = vmatprep.subr.bf16.mxu0 %v7257
        %10384 = vmatpush1.bf16.msra.mxu0 %v7256
        %10385 = vmatprep.subr.bf16.mxu0 %v7255
        %10386 = vmatpush1.bf16.msra.mxu0 %v7254
        %10387 = vmatprep.subr.bf16.mxu0 %v7285
        %10388 = vmatpush2.bf16.msra.mxu0 %v7284
        %10389 = vmatprep.subr.bf16.mxu0 %v7283
        %10390 = vmatpush2.bf16.msra.mxu0 %v7282
        %10391 = vmatprep.subr.bf16.mxu0 %v7281
        %10392 = vmatpush2.bf16.msra.mxu0 %v7280
        %10393 = vmatprep.subr.bf16.mxu0 %v7279
        %10394 = vmatpush2.bf16.msra.mxu0 %v7278
        %10395 = vmatprep.subr.bf16.mxu0 %v7277
        %10396 = vmatpush2.bf16.msra.mxu0 %v7276
        %10397 = vmatprep.subr.bf16.mxu0 %v7275
        %10398 = vmatpush2.bf16.msra.mxu0 %v7274
        %10399 = vmatprep.subr.bf16.mxu0 %v7273
        %10400 = vmatpush2.bf16.msra.mxu0 %v7272
        %10401 = vmatprep.subr.bf16.mxu0 %v7271
        %10402 = vmatpush2.bf16.msra.mxu0 %v7270
        %10403 = vmatprep.mubr.bf16.mxu0 %v1898
        %10404 = vmatmul.mubr.bf16.gmra.mxu0 %v1896
        %v10405 = vpop.f32.mrf.mxu0
        %v10406 = vadd.f32 %v10365, %v10405
        %v10407 = vpop.f32.mrf.mxu0
        %v10408 = vadd.f32 %v10367, %v10407
        %v10409 = vpop.f32.mrf.mxu0
        %v10410 = vpop.f32.mrf.mxu0
        %10411 = vdwg.mxu0
        %10412 = vmatprep.subr.bf16.mxu0 %v7301
        %10413 = vmatpush1.bf16.msra.mxu0 %v7300
        %10414 = vmatprep.subr.bf16.mxu0 %v7299
        %10415 = vmatpush1.bf16.msra.mxu0 %v7298
        %10416 = vmatprep.subr.bf16.mxu0 %v7297
        %10417 = vmatpush1.bf16.msra.mxu0 %v7296
        %10418 = vmatprep.subr.bf16.mxu0 %v7295
        %10419 = vmatpush1.bf16.msra.mxu0 %v7294
        %10420 = vmatprep.subr.bf16.mxu0 %v7293
        %10421 = vmatpush1.bf16.msra.mxu0 %v7292
        %10422 = vmatprep.subr.bf16.mxu0 %v7291
        %10423 = vmatpush1.bf16.msra.mxu0 %v7290
        %10424 = vmatprep.subr.bf16.mxu0 %v7289
        %10425 = vmatpush1.bf16.msra.mxu0 %v7288
        %10426 = vmatprep.subr.bf16.mxu0 %v7287
        %10427 = vmatpush1.bf16.msra.mxu0 %v7286
        %10428 = vmatprep.subr.bf16.mxu0 %v7317
        %10429 = vmatpush2.bf16.msra.mxu0 %v7316
        %10430 = vmatprep.subr.bf16.mxu0 %v7315
        %10431 = vmatpush2.bf16.msra.mxu0 %v7314
        %10432 = vmatprep.subr.bf16.mxu0 %v7313
        %10433 = vmatpush2.bf16.msra.mxu0 %v7312
        %10434 = vmatprep.subr.bf16.mxu0 %v7311
        %10435 = vmatpush2.bf16.msra.mxu0 %v7310
        %10436 = vmatprep.subr.bf16.mxu0 %v7309
        %10437 = vmatpush2.bf16.msra.mxu0 %v7308
        %10438 = vmatprep.subr.bf16.mxu0 %v7307
        %10439 = vmatpush2.bf16.msra.mxu0 %v7306
        %10440 = vmatprep.subr.bf16.mxu0 %v7305
        %10441 = vmatpush2.bf16.msra.mxu0 %v7304
        %10442 = vmatprep.subr.bf16.mxu0 %v7303
        %10443 = vmatpush2.bf16.msra.mxu0 %v7302
        %10444 = vmatprep.mubr.bf16.mxu0 %v1895
        %10445 = vmatmul.mubr.bf16.gmra.mxu0 %v1881
        %v10446 = vpop.f32.mrf.mxu0
        %v10447 = vadd.f32 %v10406, %v10446
        %v10448 = vpop.f32.mrf.mxu0
        %v10449 = vadd.f32 %v10408, %v10448
        %v10450 = vpop.f32.mrf.mxu0
        %v10451 = vpop.f32.mrf.mxu0
        %10452 = vdwg.mxu0
        %10453 = vmatprep.subr.bf16.mxu0 %v7333
        %10454 = vmatpush1.bf16.msra.mxu0 %v7332
        %10455 = vmatprep.subr.bf16.mxu0 %v7331
        %10456 = vmatpush1.bf16.msra.mxu0 %v7330
        %10457 = vmatprep.subr.bf16.mxu0 %v7329
        %10458 = vmatpush1.bf16.msra.mxu0 %v7328
        %10459 = vmatprep.subr.bf16.mxu0 %v7327
        %10460 = vmatpush1.bf16.msra.mxu0 %v7326
        %10461 = vmatprep.subr.bf16.mxu0 %v7325
        %10462 = vmatpush1.bf16.msra.mxu0 %v7324
        %10463 = vmatprep.subr.bf16.mxu0 %v7323
        %10464 = vmatpush1.bf16.msra.mxu0 %v7322
        %10465 = vmatprep.subr.bf16.mxu0 %v7321
        %10466 = vmatpush1.bf16.msra.mxu0 %v7320
        %10467 = vmatprep.subr.bf16.mxu0 %v7319
        %10468 = vmatpush1.bf16.msra.mxu0 %v7318
        %10469 = vmatprep.subr.bf16.mxu0 %v7349
        %10470 = vmatpush2.bf16.msra.mxu0 %v7348
        %10471 = vmatprep.subr.bf16.mxu0 %v7347
        %10472 = vmatpush2.bf16.msra.mxu0 %v7346
        %10473 = vmatprep.subr.bf16.mxu0 %v7345
        %10474 = vmatpush2.bf16.msra.mxu0 %v7344
        %10475 = vmatprep.subr.bf16.mxu0 %v7343
        %10476 = vmatpush2.bf16.msra.mxu0 %v7342
        %10477 = vmatprep.subr.bf16.mxu0 %v7341
        %10478 = vmatpush2.bf16.msra.mxu0 %v7340
        %10479 = vmatprep.subr.bf16.mxu0 %v7339
        %10480 = vmatpush2.bf16.msra.mxu0 %v7338
        %10481 = vmatprep.subr.bf16.mxu0 %v7337
        %10482 = vmatpush2.bf16.msra.mxu0 %v7336
        %10483 = vmatprep.subr.bf16.mxu0 %v7335
        %10484 = vmatpush2.bf16.msra.mxu0 %v7334
        %10485 = vmatprep.mubr.bf16.mxu0 %v1899
        %10486 = vmatmul.mubr.bf16.gmra.mxu0 %v1897
        %v10487 = vpop.f32.mrf.mxu0
        %v10488 = vadd.f32 %v10447, %v10487
        %v10489 = vpop.f32.mrf.mxu0
        %v10490 = vadd.f32 %v10449, %v10489
        %v10491 = vpop.f32.mrf.mxu0
        %v10492 = vpop.f32.mrf.mxu0
        %10493 = vdwg.mxu0
        %10494 = vmatprep.subr.bf16.mxu0 %v7365
        %10495 = vmatpush1.bf16.msra.mxu0 %v7364
        %10496 = vmatprep.subr.bf16.mxu0 %v7363
        %10497 = vmatpush1.bf16.msra.mxu0 %v7362
        %10498 = vmatprep.subr.bf16.mxu0 %v7361
        %10499 = vmatpush1.bf16.msra.mxu0 %v7360
        %10500 = vmatprep.subr.bf16.mxu0 %v7359
        %10501 = vmatpush1.bf16.msra.mxu0 %v7358
        %10502 = vmatprep.subr.bf16.mxu0 %v7357
        %10503 = vmatpush1.bf16.msra.mxu0 %v7356
        %10504 = vmatprep.subr.bf16.mxu0 %v7355
        %10505 = vmatpush1.bf16.msra.mxu0 %v7354
        %10506 = vmatprep.subr.bf16.mxu0 %v7353
        %10507 = vmatpush1.bf16.msra.mxu0 %v7352
        %10508 = vmatprep.subr.bf16.mxu0 %v7351
        %10509 = vmatpush1.bf16.msra.mxu0 %v7350
        %10510 = vmatprep.subr.bf16.mxu0 %v7381
        %10511 = vmatpush2.bf16.msra.mxu0 %v7380
        %10512 = vmatprep.subr.bf16.mxu0 %v7379
        %10513 = vmatpush2.bf16.msra.mxu0 %v7378
        %10514 = vmatprep.subr.bf16.mxu0 %v7377
        %10515 = vmatpush2.bf16.msra.mxu0 %v7376
        %10516 = vmatprep.subr.bf16.mxu0 %v7375
        %10517 = vmatpush2.bf16.msra.mxu0 %v7374
        %10518 = vmatprep.subr.bf16.mxu0 %v7373
        %10519 = vmatpush2.bf16.msra.mxu0 %v7372
        %10520 = vmatprep.subr.bf16.mxu0 %v7371
        %10521 = vmatpush2.bf16.msra.mxu0 %v7370
        %10522 = vmatprep.subr.bf16.mxu0 %v7369
        %10523 = vmatpush2.bf16.msra.mxu0 %v7368
        %10524 = vmatprep.subr.bf16.mxu0 %v7367
        %10525 = vmatpush2.bf16.msra.mxu0 %v7366
        %10526 = vmatprep.mubr.bf16.mxu0 %v1937
        %10527 = vmatmul.mubr.bf16.gmra.mxu0 %v1923
        %v10528 = vpop.f32.mrf.mxu0
        %v10529 = vadd.f32 %v10488, %v10528
        %v10530 = vpop.f32.mrf.mxu0
        %v10531 = vadd.f32 %v10490, %v10530
        %v10532 = vpop.f32.mrf.mxu0
        %v10533 = vpop.f32.mrf.mxu0
        %10534 = vdwg.mxu0
        %10535 = vmatprep.subr.bf16.mxu0 %v7397
        %10536 = vmatpush1.bf16.msra.mxu0 %v7396
        %10537 = vmatprep.subr.bf16.mxu0 %v7395
        %10538 = vmatpush1.bf16.msra.mxu0 %v7394
        %10539 = vmatprep.subr.bf16.mxu0 %v7393
        %10540 = vmatpush1.bf16.msra.mxu0 %v7392
        %10541 = vmatprep.subr.bf16.mxu0 %v7391
        %10542 = vmatpush1.bf16.msra.mxu0 %v7390
        %10543 = vmatprep.subr.bf16.mxu0 %v7389
        %10544 = vmatpush1.bf16.msra.mxu0 %v7388
        %10545 = vmatprep.subr.bf16.mxu0 %v7387
        %10546 = vmatpush1.bf16.msra.mxu0 %v7386
        %10547 = vmatprep.subr.bf16.mxu0 %v7385
        %10548 = vmatpush1.bf16.msra.mxu0 %v7384
        %10549 = vmatprep.subr.bf16.mxu0 %v7383
        %10550 = vmatpush1.bf16.msra.mxu0 %v7382
        %10551 = vmatprep.subr.bf16.mxu0 %v7413
        %10552 = vmatpush2.bf16.msra.mxu0 %v7412
        %10553 = vmatprep.subr.bf16.mxu0 %v7411
        %10554 = vmatpush2.bf16.msra.mxu0 %v7410
        %10555 = vmatprep.subr.bf16.mxu0 %v7409
        %10556 = vmatpush2.bf16.msra.mxu0 %v7408
        %10557 = vmatprep.subr.bf16.mxu0 %v7407
        %10558 = vmatpush2.bf16.msra.mxu0 %v7406
        %10559 = vmatprep.subr.bf16.mxu0 %v7405
        %10560 = vmatpush2.bf16.msra.mxu0 %v7404
        %10561 = vmatprep.subr.bf16.mxu0 %v7403
        %10562 = vmatpush2.bf16.msra.mxu0 %v7402
        %10563 = vmatprep.subr.bf16.mxu0 %v7401
        %10564 = vmatpush2.bf16.msra.mxu0 %v7400
        %10565 = vmatprep.subr.bf16.mxu0 %v7399
        %10566 = vmatpush2.bf16.msra.mxu0 %v7398
        %10567 = vmatprep.mubr.bf16.mxu0 %v1947
        %10568 = vmatmul.mubr.bf16.gmra.mxu0 %v1945
        %v10569 = vpop.f32.mrf.mxu0
        %v10570 = vadd.f32 %v10529, %v10569
        %v10571 = vpop.f32.mrf.mxu0
        %v10572 = vadd.f32 %v10531, %v10571
        %v10573 = vpop.f32.mrf.mxu0
        %v10574 = vpop.f32.mrf.mxu0
        %10575 = vdwg.mxu0
        %10576 = vmatprep.subr.bf16.mxu0 %v7429
        %10577 = vmatpush1.bf16.msra.mxu0 %v7428
        %10578 = vmatprep.subr.bf16.mxu0 %v7427
        %10579 = vmatpush1.bf16.msra.mxu0 %v7426
        %10580 = vmatprep.subr.bf16.mxu0 %v7425
        %10581 = vmatpush1.bf16.msra.mxu0 %v7424
        %10582 = vmatprep.subr.bf16.mxu0 %v7423
        %10583 = vmatpush1.bf16.msra.mxu0 %v7422
        %10584 = vmatprep.subr.bf16.mxu0 %v7421
        %10585 = vmatpush1.bf16.msra.mxu0 %v7420
        %10586 = vmatprep.subr.bf16.mxu0 %v7419
        %10587 = vmatpush1.bf16.msra.mxu0 %v7418
        %10588 = vmatprep.subr.bf16.mxu0 %v7417
        %10589 = vmatpush1.bf16.msra.mxu0 %v7416
        %10590 = vmatprep.subr.bf16.mxu0 %v7415
        %10591 = vmatpush1.bf16.msra.mxu0 %v7414
        %10592 = vmatprep.subr.bf16.mxu0 %v7445
        %10593 = vmatpush2.bf16.msra.mxu0 %v7444
        %10594 = vmatprep.subr.bf16.mxu0 %v7443
        %10595 = vmatpush2.bf16.msra.mxu0 %v7442
        %10596 = vmatprep.subr.bf16.mxu0 %v7441
        %10597 = vmatpush2.bf16.msra.mxu0 %v7440
        %10598 = vmatprep.subr.bf16.mxu0 %v7439
        %10599 = vmatpush2.bf16.msra.mxu0 %v7438
        %10600 = vmatprep.subr.bf16.mxu0 %v7437
        %10601 = vmatpush2.bf16.msra.mxu0 %v7436
        %10602 = vmatprep.subr.bf16.mxu0 %v7435
        %10603 = vmatpush2.bf16.msra.mxu0 %v7434
        %10604 = vmatprep.subr.bf16.mxu0 %v7433
        %10605 = vmatpush2.bf16.msra.mxu0 %v7432
        %10606 = vmatprep.subr.bf16.mxu0 %v7431
        %10607 = vmatpush2.bf16.msra.mxu0 %v7430
        %10608 = vmatprep.mubr.bf16.mxu0 %v1944
        %10609 = vmatmul.mubr.bf16.gmra.mxu0 %v1930
        %v10610 = vpop.f32.mrf.mxu0
        %v10611 = vadd.f32 %v10570, %v10610
        %v10612 = vpop.f32.mrf.mxu0
        %v10613 = vadd.f32 %v10572, %v10612
        %v10614 = vpop.f32.mrf.mxu0
        %v10615 = vpop.f32.mrf.mxu0
        %10616 = vdwg.mxu0
        %10617 = vmatprep.subr.bf16.mxu0 %v7461
        %10618 = vmatpush1.bf16.msra.mxu0 %v7460
        %10619 = vmatprep.subr.bf16.mxu0 %v7459
        %10620 = vmatpush1.bf16.msra.mxu0 %v7458
        %10621 = vmatprep.subr.bf16.mxu0 %v7457
        %10622 = vmatpush1.bf16.msra.mxu0 %v7456
        %10623 = vmatprep.subr.bf16.mxu0 %v7455
        %10624 = vmatpush1.bf16.msra.mxu0 %v7454
        %10625 = vmatprep.subr.bf16.mxu0 %v7453
        %10626 = vmatpush1.bf16.msra.mxu0 %v7452
        %10627 = vmatprep.subr.bf16.mxu0 %v7451
        %10628 = vmatpush1.bf16.msra.mxu0 %v7450
        %10629 = vmatprep.subr.bf16.mxu0 %v7449
        %10630 = vmatpush1.bf16.msra.mxu0 %v7448
        %10631 = vmatprep.subr.bf16.mxu0 %v7447
        %10632 = vmatpush1.bf16.msra.mxu0 %v7446
        %10633 = vmatprep.subr.bf16.mxu0 %v7477
        %10634 = vmatpush2.bf16.msra.mxu0 %v7476
        %10635 = vmatprep.subr.bf16.mxu0 %v7475
        %10636 = vmatpush2.bf16.msra.mxu0 %v7474
        %10637 = vmatprep.subr.bf16.mxu0 %v7473
        %10638 = vmatpush2.bf16.msra.mxu0 %v7472
        %10639 = vmatprep.subr.bf16.mxu0 %v7471
        %10640 = vmatpush2.bf16.msra.mxu0 %v7470
        %10641 = vmatprep.subr.bf16.mxu0 %v7469
        %10642 = vmatpush2.bf16.msra.mxu0 %v7468
        %10643 = vmatprep.subr.bf16.mxu0 %v7467
        %10644 = vmatpush2.bf16.msra.mxu0 %v7466
        %10645 = vmatprep.subr.bf16.mxu0 %v7465
        %10646 = vmatpush2.bf16.msra.mxu0 %v7464
        %10647 = vmatprep.subr.bf16.mxu0 %v7463
        %10648 = vmatpush2.bf16.msra.mxu0 %v7462
        %10649 = vmatprep.mubr.bf16.mxu0 %v1948
        %10650 = vmatmul.mubr.bf16.gmra.mxu0 %v1946
        %v10651 = vpop.f32.mrf.mxu0
        %v10652 = vadd.f32 %v10611, %v10651
        %v10653 = vpop.f32.mrf.mxu0
        %v10654 = vadd.f32 %v10613, %v10653
        %v10655 = vpop.f32.mrf.mxu0
        %v10656 = vpop.f32.mrf.mxu0
        %10657 = vdwg.mxu0
        %10658 = vmatprep.subr.bf16.mxu0 %v7493
        %10659 = vmatpush1.bf16.msra.mxu0 %v7492
        %10660 = vmatprep.subr.bf16.mxu0 %v7491
        %10661 = vmatpush1.bf16.msra.mxu0 %v7490
        %10662 = vmatprep.subr.bf16.mxu0 %v7489
        %10663 = vmatpush1.bf16.msra.mxu0 %v7488
        %10664 = vmatprep.subr.bf16.mxu0 %v7487
        %10665 = vmatpush1.bf16.msra.mxu0 %v7486
        %10666 = vmatprep.subr.bf16.mxu0 %v7485
        %10667 = vmatpush1.bf16.msra.mxu0 %v7484
        %10668 = vmatprep.subr.bf16.mxu0 %v7483
        %10669 = vmatpush1.bf16.msra.mxu0 %v7482
        %10670 = vmatprep.subr.bf16.mxu0 %v7481
        %10671 = vmatpush1.bf16.msra.mxu0 %v7480
        %10672 = vmatprep.subr.bf16.mxu0 %v7479
        %10673 = vmatpush1.bf16.msra.mxu0 %v7478
        %10674 = vmatprep.subr.bf16.mxu0 %v7509
        %10675 = vmatpush2.bf16.msra.mxu0 %v7508
        %10676 = vmatprep.subr.bf16.mxu0 %v7507
        %10677 = vmatpush2.bf16.msra.mxu0 %v7506
        %10678 = vmatprep.subr.bf16.mxu0 %v7505
        %10679 = vmatpush2.bf16.msra.mxu0 %v7504
        %10680 = vmatprep.subr.bf16.mxu0 %v7503
        %10681 = vmatpush2.bf16.msra.mxu0 %v7502
        %10682 = vmatprep.subr.bf16.mxu0 %v7501
        %10683 = vmatpush2.bf16.msra.mxu0 %v7500
        %10684 = vmatprep.subr.bf16.mxu0 %v7499
        %10685 = vmatpush2.bf16.msra.mxu0 %v7498
        %10686 = vmatprep.subr.bf16.mxu0 %v7497
        %10687 = vmatpush2.bf16.msra.mxu0 %v7496
        %10688 = vmatprep.subr.bf16.mxu0 %v7495
        %10689 = vmatpush2.bf16.msra.mxu0 %v7494
        %10690 = vmatprep.mubr.bf16.mxu0 %v1986
        %10691 = vmatmul.mubr.bf16.gmra.mxu0 %v1972
        %v10692 = vpop.f32.mrf.mxu0
        %v10693 = vadd.f32 %v10652, %v10692
        %v10694 = vpop.f32.mrf.mxu0
        %v10695 = vadd.f32 %v10654, %v10694
        %v10696 = vpop.f32.mrf.mxu0
        %v10697 = vpop.f32.mrf.mxu0
        %10698 = vdwg.mxu0
        %10699 = vmatprep.subr.bf16.mxu0 %v7525
        %10700 = vmatpush1.bf16.msra.mxu0 %v7524
        %10701 = vmatprep.subr.bf16.mxu0 %v7523
        %10702 = vmatpush1.bf16.msra.mxu0 %v7522
        %10703 = vmatprep.subr.bf16.mxu0 %v7521
        %10704 = vmatpush1.bf16.msra.mxu0 %v7520
        %10705 = vmatprep.subr.bf16.mxu0 %v7519
        %10706 = vmatpush1.bf16.msra.mxu0 %v7518
        %10707 = vmatprep.subr.bf16.mxu0 %v7517
        %10708 = vmatpush1.bf16.msra.mxu0 %v7516
        %10709 = vmatprep.subr.bf16.mxu0 %v7515
        %10710 = vmatpush1.bf16.msra.mxu0 %v7514
        %10711 = vmatprep.subr.bf16.mxu0 %v7513
        %10712 = vmatpush1.bf16.msra.mxu0 %v7512
        %10713 = vmatprep.subr.bf16.mxu0 %v7511
        %10714 = vmatpush1.bf16.msra.mxu0 %v7510
        %10715 = vmatprep.subr.bf16.mxu0 %v7541
        %10716 = vmatpush2.bf16.msra.mxu0 %v7540
        %10717 = vmatprep.subr.bf16.mxu0 %v7539
        %10718 = vmatpush2.bf16.msra.mxu0 %v7538
        %10719 = vmatprep.subr.bf16.mxu0 %v7537
        %10720 = vmatpush2.bf16.msra.mxu0 %v7536
        %10721 = vmatprep.subr.bf16.mxu0 %v7535
        %10722 = vmatpush2.bf16.msra.mxu0 %v7534
        %10723 = vmatprep.subr.bf16.mxu0 %v7533
        %10724 = vmatpush2.bf16.msra.mxu0 %v7532
        %10725 = vmatprep.subr.bf16.mxu0 %v7531
        %10726 = vmatpush2.bf16.msra.mxu0 %v7530
        %10727 = vmatprep.subr.bf16.mxu0 %v7529
        %10728 = vmatpush2.bf16.msra.mxu0 %v7528
        %10729 = vmatprep.subr.bf16.mxu0 %v7527
        %10730 = vmatpush2.bf16.msra.mxu0 %v7526
        %10731 = vmatprep.mubr.bf16.mxu0 %v1996
        %10732 = vmatmul.mubr.bf16.gmra.mxu0 %v1994
        %v10733 = vpop.f32.mrf.mxu0
        %v10734 = vadd.f32 %v10693, %v10733
        %v10735 = vpop.f32.mrf.mxu0
        %v10736 = vadd.f32 %v10695, %v10735
        %v10737 = vpop.f32.mrf.mxu0
        %v10738 = vpop.f32.mrf.mxu0
        %10739 = vdwg.mxu0
        %10740 = vmatprep.subr.bf16.mxu0 %v7557
        %10741 = vmatpush1.bf16.msra.mxu0 %v7556
        %10742 = vmatprep.subr.bf16.mxu0 %v7555
        %10743 = vmatpush1.bf16.msra.mxu0 %v7554
        %10744 = vmatprep.subr.bf16.mxu0 %v7553
        %10745 = vmatpush1.bf16.msra.mxu0 %v7552
        %10746 = vmatprep.subr.bf16.mxu0 %v7551
        %10747 = vmatpush1.bf16.msra.mxu0 %v7550
        %10748 = vmatprep.subr.bf16.mxu0 %v7549
        %10749 = vmatpush1.bf16.msra.mxu0 %v7548
        %10750 = vmatprep.subr.bf16.mxu0 %v7547
        %10751 = vmatpush1.bf16.msra.mxu0 %v7546
        %10752 = vmatprep.subr.bf16.mxu0 %v7545
        %10753 = vmatpush1.bf16.msra.mxu0 %v7544
        %10754 = vmatprep.subr.bf16.mxu0 %v7543
        %10755 = vmatpush1.bf16.msra.mxu0 %v7542
        %10756 = vmatprep.subr.bf16.mxu0 %v7573
        %10757 = vmatpush2.bf16.msra.mxu0 %v7572
        %10758 = vmatprep.subr.bf16.mxu0 %v7571
        %10759 = vmatpush2.bf16.msra.mxu0 %v7570
        %10760 = vmatprep.subr.bf16.mxu0 %v7569
        %10761 = vmatpush2.bf16.msra.mxu0 %v7568
        %10762 = vmatprep.subr.bf16.mxu0 %v7567
        %10763 = vmatpush2.bf16.msra.mxu0 %v7566
        %10764 = vmatprep.subr.bf16.mxu0 %v7565
        %10765 = vmatpush2.bf16.msra.mxu0 %v7564
        %10766 = vmatprep.subr.bf16.mxu0 %v7563
        %10767 = vmatpush2.bf16.msra.mxu0 %v7562
        %10768 = vmatprep.subr.bf16.mxu0 %v7561
        %10769 = vmatpush2.bf16.msra.mxu0 %v7560
        %10770 = vmatprep.subr.bf16.mxu0 %v7559
        %10771 = vmatpush2.bf16.msra.mxu0 %v7558
        %10772 = vmatprep.mubr.bf16.mxu0 %v1993
        %10773 = vmatmul.mubr.bf16.gmra.mxu0 %v1979
        %v10774 = vpop.f32.mrf.mxu0
        %v10775 = vadd.f32 %v10734, %v10774
        %v10776 = vpop.f32.mrf.mxu0
        %v10777 = vadd.f32 %v10736, %v10776
        %v10778 = vpop.f32.mrf.mxu0
        %v10779 = vpop.f32.mrf.mxu0
        %10780 = vdwg.mxu0
        %10781 = vmatprep.subr.bf16.mxu0 %v7589
        %10782 = vmatpush1.bf16.msra.mxu0 %v7588
        %10783 = vmatprep.subr.bf16.mxu0 %v7587
        %10784 = vmatpush1.bf16.msra.mxu0 %v7586
        %10785 = vmatprep.subr.bf16.mxu0 %v7585
        %10786 = vmatpush1.bf16.msra.mxu0 %v7584
        %10787 = vmatprep.subr.bf16.mxu0 %v7583
        %10788 = vmatpush1.bf16.msra.mxu0 %v7582
        %10789 = vmatprep.subr.bf16.mxu0 %v7581
        %10790 = vmatpush1.bf16.msra.mxu0 %v7580
        %10791 = vmatprep.subr.bf16.mxu0 %v7579
        %10792 = vmatpush1.bf16.msra.mxu0 %v7578
        %10793 = vmatprep.subr.bf16.mxu0 %v7577
        %10794 = vmatpush1.bf16.msra.mxu0 %v7576
        %10795 = vmatprep.subr.bf16.mxu0 %v7575
        %10796 = vmatpush1.bf16.msra.mxu0 %v7574
        %10797 = vmatprep.subr.bf16.mxu0 %v7605
        %10798 = vmatpush2.bf16.msra.mxu0 %v7604
        %10799 = vmatprep.subr.bf16.mxu0 %v7603
        %10800 = vmatpush2.bf16.msra.mxu0 %v7602
        %10801 = vmatprep.subr.bf16.mxu0 %v7601
        %10802 = vmatpush2.bf16.msra.mxu0 %v7600
        %10803 = vmatprep.subr.bf16.mxu0 %v7599
        %10804 = vmatpush2.bf16.msra.mxu0 %v7598
        %10805 = vmatprep.subr.bf16.mxu0 %v7597
        %10806 = vmatpush2.bf16.msra.mxu0 %v7596
        %10807 = vmatprep.subr.bf16.mxu0 %v7595
        %10808 = vmatpush2.bf16.msra.mxu0 %v7594
        %10809 = vmatprep.subr.bf16.mxu0 %v7593
        %10810 = vmatpush2.bf16.msra.mxu0 %v7592
        %10811 = vmatprep.subr.bf16.mxu0 %v7591
        %10812 = vmatpush2.bf16.msra.mxu0 %v7590
        %10813 = vmatprep.mubr.bf16.mxu0 %v1997
        %10814 = vmatmul.mubr.bf16.gmra.mxu0 %v1995
        %v10815 = vpop.f32.mrf.mxu0
        %v10816 = vadd.f32 %v10775, %v10815
        %v10817 = vpop.f32.mrf.mxu0
        %v10818 = vadd.f32 %v10777, %v10817
        %v10819 = vpop.f32.mrf.mxu0
        %v10820 = vpop.f32.mrf.mxu0
        %10821 = vdwg.mxu0
        %10822 = vmatprep.subr.bf16.mxu0 %v7621
        %10823 = vmatpush1.bf16.msra.mxu0 %v7620
        %10824 = vmatprep.subr.bf16.mxu0 %v7619
        %10825 = vmatpush1.bf16.msra.mxu0 %v7618
        %10826 = vmatprep.subr.bf16.mxu0 %v7617
        %10827 = vmatpush1.bf16.msra.mxu0 %v7616
        %10828 = vmatprep.subr.bf16.mxu0 %v7615
        %10829 = vmatpush1.bf16.msra.mxu0 %v7614
        %10830 = vmatprep.subr.bf16.mxu0 %v7613
        %10831 = vmatpush1.bf16.msra.mxu0 %v7612
        %10832 = vmatprep.subr.bf16.mxu0 %v7611
        %10833 = vmatpush1.bf16.msra.mxu0 %v7610
        %10834 = vmatprep.subr.bf16.mxu0 %v7609
        %10835 = vmatpush1.bf16.msra.mxu0 %v7608
        %10836 = vmatprep.subr.bf16.mxu0 %v7607
        %10837 = vmatpush1.bf16.msra.mxu0 %v7606
        %10838 = vmatprep.subr.bf16.mxu0 %v7637
        %10839 = vmatpush2.bf16.msra.mxu0 %v7636
        %10840 = vmatprep.subr.bf16.mxu0 %v7635
        %10841 = vmatpush2.bf16.msra.mxu0 %v7634
        %10842 = vmatprep.subr.bf16.mxu0 %v7633
        %10843 = vmatpush2.bf16.msra.mxu0 %v7632
        %10844 = vmatprep.subr.bf16.mxu0 %v7631
        %10845 = vmatpush2.bf16.msra.mxu0 %v7630
        %10846 = vmatprep.subr.bf16.mxu0 %v7629
        %10847 = vmatpush2.bf16.msra.mxu0 %v7628
        %10848 = vmatprep.subr.bf16.mxu0 %v7627
        %10849 = vmatpush2.bf16.msra.mxu0 %v7626
        %10850 = vmatprep.subr.bf16.mxu0 %v7625
        %10851 = vmatpush2.bf16.msra.mxu0 %v7624
        %10852 = vmatprep.subr.bf16.mxu0 %v7623
        %10853 = vmatpush2.bf16.msra.mxu0 %v7622
        %10854 = vmatprep.mubr.bf16.mxu0 %v2035
        %10855 = vmatmul.mubr.bf16.gmra.mxu0 %v2021
        %v10856 = vpop.f32.mrf.mxu0
        %v10857 = vadd.f32 %v10816, %v10856
        %v10858 = vpop.f32.mrf.mxu0
        %v10859 = vadd.f32 %v10818, %v10858
        %v10860 = vpop.f32.mrf.mxu0
        %v10861 = vpop.f32.mrf.mxu0
        %10862 = vdwg.mxu0
        %10863 = vmatprep.subr.bf16.mxu0 %v7653
        %10864 = vmatpush1.bf16.msra.mxu0 %v7652
        %10865 = vmatprep.subr.bf16.mxu0 %v7651
        %10866 = vmatpush1.bf16.msra.mxu0 %v7650
        %10867 = vmatprep.subr.bf16.mxu0 %v7649
        %10868 = vmatpush1.bf16.msra.mxu0 %v7648
        %10869 = vmatprep.subr.bf16.mxu0 %v7647
        %10870 = vmatpush1.bf16.msra.mxu0 %v7646
        %10871 = vmatprep.subr.bf16.mxu0 %v7645
        %10872 = vmatpush1.bf16.msra.mxu0 %v7644
        %10873 = vmatprep.subr.bf16.mxu0 %v7643
        %10874 = vmatpush1.bf16.msra.mxu0 %v7642
        %10875 = vmatprep.subr.bf16.mxu0 %v7641
        %10876 = vmatpush1.bf16.msra.mxu0 %v7640
        %10877 = vmatprep.subr.bf16.mxu0 %v7639
        %10878 = vmatpush1.bf16.msra.mxu0 %v7638
        %10879 = vmatprep.subr.bf16.mxu0 %v7669
        %10880 = vmatpush2.bf16.msra.mxu0 %v7668
        %10881 = vmatprep.subr.bf16.mxu0 %v7667
        %10882 = vmatpush2.bf16.msra.mxu0 %v7666
        %10883 = vmatprep.subr.bf16.mxu0 %v7665
        %10884 = vmatpush2.bf16.msra.mxu0 %v7664
        %10885 = vmatprep.subr.bf16.mxu0 %v7663
        %10886 = vmatpush2.bf16.msra.mxu0 %v7662
        %10887 = vmatprep.subr.bf16.mxu0 %v7661
        %10888 = vmatpush2.bf16.msra.mxu0 %v7660
        %10889 = vmatprep.subr.bf16.mxu0 %v7659
        %10890 = vmatpush2.bf16.msra.mxu0 %v7658
        %10891 = vmatprep.subr.bf16.mxu0 %v7657
        %10892 = vmatpush2.bf16.msra.mxu0 %v7656
        %10893 = vmatprep.subr.bf16.mxu0 %v7655
        %10894 = vmatpush2.bf16.msra.mxu0 %v7654
        %10895 = vmatprep.mubr.bf16.mxu0 %v2045
        %10896 = vmatmul.mubr.bf16.gmra.mxu0 %v2043
        %v10897 = vpop.f32.mrf.mxu0
        %v10898 = vadd.f32 %v10857, %v10897
        %v10899 = vpop.f32.mrf.mxu0
        %v10900 = vadd.f32 %v10859, %v10899
        %v10901 = vpop.f32.mrf.mxu0
        %v10902 = vpop.f32.mrf.mxu0
        %10903 = vdwg.mxu0
        %10904 = vmatprep.subr.bf16.mxu0 %v7685
        %10905 = vmatpush1.bf16.msra.mxu0 %v7684
        %10906 = vmatprep.subr.bf16.mxu0 %v7683
        %10907 = vmatpush1.bf16.msra.mxu0 %v7682
        %10908 = vmatprep.subr.bf16.mxu0 %v7681
        %10909 = vmatpush1.bf16.msra.mxu0 %v7680
        %10910 = vmatprep.subr.bf16.mxu0 %v7679
        %10911 = vmatpush1.bf16.msra.mxu0 %v7678
        %10912 = vmatprep.subr.bf16.mxu0 %v7677
        %10913 = vmatpush1.bf16.msra.mxu0 %v7676
        %10914 = vmatprep.subr.bf16.mxu0 %v7675
        %10915 = vmatpush1.bf16.msra.mxu0 %v7674
        %10916 = vmatprep.subr.bf16.mxu0 %v7673
        %10917 = vmatpush1.bf16.msra.mxu0 %v7672
        %10918 = vmatprep.subr.bf16.mxu0 %v7671
        %10919 = vmatpush1.bf16.msra.mxu0 %v7670
        %10920 = vmatprep.subr.bf16.mxu0 %v7701
        %10921 = vmatpush2.bf16.msra.mxu0 %v7700
        %10922 = vmatprep.subr.bf16.mxu0 %v7699
        %10923 = vmatpush2.bf16.msra.mxu0 %v7698
        %10924 = vmatprep.subr.bf16.mxu0 %v7697
        %10925 = vmatpush2.bf16.msra.mxu0 %v7696
        %10926 = vmatprep.subr.bf16.mxu0 %v7695
        %10927 = vmatpush2.bf16.msra.mxu0 %v7694
        %10928 = vmatprep.subr.bf16.mxu0 %v7693
        %10929 = vmatpush2.bf16.msra.mxu0 %v7692
        %10930 = vmatprep.subr.bf16.mxu0 %v7691
        %10931 = vmatpush2.bf16.msra.mxu0 %v7690
        %10932 = vmatprep.subr.bf16.mxu0 %v7689
        %10933 = vmatpush2.bf16.msra.mxu0 %v7688
        %10934 = vmatprep.subr.bf16.mxu0 %v7687
        %10935 = vmatpush2.bf16.msra.mxu0 %v7686
        %10936 = vmatprep.mubr.bf16.mxu0 %v2042
        %10937 = vmatmul.mubr.bf16.gmra.mxu0 %v2028
        %v10938 = vpop.f32.mrf.mxu0
        %v10939 = vadd.f32 %v10898, %v10938
        %v10940 = vpop.f32.mrf.mxu0
        %v10941 = vadd.f32 %v10900, %v10940
        %v10942 = vpop.f32.mrf.mxu0
        %v10943 = vpop.f32.mrf.mxu0
        %10944 = vdwg.mxu0
        %10945 = vmatprep.subr.bf16.mxu0 %v7717
        %10946 = vmatpush1.bf16.msra.mxu0 %v7716
        %10947 = vmatprep.subr.bf16.mxu0 %v7715
        %10948 = vmatpush1.bf16.msra.mxu0 %v7714
        %10949 = vmatprep.subr.bf16.mxu0 %v7713
        %10950 = vmatpush1.bf16.msra.mxu0 %v7712
        %10951 = vmatprep.subr.bf16.mxu0 %v7711
        %10952 = vmatpush1.bf16.msra.mxu0 %v7710
        %10953 = vmatprep.subr.bf16.mxu0 %v7709
        %10954 = vmatpush1.bf16.msra.mxu0 %v7708
        %10955 = vmatprep.subr.bf16.mxu0 %v7707
        %10956 = vmatpush1.bf16.msra.mxu0 %v7706
        %10957 = vmatprep.subr.bf16.mxu0 %v7705
        %10958 = vmatpush1.bf16.msra.mxu0 %v7704
        %10959 = vmatprep.subr.bf16.mxu0 %v7703
        %10960 = vmatpush1.bf16.msra.mxu0 %v7702
        %10961 = vmatprep.subr.bf16.mxu0 %v7733
        %10962 = vmatpush2.bf16.msra.mxu0 %v7732
        %10963 = vmatprep.subr.bf16.mxu0 %v7731
        %10964 = vmatpush2.bf16.msra.mxu0 %v7730
        %10965 = vmatprep.subr.bf16.mxu0 %v7729
        %10966 = vmatpush2.bf16.msra.mxu0 %v7728
        %10967 = vmatprep.subr.bf16.mxu0 %v7727
        %10968 = vmatpush2.bf16.msra.mxu0 %v7726
        %10969 = vmatprep.subr.bf16.mxu0 %v7725
        %10970 = vmatpush2.bf16.msra.mxu0 %v7724
        %10971 = vmatprep.subr.bf16.mxu0 %v7723
        %10972 = vmatpush2.bf16.msra.mxu0 %v7722
        %10973 = vmatprep.subr.bf16.mxu0 %v7721
        %10974 = vmatpush2.bf16.msra.mxu0 %v7720
        %10975 = vmatprep.subr.bf16.mxu0 %v7719
        %10976 = vmatpush2.bf16.msra.mxu0 %v7718
        %10977 = vmatprep.mubr.bf16.mxu0 %v2046
        %10978 = vmatmul.mubr.bf16.gmra.mxu0 %v2044
        %v10979 = vpop.f32.mrf.mxu0
        %v10980 = vadd.f32 %v10939, %v10979
        %v10981 = vpop.f32.mrf.mxu0
        %v10982 = vadd.f32 %v10941, %v10981
        %v10983 = vpop.f32.mrf.mxu0
        %v10984 = vpop.f32.mrf.mxu0
        %10985 = vdwg.mxu0
        %10986 = vmatprep.subr.bf16.mxu0 %v7749
        %10987 = vmatpush1.bf16.msra.mxu0 %v7748
        %10988 = vmatprep.subr.bf16.mxu0 %v7747
        %10989 = vmatpush1.bf16.msra.mxu0 %v7746
        %10990 = vmatprep.subr.bf16.mxu0 %v7745
        %10991 = vmatpush1.bf16.msra.mxu0 %v7744
        %10992 = vmatprep.subr.bf16.mxu0 %v7743
        %10993 = vmatpush1.bf16.msra.mxu0 %v7742
        %10994 = vmatprep.subr.bf16.mxu0 %v7741
        %10995 = vmatpush1.bf16.msra.mxu0 %v7740
        %10996 = vmatprep.subr.bf16.mxu0 %v7739
        %10997 = vmatpush1.bf16.msra.mxu0 %v7738
        %10998 = vmatprep.subr.bf16.mxu0 %v7737
        %10999 = vmatpush1.bf16.msra.mxu0 %v7736
        %11000 = vmatprep.subr.bf16.mxu0 %v7735
        %11001 = vmatpush1.bf16.msra.mxu0 %v7734
        %11002 = vmatprep.subr.bf16.mxu0 %v7765
        %11003 = vmatpush2.bf16.msra.mxu0 %v7764
        %11004 = vmatprep.subr.bf16.mxu0 %v7763
        %11005 = vmatpush2.bf16.msra.mxu0 %v7762
        %11006 = vmatprep.subr.bf16.mxu0 %v7761
        %11007 = vmatpush2.bf16.msra.mxu0 %v7760
        %11008 = vmatprep.subr.bf16.mxu0 %v7759
        %11009 = vmatpush2.bf16.msra.mxu0 %v7758
        %11010 = vmatprep.subr.bf16.mxu0 %v7757
        %11011 = vmatpush2.bf16.msra.mxu0 %v7756
        %11012 = vmatprep.subr.bf16.mxu0 %v7755
        %11013 = vmatpush2.bf16.msra.mxu0 %v7754
        %11014 = vmatprep.subr.bf16.mxu0 %v7753
        %11015 = vmatpush2.bf16.msra.mxu0 %v7752
        %11016 = vmatprep.subr.bf16.mxu0 %v7751
        %11017 = vmatpush2.bf16.msra.mxu0 %v7750
        %11018 = vmatprep.mubr.bf16.mxu0 %v2084
        %11019 = vmatmul.mubr.bf16.gmra.mxu0 %v2070
        %v11020 = vpop.f32.mrf.mxu0
        %v11021 = vadd.f32 %v10980, %v11020
        %v11022 = vpop.f32.mrf.mxu0
        %v11023 = vadd.f32 %v10982, %v11022
        %v11024 = vpop.f32.mrf.mxu0
        %v11025 = vpop.f32.mrf.mxu0
        %11026 = vdwg.mxu0
        %11027 = vmatprep.subr.bf16.mxu0 %v7781
        %11028 = vmatpush1.bf16.msra.mxu0 %v7780
        %11029 = vmatprep.subr.bf16.mxu0 %v7779
        %11030 = vmatpush1.bf16.msra.mxu0 %v7778
        %11031 = vmatprep.subr.bf16.mxu0 %v7777
        %11032 = vmatpush1.bf16.msra.mxu0 %v7776
        %11033 = vmatprep.subr.bf16.mxu0 %v7775
        %11034 = vmatpush1.bf16.msra.mxu0 %v7774
        %11035 = vmatprep.subr.bf16.mxu0 %v7773
        %11036 = vmatpush1.bf16.msra.mxu0 %v7772
        %11037 = vmatprep.subr.bf16.mxu0 %v7771
        %11038 = vmatpush1.bf16.msra.mxu0 %v7770
        %11039 = vmatprep.subr.bf16.mxu0 %v7769
        %11040 = vmatpush1.bf16.msra.mxu0 %v7768
        %11041 = vmatprep.subr.bf16.mxu0 %v7767
        %11042 = vmatpush1.bf16.msra.mxu0 %v7766
        %11043 = vmatprep.subr.bf16.mxu0 %v7797
        %11044 = vmatpush2.bf16.msra.mxu0 %v7796
        %11045 = vmatprep.subr.bf16.mxu0 %v7795
        %11046 = vmatpush2.bf16.msra.mxu0 %v7794
        %11047 = vmatprep.subr.bf16.mxu0 %v7793
        %11048 = vmatpush2.bf16.msra.mxu0 %v7792
        %11049 = vmatprep.subr.bf16.mxu0 %v7791
        %11050 = vmatpush2.bf16.msra.mxu0 %v7790
        %11051 = vmatprep.subr.bf16.mxu0 %v7789
        %11052 = vmatpush2.bf16.msra.mxu0 %v7788
        %11053 = vmatprep.subr.bf16.mxu0 %v7787
        %11054 = vmatpush2.bf16.msra.mxu0 %v7786
        %11055 = vmatprep.subr.bf16.mxu0 %v7785
        %11056 = vmatpush2.bf16.msra.mxu0 %v7784
        %11057 = vmatprep.subr.bf16.mxu0 %v7783
        %11058 = vmatpush2.bf16.msra.mxu0 %v7782
        %11059 = vmatprep.mubr.bf16.mxu0 %v2094
        %11060 = vmatmul.mubr.bf16.gmra.mxu0 %v2092
        %v11061 = vpop.f32.mrf.mxu0
        %v11062 = vadd.f32 %v11021, %v11061
        %v11063 = vpop.f32.mrf.mxu0
        %v11064 = vadd.f32 %v11023, %v11063
        %v11065 = vpop.f32.mrf.mxu0
        %v11066 = vpop.f32.mrf.mxu0
        %11067 = vdwg.mxu0
        %11068 = vmatprep.subr.bf16.mxu0 %v7813
        %11069 = vmatpush1.bf16.msra.mxu0 %v7812
        %11070 = vmatprep.subr.bf16.mxu0 %v7811
        %11071 = vmatpush1.bf16.msra.mxu0 %v7810
        %11072 = vmatprep.subr.bf16.mxu0 %v7809
        %11073 = vmatpush1.bf16.msra.mxu0 %v7808
        %11074 = vmatprep.subr.bf16.mxu0 %v7807
        %11075 = vmatpush1.bf16.msra.mxu0 %v7806
        %11076 = vmatprep.subr.bf16.mxu0 %v7805
        %11077 = vmatpush1.bf16.msra.mxu0 %v7804
        %11078 = vmatprep.subr.bf16.mxu0 %v7803
        %11079 = vmatpush1.bf16.msra.mxu0 %v7802
        %11080 = vmatprep.subr.bf16.mxu0 %v7801
        %11081 = vmatpush1.bf16.msra.mxu0 %v7800
        %11082 = vmatprep.subr.bf16.mxu0 %v7799
        %11083 = vmatpush1.bf16.msra.mxu0 %v7798
        %11084 = vmatprep.subr.bf16.mxu0 %v7829
        %11085 = vmatpush2.bf16.msra.mxu0 %v7828
        %11086 = vmatprep.subr.bf16.mxu0 %v7827
        %11087 = vmatpush2.bf16.msra.mxu0 %v7826
        %11088 = vmatprep.subr.bf16.mxu0 %v7825
        %11089 = vmatpush2.bf16.msra.mxu0 %v7824
        %11090 = vmatprep.subr.bf16.mxu0 %v7823
        %11091 = vmatpush2.bf16.msra.mxu0 %v7822
        %11092 = vmatprep.subr.bf16.mxu0 %v7821
        %11093 = vmatpush2.bf16.msra.mxu0 %v7820
        %11094 = vmatprep.subr.bf16.mxu0 %v7819
        %11095 = vmatpush2.bf16.msra.mxu0 %v7818
        %11096 = vmatprep.subr.bf16.mxu0 %v7817
        %11097 = vmatpush2.bf16.msra.mxu0 %v7816
        %11098 = vmatprep.subr.bf16.mxu0 %v7815
        %11099 = vmatpush2.bf16.msra.mxu0 %v7814
        %11100 = vmatprep.mubr.bf16.mxu0 %v2091
        %11101 = vmatmul.mubr.bf16.gmra.mxu0 %v2077
        %v11102 = vpop.f32.mrf.mxu0
        %v11103 = vadd.f32 %v11062, %v11102
        %v11104 = vpop.f32.mrf.mxu0
        %v11105 = vadd.f32 %v11064, %v11104
        %v11106 = vpop.f32.mrf.mxu0
        %v11107 = vpop.f32.mrf.mxu0
        %11108 = vdwg.mxu0
        %11109 = vmatprep.subr.bf16.mxu0 %v7845
        %11110 = vmatpush1.bf16.msra.mxu0 %v7844
        %11111 = vmatprep.subr.bf16.mxu0 %v7843
        %11112 = vmatpush1.bf16.msra.mxu0 %v7842
        %11113 = vmatprep.subr.bf16.mxu0 %v7841
        %11114 = vmatpush1.bf16.msra.mxu0 %v7840
        %11115 = vmatprep.subr.bf16.mxu0 %v7839
        %11116 = vmatpush1.bf16.msra.mxu0 %v7838
        %11117 = vmatprep.subr.bf16.mxu0 %v7837
        %11118 = vmatpush1.bf16.msra.mxu0 %v7836
        %11119 = vmatprep.subr.bf16.mxu0 %v7835
        %11120 = vmatpush1.bf16.msra.mxu0 %v7834
        %11121 = vmatprep.subr.bf16.mxu0 %v7833
        %11122 = vmatpush1.bf16.msra.mxu0 %v7832
        %11123 = vmatprep.subr.bf16.mxu0 %v7831
        %11124 = vmatpush1.bf16.msra.mxu0 %v7830
        %11125 = vmatprep.subr.bf16.mxu0 %v7861
        %11126 = vmatpush2.bf16.msra.mxu0 %v7860
        %11127 = vmatprep.subr.bf16.mxu0 %v7859
        %11128 = vmatpush2.bf16.msra.mxu0 %v7858
        %11129 = vmatprep.subr.bf16.mxu0 %v7857
        %11130 = vmatpush2.bf16.msra.mxu0 %v7856
        %11131 = vmatprep.subr.bf16.mxu0 %v7855
        %11132 = vmatpush2.bf16.msra.mxu0 %v7854
        %11133 = vmatprep.subr.bf16.mxu0 %v7853
        %11134 = vmatpush2.bf16.msra.mxu0 %v7852
        %11135 = vmatprep.subr.bf16.mxu0 %v7851
        %11136 = vmatpush2.bf16.msra.mxu0 %v7850
        %11137 = vmatprep.subr.bf16.mxu0 %v7849
        %11138 = vmatpush2.bf16.msra.mxu0 %v7848
        %11139 = vmatprep.subr.bf16.mxu0 %v7847
        %11140 = vmatpush2.bf16.msra.mxu0 %v7846
        %11141 = vmatprep.mubr.bf16.mxu0 %v2095
        %11142 = vmatmul.mubr.bf16.gmra.mxu0 %v2093
        %v11143 = vpop.f32.mrf.mxu0
        %v11144 = vadd.f32 %v11103, %v11143
        %v11145 = vpop.f32.mrf.mxu0
        %v11146 = vadd.f32 %v11105, %v11145
        %v11147 = vpop.f32.mrf.mxu0
        %v11148 = vpop.f32.mrf.mxu0
        %11149 = vdwg.mxu0
        %11150 = vmatprep.subr.bf16.mxu0 %v7877
        %11151 = vmatpush1.bf16.msra.mxu0 %v7876
        %11152 = vmatprep.subr.bf16.mxu0 %v7875
        %11153 = vmatpush1.bf16.msra.mxu0 %v7874
        %11154 = vmatprep.subr.bf16.mxu0 %v7873
        %11155 = vmatpush1.bf16.msra.mxu0 %v7872
        %11156 = vmatprep.subr.bf16.mxu0 %v7871
        %11157 = vmatpush1.bf16.msra.mxu0 %v7870
        %11158 = vmatprep.subr.bf16.mxu0 %v7869
        %11159 = vmatpush1.bf16.msra.mxu0 %v7868
        %11160 = vmatprep.subr.bf16.mxu0 %v7867
        %11161 = vmatpush1.bf16.msra.mxu0 %v7866
        %11162 = vmatprep.subr.bf16.mxu0 %v7865
        %11163 = vmatpush1.bf16.msra.mxu0 %v7864
        %11164 = vmatprep.subr.bf16.mxu0 %v7863
        %11165 = vmatpush1.bf16.msra.mxu0 %v7862
        %11166 = vmatprep.subr.bf16.mxu0 %v7893
        %11167 = vmatpush2.bf16.msra.mxu0 %v7892
        %11168 = vmatprep.subr.bf16.mxu0 %v7891
        %11169 = vmatpush2.bf16.msra.mxu0 %v7890
        %11170 = vmatprep.subr.bf16.mxu0 %v7889
        %11171 = vmatpush2.bf16.msra.mxu0 %v7888
        %11172 = vmatprep.subr.bf16.mxu0 %v7887
        %11173 = vmatpush2.bf16.msra.mxu0 %v7886
        %11174 = vmatprep.subr.bf16.mxu0 %v7885
        %11175 = vmatpush2.bf16.msra.mxu0 %v7884
        %11176 = vmatprep.subr.bf16.mxu0 %v7883
        %11177 = vmatpush2.bf16.msra.mxu0 %v7882
        %11178 = vmatprep.subr.bf16.mxu0 %v7881
        %11179 = vmatpush2.bf16.msra.mxu0 %v7880
        %11180 = vmatprep.subr.bf16.mxu0 %v7879
        %11181 = vmatpush2.bf16.msra.mxu0 %v7878
        %11182 = vmatprep.mubr.bf16.mxu0 %v2133
        %11183 = vmatmul.mubr.bf16.gmra.mxu0 %v2119
        %v11184 = vpop.f32.mrf.mxu0
        %v11185 = vadd.f32 %v11144, %v11184
        %v11186 = vpop.f32.mrf.mxu0
        %v11187 = vadd.f32 %v11146, %v11186
        %v11188 = vpop.f32.mrf.mxu0
        %v11189 = vpop.f32.mrf.mxu0
        %11190 = vdwg.mxu0
        %11191 = vmatprep.subr.bf16.mxu0 %v7909
        %11192 = vmatpush1.bf16.msra.mxu0 %v7908
        %11193 = vmatprep.subr.bf16.mxu0 %v7907
        %11194 = vmatpush1.bf16.msra.mxu0 %v7906
        %11195 = vmatprep.subr.bf16.mxu0 %v7905
        %11196 = vmatpush1.bf16.msra.mxu0 %v7904
        %11197 = vmatprep.subr.bf16.mxu0 %v7903
        %11198 = vmatpush1.bf16.msra.mxu0 %v7902
        %11199 = vmatprep.subr.bf16.mxu0 %v7901
        %11200 = vmatpush1.bf16.msra.mxu0 %v7900
        %11201 = vmatprep.subr.bf16.mxu0 %v7899
        %11202 = vmatpush1.bf16.msra.mxu0 %v7898
        %11203 = vmatprep.subr.bf16.mxu0 %v7897
        %11204 = vmatpush1.bf16.msra.mxu0 %v7896
        %11205 = vmatprep.subr.bf16.mxu0 %v7895
        %11206 = vmatpush1.bf16.msra.mxu0 %v7894
        %11207 = vmatprep.subr.bf16.mxu0 %v7925
        %11208 = vmatpush2.bf16.msra.mxu0 %v7924
        %11209 = vmatprep.subr.bf16.mxu0 %v7923
        %11210 = vmatpush2.bf16.msra.mxu0 %v7922
        %11211 = vmatprep.subr.bf16.mxu0 %v7921
        %11212 = vmatpush2.bf16.msra.mxu0 %v7920
        %11213 = vmatprep.subr.bf16.mxu0 %v7919
        %11214 = vmatpush2.bf16.msra.mxu0 %v7918
        %11215 = vmatprep.subr.bf16.mxu0 %v7917
        %11216 = vmatpush2.bf16.msra.mxu0 %v7916
        %11217 = vmatprep.subr.bf16.mxu0 %v7915
        %11218 = vmatpush2.bf16.msra.mxu0 %v7914
        %11219 = vmatprep.subr.bf16.mxu0 %v7913
        %11220 = vmatpush2.bf16.msra.mxu0 %v7912
        %11221 = vmatprep.subr.bf16.mxu0 %v7911
        %11222 = vmatpush2.bf16.msra.mxu0 %v7910
        %11223 = vmatprep.mubr.bf16.mxu0 %v2143
        %11224 = vmatmul.mubr.bf16.gmra.mxu0 %v2141
        %v11225 = vpop.f32.mrf.mxu0
        %v11226 = vadd.f32 %v11185, %v11225
        %v11227 = vpop.f32.mrf.mxu0
        %v11228 = vadd.f32 %v11187, %v11227
        %v11229 = vpop.f32.mrf.mxu0
        %v11230 = vpop.f32.mrf.mxu0
        %11231 = vdwg.mxu0
        %11232 = vmatprep.subr.bf16.mxu0 %v7941
        %11233 = vmatpush1.bf16.msra.mxu0 %v7940
        %11234 = vmatprep.subr.bf16.mxu0 %v7939
        %11235 = vmatpush1.bf16.msra.mxu0 %v7938
        %11236 = vmatprep.subr.bf16.mxu0 %v7937
        %11237 = vmatpush1.bf16.msra.mxu0 %v7936
        %11238 = vmatprep.subr.bf16.mxu0 %v7935
        %11239 = vmatpush1.bf16.msra.mxu0 %v7934
        %11240 = vmatprep.subr.bf16.mxu0 %v7933
        %11241 = vmatpush1.bf16.msra.mxu0 %v7932
        %11242 = vmatprep.subr.bf16.mxu0 %v7931
        %11243 = vmatpush1.bf16.msra.mxu0 %v7930
        %11244 = vmatprep.subr.bf16.mxu0 %v7929
        %11245 = vmatpush1.bf16.msra.mxu0 %v7928
        %11246 = vmatprep.subr.bf16.mxu0 %v7927
        %11247 = vmatpush1.bf16.msra.mxu0 %v7926
        %11248 = vmatprep.subr.bf16.mxu0 %v7957
        %11249 = vmatpush2.bf16.msra.mxu0 %v7956
        %11250 = vmatprep.subr.bf16.mxu0 %v7955
        %11251 = vmatpush2.bf16.msra.mxu0 %v7954
        %11252 = vmatprep.subr.bf16.mxu0 %v7953
        %11253 = vmatpush2.bf16.msra.mxu0 %v7952
        %11254 = vmatprep.subr.bf16.mxu0 %v7951
        %11255 = vmatpush2.bf16.msra.mxu0 %v7950
        %11256 = vmatprep.subr.bf16.mxu0 %v7949
        %11257 = vmatpush2.bf16.msra.mxu0 %v7948
        %11258 = vmatprep.subr.bf16.mxu0 %v7947
        %11259 = vmatpush2.bf16.msra.mxu0 %v7946
        %11260 = vmatprep.subr.bf16.mxu0 %v7945
        %11261 = vmatpush2.bf16.msra.mxu0 %v7944
        %11262 = vmatprep.subr.bf16.mxu0 %v7943
        %11263 = vmatpush2.bf16.msra.mxu0 %v7942
        %11264 = vmatprep.mubr.bf16.mxu0 %v2140
        %11265 = vmatmul.mubr.bf16.gmra.mxu0 %v2126
        %v11266 = vpop.f32.mrf.mxu0
        %v11267 = vadd.f32 %v11226, %v11266
        %v11268 = vpop.f32.mrf.mxu0
        %v11269 = vadd.f32 %v11228, %v11268
        %v11270 = vpop.f32.mrf.mxu0
        %v11271 = vpop.f32.mrf.mxu0
        %11272 = vdwg.mxu0
        %11273 = vmatprep.subr.bf16.mxu0 %v7973
        %11274 = vmatpush1.bf16.msra.mxu0 %v7972
        %11275 = vmatprep.subr.bf16.mxu0 %v7971
        %11276 = vmatpush1.bf16.msra.mxu0 %v7970
        %11277 = vmatprep.subr.bf16.mxu0 %v7969
        %11278 = vmatpush1.bf16.msra.mxu0 %v7968
        %11279 = vmatprep.subr.bf16.mxu0 %v7967
        %11280 = vmatpush1.bf16.msra.mxu0 %v7966
        %11281 = vmatprep.subr.bf16.mxu0 %v7965
        %11282 = vmatpush1.bf16.msra.mxu0 %v7964
        %11283 = vmatprep.subr.bf16.mxu0 %v7963
        %11284 = vmatpush1.bf16.msra.mxu0 %v7962
        %11285 = vmatprep.subr.bf16.mxu0 %v7961
        %11286 = vmatpush1.bf16.msra.mxu0 %v7960
        %11287 = vmatprep.subr.bf16.mxu0 %v7959
        %11288 = vmatpush1.bf16.msra.mxu0 %v7958
        %11289 = vmatprep.subr.bf16.mxu0 %v7989
        %11290 = vmatpush2.bf16.msra.mxu0 %v7988
        %11291 = vmatprep.subr.bf16.mxu0 %v7987
        %11292 = vmatpush2.bf16.msra.mxu0 %v7986
        %11293 = vmatprep.subr.bf16.mxu0 %v7985
        %11294 = vmatpush2.bf16.msra.mxu0 %v7984
        %11295 = vmatprep.subr.bf16.mxu0 %v7983
        %11296 = vmatpush2.bf16.msra.mxu0 %v7982
        %11297 = vmatprep.subr.bf16.mxu0 %v7981
        %11298 = vmatpush2.bf16.msra.mxu0 %v7980
        %11299 = vmatprep.subr.bf16.mxu0 %v7979
        %11300 = vmatpush2.bf16.msra.mxu0 %v7978
        %11301 = vmatprep.subr.bf16.mxu0 %v7977
        %11302 = vmatpush2.bf16.msra.mxu0 %v7976
        %11303 = vmatprep.subr.bf16.mxu0 %v7975
        %11304 = vmatpush2.bf16.msra.mxu0 %v7974
        %11305 = vmatprep.mubr.bf16.mxu0 %v2144
        %11306 = vmatmul.mubr.bf16.gmra.mxu0 %v2142
        %v11307 = vpop.f32.mrf.mxu0
        %v11308 = vadd.f32 %v11267, %v11307
        %v11309 = vpop.f32.mrf.mxu0
        %v11310 = vadd.f32 %v11269, %v11309
        %v11311 = vpop.f32.mrf.mxu0
        %v11312 = vpop.f32.mrf.mxu0
        %11313 = vdwg.mxu0
        %11314 = vmatprep.subr.bf16.mxu0 %v8005
        %11315 = vmatpush1.bf16.msra.mxu0 %v8004
        %11316 = vmatprep.subr.bf16.mxu0 %v8003
        %11317 = vmatpush1.bf16.msra.mxu0 %v8002
        %11318 = vmatprep.subr.bf16.mxu0 %v8001
        %11319 = vmatpush1.bf16.msra.mxu0 %v8000
        %11320 = vmatprep.subr.bf16.mxu0 %v7999
        %11321 = vmatpush1.bf16.msra.mxu0 %v7998
        %11322 = vmatprep.subr.bf16.mxu0 %v7997
        %11323 = vmatpush1.bf16.msra.mxu0 %v7996
        %11324 = vmatprep.subr.bf16.mxu0 %v7995
        %11325 = vmatpush1.bf16.msra.mxu0 %v7994
        %11326 = vmatprep.subr.bf16.mxu0 %v7993
        %11327 = vmatpush1.bf16.msra.mxu0 %v7992
        %11328 = vmatprep.subr.bf16.mxu0 %v7991
        %11329 = vmatpush1.bf16.msra.mxu0 %v7990
        %11330 = vmatprep.subr.bf16.mxu0 %v8021
        %11331 = vmatpush2.bf16.msra.mxu0 %v8020
        %11332 = vmatprep.subr.bf16.mxu0 %v8019
        %11333 = vmatpush2.bf16.msra.mxu0 %v8018
        %11334 = vmatprep.subr.bf16.mxu0 %v8017
        %11335 = vmatpush2.bf16.msra.mxu0 %v8016
        %11336 = vmatprep.subr.bf16.mxu0 %v8015
        %11337 = vmatpush2.bf16.msra.mxu0 %v8014
        %11338 = vmatprep.subr.bf16.mxu0 %v8013
        %11339 = vmatpush2.bf16.msra.mxu0 %v8012
        %11340 = vmatprep.subr.bf16.mxu0 %v8011
        %11341 = vmatpush2.bf16.msra.mxu0 %v8010
        %11342 = vmatprep.subr.bf16.mxu0 %v8009
        %11343 = vmatpush2.bf16.msra.mxu0 %v8008
        %11344 = vmatprep.subr.bf16.mxu0 %v8007
        %11345 = vmatpush2.bf16.msra.mxu0 %v8006
        %11346 = vmatprep.mubr.bf16.mxu0 %v2182
        %11347 = vmatmul.mubr.bf16.gmra.mxu0 %v2168
        %v11348 = vpop.f32.mrf.mxu0
        %v11349 = vadd.f32 %v11308, %v11348
        %v11350 = vpop.f32.mrf.mxu0
        %v11351 = vadd.f32 %v11310, %v11350
        %v11352 = vpop.f32.mrf.mxu0
        %v11353 = vpop.f32.mrf.mxu0
        %11354 = vdwg.mxu0
        %11355 = vmatprep.subr.bf16.mxu0 %v8037
        %11356 = vmatpush1.bf16.msra.mxu0 %v8036
        %11357 = vmatprep.subr.bf16.mxu0 %v8035
        %11358 = vmatpush1.bf16.msra.mxu0 %v8034
        %11359 = vmatprep.subr.bf16.mxu0 %v8033
        %11360 = vmatpush1.bf16.msra.mxu0 %v8032
        %11361 = vmatprep.subr.bf16.mxu0 %v8031
        %11362 = vmatpush1.bf16.msra.mxu0 %v8030
        %11363 = vmatprep.subr.bf16.mxu0 %v8029
        %11364 = vmatpush1.bf16.msra.mxu0 %v8028
        %11365 = vmatprep.subr.bf16.mxu0 %v8027
        %11366 = vmatpush1.bf16.msra.mxu0 %v8026
        %11367 = vmatprep.subr.bf16.mxu0 %v8025
        %11368 = vmatpush1.bf16.msra.mxu0 %v8024
        %11369 = vmatprep.subr.bf16.mxu0 %v8023
        %11370 = vmatpush1.bf16.msra.mxu0 %v8022
        %11371 = vmatprep.subr.bf16.mxu0 %v8053
        %11372 = vmatpush2.bf16.msra.mxu0 %v8052
        %11373 = vmatprep.subr.bf16.mxu0 %v8051
        %11374 = vmatpush2.bf16.msra.mxu0 %v8050
        %11375 = vmatprep.subr.bf16.mxu0 %v8049
        %11376 = vmatpush2.bf16.msra.mxu0 %v8048
        %11377 = vmatprep.subr.bf16.mxu0 %v8047
        %11378 = vmatpush2.bf16.msra.mxu0 %v8046
        %11379 = vmatprep.subr.bf16.mxu0 %v8045
        %11380 = vmatpush2.bf16.msra.mxu0 %v8044
        %11381 = vmatprep.subr.bf16.mxu0 %v8043
        %11382 = vmatpush2.bf16.msra.mxu0 %v8042
        %11383 = vmatprep.subr.bf16.mxu0 %v8041
        %11384 = vmatpush2.bf16.msra.mxu0 %v8040
        %11385 = vmatprep.subr.bf16.mxu0 %v8039
        %11386 = vmatpush2.bf16.msra.mxu0 %v8038
        %11387 = vmatprep.mubr.bf16.mxu0 %v2192
        %11388 = vmatmul.mubr.bf16.gmra.mxu0 %v2190
        %v11389 = vpop.f32.mrf.mxu0
        %v11390 = vadd.f32 %v11349, %v11389
        %v11391 = vpop.f32.mrf.mxu0
        %v11392 = vadd.f32 %v11351, %v11391
        %v11393 = vpop.f32.mrf.mxu0
        %v11394 = vpop.f32.mrf.mxu0
        %11395 = vdwg.mxu0
        %11396 = vmatprep.subr.bf16.mxu0 %v8069
        %11397 = vmatpush1.bf16.msra.mxu0 %v8068
        %11398 = vmatprep.subr.bf16.mxu0 %v8067
        %11399 = vmatpush1.bf16.msra.mxu0 %v8066
        %11400 = vmatprep.subr.bf16.mxu0 %v8065
        %11401 = vmatpush1.bf16.msra.mxu0 %v8064
        %11402 = vmatprep.subr.bf16.mxu0 %v8063
        %11403 = vmatpush1.bf16.msra.mxu0 %v8062
        %11404 = vmatprep.subr.bf16.mxu0 %v8061
        %11405 = vmatpush1.bf16.msra.mxu0 %v8060
        %11406 = vmatprep.subr.bf16.mxu0 %v8059
        %11407 = vmatpush1.bf16.msra.mxu0 %v8058
        %11408 = vmatprep.subr.bf16.mxu0 %v8057
        %11409 = vmatpush1.bf16.msra.mxu0 %v8056
        %11410 = vmatprep.subr.bf16.mxu0 %v8055
        %11411 = vmatpush1.bf16.msra.mxu0 %v8054
        %11412 = vmatprep.subr.bf16.mxu0 %v8085
        %11413 = vmatpush2.bf16.msra.mxu0 %v8084
        %11414 = vmatprep.subr.bf16.mxu0 %v8083
        %11415 = vmatpush2.bf16.msra.mxu0 %v8082
        %11416 = vmatprep.subr.bf16.mxu0 %v8081
        %11417 = vmatpush2.bf16.msra.mxu0 %v8080
        %11418 = vmatprep.subr.bf16.mxu0 %v8079
        %11419 = vmatpush2.bf16.msra.mxu0 %v8078
        %11420 = vmatprep.subr.bf16.mxu0 %v8077
        %11421 = vmatpush2.bf16.msra.mxu0 %v8076
        %11422 = vmatprep.subr.bf16.mxu0 %v8075
        %11423 = vmatpush2.bf16.msra.mxu0 %v8074
        %11424 = vmatprep.subr.bf16.mxu0 %v8073
        %11425 = vmatpush2.bf16.msra.mxu0 %v8072
        %11426 = vmatprep.subr.bf16.mxu0 %v8071
        %11427 = vmatpush2.bf16.msra.mxu0 %v8070
        %11428 = vmatprep.mubr.bf16.mxu0 %v2189
        %11429 = vmatmul.mubr.bf16.gmra.mxu0 %v2175
        %v11430 = vpop.f32.mrf.mxu0
        %v11431 = vadd.f32 %v11390, %v11430
        %v11432 = vpop.f32.mrf.mxu0
        %v11433 = vadd.f32 %v11392, %v11432
        %v11434 = vpop.f32.mrf.mxu0
        %v11435 = vpop.f32.mrf.mxu0
        %11436 = vdwg.mxu0
        %11437 = vmatprep.subr.bf16.mxu0 %v8101
        %11438 = vmatpush1.bf16.msra.mxu0 %v8100
        %11439 = vmatprep.subr.bf16.mxu0 %v8099
        %11440 = vmatpush1.bf16.msra.mxu0 %v8098
        %11441 = vmatprep.subr.bf16.mxu0 %v8097
        %11442 = vmatpush1.bf16.msra.mxu0 %v8096
        %11443 = vmatprep.subr.bf16.mxu0 %v8095
        %11444 = vmatpush1.bf16.msra.mxu0 %v8094
        %11445 = vmatprep.subr.bf16.mxu0 %v8093
        %11446 = vmatpush1.bf16.msra.mxu0 %v8092
        %11447 = vmatprep.subr.bf16.mxu0 %v8091
        %11448 = vmatpush1.bf16.msra.mxu0 %v8090
        %11449 = vmatprep.subr.bf16.mxu0 %v8089
        %11450 = vmatpush1.bf16.msra.mxu0 %v8088
        %11451 = vmatprep.subr.bf16.mxu0 %v8087
        %11452 = vmatpush1.bf16.msra.mxu0 %v8086
        %11453 = vmatprep.subr.bf16.mxu0 %v8117
        %11454 = vmatpush2.bf16.msra.mxu0 %v8116
        %11455 = vmatprep.subr.bf16.mxu0 %v8115
        %11456 = vmatpush2.bf16.msra.mxu0 %v8114
        %11457 = vmatprep.subr.bf16.mxu0 %v8113
        %11458 = vmatpush2.bf16.msra.mxu0 %v8112
        %11459 = vmatprep.subr.bf16.mxu0 %v8111
        %11460 = vmatpush2.bf16.msra.mxu0 %v8110
        %11461 = vmatprep.subr.bf16.mxu0 %v8109
        %11462 = vmatpush2.bf16.msra.mxu0 %v8108
        %11463 = vmatprep.subr.bf16.mxu0 %v8107
        %11464 = vmatpush2.bf16.msra.mxu0 %v8106
        %11465 = vmatprep.subr.bf16.mxu0 %v8105
        %11466 = vmatpush2.bf16.msra.mxu0 %v8104
        %11467 = vmatprep.subr.bf16.mxu0 %v8103
        %11468 = vmatpush2.bf16.msra.mxu0 %v8102
        %11469 = vmatprep.mubr.bf16.mxu0 %v2193
        %11470 = vmatmul.mubr.bf16.gmra.mxu0 %v2191
        %v11471 = vpop.f32.mrf.mxu0
        %v11472 = vadd.f32 %v11431, %v11471
        %v11473 = vpop.f32.mrf.mxu0
        %v11474 = vadd.f32 %v11433, %v11473
        %v11475 = vpop.f32.mrf.mxu0
        %v11476 = vpop.f32.mrf.mxu0
        %11477 = vdwg.mxu0
        %11478 = vmatprep.subr.bf16.mxu0 %v8133
        %11479 = vmatpush1.bf16.msra.mxu0 %v8132
        %11480 = vmatprep.subr.bf16.mxu0 %v8131
        %11481 = vmatpush1.bf16.msra.mxu0 %v8130
        %11482 = vmatprep.subr.bf16.mxu0 %v8129
        %11483 = vmatpush1.bf16.msra.mxu0 %v8128
        %11484 = vmatprep.subr.bf16.mxu0 %v8127
        %11485 = vmatpush1.bf16.msra.mxu0 %v8126
        %11486 = vmatprep.subr.bf16.mxu0 %v8125
        %11487 = vmatpush1.bf16.msra.mxu0 %v8124
        %11488 = vmatprep.subr.bf16.mxu0 %v8123
        %11489 = vmatpush1.bf16.msra.mxu0 %v8122
        %11490 = vmatprep.subr.bf16.mxu0 %v8121
        %11491 = vmatpush1.bf16.msra.mxu0 %v8120
        %11492 = vmatprep.subr.bf16.mxu0 %v8119
        %11493 = vmatpush1.bf16.msra.mxu0 %v8118
        %11494 = vmatprep.subr.bf16.mxu0 %v8149
        %11495 = vmatpush2.bf16.msra.mxu0 %v8148
        %11496 = vmatprep.subr.bf16.mxu0 %v8147
        %11497 = vmatpush2.bf16.msra.mxu0 %v8146
        %11498 = vmatprep.subr.bf16.mxu0 %v8145
        %11499 = vmatpush2.bf16.msra.mxu0 %v8144
        %11500 = vmatprep.subr.bf16.mxu0 %v8143
        %11501 = vmatpush2.bf16.msra.mxu0 %v8142
        %11502 = vmatprep.subr.bf16.mxu0 %v8141
        %11503 = vmatpush2.bf16.msra.mxu0 %v8140
        %11504 = vmatprep.subr.bf16.mxu0 %v8139
        %11505 = vmatpush2.bf16.msra.mxu0 %v8138
        %11506 = vmatprep.subr.bf16.mxu0 %v8137
        %11507 = vmatpush2.bf16.msra.mxu0 %v8136
        %11508 = vmatprep.subr.bf16.mxu0 %v8135
        %11509 = vmatpush2.bf16.msra.mxu0 %v8134
        %11510 = vmatprep.mubr.bf16.mxu0 %v2231
        %11511 = vmatmul.mubr.bf16.gmra.mxu0 %v2217
        %v11512 = vpop.f32.mrf.mxu0
        %v11513 = vadd.f32 %v11472, %v11512
        %v11514 = vpop.f32.mrf.mxu0
        %v11515 = vadd.f32 %v11474, %v11514
        %v11516 = vpop.f32.mrf.mxu0
        %v11517 = vpop.f32.mrf.mxu0
        %11518 = vdwg.mxu0
        %11519 = vmatprep.subr.bf16.mxu0 %v8165
        %11520 = vmatpush1.bf16.msra.mxu0 %v8164
        %11521 = vmatprep.subr.bf16.mxu0 %v8163
        %11522 = vmatpush1.bf16.msra.mxu0 %v8162
        %11523 = vmatprep.subr.bf16.mxu0 %v8161
        %11524 = vmatpush1.bf16.msra.mxu0 %v8160
        %11525 = vmatprep.subr.bf16.mxu0 %v8159
        %11526 = vmatpush1.bf16.msra.mxu0 %v8158
        %11527 = vmatprep.subr.bf16.mxu0 %v8157
        %11528 = vmatpush1.bf16.msra.mxu0 %v8156
        %11529 = vmatprep.subr.bf16.mxu0 %v8155
        %11530 = vmatpush1.bf16.msra.mxu0 %v8154
        %11531 = vmatprep.subr.bf16.mxu0 %v8153
        %11532 = vmatpush1.bf16.msra.mxu0 %v8152
        %11533 = vmatprep.subr.bf16.mxu0 %v8151
        %11534 = vmatpush1.bf16.msra.mxu0 %v8150
        %11535 = vmatprep.subr.bf16.mxu0 %v8181
        %11536 = vmatpush2.bf16.msra.mxu0 %v8180
        %11537 = vmatprep.subr.bf16.mxu0 %v8179
        %11538 = vmatpush2.bf16.msra.mxu0 %v8178
        %11539 = vmatprep.subr.bf16.mxu0 %v8177
        %11540 = vmatpush2.bf16.msra.mxu0 %v8176
        %11541 = vmatprep.subr.bf16.mxu0 %v8175
        %11542 = vmatpush2.bf16.msra.mxu0 %v8174
        %11543 = vmatprep.subr.bf16.mxu0 %v8173
        %11544 = vmatpush2.bf16.msra.mxu0 %v8172
        %11545 = vmatprep.subr.bf16.mxu0 %v8171
        %11546 = vmatpush2.bf16.msra.mxu0 %v8170
        %11547 = vmatprep.subr.bf16.mxu0 %v8169
        %11548 = vmatpush2.bf16.msra.mxu0 %v8168
        %11549 = vmatprep.subr.bf16.mxu0 %v8167
        %11550 = vmatpush2.bf16.msra.mxu0 %v8166
        %11551 = vmatprep.mubr.bf16.mxu0 %v2241
        %11552 = vmatmul.mubr.bf16.gmra.mxu0 %v2239
        %v11553 = vpop.f32.mrf.mxu0
        %v11554 = vadd.f32 %v11513, %v11553
        %v11555 = vpop.f32.mrf.mxu0
        %v11556 = vadd.f32 %v11515, %v11555
        %v11557 = vpop.f32.mrf.mxu0
        %v11558 = vpop.f32.mrf.mxu0
        %11559 = vdwg.mxu0
        %11560 = vmatprep.subr.bf16.mxu0 %v8197
        %11561 = vmatpush1.bf16.msra.mxu0 %v8196
        %11562 = vmatprep.subr.bf16.mxu0 %v8195
        %11563 = vmatpush1.bf16.msra.mxu0 %v8194
        %11564 = vmatprep.subr.bf16.mxu0 %v8193
        %11565 = vmatpush1.bf16.msra.mxu0 %v8192
        %11566 = vmatprep.subr.bf16.mxu0 %v8191
        %11567 = vmatpush1.bf16.msra.mxu0 %v8190
        %11568 = vmatprep.subr.bf16.mxu0 %v8189
        %11569 = vmatpush1.bf16.msra.mxu0 %v8188
        %11570 = vmatprep.subr.bf16.mxu0 %v8187
        %11571 = vmatpush1.bf16.msra.mxu0 %v8186
        %11572 = vmatprep.subr.bf16.mxu0 %v8185
        %11573 = vmatpush1.bf16.msra.mxu0 %v8184
        %11574 = vmatprep.subr.bf16.mxu0 %v8183
        %11575 = vmatpush1.bf16.msra.mxu0 %v8182
        %11576 = vmatprep.subr.bf16.mxu0 %v8213
        %11577 = vmatpush2.bf16.msra.mxu0 %v8212
        %11578 = vmatprep.subr.bf16.mxu0 %v8211
        %11579 = vmatpush2.bf16.msra.mxu0 %v8210
        %11580 = vmatprep.subr.bf16.mxu0 %v8209
        %11581 = vmatpush2.bf16.msra.mxu0 %v8208
        %11582 = vmatprep.subr.bf16.mxu0 %v8207
        %11583 = vmatpush2.bf16.msra.mxu0 %v8206
        %11584 = vmatprep.subr.bf16.mxu0 %v8205
        %11585 = vmatpush2.bf16.msra.mxu0 %v8204
        %11586 = vmatprep.subr.bf16.mxu0 %v8203
        %11587 = vmatpush2.bf16.msra.mxu0 %v8202
        %11588 = vmatprep.subr.bf16.mxu0 %v8201
        %11589 = vmatpush2.bf16.msra.mxu0 %v8200
        %11590 = vmatprep.subr.bf16.mxu0 %v8199
        %11591 = vmatpush2.bf16.msra.mxu0 %v8198
        %11592 = vmatprep.mubr.bf16.mxu0 %v2238
        %11593 = vmatmul.mubr.bf16.gmra.mxu0 %v2224
        %v11594 = vpop.f32.mrf.mxu0
        %v11595 = vadd.f32 %v11554, %v11594
        %v11596 = vpop.f32.mrf.mxu0
        %v11597 = vadd.f32 %v11556, %v11596
        %v11598 = vpop.f32.mrf.mxu0
        %v11599 = vpop.f32.mrf.mxu0
        %11600 = vdwg.mxu0
        %11601 = vmatprep.subr.bf16.mxu0 %v8229
        %11602 = vmatpush1.bf16.msra.mxu0 %v8228
        %11603 = vmatprep.subr.bf16.mxu0 %v8227
        %11604 = vmatpush1.bf16.msra.mxu0 %v8226
        %11605 = vmatprep.subr.bf16.mxu0 %v8225
        %11606 = vmatpush1.bf16.msra.mxu0 %v8224
        %11607 = vmatprep.subr.bf16.mxu0 %v8223
        %11608 = vmatpush1.bf16.msra.mxu0 %v8222
        %11609 = vmatprep.subr.bf16.mxu0 %v8221
        %11610 = vmatpush1.bf16.msra.mxu0 %v8220
        %11611 = vmatprep.subr.bf16.mxu0 %v8219
        %11612 = vmatpush1.bf16.msra.mxu0 %v8218
        %11613 = vmatprep.subr.bf16.mxu0 %v8217
        %11614 = vmatpush1.bf16.msra.mxu0 %v8216
        %11615 = vmatprep.subr.bf16.mxu0 %v8215
        %11616 = vmatpush1.bf16.msra.mxu0 %v8214
        %11617 = vmatprep.subr.bf16.mxu0 %v8245
        %11618 = vmatpush2.bf16.msra.mxu0 %v8244
        %11619 = vmatprep.subr.bf16.mxu0 %v8243
        %11620 = vmatpush2.bf16.msra.mxu0 %v8242
        %11621 = vmatprep.subr.bf16.mxu0 %v8241
        %11622 = vmatpush2.bf16.msra.mxu0 %v8240
        %11623 = vmatprep.subr.bf16.mxu0 %v8239
        %11624 = vmatpush2.bf16.msra.mxu0 %v8238
        %11625 = vmatprep.subr.bf16.mxu0 %v8237
        %11626 = vmatpush2.bf16.msra.mxu0 %v8236
        %11627 = vmatprep.subr.bf16.mxu0 %v8235
        %11628 = vmatpush2.bf16.msra.mxu0 %v8234
        %11629 = vmatprep.subr.bf16.mxu0 %v8233
        %11630 = vmatpush2.bf16.msra.mxu0 %v8232
        %11631 = vmatprep.subr.bf16.mxu0 %v8231
        %11632 = vmatpush2.bf16.msra.mxu0 %v8230
        %11633 = vmatprep.mubr.bf16.mxu0 %v2242
        %11634 = vmatmul.mubr.bf16.gmra.mxu0 %v2240
        %v11635 = vpop.f32.mrf.mxu0
        %v11636 = vadd.f32 %v11595, %v11635
        %v11637 = vpop.f32.mrf.mxu0
        %v11638 = vadd.f32 %v11597, %v11637
        %v11639 = vpop.f32.mrf.mxu0
        %v11640 = vpop.f32.mrf.mxu0
        %11641 = vdwg.mxu0
        %11642 = vmatprep.subr.bf16.mxu0 %v8261
        %11643 = vmatpush1.bf16.msra.mxu0 %v8260
        %11644 = vmatprep.subr.bf16.mxu0 %v8259
        %11645 = vmatpush1.bf16.msra.mxu0 %v8258
        %11646 = vmatprep.subr.bf16.mxu0 %v8257
        %11647 = vmatpush1.bf16.msra.mxu0 %v8256
        %11648 = vmatprep.subr.bf16.mxu0 %v8255
        %11649 = vmatpush1.bf16.msra.mxu0 %v8254
        %11650 = vmatprep.subr.bf16.mxu0 %v8253
        %11651 = vmatpush1.bf16.msra.mxu0 %v8252
        %11652 = vmatprep.subr.bf16.mxu0 %v8251
        %11653 = vmatpush1.bf16.msra.mxu0 %v8250
        %11654 = vmatprep.subr.bf16.mxu0 %v8249
        %11655 = vmatpush1.bf16.msra.mxu0 %v8248
        %11656 = vmatprep.subr.bf16.mxu0 %v8247
        %11657 = vmatpush1.bf16.msra.mxu0 %v8246
        %11658 = vmatprep.subr.bf16.mxu0 %v8277
        %11659 = vmatpush2.bf16.msra.mxu0 %v8276
        %11660 = vmatprep.subr.bf16.mxu0 %v8275
        %11661 = vmatpush2.bf16.msra.mxu0 %v8274
        %11662 = vmatprep.subr.bf16.mxu0 %v8273
        %11663 = vmatpush2.bf16.msra.mxu0 %v8272
        %11664 = vmatprep.subr.bf16.mxu0 %v8271
        %11665 = vmatpush2.bf16.msra.mxu0 %v8270
        %11666 = vmatprep.subr.bf16.mxu0 %v8269
        %11667 = vmatpush2.bf16.msra.mxu0 %v8268
        %11668 = vmatprep.subr.bf16.mxu0 %v8267
        %11669 = vmatpush2.bf16.msra.mxu0 %v8266
        %11670 = vmatprep.subr.bf16.mxu0 %v8265
        %11671 = vmatpush2.bf16.msra.mxu0 %v8264
        %11672 = vmatprep.subr.bf16.mxu0 %v8263
        %11673 = vmatpush2.bf16.msra.mxu0 %v8262
        %11674 = vmatprep.mubr.bf16.mxu0 %v2280
        %11675 = vmatmul.mubr.bf16.gmra.mxu0 %v2266
        %v11676 = vpop.f32.mrf.mxu0
        %v11677 = vadd.f32 %v11636, %v11676
        %v11678 = vpop.f32.mrf.mxu0
        %v11679 = vadd.f32 %v11638, %v11678
        %v11680 = vpop.f32.mrf.mxu0
        %v11681 = vpop.f32.mrf.mxu0
        %11682 = vdwg.mxu0
        %11683 = vmatprep.subr.bf16.mxu0 %v8293
        %11684 = vmatpush1.bf16.msra.mxu0 %v8292
        %11685 = vmatprep.subr.bf16.mxu0 %v8291
        %11686 = vmatpush1.bf16.msra.mxu0 %v8290
        %11687 = vmatprep.subr.bf16.mxu0 %v8289
        %11688 = vmatpush1.bf16.msra.mxu0 %v8288
        %11689 = vmatprep.subr.bf16.mxu0 %v8287
        %11690 = vmatpush1.bf16.msra.mxu0 %v8286
        %11691 = vmatprep.subr.bf16.mxu0 %v8285
        %11692 = vmatpush1.bf16.msra.mxu0 %v8284
        %11693 = vmatprep.subr.bf16.mxu0 %v8283
        %11694 = vmatpush1.bf16.msra.mxu0 %v8282
        %11695 = vmatprep.subr.bf16.mxu0 %v8281
        %11696 = vmatpush1.bf16.msra.mxu0 %v8280
        %11697 = vmatprep.subr.bf16.mxu0 %v8279
        %11698 = vmatpush1.bf16.msra.mxu0 %v8278
        %11699 = vmatprep.subr.bf16.mxu0 %v8309
        %11700 = vmatpush2.bf16.msra.mxu0 %v8308
        %11701 = vmatprep.subr.bf16.mxu0 %v8307
        %11702 = vmatpush2.bf16.msra.mxu0 %v8306
        %11703 = vmatprep.subr.bf16.mxu0 %v8305
        %11704 = vmatpush2.bf16.msra.mxu0 %v8304
        %11705 = vmatprep.subr.bf16.mxu0 %v8303
        %11706 = vmatpush2.bf16.msra.mxu0 %v8302
        %11707 = vmatprep.subr.bf16.mxu0 %v8301
        %11708 = vmatpush2.bf16.msra.mxu0 %v8300
        %11709 = vmatprep.subr.bf16.mxu0 %v8299
        %11710 = vmatpush2.bf16.msra.mxu0 %v8298
        %11711 = vmatprep.subr.bf16.mxu0 %v8297
        %11712 = vmatpush2.bf16.msra.mxu0 %v8296
        %11713 = vmatprep.subr.bf16.mxu0 %v8295
        %11714 = vmatpush2.bf16.msra.mxu0 %v8294
        %11715 = vmatprep.mubr.bf16.mxu0 %v2290
        %11716 = vmatmul.mubr.bf16.gmra.mxu0 %v2288
        %v11717 = vpop.f32.mrf.mxu0
        %v11718 = vadd.f32 %v11677, %v11717
        %v11719 = vpop.f32.mrf.mxu0
        %v11720 = vadd.f32 %v11679, %v11719
        %v11721 = vpop.f32.mrf.mxu0
        %v11722 = vpop.f32.mrf.mxu0
        %11723 = vdwg.mxu0
        %11724 = vmatprep.subr.bf16.mxu0 %v8325
        %11725 = vmatpush1.bf16.msra.mxu0 %v8324
        %11726 = vmatprep.subr.bf16.mxu0 %v8323
        %11727 = vmatpush1.bf16.msra.mxu0 %v8322
        %11728 = vmatprep.subr.bf16.mxu0 %v8321
        %11729 = vmatpush1.bf16.msra.mxu0 %v8320
        %11730 = vmatprep.subr.bf16.mxu0 %v8319
        %11731 = vmatpush1.bf16.msra.mxu0 %v8318
        %11732 = vmatprep.subr.bf16.mxu0 %v8317
        %11733 = vmatpush1.bf16.msra.mxu0 %v8316
        %11734 = vmatprep.subr.bf16.mxu0 %v8315
        %11735 = vmatpush1.bf16.msra.mxu0 %v8314
        %11736 = vmatprep.subr.bf16.mxu0 %v8313
        %11737 = vmatpush1.bf16.msra.mxu0 %v8312
        %11738 = vmatprep.subr.bf16.mxu0 %v8311
        %11739 = vmatpush1.bf16.msra.mxu0 %v8310
        %11740 = vmatprep.subr.bf16.mxu0 %v8341
        %11741 = vmatpush2.bf16.msra.mxu0 %v8340
        %11742 = vmatprep.subr.bf16.mxu0 %v8339
        %11743 = vmatpush2.bf16.msra.mxu0 %v8338
        %11744 = vmatprep.subr.bf16.mxu0 %v8337
        %11745 = vmatpush2.bf16.msra.mxu0 %v8336
        %11746 = vmatprep.subr.bf16.mxu0 %v8335
        %11747 = vmatpush2.bf16.msra.mxu0 %v8334
        %11748 = vmatprep.subr.bf16.mxu0 %v8333
        %11749 = vmatpush2.bf16.msra.mxu0 %v8332
        %11750 = vmatprep.subr.bf16.mxu0 %v8331
        %11751 = vmatpush2.bf16.msra.mxu0 %v8330
        %11752 = vmatprep.subr.bf16.mxu0 %v8329
        %11753 = vmatpush2.bf16.msra.mxu0 %v8328
        %11754 = vmatprep.subr.bf16.mxu0 %v8327
        %11755 = vmatpush2.bf16.msra.mxu0 %v8326
        %11756 = vmatprep.mubr.bf16.mxu0 %v2287
        %11757 = vmatmul.mubr.bf16.gmra.mxu0 %v2273
        %v11758 = vpop.f32.mrf.mxu0
        %v11759 = vadd.f32 %v11718, %v11758
        %v11760 = vpop.f32.mrf.mxu0
        %v11761 = vadd.f32 %v11720, %v11760
        %v11762 = vpop.f32.mrf.mxu0
        %v11763 = vpop.f32.mrf.mxu0
        %11764 = vdwg.mxu0
        %11765 = vmatprep.subr.bf16.mxu0 %v8357
        %11766 = vmatpush1.bf16.msra.mxu0 %v8356
        %11767 = vmatprep.subr.bf16.mxu0 %v8355
        %11768 = vmatpush1.bf16.msra.mxu0 %v8354
        %11769 = vmatprep.subr.bf16.mxu0 %v8353
        %11770 = vmatpush1.bf16.msra.mxu0 %v8352
        %11771 = vmatprep.subr.bf16.mxu0 %v8351
        %11772 = vmatpush1.bf16.msra.mxu0 %v8350
        %11773 = vmatprep.subr.bf16.mxu0 %v8349
        %11774 = vmatpush1.bf16.msra.mxu0 %v8348
        %11775 = vmatprep.subr.bf16.mxu0 %v8347
        %11776 = vmatpush1.bf16.msra.mxu0 %v8346
        %11777 = vmatprep.subr.bf16.mxu0 %v8345
        %11778 = vmatpush1.bf16.msra.mxu0 %v8344
        %11779 = vmatprep.subr.bf16.mxu0 %v8343
        %11780 = vmatpush1.bf16.msra.mxu0 %v8342
        %11781 = vmatprep.subr.bf16.mxu0 %v8373
        %11782 = vmatpush2.bf16.msra.mxu0 %v8372
        %11783 = vmatprep.subr.bf16.mxu0 %v8371
        %11784 = vmatpush2.bf16.msra.mxu0 %v8370
        %11785 = vmatprep.subr.bf16.mxu0 %v8369
        %11786 = vmatpush2.bf16.msra.mxu0 %v8368
        %11787 = vmatprep.subr.bf16.mxu0 %v8367
        %11788 = vmatpush2.bf16.msra.mxu0 %v8366
        %11789 = vmatprep.subr.bf16.mxu0 %v8365
        %11790 = vmatpush2.bf16.msra.mxu0 %v8364
        %11791 = vmatprep.subr.bf16.mxu0 %v8363
        %11792 = vmatpush2.bf16.msra.mxu0 %v8362
        %11793 = vmatprep.subr.bf16.mxu0 %v8361
        %11794 = vmatpush2.bf16.msra.mxu0 %v8360
        %11795 = vmatprep.subr.bf16.mxu0 %v8359
        %11796 = vmatpush2.bf16.msra.mxu0 %v8358
        %11797 = vmatprep.mubr.bf16.mxu0 %v2291
        %11798 = vmatmul.mubr.bf16.gmra.mxu0 %v2289
        %v11799 = vpop.f32.mrf.mxu0
        %v11800 = vadd.f32 %v11759, %v11799
        %v11801 = vpop.f32.mrf.mxu0
        %v11802 = vadd.f32 %v11761, %v11801
        %v11803 = vpop.f32.mrf.mxu0
        %v11804 = vpop.f32.mrf.mxu0
        %11805 = vdwg.mxu0
        %11806 = vmatprep.subr.bf16.mxu0 %v8389
        %11807 = vmatpush1.bf16.msra.mxu0 %v8388
        %11808 = vmatprep.subr.bf16.mxu0 %v8387
        %11809 = vmatpush1.bf16.msra.mxu0 %v8386
        %11810 = vmatprep.subr.bf16.mxu0 %v8385
        %11811 = vmatpush1.bf16.msra.mxu0 %v8384
        %11812 = vmatprep.subr.bf16.mxu0 %v8383
        %11813 = vmatpush1.bf16.msra.mxu0 %v8382
        %11814 = vmatprep.subr.bf16.mxu0 %v8381
        %11815 = vmatpush1.bf16.msra.mxu0 %v8380
        %11816 = vmatprep.subr.bf16.mxu0 %v8379
        %11817 = vmatpush1.bf16.msra.mxu0 %v8378
        %11818 = vmatprep.subr.bf16.mxu0 %v8377
        %11819 = vmatpush1.bf16.msra.mxu0 %v8376
        %11820 = vmatprep.subr.bf16.mxu0 %v8375
        %11821 = vmatpush1.bf16.msra.mxu0 %v8374
        %11822 = vmatprep.subr.bf16.mxu0 %v8405
        %11823 = vmatpush2.bf16.msra.mxu0 %v8404
        %11824 = vmatprep.subr.bf16.mxu0 %v8403
        %11825 = vmatpush2.bf16.msra.mxu0 %v8402
        %11826 = vmatprep.subr.bf16.mxu0 %v8401
        %11827 = vmatpush2.bf16.msra.mxu0 %v8400
        %11828 = vmatprep.subr.bf16.mxu0 %v8399
        %11829 = vmatpush2.bf16.msra.mxu0 %v8398
        %11830 = vmatprep.subr.bf16.mxu0 %v8397
        %11831 = vmatpush2.bf16.msra.mxu0 %v8396
        %11832 = vmatprep.subr.bf16.mxu0 %v8395
        %11833 = vmatpush2.bf16.msra.mxu0 %v8394
        %11834 = vmatprep.subr.bf16.mxu0 %v8393
        %11835 = vmatpush2.bf16.msra.mxu0 %v8392
        %11836 = vmatprep.subr.bf16.mxu0 %v8391
        %11837 = vmatpush2.bf16.msra.mxu0 %v8390
        %11838 = vmatprep.mubr.bf16.mxu0 %v2329
        %11839 = vmatmul.mubr.bf16.gmra.mxu0 %v2315
        %v11840 = vpop.f32.mrf.mxu0
        %v11841 = vadd.f32 %v11800, %v11840
        %v11842 = vpop.f32.mrf.mxu0
        %v11843 = vadd.f32 %v11802, %v11842
        %v11844 = vpop.f32.mrf.mxu0
        %v11845 = vpop.f32.mrf.mxu0
        %11846 = vdwg.mxu0
        %11847 = vmatprep.subr.bf16.mxu0 %v8421
        %11848 = vmatpush1.bf16.msra.mxu0 %v8420
        %11849 = vmatprep.subr.bf16.mxu0 %v8419
        %11850 = vmatpush1.bf16.msra.mxu0 %v8418
        %11851 = vmatprep.subr.bf16.mxu0 %v8417
        %11852 = vmatpush1.bf16.msra.mxu0 %v8416
        %11853 = vmatprep.subr.bf16.mxu0 %v8415
        %11854 = vmatpush1.bf16.msra.mxu0 %v8414
        %11855 = vmatprep.subr.bf16.mxu0 %v8413
        %11856 = vmatpush1.bf16.msra.mxu0 %v8412
        %11857 = vmatprep.subr.bf16.mxu0 %v8411
        %11858 = vmatpush1.bf16.msra.mxu0 %v8410
        %11859 = vmatprep.subr.bf16.mxu0 %v8409
        %11860 = vmatpush1.bf16.msra.mxu0 %v8408
        %11861 = vmatprep.subr.bf16.mxu0 %v8407
        %11862 = vmatpush1.bf16.msra.mxu0 %v8406
        %11863 = vmatprep.subr.bf16.mxu0 %v8437
        %11864 = vmatpush2.bf16.msra.mxu0 %v8436
        %11865 = vmatprep.subr.bf16.mxu0 %v8435
        %11866 = vmatpush2.bf16.msra.mxu0 %v8434
        %11867 = vmatprep.subr.bf16.mxu0 %v8433
        %11868 = vmatpush2.bf16.msra.mxu0 %v8432
        %11869 = vmatprep.subr.bf16.mxu0 %v8431
        %11870 = vmatpush2.bf16.msra.mxu0 %v8430
        %11871 = vmatprep.subr.bf16.mxu0 %v8429
        %11872 = vmatpush2.bf16.msra.mxu0 %v8428
        %11873 = vmatprep.subr.bf16.mxu0 %v8427
        %11874 = vmatpush2.bf16.msra.mxu0 %v8426
        %11875 = vmatprep.subr.bf16.mxu0 %v8425
        %11876 = vmatpush2.bf16.msra.mxu0 %v8424
        %11877 = vmatprep.subr.bf16.mxu0 %v8423
        %11878 = vmatpush2.bf16.msra.mxu0 %v8422
        %11879 = vmatprep.mubr.bf16.mxu0 %v2339
        %11880 = vmatmul.mubr.bf16.gmra.mxu0 %v2337
        %v11881 = vpop.f32.mrf.mxu0
        %v11882 = vadd.f32 %v11841, %v11881
        %v11883 = vpop.f32.mrf.mxu0
        %v11884 = vadd.f32 %v11843, %v11883
        %v11885 = vpop.f32.mrf.mxu0
        %v11886 = vpop.f32.mrf.mxu0
        %11887 = vdwg.mxu0
        %11888 = vmatprep.subr.bf16.mxu0 %v8453
        %11889 = vmatpush1.bf16.msra.mxu0 %v8452
        %11890 = vmatprep.subr.bf16.mxu0 %v8451
        %11891 = vmatpush1.bf16.msra.mxu0 %v8450
        %11892 = vmatprep.subr.bf16.mxu0 %v8449
        %11893 = vmatpush1.bf16.msra.mxu0 %v8448
        %11894 = vmatprep.subr.bf16.mxu0 %v8447
        %11895 = vmatpush1.bf16.msra.mxu0 %v8446
        %11896 = vmatprep.subr.bf16.mxu0 %v8445
        %11897 = vmatpush1.bf16.msra.mxu0 %v8444
        %11898 = vmatprep.subr.bf16.mxu0 %v8443
        %11899 = vmatpush1.bf16.msra.mxu0 %v8442
        %11900 = vmatprep.subr.bf16.mxu0 %v8441
        %11901 = vmatpush1.bf16.msra.mxu0 %v8440
        %11902 = vmatprep.subr.bf16.mxu0 %v8439
        %11903 = vmatpush1.bf16.msra.mxu0 %v8438
        %11904 = vmatprep.subr.bf16.mxu0 %v8469
        %11905 = vmatpush2.bf16.msra.mxu0 %v8468
        %11906 = vmatprep.subr.bf16.mxu0 %v8467
        %11907 = vmatpush2.bf16.msra.mxu0 %v8466
        %11908 = vmatprep.subr.bf16.mxu0 %v8465
        %11909 = vmatpush2.bf16.msra.mxu0 %v8464
        %11910 = vmatprep.subr.bf16.mxu0 %v8463
        %11911 = vmatpush2.bf16.msra.mxu0 %v8462
        %11912 = vmatprep.subr.bf16.mxu0 %v8461
        %11913 = vmatpush2.bf16.msra.mxu0 %v8460
        %11914 = vmatprep.subr.bf16.mxu0 %v8459
        %11915 = vmatpush2.bf16.msra.mxu0 %v8458
        %11916 = vmatprep.subr.bf16.mxu0 %v8457
        %11917 = vmatpush2.bf16.msra.mxu0 %v8456
        %11918 = vmatprep.subr.bf16.mxu0 %v8455
        %11919 = vmatpush2.bf16.msra.mxu0 %v8454
        %11920 = vmatprep.mubr.bf16.mxu0 %v2336
        %11921 = vmatmul.mubr.bf16.gmra.mxu0 %v2322
        %v11922 = vpop.f32.mrf.mxu0
        %v11923 = vadd.f32 %v11882, %v11922
        %v11924 = vpop.f32.mrf.mxu0
        %v11925 = vadd.f32 %v11884, %v11924
        %v11926 = vpop.f32.mrf.mxu0
        %v11927 = vpop.f32.mrf.mxu0
        %11928 = vdwg.mxu0
        %11929 = vmatprep.subr.bf16.mxu0 %v8485
        %11930 = vmatpush1.bf16.msra.mxu0 %v8484
        %11931 = vmatprep.subr.bf16.mxu0 %v8483
        %11932 = vmatpush1.bf16.msra.mxu0 %v8482
        %11933 = vmatprep.subr.bf16.mxu0 %v8481
        %11934 = vmatpush1.bf16.msra.mxu0 %v8480
        %11935 = vmatprep.subr.bf16.mxu0 %v8479
        %11936 = vmatpush1.bf16.msra.mxu0 %v8478
        %11937 = vmatprep.subr.bf16.mxu0 %v8477
        %11938 = vmatpush1.bf16.msra.mxu0 %v8476
        %11939 = vmatprep.subr.bf16.mxu0 %v8475
        %11940 = vmatpush1.bf16.msra.mxu0 %v8474
        %11941 = vmatprep.subr.bf16.mxu0 %v8473
        %11942 = vmatpush1.bf16.msra.mxu0 %v8472
        %11943 = vmatprep.subr.bf16.mxu0 %v8471
        %11944 = vmatpush1.bf16.msra.mxu0 %v8470
        %11945 = vmatprep.subr.bf16.mxu0 %v8501
        %11946 = vmatpush2.bf16.msra.mxu0 %v8500
        %11947 = vmatprep.subr.bf16.mxu0 %v8499
        %11948 = vmatpush2.bf16.msra.mxu0 %v8498
        %11949 = vmatprep.subr.bf16.mxu0 %v8497
        %11950 = vmatpush2.bf16.msra.mxu0 %v8496
        %11951 = vmatprep.subr.bf16.mxu0 %v8495
        %11952 = vmatpush2.bf16.msra.mxu0 %v8494
        %11953 = vmatprep.subr.bf16.mxu0 %v8493
        %11954 = vmatpush2.bf16.msra.mxu0 %v8492
        %11955 = vmatprep.subr.bf16.mxu0 %v8491
        %11956 = vmatpush2.bf16.msra.mxu0 %v8490
        %11957 = vmatprep.subr.bf16.mxu0 %v8489
        %11958 = vmatpush2.bf16.msra.mxu0 %v8488
        %11959 = vmatprep.subr.bf16.mxu0 %v8487
        %11960 = vmatpush2.bf16.msra.mxu0 %v8486
        %11961 = vmatprep.mubr.bf16.mxu0 %v2340
        %11962 = vmatmul.mubr.bf16.gmra.mxu0 %v2338
        %v11963 = vpop.f32.mrf.mxu0
        %v11964 = vadd.f32 %v11923, %v11963
        %v11965 = vpop.f32.mrf.mxu0
        %v11966 = vadd.f32 %v11925, %v11965
        %v11967 = vpop.f32.mrf.mxu0
        %v11968 = vpop.f32.mrf.mxu0
        %11969 = vdwg.mxu0
        %11970 = vmatprep.subr.bf16.mxu0 %v8517
        %11971 = vmatpush1.bf16.msra.mxu0 %v8516
        %11972 = vmatprep.subr.bf16.mxu0 %v8515
        %11973 = vmatpush1.bf16.msra.mxu0 %v8514
        %11974 = vmatprep.subr.bf16.mxu0 %v8513
        %11975 = vmatpush1.bf16.msra.mxu0 %v8512
        %11976 = vmatprep.subr.bf16.mxu0 %v8511
        %11977 = vmatpush1.bf16.msra.mxu0 %v8510
        %11978 = vmatprep.subr.bf16.mxu0 %v8509
        %11979 = vmatpush1.bf16.msra.mxu0 %v8508
        %11980 = vmatprep.subr.bf16.mxu0 %v8507
        %11981 = vmatpush1.bf16.msra.mxu0 %v8506
        %11982 = vmatprep.subr.bf16.mxu0 %v8505
        %11983 = vmatpush1.bf16.msra.mxu0 %v8504
        %11984 = vmatprep.subr.bf16.mxu0 %v8503
        %11985 = vmatpush1.bf16.msra.mxu0 %v8502
        %11986 = vmatprep.subr.bf16.mxu0 %v8533
        %11987 = vmatpush2.bf16.msra.mxu0 %v8532
        %11988 = vmatprep.subr.bf16.mxu0 %v8531
        %11989 = vmatpush2.bf16.msra.mxu0 %v8530
        %11990 = vmatprep.subr.bf16.mxu0 %v8529
        %11991 = vmatpush2.bf16.msra.mxu0 %v8528
        %11992 = vmatprep.subr.bf16.mxu0 %v8527
        %11993 = vmatpush2.bf16.msra.mxu0 %v8526
        %11994 = vmatprep.subr.bf16.mxu0 %v8525
        %11995 = vmatpush2.bf16.msra.mxu0 %v8524
        %11996 = vmatprep.subr.bf16.mxu0 %v8523
        %11997 = vmatpush2.bf16.msra.mxu0 %v8522
        %11998 = vmatprep.subr.bf16.mxu0 %v8521
        %11999 = vmatpush2.bf16.msra.mxu0 %v8520
        %12000 = vmatprep.subr.bf16.mxu0 %v8519
        %12001 = vmatpush2.bf16.msra.mxu0 %v8518
        %12002 = vmatprep.mubr.bf16.mxu0 %v2378
        %12003 = vmatmul.mubr.bf16.gmra.mxu0 %v2364
        %v12004 = vpop.f32.mrf.mxu0
        %v12005 = vadd.f32 %v11964, %v12004
        %v12006 = vpop.f32.mrf.mxu0
        %v12007 = vadd.f32 %v11966, %v12006
        %v12008 = vpop.f32.mrf.mxu0
        %v12009 = vpop.f32.mrf.mxu0
        %12010 = vdwg.mxu0
        %12011 = vmatprep.subr.bf16.mxu0 %v8549
        %12012 = vmatpush1.bf16.msra.mxu0 %v8548
        %12013 = vmatprep.subr.bf16.mxu0 %v8547
        %12014 = vmatpush1.bf16.msra.mxu0 %v8546
        %12015 = vmatprep.subr.bf16.mxu0 %v8545
        %12016 = vmatpush1.bf16.msra.mxu0 %v8544
        %12017 = vmatprep.subr.bf16.mxu0 %v8543
        %12018 = vmatpush1.bf16.msra.mxu0 %v8542
        %12019 = vmatprep.subr.bf16.mxu0 %v8541
        %12020 = vmatpush1.bf16.msra.mxu0 %v8540
        %12021 = vmatprep.subr.bf16.mxu0 %v8539
        %12022 = vmatpush1.bf16.msra.mxu0 %v8538
        %12023 = vmatprep.subr.bf16.mxu0 %v8537
        %12024 = vmatpush1.bf16.msra.mxu0 %v8536
        %12025 = vmatprep.subr.bf16.mxu0 %v8535
        %12026 = vmatpush1.bf16.msra.mxu0 %v8534
        %12027 = vmatprep.subr.bf16.mxu0 %v8565
        %12028 = vmatpush2.bf16.msra.mxu0 %v8564
        %12029 = vmatprep.subr.bf16.mxu0 %v8563
        %12030 = vmatpush2.bf16.msra.mxu0 %v8562
        %12031 = vmatprep.subr.bf16.mxu0 %v8561
        %12032 = vmatpush2.bf16.msra.mxu0 %v8560
        %12033 = vmatprep.subr.bf16.mxu0 %v8559
        %12034 = vmatpush2.bf16.msra.mxu0 %v8558
        %12035 = vmatprep.subr.bf16.mxu0 %v8557
        %12036 = vmatpush2.bf16.msra.mxu0 %v8556
        %12037 = vmatprep.subr.bf16.mxu0 %v8555
        %12038 = vmatpush2.bf16.msra.mxu0 %v8554
        %12039 = vmatprep.subr.bf16.mxu0 %v8553
        %12040 = vmatpush2.bf16.msra.mxu0 %v8552
        %12041 = vmatprep.subr.bf16.mxu0 %v8551
        %12042 = vmatpush2.bf16.msra.mxu0 %v8550
        %12043 = vmatprep.mubr.bf16.mxu0 %v2388
        %12044 = vmatmul.mubr.bf16.gmra.mxu0 %v2386
        %v12045 = vpop.f32.mrf.mxu0
        %v12046 = vadd.f32 %v12005, %v12045
        %v12047 = vpop.f32.mrf.mxu0
        %v12048 = vadd.f32 %v12007, %v12047
        %v12049 = vpop.f32.mrf.mxu0
        %v12050 = vpop.f32.mrf.mxu0
        %12051 = vdwg.mxu0
        %12052 = vmatprep.subr.bf16.mxu0 %v8581
        %12053 = vmatpush1.bf16.msra.mxu0 %v8580
        %12054 = vmatprep.subr.bf16.mxu0 %v8579
        %12055 = vmatpush1.bf16.msra.mxu0 %v8578
        %12056 = vmatprep.subr.bf16.mxu0 %v8577
        %12057 = vmatpush1.bf16.msra.mxu0 %v8576
        %12058 = vmatprep.subr.bf16.mxu0 %v8575
        %12059 = vmatpush1.bf16.msra.mxu0 %v8574
        %12060 = vmatprep.subr.bf16.mxu0 %v8573
        %12061 = vmatpush1.bf16.msra.mxu0 %v8572
        %12062 = vmatprep.subr.bf16.mxu0 %v8571
        %12063 = vmatpush1.bf16.msra.mxu0 %v8570
        %12064 = vmatprep.subr.bf16.mxu0 %v8569
        %12065 = vmatpush1.bf16.msra.mxu0 %v8568
        %12066 = vmatprep.subr.bf16.mxu0 %v8567
        %12067 = vmatpush1.bf16.msra.mxu0 %v8566
        %12068 = vmatprep.subr.bf16.mxu0 %v8597
        %12069 = vmatpush2.bf16.msra.mxu0 %v8596
        %12070 = vmatprep.subr.bf16.mxu0 %v8595
        %12071 = vmatpush2.bf16.msra.mxu0 %v8594
        %12072 = vmatprep.subr.bf16.mxu0 %v8593
        %12073 = vmatpush2.bf16.msra.mxu0 %v8592
        %12074 = vmatprep.subr.bf16.mxu0 %v8591
        %12075 = vmatpush2.bf16.msra.mxu0 %v8590
        %12076 = vmatprep.subr.bf16.mxu0 %v8589
        %12077 = vmatpush2.bf16.msra.mxu0 %v8588
        %12078 = vmatprep.subr.bf16.mxu0 %v8587
        %12079 = vmatpush2.bf16.msra.mxu0 %v8586
        %12080 = vmatprep.subr.bf16.mxu0 %v8585
        %12081 = vmatpush2.bf16.msra.mxu0 %v8584
        %12082 = vmatprep.subr.bf16.mxu0 %v8583
        %12083 = vmatpush2.bf16.msra.mxu0 %v8582
        %12084 = vmatprep.mubr.bf16.mxu0 %v2385
        %12085 = vmatmul.mubr.bf16.gmra.mxu0 %v2371
        %v12086 = vpop.f32.mrf.mxu0
        %v12087 = vadd.f32 %v12046, %v12086
        %v12088 = vpop.f32.mrf.mxu0
        %v12089 = vadd.f32 %v12048, %v12088
        %v12090 = vpop.f32.mrf.mxu0
        %v12091 = vpop.f32.mrf.mxu0
        %12092 = vdwg.mxu0
        %12093 = vmatprep.subr.bf16.mxu0 %v8613
        %12094 = vmatpush1.bf16.msra.mxu0 %v8612
        %12095 = vmatprep.subr.bf16.mxu0 %v8611
        %12096 = vmatpush1.bf16.msra.mxu0 %v8610
        %12097 = vmatprep.subr.bf16.mxu0 %v8609
        %12098 = vmatpush1.bf16.msra.mxu0 %v8608
        %12099 = vmatprep.subr.bf16.mxu0 %v8607
        %12100 = vmatpush1.bf16.msra.mxu0 %v8606
        %12101 = vmatprep.subr.bf16.mxu0 %v8605
        %12102 = vmatpush1.bf16.msra.mxu0 %v8604
        %12103 = vmatprep.subr.bf16.mxu0 %v8603
        %12104 = vmatpush1.bf16.msra.mxu0 %v8602
        %12105 = vmatprep.subr.bf16.mxu0 %v8601
        %12106 = vmatpush1.bf16.msra.mxu0 %v8600
        %12107 = vmatprep.subr.bf16.mxu0 %v8599
        %12108 = vmatpush1.bf16.msra.mxu0 %v8598
        %12109 = vmatprep.subr.bf16.mxu0 %v8629
        %12110 = vmatpush2.bf16.msra.mxu0 %v8628
        %12111 = vmatprep.subr.bf16.mxu0 %v8627
        %12112 = vmatpush2.bf16.msra.mxu0 %v8626
        %12113 = vmatprep.subr.bf16.mxu0 %v8625
        %12114 = vmatpush2.bf16.msra.mxu0 %v8624
        %12115 = vmatprep.subr.bf16.mxu0 %v8623
        %12116 = vmatpush2.bf16.msra.mxu0 %v8622
        %12117 = vmatprep.subr.bf16.mxu0 %v8621
        %12118 = vmatpush2.bf16.msra.mxu0 %v8620
        %12119 = vmatprep.subr.bf16.mxu0 %v8619
        %12120 = vmatpush2.bf16.msra.mxu0 %v8618
        %12121 = vmatprep.subr.bf16.mxu0 %v8617
        %12122 = vmatpush2.bf16.msra.mxu0 %v8616
        %12123 = vmatprep.subr.bf16.mxu0 %v8615
        %12124 = vmatpush2.bf16.msra.mxu0 %v8614
        %12125 = vmatprep.mubr.bf16.mxu0 %v2389
        %12126 = vmatmul.mubr.bf16.gmra.mxu0 %v2387
        %v12127 = vpop.f32.mrf.mxu0
        %v12128 = vadd.f32 %v12087, %v12127
        %v12129 = vpop.f32.mrf.mxu0
        %v12130 = vadd.f32 %v12089, %v12129
        %v12131 = vpop.f32.mrf.mxu0
        %v12132 = vpop.f32.mrf.mxu0
        %12133 = vdwg.mxu0
        %v12134 = vmax.f32 %v12128, 0.0
        %v12135 = vmax.f32 %v12130, 0.0
        %v12136 = vpack.c.bf16 %v12134, %v12134
        %v12137 = vpack.c.bf16 %v12135, %v12135
        %v12140 = vcombine.low %v12136, %v12137
        %v12142 = vunpack.c.l.s4 1966171168
        %v12143 = vunpack.c.0.s8 %v12142
        %v12144 = vlaneseq
        %v12145 = vshrl.u32 %v12144, 7
        %v12146 = vsub.s32 %v12143, %v12145
        %v12147 = vrot.slane %v12140, %v12146
        %v12149 = vunpack.c.l.s4 1966171168
        %v12150 = vunpack.c.0.s8 %v12149
        %v12151 = vlaneseq
        %v12152 = vshrl.u32 %v12151, 7
        %v12153 = vsub.s32 %v12150, %v12152
        %v12154 = vrot.slane %v12147, %v12153
        %12156 = vst [vmem:[%s228] sm:$0x3] %v12154
        %s12157 = smul.u32 2, %s20
        %p12158 = scmp.lt.s32.totalorder %s12157, 3
        %s12159 = scalar_select %p12158, %s12157, 3
        %s12160 = scalar_lea.vmem %s3, %s12159
        // Predicated region
        $region41: #{simple_dnn_forward.2} parent=31 // pred_check
          %p12161 = pneg %p111
        $region42: #{simple_dnn_forward.2} parent=31 // pred_check_branch
          %12163 = sbr.rel (%p12161) target = $region44
        $region43: #{simple_dnn_forward.2} parent=31 // pred_region
          %s12164 = smul.u32 2, %s20
        $region44: #{simple_dnn_forward.2} parent=31 // pred_fallthru
          _
      $region32: #{simple_dnn_forward.2} parent=5 // pred_fallthru
        _
      %p12165 = scmp.le.s32.totalorder 2, %s15
      // Predicated region
      $region45: #{simple_dnn_forward.2} parent=5 // pred_check
        %p12166 = pneg %p12165
      $region46: #{simple_dnn_forward.2} parent=5 // pred_check_branch
        %12168 = sbr.rel (%p12166) target = $region48
      $region47: #{simple_dnn_forward.2} parent=5 // pred_region
        %s12169 = ssub.s32 %s15, 2
        // Predicated region
        $region49: #{simple_dnn_forward.2} parent=47 // pred_check
          %p12170 = pneg %p117
        $region50: #{simple_dnn_forward.2} parent=47 // pred_check_branch
          %12172 = sbr.rel (%p12170) target = $region52
        $region51: #{simple_dnn_forward.2} parent=47 // pred_region
          %s12173 = smul.u32 2, %s21
          %p12174 = scmp.lt.s32.totalorder %s12173, 3
          %s12175 = scalar_select %p12174, %s12173, 3
          %s12176 = scalar_lea.vmem %s3, %s12175
        $region52: #{simple_dnn_forward.2} parent=47 // pred_fallthru
          _
      $region48: #{simple_dnn_forward.2} parent=5 // pred_fallthru
        _
    $region6: #{simple_dnn_forward.2} parent=1 // loop_footer
      %s19 = sadd.s32 1, %s15
    $region7: #{simple_dnn_forward.2} parent=1 // loop_footer_branch
      %14 = sbr.rel target = $region3
    $region8: #{simple_dnn_forward.2} parent=1 // loop_exit
      _
    %12177 = vsyncpa [#allocation3], 1
    %s12178 = scalar_lea.sflag [#allocation3], 1
    %12179 = vsyncpa %s12178, 1
    %12180 = vsyncpa [#allocation5], 1
    %s12181 = scalar_lea.sflag [#allocation5], 1
    %12182 = vsyncpa %s12181, 1

</llo_original>
